<compile_context>
chip_gen: v6e
topology: v6e:2x2x1
jax: 0.10.0
libtpu: 0.0.40
codegen_flags: <defaults>
</compile_context>

<pallas_src>
import jax
import jax.numpy as jnp
from jax.experimental import pallas as pl
from jax.experimental.pallas import tpu as pltpu

_VMEM_LIMIT = 48 * 1024 * 1024  # explicit scoped-VMEM cap (< v7x 64 MiB physical)


# ---------------------------------------------------------------------------
# Kernel 1: ConvTranspose2d(k=2, s=2), both row-phases in one grid step.
# Output is phase-major: o[n, i, a, j, b*mid1 + c] = up[n, 2i+a, 2j+b, c],
# so the wrapper only needs a pure reshape (no transpose) to interleave.
# ---------------------------------------------------------------------------
def _upsample_kernel(x_ref, w_ref, b_ref, o_ref):
    # x_ref: (1, H0, W0, Cin)  w_ref: (Cin, 4*mid1)  b_ref: (1, 4*mid1)
    # o_ref: (1, H0, 2, W0, 2*mid1)
    _, H0, W0, Cin = x_ref.shape
    C4 = w_ref.shape[1]
    C2 = C4 // 2

    x2 = x_ref[0].reshape(H0 * W0, Cin)
    y = jnp.dot(x2, w_ref[...], preferred_element_type=jnp.float32) + b_ref[...]
    y = y.astype(o_ref.dtype)                      # (H0*W0, 4*mid1), cols (a,b,c)

    # Two static column-slice stores, one per row-phase a.
    o_ref[:, :, 0:1, :, :] = y[:, :C2].reshape(1, H0, 1, W0, C2)
    o_ref[:, :, 1:2, :, :] = y[:, C2:].reshape(1, H0, 1, W0, C2)


# ---------------------------------------------------------------------------
# Kernel 2: fused concat + zero-pad + conv1(3x3) + ReLU + conv2(3x3) + ReLU.
# The concatenated/padded input and the mid activation live only in VMEM.
# ---------------------------------------------------------------------------
def _doble_conv_kernel(up_ref, conc_ref, w1_ref, b1_ref, w2_ref, b2_ref,
                       o_ref, catpad_ref, mpad_ref):
    # up_ref/conc_ref: (1, H, W, mid1) bf16
    # w1_ref: (9*2*mid1, mid2) bf16    b1_ref: (1, mid2) f32
    # w2_ref: (9*mid2, Cout)  bf16     b2_ref: (1, Cout) f32
    # o_ref:  (1, H, W, Cout) f32
    # catpad_ref: VMEM (H+2, W+2, 2*mid1) bf16   (single concat buffer + pad)
    # mpad_ref:   VMEM (H+2, W+2, mid2)   bf16   (padded mid activation)
    _, H, W, C1 = up_ref.shape
    Ccat = catpad_ref.shape[-1]                    # 2*mid1
    mid2 = mpad_ref.shape[-1]
    Cout = o_ref.shape[-1]
    cdt = catpad_ref.dtype
    mdt = mpad_ref.dtype

    # Zero only the 1-px padding border (every step: O(H*C), not O(H*W*C), and
    # stays correct even when the grid axis is split across TensorCores).
    catpad_ref[0:1, :, :] = jnp.zeros((1, W + 2, Ccat), cdt)
    catpad_ref[H + 1:H + 2, :, :] = jnp.zeros((1, W + 2, Ccat), cdt)
    catpad_ref[:, 0:1, :] = jnp.zeros((H + 2, 1, Ccat), cdt)
    catpad_ref[:, W + 1:W + 2, :] = jnp.zeros((H + 2, 1, Ccat), cdt)
    mpad_ref[0:1, :, :] = jnp.zeros((1, W + 2, mid2), mdt)
    mpad_ref[H + 1:H + 2, :, :] = jnp.zeros((1, W + 2, mid2), mdt)
    mpad_ref[:, 0:1, :] = jnp.zeros((H + 2, 1, mid2), mdt)
    mpad_ref[:, W + 1:W + 2, :] = jnp.zeros((H + 2, 1, mid2), mdt)

    # Fused channel concat into ONE channels-last buffer (no HBM concat/pad):
    #   catpad[..., :mid1] = up,  catpad[..., mid1:] = conc  == torch.cat order.
    catpad_ref[1:H + 1, 1:W + 1, 0:C1] = up_ref[0]
    catpad_ref[1:H + 1, 1:W + 1, C1:Ccat] = conc_ref[0]

    # conv1 as ONE im2col matmul: 9 taps, each of lane width 2*mid1.
    taps1 = [catpad_ref[kh:kh + H, kw:kw + W, :].reshape(H * W, Ccat)
             for kh in range(3) for kw in range(3)]
    patches1 = jnp.concatenate(taps1, axis=-1)                 # (H*W, 9*2*mid1)
    h1 = jnp.dot(patches1, w1_ref[...], preferred_element_type=jnp.float32)
    h1 = jnp.maximum(h1 + b1_ref[...], 0.0)                    # f32 epilogue

    # Mid activation stays in VMEM (padded) -> no HBM traffic between convs.
    mpad_ref[1:H + 1, 1:W + 1, :] = h1.astype(mdt).reshape(H, W, mid2)

    # conv2 as ONE im2col matmul: K = 9*mid2.
    taps2 = [mpad_ref[kh:kh + H, kw:kw + W, :].reshape(H * W, mid2)
             for kh in range(3) for kw in range(3)]
    patches2 = jnp.concatenate(taps2, axis=-1)                 # (H*W, 9*mid2)
    h2 = jnp.dot(patches2, w2_ref[...], preferred_element_type=jnp.float32)
    h2 = jnp.maximum(h2 + b2_ref[...], 0.0)
    o_ref[...] = h2.reshape(1, H, W, Cout)


# ---------------------------------------------------------------------------
# Wrapper: NCHW in/out, CenterCrop, weight packing, two pallas_calls.
# ---------------------------------------------------------------------------
def decoder_forward(params, x_nchw, conc_nchw):
    cdt = jnp.bfloat16

    # NCHW -> NHWC (interface kept NCHW to match the PyTorch reference).
    x = jnp.transpose(x_nchw, (0, 2, 3, 1)).astype(cdt)
    conc = jnp.transpose(conc_nchw, (0, 2, 3, 1))

    N, H0, W0, Cin = x.shape
    mid1 = params["up_w"].shape[1]
    H, W = 2 * H0, 2 * W0

    # --- self.up(x): ConvTranspose2d(k=2, s=2) ------------------------------
    # packed[ci, (a*2+b)*mid1 + c] = up_w[ci, c, a, b]
    w_up = jnp.transpose(params["up_w"], (0, 2, 3, 1)).reshape(Cin, 4 * mid1).astype(cdt)
    b_up = jnp.tile(params["up_b"], 4).reshape(1, 4 * mid1).astype(jnp.float32)

    up_pm = pl.pallas_call(
        _upsample_kernel,
        out_shape=jax.ShapeDtypeStruct((N, H0, 2, W0, 2 * mid1), cdt),
        grid=(N,),
        in_specs=[
            pl.BlockSpec((1, H0, W0, Cin), lambda n: (n, 0, 0, 0)),
            pl.BlockSpec((Cin, 4 * mid1), lambda n: (0, 0)),
            pl.BlockSpec((1, 4 * mid1), lambda n: (0, 0)),
        ],
        out_specs=pl.BlockSpec((1, H0, 2, W0, 2 * mid1), lambda n: (n, 0, 0, 0, 0)),
        compiler_params=pltpu.CompilerParams(
            dimension_semantics=("parallel",),
            vmem_limit_bytes=_VMEM_LIMIT),
    )(x, w_up, b_up)

    # Pure reshape (no transpose): (N,H0,2,W0,2,mid1) -> (N, 2H0, 2W0, mid1).
    up = up_pm.reshape(N, H, W, mid1)

    # --- CenterCrop(conc) to (H, W) (torchvision semantics, static offsets) --
    Hc, Wc = conc.shape[1], conc.shape[2]
    top = int(round((Hc - H) / 2.0))
    left = int(round((Wc - W) / 2.0))
    conc_c = conc[:, top:top + H, left:left + W, :].astype(cdt)

    # --- fused concat + DobleConv (BN=False) ---------------------------------
    mid2 = params["conv1_w"].shape[0]
    Cout = params["conv2_w"].shape[0]
    # im2col weights: row = (kh*3 + kw) * Cin_cat + ci  (matches patch order;
    # torch in-channel order is [up, conc], same as the catpad layout).
    w1 = jnp.transpose(params["conv1_w"], (2, 3, 1, 0)).reshape(9 * 2 * mid1, mid2).astype(cdt)
    b1 = params["conv1_b"].reshape(1, mid2).astype(jnp.float32)
    w2 = jnp.transpose(params["conv2_w"], (2, 3, 1, 0)).reshape(9 * mid2, Cout).astype(cdt)
    b2 = params["conv2_b"].reshape(1, Cout).astype(jnp.float32)

    out_nhwc = pl.pallas_call(
        _doble_conv_kernel,
        out_shape=jax.ShapeDtypeStruct((N, H, W, Cout), jnp.float32),
        grid=(N,),
        in_specs=[
            pl.BlockSpec((1, H, W, mid1), lambda n: (n, 0, 0, 0)),     # up
            pl.BlockSpec((1, H, W, mid1), lambda n: (n, 0, 0, 0)),     # conc
            pl.BlockSpec((9 * 2 * mid1, mid2), lambda n: (0, 0)),      # w1
            pl.BlockSpec((1, mid2), lambda n: (0, 0)),                 # b1
            pl.BlockSpec((9 * mid2, Cout), lambda n: (0, 0)),          # w2
            pl.BlockSpec((1, Cout), lambda n: (0, 0)),                 # b2
        ],
        out_specs=pl.BlockSpec((1, H, W, Cout), lambda n: (n, 0, 0, 0)),
        scratch_shapes=[
            pltpu.VMEM((H + 2, W + 2, 2 * mid1), jnp.bfloat16),
            pltpu.VMEM((H + 2, W + 2, mid2), jnp.bfloat16),
        ],
        compiler_params=pltpu.CompilerParams(
            dimension_semantics=("parallel",),
            vmem_limit_bytes=_VMEM_LIMIT),
    )(up, conc_c, w1, b1, w2, b2)

    # NHWC -> NCHW
    return jnp.transpose(out_nhwc, (0, 3, 1, 2))


def init_decoder_params(key, in_channels, mid1, mid2, out_channels):
    ks = jax.random.split(key, 6)
    scale = 0.1
    return {
        # ConvTranspose2d weight layout: (Cin, Cout, kH, kW)
        "up_w": scale * jax.random.normal(ks[0], (in_channels, mid1, 2, 2), jnp.float32),
        "up_b": scale * jax.random.normal(ks[1], (mid1,), jnp.float32),
        # Conv2d weight layout: (Cout, Cin, kH, kW)
        "conv1_w": scale * jax.random.normal(ks[2], (mid2, mid1 * 2, 3, 3), jnp.float32),
        "conv1_b": scale * jax.random.normal(ks[3], (mid2,), jnp.float32),
        "conv2_w": scale * jax.random.normal(ks[4], (out_channels, mid2, 3, 3), jnp.float32),
        "conv2_b": scale * jax.random.normal(ks[5], (out_channels,), jnp.float32),
    }


if __name__ == "__main__":
    key = jax.random.PRNGKey(0)
    k_x, k_c, k_p = jax.random.split(key, 3)

    in_channels, mid1, mid2, out_channels = 8, 4, 8, 4
    N, H, W = 2, 8, 8                       # low-res feature map going into `up`

    x = jax.random.normal(k_x, (N, in_channels, H, W), jnp.float32)          # NCHW
    conc_layer = jax.random.normal(k_c, (N, mid1, 2 * H + 2, 2 * W + 2),
                                   jnp.float32)                              # NCHW

    params = init_decoder_params(k_p, in_channels, mid1, mid2, out_channels)

    fwd = jax.jit(decoder_forward)
    out = fwd(params, x, conc_layer)
    out = jax.block_until_ready(out)

    assert out.shape == (N, out_channels, 2 * H, 2 * W), out.shape
    assert bool(jnp.all(out >= 0.0))  # ReLU output
    print("KERNEL_OK")
</pallas_src>

<mosaic_0001>
module attributes {stable_mosaic.version = 11 : i64} {
  func.func @_upsample_kernel(%arg0: i32, %arg1: memref<1x8x8x8xbf16, #tpu.memory_space<vmem>>, %arg2: memref<8x16xbf16, #tpu.memory_space<vmem>>, %arg3: memref<1x16xf32, #tpu.memory_space<vmem>>, %arg4: memref<1x8x2x8x8xbf16, #tpu.memory_space<vmem>>) attributes {dimension_semantics = [#tpu.dimension_semantics<parallel>], iteration_bounds = array<i64: 2>, scalar_prefetch = 0 : i64, scratch_operands = 0 : i64, tpu.core_type = #tpu.core_type<tc>, window_params = [{transform_indices = @transform_0, window_bounds = array<i64: 1, 8, 8, 8>}, {pipeline_mode = #tpu.pipeline_mode<synchronous>, transform_indices = @transform_1, window_bounds = array<i64: 8, 16>}, {pipeline_mode = #tpu.pipeline_mode<synchronous>, transform_indices = @transform_2, window_bounds = array<i64: 1, 16>}, {transform_indices = @transform_3, window_bounds = array<i64: 1, 8, 2, 8, 8>}]} {
    %c0 = arith.constant 0 : index
    %c0_0 = arith.constant 0 : index
    %c0_1 = arith.constant 0 : index
    %c0_2 = arith.constant 0 : index
    %0 = vector.load %arg1[%c0, %c0_0, %c0_1, %c0_2] : memref<1x8x8x8xbf16, #tpu.memory_space<vmem>>, vector<1x8x8x8xbf16>
    %1 = vector.shape_cast %0 : vector<1x8x8x8xbf16> to vector<8x8x8xbf16>
    %2 = vector.shape_cast %1 : vector<8x8x8xbf16> to vector<64x8xbf16>
    %c0_3 = arith.constant 0 : index
    %c0_4 = arith.constant 0 : index
    %3 = vector.load %arg2[%c0_3, %c0_4] : memref<8x16xbf16, #tpu.memory_space<vmem>>, vector<8x16xbf16>
    %cst = arith.constant dense<0.000000e+00> : vector<64x16xf32>
    %4 = tpu.matmul %2, %3, %cst {dimension_numbers = #tpu.dot_dimension_numbers<[1], [0], [0], [1], [0, 0, 1, 1], [], []>} : vector<64x8xbf16>, vector<8x16xbf16>, vector<64x16xf32> -> vector<64x16xf32>
    %c0_5 = arith.constant 0 : index
    %c0_6 = arith.constant 0 : index
    %5 = vector.load %arg3[%c0_5, %c0_6] : memref<1x16xf32, #tpu.memory_space<vmem>>, vector<1x16xf32>
    %6 = vector.broadcast %5 : vector<1x16xf32> to vector<64x16xf32>
    %7 = arith.addf %4, %6 : vector<64x16xf32>
    %8 = arith.truncf %7 : vector<64x16xf32> to vector<64x16xbf16>
    %9 = vector.extract_strided_slice %8 {offsets = [0, 0], sizes = [64, 8], strides = [1, 1]} : vector<64x16xbf16> to vector<64x8xbf16>
    %10 = vector.shape_cast %9 : vector<64x8xbf16> to vector<1x8x1x8x8xbf16>
    %c0_7 = arith.constant 0 : index
    %c0_8 = arith.constant 0 : index
    %c0_9 = arith.constant 0 : index
    %c0_10 = arith.constant 0 : index
    %c0_11 = arith.constant 0 : index
    %11 = vector.load %arg4[%c0_7, %c0_8, %c0_9, %c0_10, %c0_11] : memref<1x8x2x8x8xbf16, #tpu.memory_space<vmem>>, vector<1x8x1x8x8xbf16>
    tpu.vector_store %arg4[%c0_7, %c0_8, %c0_9, %c0_10, %c0_11], %10 {strides = array<i32>} : memref<1x8x2x8x8xbf16, #tpu.memory_space<vmem>>, vector<1x8x1x8x8xbf16>,
    %12 = vector.extract_strided_slice %8 {offsets = [0, 8], sizes = [64, 8], strides = [1, 1]} : vector<64x16xbf16> to vector<64x8xbf16>
    %13 = vector.shape_cast %12 : vector<64x8xbf16> to vector<1x8x1x8x8xbf16>
    %c0_12 = arith.constant 0 : index
    %c0_13 = arith.constant 0 : index
    %c1 = arith.constant 1 : index
    %c0_14 = arith.constant 0 : index
    %c0_15 = arith.constant 0 : index
    %14 = vector.load %arg4[%c0_12, %c0_13, %c1, %c0_14, %c0_15] : memref<1x8x2x8x8xbf16, #tpu.memory_space<vmem>>, vector<1x8x1x8x8xbf16>
    tpu.vector_store %arg4[%c0_12, %c0_13, %c1, %c0_14, %c0_15], %13 {strides = array<i32>} : memref<1x8x2x8x8xbf16, #tpu.memory_space<vmem>>, vector<1x8x1x8x8xbf16>,
    return
  }
  func.func @transform_0(%arg0: i32) -> (i32, i32, i32, i32) {
    %c0_i32 = arith.constant 0 : i32
    %c0_i32_0 = arith.constant 0 : i32
    %c0_i32_1 = arith.constant 0 : i32
    %c0_i32_2 = arith.constant 0 : i32
    return %arg0, %c0_i32, %c0_i32_0, %c0_i32_1 : i32, i32, i32, i32
  }
  func.func @transform_1(%arg0: i32) -> (i32, i32) {
    %c0_i32 = arith.constant 0 : i32
    %c0_i32_0 = arith.constant 0 : i32
    %c0_i32_1 = arith.constant 0 : i32
    return %c0_i32, %c0_i32_0 : i32, i32
  }
  func.func @transform_2(%arg0: i32) -> (i32, i32) {
    %c0_i32 = arith.constant 0 : i32
    %c0_i32_0 = arith.constant 0 : i32
    %c0_i32_1 = arith.constant 0 : i32
    return %c0_i32, %c0_i32_0 : i32, i32
  }
  func.func @transform_3(%arg0: i32) -> (i32, i32, i32, i32, i32) {
    %c0_i32 = arith.constant 0 : i32
    %c0_i32_0 = arith.constant 0 : i32
    %c0_i32_1 = arith.constant 0 : i32
    %c0_i32_2 = arith.constant 0 : i32
    %c0_i32_3 = arith.constant 0 : i32
    return %arg0, %c0_i32, %c0_i32_0, %c0_i32_1, %c0_i32_2 : i32, i32, i32, i32, i32
  }
}

module attributes {stable_mosaic.version = 11 : i64} {
  func.func @_doble_conv_kernel(%arg0: i32, %arg1: memref<1x16x16x4xbf16, #tpu.memory_space<vmem>>, %arg2: memref<1x16x16x4xbf16, #tpu.memory_space<vmem>>, %arg3: memref<72x8xbf16, #tpu.memory_space<vmem>>, %arg4: memref<1x8xf32, #tpu.memory_space<vmem>>, %arg5: memref<72x4xbf16, #tpu.memory_space<vmem>>, %arg6: memref<1x4xf32, #tpu.memory_space<vmem>>, %arg7: memref<1x16x16x4xf32, #tpu.memory_space<vmem>>, %arg8: memref<18x18x8xbf16, #tpu.memory_space<vmem>>, %arg9: memref<18x18x8xbf16, #tpu.memory_space<vmem>>) attributes {dimension_semantics = [#tpu.dimension_semantics<parallel>], iteration_bounds = array<i64: 2>, scalar_prefetch = 0 : i64, scratch_operands = 2 : i64, tpu.core_type = #tpu.core_type<tc>, window_params = [{transform_indices = @transform_0, window_bounds = array<i64: 1, 16, 16, 4>}, {transform_indices = @transform_1, window_bounds = array<i64: 1, 16, 16, 4>}, {pipeline_mode = #tpu.pipeline_mode<synchronous>, transform_indices = @transform_2, window_bounds = array<i64: 72, 8>}, {pipeline_mode = #tpu.pipeline_mode<synchronous>, transform_indices = @transform_3, window_bounds = array<i64: 1, 8>}, {pipeline_mode = #tpu.pipeline_mode<synchronous>, transform_indices = @transform_4, window_bounds = array<i64: 72, 4>}, {pipeline_mode = #tpu.pipeline_mode<synchronous>, transform_indices = @transform_5, window_bounds = array<i64: 1, 4>}, {transform_indices = @transform_6, window_bounds = array<i64: 1, 16, 16, 4>}]} {
    %cst = arith.constant 0.000000e+00 : bf16
    %0 = vector.broadcast %cst : bf16 to vector<1x18x8xbf16>
    %c0 = arith.constant 0 : index
    %c0_0 = arith.constant 0 : index
    %c0_1 = arith.constant 0 : index
    %1 = vector.load %arg8[%c0, %c0_0, %c0_1] : memref<18x18x8xbf16, #tpu.memory_space<vmem>>, vector<1x18x8xbf16>
    tpu.vector_store %arg8[%c0, %c0_0, %c0_1], %0 {strides = array<i32>} : memref<18x18x8xbf16, #tpu.memory_space<vmem>>, vector<1x18x8xbf16>,
    %cst_2 = arith.constant 0.000000e+00 : bf16
    %2 = vector.broadcast %cst_2 : bf16 to vector<1x18x8xbf16>
    %c17 = arith.constant 17 : index
    %c0_3 = arith.constant 0 : index
    %c0_4 = arith.constant 0 : index
    %3 = vector.load %arg8[%c17, %c0_3, %c0_4] : memref<18x18x8xbf16, #tpu.memory_space<vmem>>, vector<1x18x8xbf16>
    tpu.vector_store %arg8[%c17, %c0_3, %c0_4], %2 {strides = array<i32>} : memref<18x18x8xbf16, #tpu.memory_space<vmem>>, vector<1x18x8xbf16>,
    %cst_5 = arith.constant 0.000000e+00 : bf16
    %4 = vector.broadcast %cst_5 : bf16 to vector<18x1x8xbf16>
    %c0_6 = arith.constant 0 : index
    %c0_7 = arith.constant 0 : index
    %c0_8 = arith.constant 0 : index
    %5 = vector.load %arg8[%c0_6, %c0_7, %c0_8] : memref<18x18x8xbf16, #tpu.memory_space<vmem>>, vector<18x1x8xbf16>
    tpu.vector_store %arg8[%c0_6, %c0_7, %c0_8], %4 {strides = array<i32>} : memref<18x18x8xbf16, #tpu.memory_space<vmem>>, vector<18x1x8xbf16>,
    %cst_9 = arith.constant 0.000000e+00 : bf16
    %6 = vector.broadcast %cst_9 : bf16 to vector<18x1x8xbf16>
    %c0_10 = arith.constant 0 : index
    %c17_11 = arith.constant 17 : index
    %c0_12 = arith.constant 0 : index
    %7 = vector.load %arg8[%c0_10, %c17_11, %c0_12] : memref<18x18x8xbf16, #tpu.memory_space<vmem>>, vector<18x1x8xbf16>
    tpu.vector_store %arg8[%c0_10, %c17_11, %c0_12], %6 {strides = array<i32>} : memref<18x18x8xbf16, #tpu.memory_space<vmem>>, vector<18x1x8xbf16>,
    %cst_13 = arith.constant 0.000000e+00 : bf16
    %8 = vector.broadcast %cst_13 : bf16 to vector<1x18x8xbf16>
    %c0_14 = arith.constant 0 : index
    %c0_15 = arith.constant 0 : index
    %c0_16 = arith.constant 0 : index
    %9 = vector.load %arg9[%c0_14, %c0_15, %c0_16] : memref<18x18x8xbf16, #tpu.memory_space<vmem>>, vector<1x18x8xbf16>
    tpu.vector_store %arg9[%c0_14, %c0_15, %c0_16], %8 {strides = array<i32>} : memref<18x18x8xbf16, #tpu.memory_space<vmem>>, vector<1x18x8xbf16>,
    %cst_17 = arith.constant 0.000000e+00 : bf16
    %10 = vector.broadcast %cst_17 : bf16 to vector<1x18x8xbf16>
    %c17_18 = arith.constant 17 : index
    %c0_19 = arith.constant 0 : index
    %c0_20 = arith.constant 0 : index
    %11 = vector.load %arg9[%c17_18, %c0_19, %c0_20] : memref<18x18x8xbf16, #tpu.memory_space<vmem>>, vector<1x18x8xbf16>
    tpu.vector_store %arg9[%c17_18, %c0_19, %c0_20], %10 {strides = array<i32>} : memref<18x18x8xbf16, #tpu.memory_space<vmem>>, vector<1x18x8xbf16>,
    %cst_21 = arith.constant 0.000000e+00 : bf16
    %12 = vector.broadcast %cst_21 : bf16 to vector<18x1x8xbf16>
    %c0_22 = arith.constant 0 : index
    %c0_23 = arith.constant 0 : index
    %c0_24 = arith.constant 0 : index
    %13 = vector.load %arg9[%c0_22, %c0_23, %c0_24] : memref<18x18x8xbf16, #tpu.memory_space<vmem>>, vector<18x1x8xbf16>
    tpu.vector_store %arg9[%c0_22, %c0_23, %c0_24], %12 {strides = array<i32>} : memref<18x18x8xbf16, #tpu.memory_space<vmem>>, vector<18x1x8xbf16>,
    %cst_25 = arith.constant 0.000000e+00 : bf16
    %14 = vector.broadcast %cst_25 : bf16 to vector<18x1x8xbf16>
    %c0_26 = arith.constant 0 : index
    %c17_27 = arith.constant 17 : index
    %c0_28 = arith.constant 0 : index
    %15 = vector.load %arg9[%c0_26, %c17_27, %c0_28] : memref<18x18x8xbf16, #tpu.memory_space<vmem>>, vector<18x1x8xbf16>
    tpu.vector_store %arg9[%c0_26, %c17_27, %c0_28], %14 {strides = array<i32>} : memref<18x18x8xbf16, #tpu.memory_space<vmem>>, vector<18x1x8xbf16>,
    %c0_29 = arith.constant 0 : index
    %c0_30 = arith.constant 0 : index
    %c0_31 = arith.constant 0 : index
    %c0_32 = arith.constant 0 : index
    %16 = vector.load %arg1[%c0_29, %c0_30, %c0_31, %c0_32] : memref<1x16x16x4xbf16, #tpu.memory_space<vmem>>, vector<1x16x16x4xbf16>
    %17 = vector.shape_cast %16 : vector<1x16x16x4xbf16> to vector<16x16x4xbf16>
    %c1 = arith.constant 1 : index
    %c1_33 = arith.constant 1 : index
    %c0_34 = arith.constant 0 : index
    %18 = vector.load %arg8[%c1, %c1_33, %c0_34] : memref<18x18x8xbf16, #tpu.memory_space<vmem>>, vector<16x16x4xbf16>
    tpu.vector_store %arg8[%c1, %c1_33, %c0_34], %17 {strides = array<i32>} : memref<18x18x8xbf16, #tpu.memory_space<vmem>>, vector<16x16x4xbf16>,
    %c0_35 = arith.constant 0 : index
    %c0_36 = arith.constant 0 : index
    %c0_37 = arith.constant 0 : index
    %c0_38 = arith.constant 0 : index
    %19 = vector.load %arg2[%c0_35, %c0_36, %c0_37, %c0_38] : memref<1x16x16x4xbf16, #tpu.memory_space<vmem>>, vector<1x16x16x4xbf16>
    %20 = vector.shape_cast %19 : vector<1x16x16x4xbf16> to vector<16x16x4xbf16>
    %c1_39 = arith.constant 1 : index
    %c1_40 = arith.constant 1 : index
    %c4 = arith.constant 4 : index
    %21 = vector.load %arg8[%c1_39, %c1_40, %c4] : memref<18x18x8xbf16, #tpu.memory_space<vmem>>, vector<16x16x4xbf16>
    tpu.vector_store %arg8[%c1_39, %c1_40, %c4], %20 {strides = array<i32>} : memref<18x18x8xbf16, #tpu.memory_space<vmem>>, vector<16x16x4xbf16>,
    %c0_41 = arith.constant 0 : index
    %c0_42 = arith.constant 0 : index
    %c0_43 = arith.constant 0 : index
    %22 = vector.load %arg8[%c0_41, %c0_42, %c0_43] : memref<18x18x8xbf16, #tpu.memory_space<vmem>>, vector<16x16x8xbf16>
    %23 = vector.shape_cast %22 : vector<16x16x8xbf16> to vector<256x8xbf16>
    %c0_44 = arith.constant 0 : index
    %c1_45 = arith.constant 1 : index
    %c0_46 = arith.constant 0 : index
    %24 = vector.load %arg8[%c0_44, %c1_45, %c0_46] : memref<18x18x8xbf16, #tpu.memory_space<vmem>>, vector<16x16x8xbf16>
    %25 = vector.shape_cast %24 : vector<16x16x8xbf16> to vector<256x8xbf16>
    %c0_47 = arith.constant 0 : index
    %c2 = arith.constant 2 : index
    %c0_48 = arith.constant 0 : index
    %26 = vector.load %arg8[%c0_47, %c2, %c0_48] : memref<18x18x8xbf16, #tpu.memory_space<vmem>>, vector<16x16x8xbf16>
    %27 = vector.shape_cast %26 : vector<16x16x8xbf16> to vector<256x8xbf16>
    %c1_49 = arith.constant 1 : index
    %c0_50 = arith.constant 0 : index
    %c0_51 = arith.constant 0 : index
    %28 = vector.load %arg8[%c1_49, %c0_50, %c0_51] : memref<18x18x8xbf16, #tpu.memory_space<vmem>>, vector<16x16x8xbf16>
    %29 = vector.shape_cast %28 : vector<16x16x8xbf16> to vector<256x8xbf16>
    %c1_52 = arith.constant 1 : index
    %c1_53 = arith.constant 1 : index
    %c0_54 = arith.constant 0 : index
    %30 = vector.load %arg8[%c1_52, %c1_53, %c0_54] : memref<18x18x8xbf16, #tpu.memory_space<vmem>>, vector<16x16x8xbf16>
    %31 = vector.shape_cast %30 : vector<16x16x8xbf16> to vector<256x8xbf16>
    %c1_55 = arith.constant 1 : index
    %c2_56 = arith.constant 2 : index
    %c0_57 = arith.constant 0 : index
    %32 = vector.load %arg8[%c1_55, %c2_56, %c0_57] : memref<18x18x8xbf16, #tpu.memory_space<vmem>>, vector<16x16x8xbf16>
    %33 = vector.shape_cast %32 : vector<16x16x8xbf16> to vector<256x8xbf16>
    %c2_58 = arith.constant 2 : index
    %c0_59 = arith.constant 0 : index
    %c0_60 = arith.constant 0 : index
    %34 = vector.load %arg8[%c2_58, %c0_59, %c0_60] : memref<18x18x8xbf16, #tpu.memory_space<vmem>>, vector<16x16x8xbf16>
    %35 = vector.shape_cast %34 : vector<16x16x8xbf16> to vector<256x8xbf16>
    %c2_61 = arith.constant 2 : index
    %c1_62 = arith.constant 1 : index
    %c0_63 = arith.constant 0 : index
    %36 = vector.load %arg8[%c2_61, %c1_62, %c0_63] : memref<18x18x8xbf16, #tpu.memory_space<vmem>>, vector<16x16x8xbf16>
    %37 = vector.shape_cast %36 : vector<16x16x8xbf16> to vector<256x8xbf16>
    %c2_64 = arith.constant 2 : index
    %c2_65 = arith.constant 2 : index
    %c0_66 = arith.constant 0 : index
    %38 = vector.load %arg8[%c2_64, %c2_65, %c0_66] : memref<18x18x8xbf16, #tpu.memory_space<vmem>>, vector<16x16x8xbf16>
    %39 = vector.shape_cast %38 : vector<16x16x8xbf16> to vector<256x8xbf16>
    %40 = tpu.concatenate %23, %25, %27, %29, %31, %33, %35, %37, %39 in 1 : vector<256x8xbf16>, vector<256x8xbf16>, vector<256x8xbf16>, vector<256x8xbf16>, vector<256x8xbf16>, vector<256x8xbf16>, vector<256x8xbf16>, vector<256x8xbf16>, vector<256x8xbf16> -> vector<256x72xbf16>
    %c0_67 = arith.constant 0 : index
    %c0_68 = arith.constant 0 : index
    %41 = vector.load %arg3[%c0_67, %c0_68] : memref<72x8xbf16, #tpu.memory_space<vmem>>, vector<72x8xbf16>
    %cst_69 = arith.constant dense<0.000000e+00> : vector<256x8xf32>
    %42 = tpu.matmul %40, %41, %cst_69 {dimension_numbers = #tpu.dot_dimension_numbers<[1], [0], [0], [1], [0, 0, 1, 1], [], []>} : vector<256x72xbf16>, vector<72x8xbf16>, vector<256x8xf32> -> vector<256x8xf32>
    %c0_70 = arith.constant 0 : index
    %c0_71 = arith.constant 0 : index
    %43 = vector.load %arg4[%c0_70, %c0_71] : memref<1x8xf32, #tpu.memory_space<vmem>>, vector<1x8xf32>
    %44 = vector.broadcast %43 : vector<1x8xf32> to vector<256x8xf32>
    %45 = arith.addf %42, %44 : vector<256x8xf32>
    %cst_72 = arith.constant 0.000000e+00 : f32
    %46 = vector.broadcast %cst_72 : f32 to vector<256x8xf32>
    %47 = arith.maximumf %45, %46 : vector<256x8xf32>
    %48 = arith.truncf %47 : vector<256x8xf32> to vector<256x8xbf16>
    %49 = vector.shape_cast %48 : vector<256x8xbf16> to vector<16x16x8xbf16>
    %c1_73 = arith.constant 1 : index
    %c1_74 = arith.constant 1 : index
    %c0_75 = arith.constant 0 : index
    %50 = vector.load %arg9[%c1_73, %c1_74, %c0_75] : memref<18x18x8xbf16, #tpu.memory_space<vmem>>, vector<16x16x8xbf16>
    tpu.vector_store %arg9[%c1_73, %c1_74, %c0_75], %49 {strides = array<i32>} : memref<18x18x8xbf16, #tpu.memory_space<vmem>>, vector<16x16x8xbf16>,
    %c0_76 = arith.constant 0 : index
    %c0_77 = arith.constant 0 : index
    %c0_78 = arith.constant 0 : index
    %51 = vector.load %arg9[%c0_76, %c0_77, %c0_78] : memref<18x18x8xbf16, #tpu.memory_space<vmem>>, vector<16x16x8xbf16>
    %52 = vector.shape_cast %51 : vector<16x16x8xbf16> to vector<256x8xbf16>
    %c0_79 = arith.constant 0 : index
    %c1_80 = arith.constant 1 : index
    %c0_81 = arith.constant 0 : index
    %53 = vector.load %arg9[%c0_79, %c1_80, %c0_81] : memref<18x18x8xbf16, #tpu.memory_space<vmem>>, vector<16x16x8xbf16>
    %54 = vector.shape_cast %53 : vector<16x16x8xbf16> to vector<256x8xbf16>
    %c0_82 = arith.constant 0 : index
    %c2_83 = arith.constant 2 : index
    %c0_84 = arith.constant 0 : index
    %55 = vector.load %arg9[%c0_82, %c2_83, %c0_84] : memref<18x18x8xbf16, #tpu.memory_space<vmem>>, vector<16x16x8xbf16>
    %56 = vector.shape_cast %55 : vector<16x16x8xbf16> to vector<256x8xbf16>
    %c1_85 = arith.constant 1 : index
    %c0_86 = arith.constant 0 : index
    %c0_87 = arith.constant 0 : index
    %57 = vector.load %arg9[%c1_85, %c0_86, %c0_87] : memref<18x18x8xbf16, #tpu.memory_space<vmem>>, vector<16x16x8xbf16>
    %58 = vector.shape_cast %57 : vector<16x16x8xbf16> to vector<256x8xbf16>
    %c1_88 = arith.constant 1 : index
    %c1_89 = arith.constant 1 : index
    %c0_90 = arith.constant 0 : index
    %59 = vector.load %arg9[%c1_88, %c1_89, %c0_90] : memref<18x18x8xbf16, #tpu.memory_space<vmem>>, vector<16x16x8xbf16>
    %60 = vector.shape_cast %59 : vector<16x16x8xbf16> to vector<256x8xbf16>
    %c1_91 = arith.constant 1 : index
    %c2_92 = arith.constant 2 : index
    %c0_93 = arith.constant 0 : index
    %61 = vector.load %arg9[%c1_91, %c2_92, %c0_93] : memref<18x18x8xbf16, #tpu.memory_space<vmem>>, vector<16x16x8xbf16>
    %62 = vector.shape_cast %61 : vector<16x16x8xbf16> to vector<256x8xbf16>
    %c2_94 = arith.constant 2 : index
    %c0_95 = arith.constant 0 : index
    %c0_96 = arith.constant 0 : index
    %63 = vector.load %arg9[%c2_94, %c0_95, %c0_96] : memref<18x18x8xbf16, #tpu.memory_space<vmem>>, vector<16x16x8xbf16>
    %64 = vector.shape_cast %63 : vector<16x16x8xbf16> to vector<256x8xbf16>
    %c2_97 = arith.constant 2 : index
    %c1_98 = arith.constant 1 : index
    %c0_99 = arith.constant 0 : index
    %65 = vector.load %arg9[%c2_97, %c1_98, %c0_99] : memref<18x18x8xbf16, #tpu.memory_space<vmem>>, vector<16x16x8xbf16>
    %66 = vector.shape_cast %65 : vector<16x16x8xbf16> to vector<256x8xbf16>
    %c2_100 = arith.constant 2 : index
    %c2_101 = arith.constant 2 : index
    %c0_102 = arith.constant 0 : index
    %67 = vector.load %arg9[%c2_100, %c2_101, %c0_102] : memref<18x18x8xbf16, #tpu.memory_space<vmem>>, vector<16x16x8xbf16>
    %68 = vector.shape_cast %67 : vector<16x16x8xbf16> to vector<256x8xbf16>
    %69 = tpu.concatenate %52, %54, %56, %58, %60, %62, %64, %66, %68 in 1 : vector<256x8xbf16>, vector<256x8xbf16>, vector<256x8xbf16>, vector<256x8xbf16>, vector<256x8xbf16>, vector<256x8xbf16>, vector<256x8xbf16>, vector<256x8xbf16>, vector<256x8xbf16> -> vector<256x72xbf16>
    %c0_103 = arith.constant 0 : index
    %c0_104 = arith.constant 0 : index
    %70 = vector.load %arg5[%c0_103, %c0_104] : memref<72x4xbf16, #tpu.memory_space<vmem>>, vector<72x4xbf16>
    %cst_105 = arith.constant dense<0.000000e+00> : vector<256x4xf32>
    %71 = tpu.matmul %69, %70, %cst_105 {dimension_numbers = #tpu.dot_dimension_numbers<[1], [0], [0], [1], [0, 0, 1, 1], [], []>} : vector<256x72xbf16>, vector<72x4xbf16>, vector<256x4xf32> -> vector<256x4xf32>
    %c0_106 = arith.constant 0 : index
    %c0_107 = arith.constant 0 : index
    %72 = vector.load %arg6[%c0_106, %c0_107] : memref<1x4xf32, #tpu.memory_space<vmem>>, vector<1x4xf32>
    %73 = vector.broadcast %72 : vector<1x4xf32> to vector<256x4xf32>
    %74 = arith.addf %71, %73 : vector<256x4xf32>
    %cst_108 = arith.constant 0.000000e+00 : f32
    %75 = vector.broadcast %cst_108 : f32 to vector<256x4xf32>
    %76 = arith.maximumf %74, %75 : vector<256x4xf32>
    %77 = vector.shape_cast %76 : vector<256x4xf32> to vector<1x16x16x4xf32>
    %c0_109 = arith.constant 0 : index
    %c0_110 = arith.constant 0 : index
    %c0_111 = arith.constant 0 : index
    %c0_112 = arith.constant 0 : index
    %78 = vector.load %arg7[%c0_109, %c0_110, %c0_111, %c0_112] : memref<1x16x16x4xf32, #tpu.memory_space<vmem>>, vector<1x16x16x4xf32>
    tpu.vector_store %arg7[%c0_109, %c0_110, %c0_111, %c0_112], %77 {strides = array<i32>} : memref<1x16x16x4xf32, #tpu.memory_space<vmem>>, vector<1x16x16x4xf32>,
    return
  }
  func.func @transform_0(%arg0: i32) -> (i32, i32, i32, i32) {
    %c0_i32 = arith.constant 0 : i32
    %c0_i32_0 = arith.constant 0 : i32
    %c0_i32_1 = arith.constant 0 : i32
    %c0_i32_2 = arith.constant 0 : i32
    return %arg0, %c0_i32, %c0_i32_0, %c0_i32_1 : i32, i32, i32, i32
  }
  func.func @transform_1(%arg0: i32) -> (i32, i32, i32, i32) {
    %c0_i32 = arith.constant 0 : i32
    %c0_i32_0 = arith.constant 0 : i32
    %c0_i32_1 = arith.constant 0 : i32
    %c0_i32_2 = arith.constant 0 : i32
    return %arg0, %c0_i32, %c0_i32_0, %c0_i32_1 : i32, i32, i32, i32
  }
  func.func @transform_2(%arg0: i32) -> (i32, i32) {
    %c0_i32 = arith.constant 0 : i32
    %c0_i32_0 = arith.constant 0 : i32
    %c0_i32_1 = arith.constant 0 : i32
    return %c0_i32, %c0_i32_0 : i32, i32
  }
  func.func @transform_3(%arg0: i32) -> (i32, i32) {
    %c0_i32 = arith.constant 0 : i32
    %c0_i32_0 = arith.constant 0 : i32
    %c0_i32_1 = arith.constant 0 : i32
    return %c0_i32, %c0_i32_0 : i32, i32
  }
  func.func @transform_4(%arg0: i32) -> (i32, i32) {
    %c0_i32 = arith.constant 0 : i32
    %c0_i32_0 = arith.constant 0 : i32
    %c0_i32_1 = arith.constant 0 : i32
    return %c0_i32, %c0_i32_0 : i32, i32
  }
  func.func @transform_5(%arg0: i32) -> (i32, i32) {
    %c0_i32 = arith.constant 0 : i32
    %c0_i32_0 = arith.constant 0 : i32
    %c0_i32_1 = arith.constant 0 : i32
    return %c0_i32, %c0_i32_0 : i32, i32
  }
  func.func @transform_6(%arg0: i32) -> (i32, i32, i32, i32) {
    %c0_i32 = arith.constant 0 : i32
    %c0_i32_0 = arith.constant 0 : i32
    %c0_i32_1 = arith.constant 0 : i32
    %c0_i32_2 = arith.constant 0 : i32
    return %arg0, %c0_i32, %c0_i32_0, %c0_i32_1 : i32, i32, i32, i32
  }
}

</mosaic_0001>

<llo_original>
// kernel: tile.8
$region0: #{tile.8}
  #allocation2 [shape = 's32[1]{0}', space=sflag, size = 0x4, scoped, tag = 'scoped memory for tile.8']
  %s0 = inlined_call_operand.hbm [shape: f32[4], index: 0, kind: input, shape index: {}]
  %s1 = inlined_call_operand.vmem [shape: f32[4,4], index: 1, kind: output, shape index: {}]
  $region1: #{tile.8} parent=0
    #allocation0 [shape = 'u8[512]{0}', space=vmem, size = 0x400, scoped, tag = 'operand span for operand 0']
    #allocation1 [shape = 's32[1]{0}', space=sflag, size = 0x4, scoped, tag = 'scoped memory for tile.8']
    %2 = vsyncpa [#allocation1], 0
    // Predicated region
    $region2: #{tile.8} parent=1 // pred_check
      _
    $region3: #{tile.8} parent=1 // pred_check_branch
      %4 = sbr.rel (0) target = $region5
    $region4: #{tile.8} parent=1 // pred_region
      %s6 = ssub.s32 16, 16
      %7 = vsyncadd [#allocation1], %s6
      %s9 = sshll.u32 [#allocation0], 4
      %s10 = int_to_ptr.vmem [resolvable:$true] %s9
      %12 = dma.hbm_to_vmem [thread:$0]  %s0, 16, %s10, [#allocation1]
    $region5: #{tile.8} parent=1 // pred_fallthru
      _
    // Predicated region
    $region6: #{tile.8} parent=1 // pred_check
      _
    $region7: #{tile.8} parent=1 // pred_check_branch
      %14 = sbr.rel (0) target = $region9
    $region8: #{tile.8} parent=1 // pred_region
      %15 = dma.done [#allocation1], 16
    $region9: #{tile.8} parent=1 // pred_fallthru
      _
    %v16 = vld [vmem:[#allocation0] ss:$0 sm:$0xff]
    %17 = vst [vmem:[%s1] sm:$0xf] %v16
    %18 = vsyncpa [#allocation1], 1

// kernel: tile.9
$region0: #{tile.9}
  %s0 = inlined_call_operand.vmem [shape: f32[4,4], index: 0, kind: input, shape index: {}]
  %s1 = inlined_call_operand.vmem [shape: f32[1,16], index: 1, kind: output, shape index: {}]
  $region1: #{tile.9} parent=0
    #allocation0 [shape = 'u8[4096]{0}', space=vmem, size = 0x1000, scoped, tag = 'scoped mem for output reshape']
    #allocation1 [shape = 'u8[4096]{0}', space=vmem, size = 0x1000, scoped, tag = 'scoped mem for input reshape']
    %s3 = sshll.u32 1, 4
    %s4 = ssub.s32 %s3, 1
    %v5 = vld [vmem:[%s0] sm:%s4]
    %6 = vst [vmem:[#allocation1] sm:%s4] %v5
    %v7 = vld [vmem:[#allocation1] sm:$0x1]
    %vm8 = vcmask 31744
    %9 = vst.msk [vmem:[#allocation0] sm:$0x1] %vm8, %v7
    %s10 = scalar_lea.vmem [#allocation1], 3
    %v11 = vld [vmem:[%s10] sm:$0x1]
    %12 = vrot.lane.b32.xlu0 %v11, 12
    %v13 = vpop.permute.xlu0 %12
    %vm14 = vcmask 130144
    %15 = vst.msk [vmem:[#allocation0] sm:$0x1] %vm14, %v13
    %s16 = scalar_lea.vmem [#allocation1], 2
    %v17 = vld [vmem:[%s16] sm:$0x1]
    %18 = vrot.lane.b32.xlu0 %v17, 8
    %v19 = vpop.permute.xlu0 %18
    %vm20 = vcmask 97344
    %21 = vst.msk [vmem:[#allocation0] sm:$0x1] %vm20, %v19
    %s22 = scalar_lea.vmem [#allocation1], 1
    %v23 = vld [vmem:[%s22] sm:$0x1]
    %24 = vrot.lane.b32.xlu0 %v23, 4
    %v25 = vpop.permute.xlu0 %24
    %vm26 = vcmask 64544
    %27 = vst.msk [vmem:[#allocation0] sm:$0x1] %vm26, %v25
    %s29 = sshll.u32 1, 1
    %s30 = ssub.s32 %s29, 1
    %v32 = vld [vmem:[#allocation0] sm:%s30]
    %s33 = sshll.u32 1, 1
    %s34 = ssub.s32 %s33, 1
    %35 = vst [vmem:[%s1] sm:%s34] %v32

// kernel: decoder_forward.2
$region0: #{decoder_forward.2}
  #allocation0 [shape = 'u32[]', space=smem, size = 0x4, offset = 0x4, fixed_abs, tag = 'smem constant byte address 0x4 - core index']
  #allocation1 [shape = 'u32[144,128]{1,0:T(1,128)}', space=vmem, size = 0x12000, scoped, tag = 'internal scratch']
  %s0 = inlined_call_operand.vmem [shape: bf16[2,8,8,8], index: 0, kind: input, shape index: {}]
  %s1 = inlined_call_operand.vmem [shape: bf16[8,16], index: 1, kind: input, shape index: {}]
  %s2 = inlined_call_operand.vmem [shape: f32[1,16], index: 2, kind: input, shape index: {}]
  %s3 = inlined_call_operand.vmem [shape: bf16[2,8,2,8,8], index: 3, kind: output, shape index: {}]
  %s4 = sld [smem:[#allocation0]]
  $region45: #{decoder_forward.2} parent=0
    _
  %s6 = ssub.s32 1, %s4
  %s7 = scalar_select 0, %s6, %s4
  loop: start=0, step=1, limit=4
  $region2: #{decoder_forward.2} parent=0 // loop_pre_header
    _
  $region3: #{decoder_forward.2} parent=0 // loop_header
    %s9 = sphi 0, %s13
    %p10 = scmp.ge.s32.totalorder %s9, 4
    %s19 = sphi 0, %s21
    %s22 = sphi 0, %s19
    %s23 = sphi 0, %s22
    %s39 = sphi 0, %s23
    %s43 = sphi 0, %s43
    %s45 = sphi 0, %s43
    %s46 = sphi 0, %s45
    %s60 = sphi 0, %s46
    %s64 = sphi 0, %s64
    %s66 = sphi 0, %s64
    %s67 = sphi 0, %s66
    %s81 = sphi 0, %s67
    %s87 = sphi 0, %s89
    %s90 = sphi 0, %s87
    %s91 = sphi 0, %s90
    %s107 = sphi 0, %s91
  $region4: #{decoder_forward.2} parent=0 // loop_header_branch
    %12 = sbr.rel (%p10) target = $region8
  $region5: #{decoder_forward.2} parent=0 // loop_body
    %s14 = ssub.s32 %s9, 1
    %s15 = ssub.s32 %s9, 2
    %s16 = sadd.s32 %s9, 1
    %s17 = ssub.s32 %s9, %s16
    %p18 = scmp.eq.s32.totalorder %s17, 0
    %s20 = sadd.s32 %s19, 1
    %s21 = scalar_select %p18, %s19, %s20
    %p24 = pneg %p18
    %p25 = scmp.eq.s32.totalorder %s9, 1
    %p26 = por %p24, %p25
    %p27 = scmp.ne.s32.totalorder %s19, %s22
    %p28 = scmp.eq.s32.totalorder %s9, 0
    %p29 = por %p27, %p28
    %p30 = scmp.ne.s32.totalorder %s19, %s22
    %p31 = scmp.eq.s32.totalorder %s14, 1
    %p32 = por %p30, %p31
    %p33 = scmp.ne.s32.totalorder %s22, %s23
    %p34 = scmp.eq.s32.totalorder %s14, 0
    %p35 = por %p33, %p34
    %p36 = scmp.ne.s32.totalorder %s22, %s23
    %p37 = scmp.eq.s32.totalorder %s15, 1
    %p38 = por %p36, %p37
    %p40 = scmp.ne.s32.totalorder %s23, %s39
    %p41 = scmp.eq.s32.totalorder %s15, 0
    %p42 = por %p40, %p41
    %s44 = sadd.s32 %s43, 1
    %p47 = scmp.eq.s32.totalorder %s9, 1
    %p48 = scmp.ne.s32.totalorder %s43, %s45
    %p49 = scmp.eq.s32.totalorder %s9, 0
    %p50 = por %p48, %p49
    %p51 = scmp.ne.s32.totalorder %s43, %s45
    %p52 = scmp.eq.s32.totalorder %s14, 1
    %p53 = por %p51, %p52
    %p54 = scmp.ne.s32.totalorder %s45, %s46
    %p55 = scmp.eq.s32.totalorder %s14, 0
    %p56 = por %p54, %p55
    %p57 = scmp.ne.s32.totalorder %s45, %s46
    %p58 = scmp.eq.s32.totalorder %s15, 1
    %p59 = por %p57, %p58
    %p61 = scmp.ne.s32.totalorder %s46, %s60
    %p62 = scmp.eq.s32.totalorder %s15, 0
    %p63 = por %p61, %p62
    %s65 = sadd.s32 %s64, 1
    %p68 = scmp.eq.s32.totalorder %s9, 1
    %p69 = scmp.ne.s32.totalorder %s64, %s66
    %p70 = scmp.eq.s32.totalorder %s9, 0
    %p71 = por %p69, %p70
    %p72 = scmp.ne.s32.totalorder %s64, %s66
    %p73 = scmp.eq.s32.totalorder %s14, 1
    %p74 = por %p72, %p73
    %p75 = scmp.ne.s32.totalorder %s66, %s67
    %p76 = scmp.eq.s32.totalorder %s14, 0
    %p77 = por %p75, %p76
    %p78 = scmp.ne.s32.totalorder %s66, %s67
    %p79 = scmp.eq.s32.totalorder %s15, 1
    %p80 = por %p78, %p79
    %p82 = scmp.ne.s32.totalorder %s67, %s81
    %p83 = scmp.eq.s32.totalorder %s15, 0
    %p84 = por %p82, %p83
    %s85 = ssub.s32 %s9, %s16
    %p86 = scmp.eq.s32.totalorder %s85, 0
    %s88 = sadd.s32 %s87, 1
    %s89 = scalar_select %p86, %s87, %s88
    %p92 = pneg %p86
    %p93 = scmp.eq.s32.totalorder %s9, 1
    %p94 = por %p92, %p93
    %p95 = scmp.ne.s32.totalorder %s87, %s90
    %p96 = scmp.eq.s32.totalorder %s9, 0
    %p97 = por %p95, %p96
    %p98 = scmp.ne.s32.totalorder %s87, %s90
    %p99 = scmp.eq.s32.totalorder %s14, 1
    %p100 = por %p98, %p99
    %p101 = scmp.ne.s32.totalorder %s90, %s91
    %p102 = scmp.eq.s32.totalorder %s14, 0
    %p103 = por %p101, %p102
    %p104 = scmp.ne.s32.totalorder %s90, %s91
    %p105 = scmp.eq.s32.totalorder %s15, 1
    %p106 = por %p104, %p105
    %p108 = scmp.ne.s32.totalorder %s91, %s107
    %p109 = scmp.eq.s32.totalorder %s15, 0
    %p110 = por %p108, %p109
    %p111 = scmp.le.s32.totalorder 1, %s9
    %p112 = scmp.lt.s32.totalorder %s9, 3
    %p113 = pnand %p111, %p112
    %p114 = pneg %p113
    // Predicated region
    $region9: #{decoder_forward.2} parent=5 // pred_check
      _
    $region10: #{decoder_forward.2} parent=5 // pred_check_branch
      %116 = sbr.rel (%p113) target = $region12
    $region11: #{decoder_forward.2} parent=5 // pred_region
      %s117 = ssub.s32 %s9, 1
      // Predicated region
      $region13: #{decoder_forward.2} parent=11 // pred_check
        %p118 = pneg %p56
      $region14: #{decoder_forward.2} parent=11 // pred_check_branch
        %120 = sbr.rel (%p118) target = $region16
      $region15: #{decoder_forward.2} parent=11 // pred_region
        _
      $region16: #{decoder_forward.2} parent=11 // pred_fallthru
        _
      // Predicated region
      $region17: #{decoder_forward.2} parent=11 // pred_check
        %p121 = pneg %p77
      $region18: #{decoder_forward.2} parent=11 // pred_check_branch
        %123 = sbr.rel (%p121) target = $region20
      $region19: #{decoder_forward.2} parent=11 // pred_region
        _
      $region20: #{decoder_forward.2} parent=11 // pred_fallthru
        _
    $region12: #{decoder_forward.2} parent=5 // pred_fallthru
      _
    %p124 = scmp.lt.s32.totalorder %s9, 2
    // Predicated region
    $region21: #{decoder_forward.2} parent=5 // pred_check
      %p125 = pneg %p124
    $region22: #{decoder_forward.2} parent=5 // pred_check_branch
      %127 = sbr.rel (%p125) target = $region24
    $region23: #{decoder_forward.2} parent=5 // pred_region
      // Predicated region
      $region25: #{decoder_forward.2} parent=23 // pred_check
        %p128 = pneg %p29
      $region26: #{decoder_forward.2} parent=23 // pred_check_branch
        %130 = sbr.rel (%p128) target = $region28
      $region27: #{decoder_forward.2} parent=23 // pred_region
        %p131 = scmp.lt.s32.totalorder %s9, 1
        %s132 = scalar_select %p131, %s9, 1
        %s133 = smul.addr %s132, 8
        %s134 = smul.addr %s133, 4
        %s135 = scalar_lea.vmem %s0, %s134
      $region28: #{decoder_forward.2} parent=23 // pred_fallthru
        _
    $region24: #{decoder_forward.2} parent=5 // pred_fallthru
      _
    %p136 = scmp.le.s32.totalorder 1, %s9
    %p137 = scmp.lt.s32.totalorder %s9, 3
    %p138 = pnand %p136, %p137
    %p139 = pneg %p138
    // Predicated region
    $region29: #{decoder_forward.2} parent=5 // pred_check
      _
    $region30: #{decoder_forward.2} parent=5 // pred_check_branch
      %141 = sbr.rel (%p138) target = $region32
    $region31: #{decoder_forward.2} parent=5 // pred_region
      %s142 = ssub.s32 %s9, 1
      %p143 = scmp.lt.s32.totalorder %s14, 1
      %s144 = scalar_select %p143, %s14, 1
      %s145 = smul.addr %s144, 8
      %s146 = smul.addr %s145, 4
      %s147 = scalar_lea.vmem %s0, %s146
      %p148 = pneg %p35
      %p149 = pneg %p32
      %p150 = pneg %p56
      %p151 = pneg %p53
      %p152 = pneg %p77
      %p153 = pneg %p74
      %p154 = pneg %p103
      %p155 = pneg %p100
      %p156 = scmp.lt.s32.totalorder %s14, 1
      %s157 = scalar_select %p156, %s14, 1
      %s158 = smul.addr %s157, 16
      %s159 = smul.addr %s158, 4
      %s160 = scalar_lea.vmem %s3, %s159
      %p161 = scmp.lt.s32.totalorder %s14, 1
      %s162 = scalar_select %p161, %s14, 1
      %s163 = smul.addr %s162, 8
      %s164 = smul.addr %s163, 4
      %s165 = scalar_lea.vmem %s0, %s164
      %p166 = scmp.lt.s32.totalorder %s14, 1
      %s167 = scalar_select %p166, %s14, 1
      %s168 = smul.addr %s167, 16
      %s169 = smul.addr %s168, 4
      %s170 = scalar_lea.vmem %s3, %s169
      %v172 = vld [vmem:[%s165] sm:$0xf]
      %v173 = vld [vmem:[%s165 + $0x4] sm:$0xf]
      %v174 = vld [vmem:[%s165 + $0x8] sm:$0xf]
      %v175 = vld [vmem:[%s165 + $0xc] sm:$0xf]
      %v176 = vld [vmem:[%s165 + $0x10] sm:$0xf]
      %v177 = vld [vmem:[%s165 + $0x14] sm:$0xf]
      %v178 = vld [vmem:[%s165 + $0x18] sm:$0xf]
      %v179 = vld [vmem:[%s165 + $0x1c] sm:$0xf]
      %v180 = vld [vmem:[%s1] sm:$0xf]
      %v181 = vld [vmem:[%s2] sm:$0x1]
      %v183 = vlaneseq
      %v184 = vshrl.u32 %v183, 7
      %v185 = vsub.s32 0, %v184
      %v186 = vrot.slane %v181, %v185
      %v196 = vunpack.c.l.b16 %v172
      %v197 = vunpack.c.l.b16 %v173
      %v198 = vunpack.c.l.b16 %v174
      %v199 = vunpack.c.l.b16 %v175
      %v200 = vunpack.c.l.b16 %v176
      %v201 = vunpack.c.l.b16 %v177
      %v202 = vunpack.c.l.b16 %v178
      %v203 = vunpack.c.l.b16 %v179
      %v204 = vpack.c.b16 %v197, %v196
      %v205 = vpack.c.b16 %v199, %v198
      %v206 = vpack.c.b16 %v201, %v200
      %v207 = vpack.c.b16 %v203, %v202
      %vm208 = vcmask 64512
      %v210 = vsel %vm208, %v204, 0
      %v213 = vsel %vm208, %v205, 0
      %v216 = vsel %vm208, %v206, 0
      %v219 = vsel %vm208, %v207, 0
      %vm221 = vcmask 1043456
      %v223 = vsel %vm221, %v180, 0
      %225 = vmatprep.subr.bf16.mxu0 0
      %226 = vmatpush1.bf16.msra.mxu0 0
      %227 = vmatprep.subr.bf16.mxu0 0
      %228 = vmatpush1.bf16.msra.mxu0 0
      %229 = vmatprep.subr.bf16.mxu0 0
      %230 = vmatpush1.bf16.msra.mxu0 0
      %231 = vmatprep.subr.bf16.mxu0 0
      %232 = vmatpush1.bf16.msra.mxu0 0
      %233 = vmatprep.subr.bf16.mxu0 0
      %234 = vmatpush1.bf16.msra.mxu0 0
      %235 = vmatprep.subr.bf16.mxu0 0
      %236 = vmatpush1.bf16.msra.mxu0 0
      %237 = vmatprep.subr.bf16.mxu0 0
      %238 = vmatpush1.bf16.msra.mxu0 0
      %239 = vmatprep.subr.bf16.mxu0 0
      %240 = vmatpush1.bf16.msra.mxu0 %v223
      %241 = vmatprep.subr.bf16.mxu0 0
      %242 = vmatpush2.bf16.msra.mxu0 0
      %243 = vmatprep.subr.bf16.mxu0 0
      %244 = vmatpush2.bf16.msra.mxu0 0
      %245 = vmatprep.subr.bf16.mxu0 0
      %246 = vmatpush2.bf16.msra.mxu0 0
      %247 = vmatprep.subr.bf16.mxu0 0
      %248 = vmatpush2.bf16.msra.mxu0 0
      %249 = vmatprep.subr.bf16.mxu0 0
      %250 = vmatpush2.bf16.msra.mxu0 0
      %251 = vmatprep.subr.bf16.mxu0 0
      %252 = vmatpush2.bf16.msra.mxu0 0
      %253 = vmatprep.subr.bf16.mxu0 0
      %254 = vmatpush2.bf16.msra.mxu0 0
      %255 = vmatprep.subr.bf16.mxu0 0
      %256 = vmatpush2.bf16.msra.mxu0 0
      %257 = vmatprep.mubr.bf16.mxu0 0
      %258 = vmatmul.mubr.bf16.gmra.mxu0 %v210
      %v259 = vpop.f32.mrf.mxu0
      %v260 = vadd.f32 %v186, %v259
      %v261 = vpop.f32.mrf.mxu0
      %v262 = vpop.f32.mrf.mxu0
      %v263 = vadd.f32 %v186, %v262
      %v264 = vpop.f32.mrf.mxu0
      %265 = vmatprep.mubr.bf16.mxu0 0
      %266 = vmatmul.mubr.bf16.gmra.mxu0 %v213
      %v267 = vpop.f32.mrf.mxu0
      %v268 = vadd.f32 %v186, %v267
      %v269 = vpop.f32.mrf.mxu0
      %v270 = vpop.f32.mrf.mxu0
      %v271 = vadd.f32 %v186, %v270
      %v272 = vpop.f32.mrf.mxu0
      %273 = vmatprep.mubr.bf16.mxu0 0
      %274 = vmatmul.mubr.bf16.gmra.mxu0 %v216
      %v275 = vpop.f32.mrf.mxu0
      %v276 = vadd.f32 %v186, %v275
      %v277 = vpop.f32.mrf.mxu0
      %v278 = vpop.f32.mrf.mxu0
      %v279 = vadd.f32 %v186, %v278
      %v280 = vpop.f32.mrf.mxu0
      %281 = vmatprep.mubr.bf16.mxu0 0
      %282 = vmatmul.mubr.bf16.gmra.mxu0 %v219
      %v283 = vpop.f32.mrf.mxu0
      %v284 = vadd.f32 %v186, %v283
      %v285 = vpop.f32.mrf.mxu0
      %v286 = vpop.f32.mrf.mxu0
      %v287 = vadd.f32 %v186, %v286
      %v288 = vpop.f32.mrf.mxu0
      %289 = vdwg.mxu0
      %v290 = vpack.c.bf16 %v263, %v260
      %v291 = vpack.c.bf16 %v271, %v268
      %v292 = vpack.c.bf16 %v279, %v276
      %v293 = vpack.c.bf16 %v287, %v284
      %v298 = vunpack.c.l.b16 %v290
      %v299 = vunpack.c.h.b16 %v290
      %v300 = vunpack.c.l.b16 %v291
      %v301 = vunpack.c.h.b16 %v291
      %v302 = vunpack.c.l.b16 %v292
      %v303 = vunpack.c.h.b16 %v292
      %v304 = vunpack.c.l.b16 %v293
      %v305 = vunpack.c.h.b16 %v293
      %v306 = vpack.c.b16 %v298, %v298
      %v307 = vpack.c.b16 %v299, %v299
      %v308 = vpack.c.b16 %v300, %v300
      %v309 = vpack.c.b16 %v301, %v301
      %v310 = vpack.c.b16 %v302, %v302
      %v311 = vpack.c.b16 %v303, %v303
      %v312 = vpack.c.b16 %v304, %v304
      %v313 = vpack.c.b16 %v305, %v305
      %vm322 = vcmask 60416
      %323 = vst.msk [vmem:[%s170] sm:$0xf] %vm322, %v306
      %324 = vst.msk [vmem:[%s170 + $0x8] sm:$0xf] %vm322, %v307
      %325 = vst.msk [vmem:[%s170 + $0x10] sm:$0xf] %vm322, %v308
      %326 = vst.msk [vmem:[%s170 + $0x18] sm:$0xf] %vm322, %v309
      %327 = vst.msk [vmem:[%s170 + $0x20] sm:$0xf] %vm322, %v310
      %328 = vst.msk [vmem:[%s170 + $0x28] sm:$0xf] %vm322, %v311
      %329 = vst.msk [vmem:[%s170 + $0x30] sm:$0xf] %vm322, %v312
      %330 = vst.msk [vmem:[%s170 + $0x38] sm:$0xf] %vm322, %v313
      %331 = vrot.lane.b32.xlu0 %v306, 120
      %v332 = vpop.permute.xlu0 %331
      %333 = vrot.lane.b32.xlu0 %v307, 120
      %v334 = vpop.permute.xlu0 %333
      %335 = vrot.lane.b32.xlu0 %v308, 120
      %v336 = vpop.permute.xlu0 %335
      %337 = vrot.lane.b32.xlu0 %v309, 120
      %v338 = vpop.permute.xlu0 %337
      %339 = vrot.lane.b32.xlu0 %v310, 120
      %v340 = vpop.permute.xlu0 %339
      %341 = vrot.lane.b32.xlu0 %v311, 120
      %v342 = vpop.permute.xlu0 %341
      %343 = vrot.lane.b32.xlu0 %v312, 120
      %v344 = vpop.permute.xlu0 %343
      %345 = vrot.lane.b32.xlu0 %v313, 120
      %v346 = vpop.permute.xlu0 %345
      %s355 = scalar_lea.vmem %s170, 4
      %356 = vst.msk [vmem:[%s355] sm:$0xf] %vm322, %v332
      %357 = vst.msk [vmem:[%s355 + $0x8] sm:$0xf] %vm322, %v334
      %358 = vst.msk [vmem:[%s355 + $0x10] sm:$0xf] %vm322, %v336
      %359 = vst.msk [vmem:[%s355 + $0x18] sm:$0xf] %vm322, %v338
      %360 = vst.msk [vmem:[%s355 + $0x20] sm:$0xf] %vm322, %v340
      %361 = vst.msk [vmem:[%s355 + $0x28] sm:$0xf] %vm322, %v342
      %362 = vst.msk [vmem:[%s355 + $0x30] sm:$0xf] %vm322, %v344
      %363 = vst.msk [vmem:[%s355 + $0x38] sm:$0xf] %vm322, %v346
      %p364 = scmp.lt.s32.totalorder %s14, 1
      %s365 = scalar_select %p364, %s14, 1
      %s366 = smul.addr %s365, 16
      %s367 = smul.addr %s366, 4
      %s368 = scalar_lea.vmem %s3, %s367
      // Predicated region
      $region33: #{decoder_forward.2} parent=31 // pred_check
        %p369 = pneg %p100
      $region34: #{decoder_forward.2} parent=31 // pred_check_branch
        %371 = sbr.rel (%p369) target = $region36
      $region35: #{decoder_forward.2} parent=31 // pred_region
        _
      $region36: #{decoder_forward.2} parent=31 // pred_fallthru
        _
    $region32: #{decoder_forward.2} parent=5 // pred_fallthru
      _
    %p372 = scmp.le.s32.totalorder 2, %s9
    // Predicated region
    $region37: #{decoder_forward.2} parent=5 // pred_check
      %p373 = pneg %p372
    $region38: #{decoder_forward.2} parent=5 // pred_check_branch
      %375 = sbr.rel (%p373) target = $region40
    $region39: #{decoder_forward.2} parent=5 // pred_region
      %s376 = ssub.s32 %s9, 2
      // Predicated region
      $region41: #{decoder_forward.2} parent=39 // pred_check
        %p377 = pneg %p106
      $region42: #{decoder_forward.2} parent=39 // pred_check_branch
        %379 = sbr.rel (%p377) target = $region44
      $region43: #{decoder_forward.2} parent=39 // pred_region
        %p380 = scmp.lt.s32.totalorder %s15, 1
        %s381 = scalar_select %p380, %s15, 1
        %s382 = smul.addr %s381, 16
        %s383 = smul.addr %s382, 4
        %s384 = scalar_lea.vmem %s3, %s383
      $region44: #{decoder_forward.2} parent=39 // pred_fallthru
        _
    $region40: #{decoder_forward.2} parent=5 // pred_fallthru
      _
  $region6: #{decoder_forward.2} parent=0 // loop_footer
    %s13 = sadd.s32 1, %s9
  $region7: #{decoder_forward.2} parent=0 // loop_footer_branch
    %8 = sbr.rel target = $region3
  $region8: #{decoder_forward.2} parent=0 // loop_exit
    _

// kernel: decoder_forward.3
$region0: #{decoder_forward.3}
  #allocation0 [shape = 'u32[]', space=smem, size = 0x4, offset = 0x4, fixed_abs, tag = 'smem constant byte address 0x4 - core index']
  #allocation1 [shape = 'u32[144,128]{1,0:T(1,128)}', space=vmem, size = 0x12000, scoped, tag = 'internal scratch']
  #allocation2 [shape = 'bf16[18,18,8]{2,1,0:T(8,128)(2,1)}', space=vmem, size = 0x1b000, scoped, tag = 'scratch operand']
  #allocation3 [shape = 'bf16[18,18,8]{2,1,0:T(8,128)(2,1)}', space=vmem, size = 0x1b000, scoped, tag = 'scratch operand']
  %s0 = inlined_call_operand.vmem [shape: bf16[2,16,16,4], index: 0, kind: input, shape index: {}]
  %s1 = inlined_call_operand.vmem [shape: bf16[2,16,16,4], index: 1, kind: input, shape index: {}]
  %s2 = inlined_call_operand.vmem [shape: bf16[72,8], index: 2, kind: input, shape index: {}]
  %s3 = inlined_call_operand.vmem [shape: f32[1,8], index: 3, kind: input, shape index: {}]
  %s4 = inlined_call_operand.vmem [shape: bf16[72,4], index: 4, kind: input, shape index: {}]
  %s5 = inlined_call_operand.vmem [shape: f32[1,4], index: 5, kind: input, shape index: {}]
  %s6 = inlined_call_operand.vmem [shape: f32[2,16,16,4], index: 6, kind: output, shape index: {}]
  %s7 = sld [smem:[#allocation0]]
  $region57: #{decoder_forward.3} parent=0
    _
  %s9 = ssub.s32 1, %s7
  %s10 = scalar_select 0, %s9, %s7
  loop: start=0, step=1, limit=4
  $region2: #{decoder_forward.3} parent=0 // loop_pre_header
    _
  $region3: #{decoder_forward.3} parent=0 // loop_header
    %s12 = sphi 0, %s16
    %p13 = scmp.ge.s32.totalorder %s12, 4
    %s22 = sphi 0, %s24
    %s25 = sphi 0, %s22
    %s26 = sphi 0, %s25
    %s42 = sphi 0, %s26
    %s48 = sphi 0, %s50
    %s51 = sphi 0, %s48
    %s52 = sphi 0, %s51
    %s68 = sphi 0, %s52
    %s72 = sphi 0, %s72
    %s74 = sphi 0, %s72
    %s75 = sphi 0, %s74
    %s89 = sphi 0, %s75
    %s93 = sphi 0, %s93
    %s95 = sphi 0, %s93
    %s96 = sphi 0, %s95
    %s110 = sphi 0, %s96
    %s114 = sphi 0, %s114
    %s116 = sphi 0, %s114
    %s117 = sphi 0, %s116
    %s131 = sphi 0, %s117
    %s135 = sphi 0, %s135
    %s137 = sphi 0, %s135
    %s138 = sphi 0, %s137
    %s152 = sphi 0, %s138
    %s158 = sphi 0, %s160
    %s161 = sphi 0, %s158
    %s162 = sphi 0, %s161
    %s178 = sphi 0, %s162
  $region4: #{decoder_forward.3} parent=0 // loop_header_branch
    %15 = sbr.rel (%p13) target = $region8
  $region5: #{decoder_forward.3} parent=0 // loop_body
    %s17 = ssub.s32 %s12, 1
    %s18 = ssub.s32 %s12, 2
    %s19 = sadd.s32 %s12, 1
    %s20 = ssub.s32 %s12, %s19
    %p21 = scmp.eq.s32.totalorder %s20, 0
    %s23 = sadd.s32 %s22, 1
    %s24 = scalar_select %p21, %s22, %s23
    %p27 = pneg %p21
    %p28 = scmp.eq.s32.totalorder %s12, 1
    %p29 = por %p27, %p28
    %p30 = scmp.ne.s32.totalorder %s22, %s25
    %p31 = scmp.eq.s32.totalorder %s12, 0
    %p32 = por %p30, %p31
    %p33 = scmp.ne.s32.totalorder %s22, %s25
    %p34 = scmp.eq.s32.totalorder %s17, 1
    %p35 = por %p33, %p34
    %p36 = scmp.ne.s32.totalorder %s25, %s26
    %p37 = scmp.eq.s32.totalorder %s17, 0
    %p38 = por %p36, %p37
    %p39 = scmp.ne.s32.totalorder %s25, %s26
    %p40 = scmp.eq.s32.totalorder %s18, 1
    %p41 = por %p39, %p40
    %p43 = scmp.ne.s32.totalorder %s26, %s42
    %p44 = scmp.eq.s32.totalorder %s18, 0
    %p45 = por %p43, %p44
    %s46 = ssub.s32 %s12, %s19
    %p47 = scmp.eq.s32.totalorder %s46, 0
    %s49 = sadd.s32 %s48, 1
    %s50 = scalar_select %p47, %s48, %s49
    %p53 = pneg %p47
    %p54 = scmp.eq.s32.totalorder %s12, 1
    %p55 = por %p53, %p54
    %p56 = scmp.ne.s32.totalorder %s48, %s51
    %p57 = scmp.eq.s32.totalorder %s12, 0
    %p58 = por %p56, %p57
    %p59 = scmp.ne.s32.totalorder %s48, %s51
    %p60 = scmp.eq.s32.totalorder %s17, 1
    %p61 = por %p59, %p60
    %p62 = scmp.ne.s32.totalorder %s51, %s52
    %p63 = scmp.eq.s32.totalorder %s17, 0
    %p64 = por %p62, %p63
    %p65 = scmp.ne.s32.totalorder %s51, %s52
    %p66 = scmp.eq.s32.totalorder %s18, 1
    %p67 = por %p65, %p66
    %p69 = scmp.ne.s32.totalorder %s52, %s68
    %p70 = scmp.eq.s32.totalorder %s18, 0
    %p71 = por %p69, %p70
    %s73 = sadd.s32 %s72, 1
    %p76 = scmp.eq.s32.totalorder %s12, 1
    %p77 = scmp.ne.s32.totalorder %s72, %s74
    %p78 = scmp.eq.s32.totalorder %s12, 0
    %p79 = por %p77, %p78
    %p80 = scmp.ne.s32.totalorder %s72, %s74
    %p81 = scmp.eq.s32.totalorder %s17, 1
    %p82 = por %p80, %p81
    %p83 = scmp.ne.s32.totalorder %s74, %s75
    %p84 = scmp.eq.s32.totalorder %s17, 0
    %p85 = por %p83, %p84
    %p86 = scmp.ne.s32.totalorder %s74, %s75
    %p87 = scmp.eq.s32.totalorder %s18, 1
    %p88 = por %p86, %p87
    %p90 = scmp.ne.s32.totalorder %s75, %s89
    %p91 = scmp.eq.s32.totalorder %s18, 0
    %p92 = por %p90, %p91
    %s94 = sadd.s32 %s93, 1
    %p97 = scmp.eq.s32.totalorder %s12, 1
    %p98 = scmp.ne.s32.totalorder %s93, %s95
    %p99 = scmp.eq.s32.totalorder %s12, 0
    %p100 = por %p98, %p99
    %p101 = scmp.ne.s32.totalorder %s93, %s95
    %p102 = scmp.eq.s32.totalorder %s17, 1
    %p103 = por %p101, %p102
    %p104 = scmp.ne.s32.totalorder %s95, %s96
    %p105 = scmp.eq.s32.totalorder %s17, 0
    %p106 = por %p104, %p105
    %p107 = scmp.ne.s32.totalorder %s95, %s96
    %p108 = scmp.eq.s32.totalorder %s18, 1
    %p109 = por %p107, %p108
    %p111 = scmp.ne.s32.totalorder %s96, %s110
    %p112 = scmp.eq.s32.totalorder %s18, 0
    %p113 = por %p111, %p112
    %s115 = sadd.s32 %s114, 1
    %p118 = scmp.eq.s32.totalorder %s12, 1
    %p119 = scmp.ne.s32.totalorder %s114, %s116
    %p120 = scmp.eq.s32.totalorder %s12, 0
    %p121 = por %p119, %p120
    %p122 = scmp.ne.s32.totalorder %s114, %s116
    %p123 = scmp.eq.s32.totalorder %s17, 1
    %p124 = por %p122, %p123
    %p125 = scmp.ne.s32.totalorder %s116, %s117
    %p126 = scmp.eq.s32.totalorder %s17, 0
    %p127 = por %p125, %p126
    %p128 = scmp.ne.s32.totalorder %s116, %s117
    %p129 = scmp.eq.s32.totalorder %s18, 1
    %p130 = por %p128, %p129
    %p132 = scmp.ne.s32.totalorder %s117, %s131
    %p133 = scmp.eq.s32.totalorder %s18, 0
    %p134 = por %p132, %p133
    %s136 = sadd.s32 %s135, 1
    %p139 = scmp.eq.s32.totalorder %s12, 1
    %p140 = scmp.ne.s32.totalorder %s135, %s137
    %p141 = scmp.eq.s32.totalorder %s12, 0
    %p142 = por %p140, %p141
    %p143 = scmp.ne.s32.totalorder %s135, %s137
    %p144 = scmp.eq.s32.totalorder %s17, 1
    %p145 = por %p143, %p144
    %p146 = scmp.ne.s32.totalorder %s137, %s138
    %p147 = scmp.eq.s32.totalorder %s17, 0
    %p148 = por %p146, %p147
    %p149 = scmp.ne.s32.totalorder %s137, %s138
    %p150 = scmp.eq.s32.totalorder %s18, 1
    %p151 = por %p149, %p150
    %p153 = scmp.ne.s32.totalorder %s138, %s152
    %p154 = scmp.eq.s32.totalorder %s18, 0
    %p155 = por %p153, %p154
    %s156 = ssub.s32 %s12, %s19
    %p157 = scmp.eq.s32.totalorder %s156, 0
    %s159 = sadd.s32 %s158, 1
    %s160 = scalar_select %p157, %s158, %s159
    %p163 = pneg %p157
    %p164 = scmp.eq.s32.totalorder %s12, 1
    %p165 = por %p163, %p164
    %p166 = scmp.ne.s32.totalorder %s158, %s161
    %p167 = scmp.eq.s32.totalorder %s12, 0
    %p168 = por %p166, %p167
    %p169 = scmp.ne.s32.totalorder %s158, %s161
    %p170 = scmp.eq.s32.totalorder %s17, 1
    %p171 = por %p169, %p170
    %p172 = scmp.ne.s32.totalorder %s161, %s162
    %p173 = scmp.eq.s32.totalorder %s17, 0
    %p174 = por %p172, %p173
    %p175 = scmp.ne.s32.totalorder %s161, %s162
    %p176 = scmp.eq.s32.totalorder %s18, 1
    %p177 = por %p175, %p176
    %p179 = scmp.ne.s32.totalorder %s162, %s178
    %p180 = scmp.eq.s32.totalorder %s18, 0
    %p181 = por %p179, %p180
    %p182 = scmp.le.s32.totalorder 1, %s12
    %p183 = scmp.lt.s32.totalorder %s12, 3
    %p184 = pnand %p182, %p183
    %p185 = pneg %p184
    // Predicated region
    $region9: #{decoder_forward.3} parent=5 // pred_check
      _
    $region10: #{decoder_forward.3} parent=5 // pred_check_branch
      %187 = sbr.rel (%p184) target = $region12
    $region11: #{decoder_forward.3} parent=5 // pred_region
      %s188 = ssub.s32 %s12, 1
      // Predicated region
      $region13: #{decoder_forward.3} parent=11 // pred_check
        %p189 = pneg %p85
      $region14: #{decoder_forward.3} parent=11 // pred_check_branch
        %191 = sbr.rel (%p189) target = $region16
      $region15: #{decoder_forward.3} parent=11 // pred_region
        _
      $region16: #{decoder_forward.3} parent=11 // pred_fallthru
        _
      // Predicated region
      $region17: #{decoder_forward.3} parent=11 // pred_check
        %p192 = pneg %p106
      $region18: #{decoder_forward.3} parent=11 // pred_check_branch
        %194 = sbr.rel (%p192) target = $region20
      $region19: #{decoder_forward.3} parent=11 // pred_region
        _
      $region20: #{decoder_forward.3} parent=11 // pred_fallthru
        _
      // Predicated region
      $region21: #{decoder_forward.3} parent=11 // pred_check
        %p195 = pneg %p127
      $region22: #{decoder_forward.3} parent=11 // pred_check_branch
        %197 = sbr.rel (%p195) target = $region24
      $region23: #{decoder_forward.3} parent=11 // pred_region
        _
      $region24: #{decoder_forward.3} parent=11 // pred_fallthru
        _
      // Predicated region
      $region25: #{decoder_forward.3} parent=11 // pred_check
        %p198 = pneg %p148
      $region26: #{decoder_forward.3} parent=11 // pred_check_branch
        %200 = sbr.rel (%p198) target = $region28
      $region27: #{decoder_forward.3} parent=11 // pred_region
        _
      $region28: #{decoder_forward.3} parent=11 // pred_fallthru
        _
    $region12: #{decoder_forward.3} parent=5 // pred_fallthru
      _
    %p201 = scmp.lt.s32.totalorder %s12, 2
    // Predicated region
    $region29: #{decoder_forward.3} parent=5 // pred_check
      %p202 = pneg %p201
    $region30: #{decoder_forward.3} parent=5 // pred_check_branch
      %204 = sbr.rel (%p202) target = $region32
    $region31: #{decoder_forward.3} parent=5 // pred_region
      // Predicated region
      $region33: #{decoder_forward.3} parent=31 // pred_check
        %p205 = pneg %p32
      $region34: #{decoder_forward.3} parent=31 // pred_check_branch
        %207 = sbr.rel (%p205) target = $region36
      $region35: #{decoder_forward.3} parent=31 // pred_region
        %p208 = scmp.lt.s32.totalorder %s12, 1
        %s209 = scalar_select %p208, %s12, 1
        %s210 = smul.addr %s209, 32
        %s211 = smul.addr %s210, 4
        %s212 = scalar_lea.vmem %s0, %s211
      $region36: #{decoder_forward.3} parent=31 // pred_fallthru
        _
      // Predicated region
      $region37: #{decoder_forward.3} parent=31 // pred_check
        %p213 = pneg %p58
      $region38: #{decoder_forward.3} parent=31 // pred_check_branch
        %215 = sbr.rel (%p213) target = $region40
      $region39: #{decoder_forward.3} parent=31 // pred_region
        %p216 = scmp.lt.s32.totalorder %s12, 1
        %s217 = scalar_select %p216, %s12, 1
        %s218 = smul.addr %s217, 32
        %s219 = smul.addr %s218, 4
        %s220 = scalar_lea.vmem %s1, %s219
      $region40: #{decoder_forward.3} parent=31 // pred_fallthru
        _
    $region32: #{decoder_forward.3} parent=5 // pred_fallthru
      _
    %p221 = scmp.le.s32.totalorder 1, %s12
    %p222 = scmp.lt.s32.totalorder %s12, 3
    %p223 = pnand %p221, %p222
    %p224 = pneg %p223
    // Predicated region
    $region41: #{decoder_forward.3} parent=5 // pred_check
      _
    $region42: #{decoder_forward.3} parent=5 // pred_check_branch
      %226 = sbr.rel (%p223) target = $region44
    $region43: #{decoder_forward.3} parent=5 // pred_region
      %s227 = ssub.s32 %s12, 1
      %p228 = scmp.lt.s32.totalorder %s17, 1
      %s229 = scalar_select %p228, %s17, 1
      %s230 = smul.addr %s229, 32
      %s231 = smul.addr %s230, 4
      %s232 = scalar_lea.vmem %s0, %s231
      %p233 = pneg %p38
      %p234 = pneg %p35
      %p235 = scmp.lt.s32.totalorder %s17, 1
      %s236 = scalar_select %p235, %s17, 1
      %s237 = smul.addr %s236, 32
      %s238 = smul.addr %s237, 4
      %s239 = scalar_lea.vmem %s1, %s238
      %p240 = pneg %p64
      %p241 = pneg %p61
      %p242 = pneg %p85
      %p243 = pneg %p82
      %p244 = pneg %p106
      %p245 = pneg %p103
      %p246 = pneg %p127
      %p247 = pneg %p124
      %p248 = pneg %p148
      %p249 = pneg %p145
      %p250 = pneg %p174
      %p251 = pneg %p171
      %p252 = scmp.lt.s32.totalorder %s17, 1
      %s253 = scalar_select %p252, %s17, 1
      %s254 = smul.addr %s253, 32
      %s255 = smul.addr %s254, 8
      %s256 = scalar_lea.vmem %s6, %s255
      %p257 = scmp.lt.s32.totalorder %s17, 1
      %s258 = scalar_select %p257, %s17, 1
      %s259 = smul.addr %s258, 32
      %s260 = smul.addr %s259, 4
      %s261 = scalar_lea.vmem %s0, %s260
      %p262 = scmp.lt.s32.totalorder %s17, 1
      %s263 = scalar_select %p262, %s17, 1
      %s264 = smul.addr %s263, 32
      %s265 = smul.addr %s264, 4
      %s266 = scalar_lea.vmem %s1, %s265
      %p267 = scmp.lt.s32.totalorder %s17, 1
      %s268 = scalar_select %p267, %s17, 1
      %s269 = smul.addr %s268, 32
      %s270 = smul.addr %s269, 8
      %s271 = scalar_lea.vmem %s6, %s270
      %vm273 = vcmask 60416
      %274 = vst.msk [vmem:[#allocation2] sm:$0xf] %vm273, 0
      %275 = vst.msk [vmem:[#allocation2 + $0x4] sm:$0xf] %vm273, 0
      %vm276 = vcmask 57344
      %277 = vst.msk [vmem:[#allocation2 + $0x8] sm:$0x1] %vm276, 0
      %s278 = scalar_lea.vmem [#allocation2], 204
      %279 = vst.msk [vmem:[%s278] sm:$0xf] %vm273, 0
      %280 = vst.msk [vmem:[%s278 + $0x4] sm:$0xf] %vm273, 0
      %281 = vst.msk [vmem:[%s278 + $0x8] sm:$0x1] %vm276, 0
      %vm282 = vcmask 57344
      %vm283 = vsmask.f32 256
      %vm284 = vmand %vm282, %vm283
      %v285 = vld [vmem:[#allocation2] sm:$0x1]
      %v286 = vsel %vm284, 0, %v285
      %287 = vst [vmem:[#allocation2] sm:$0x1] %v286
      %v288 = vld [vmem:[#allocation2 + $0xc] sm:$0x1]
      %v289 = vsel %vm284, 0, %v288
      %290 = vst [vmem:[#allocation2 + $0xc] sm:$0x1] %v289
      %v291 = vld [vmem:[#allocation2 + $0x18] sm:$0x1]
      %v292 = vsel %vm284, 0, %v291
      %293 = vst [vmem:[#allocation2 + $0x18] sm:$0x1] %v292
      %v294 = vld [vmem:[#allocation2 + $0x24] sm:$0x1]
      %v295 = vsel %vm284, 0, %v294
      %296 = vst [vmem:[#allocation2 + $0x24] sm:$0x1] %v295
      %v297 = vld [vmem:[#allocation2 + $0x30] sm:$0x1]
      %v298 = vsel %vm284, 0, %v297
      %299 = vst [vmem:[#allocation2 + $0x30] sm:$0x1] %v298
      %v300 = vld [vmem:[#allocation2 + $0x3c] sm:$0x1]
      %v301 = vsel %vm284, 0, %v300
      %302 = vst [vmem:[#allocation2 + $0x3c] sm:$0x1] %v301
      %v303 = vld [vmem:[#allocation2 + $0x48] sm:$0x1]
      %v304 = vsel %vm284, 0, %v303
      %305 = vst [vmem:[#allocation2 + $0x48] sm:$0x1] %v304
      %v306 = vld [vmem:[#allocation2 + $0x54] sm:$0x1]
      %v307 = vsel %vm284, 0, %v306
      %308 = vst [vmem:[#allocation2 + $0x54] sm:$0x1] %v307
      %v309 = vld [vmem:[#allocation2 + $0x60] sm:$0x1]
      %v310 = vsel %vm284, 0, %v309
      %311 = vst [vmem:[#allocation2 + $0x60] sm:$0x1] %v310
      %v312 = vld [vmem:[#allocation2 + $0x6c] sm:$0x1]
      %v313 = vsel %vm284, 0, %v312
      %314 = vst [vmem:[#allocation2 + $0x6c] sm:$0x1] %v313
      %v315 = vld [vmem:[#allocation2 + $0x78] sm:$0x1]
      %v316 = vsel %vm284, 0, %v315
      %317 = vst [vmem:[#allocation2 + $0x78] sm:$0x1] %v316
      %v318 = vld [vmem:[#allocation2 + $0x84] sm:$0x1]
      %v319 = vsel %vm284, 0, %v318
      %320 = vst [vmem:[#allocation2 + $0x84] sm:$0x1] %v319
      %v321 = vld [vmem:[#allocation2 + $0x90] sm:$0x1]
      %v322 = vsel %vm284, 0, %v321
      %323 = vst [vmem:[#allocation2 + $0x90] sm:$0x1] %v322
      %v324 = vld [vmem:[#allocation2 + $0x9c] sm:$0x1]
      %v325 = vsel %vm284, 0, %v324
      %326 = vst [vmem:[#allocation2 + $0x9c] sm:$0x1] %v325
      %v327 = vld [vmem:[#allocation2 + $0xa8] sm:$0x1]
      %v328 = vsel %vm284, 0, %v327
      %329 = vst [vmem:[#allocation2 + $0xa8] sm:$0x1] %v328
      %v330 = vld [vmem:[#allocation2 + $0xb4] sm:$0x1]
      %v331 = vsel %vm284, 0, %v330
      %332 = vst [vmem:[#allocation2 + $0xb4] sm:$0x1] %v331
      %v333 = vld [vmem:[#allocation2 + $0xc0] sm:$0x1]
      %v334 = vsel %vm284, 0, %v333
      %335 = vst [vmem:[#allocation2 + $0xc0] sm:$0x1] %v334
      %v336 = vld [vmem:[#allocation2 + $0xcc] sm:$0x1]
      %v337 = vsel %vm284, 0, %v336
      %338 = vst [vmem:[#allocation2 + $0xcc] sm:$0x1] %v337
      %vm339 = vsmask.f32 7938
      %vm340 = vmand %vm282, %vm339
      %v341 = vld [vmem:[#allocation2 + $0x8] sm:$0x1]
      %v342 = vsel %vm340, 0, %v341
      %343 = vst [vmem:[#allocation2 + $0x8] sm:$0x1] %v342
      %v344 = vld [vmem:[#allocation2 + $0x14] sm:$0x1]
      %v345 = vsel %vm340, 0, %v344
      %346 = vst [vmem:[#allocation2 + $0x14] sm:$0x1] %v345
      %v347 = vld [vmem:[#allocation2 + $0x20] sm:$0x1]
      %v348 = vsel %vm340, 0, %v347
      %349 = vst [vmem:[#allocation2 + $0x20] sm:$0x1] %v348
      %v350 = vld [vmem:[#allocation2 + $0x2c] sm:$0x1]
      %v351 = vsel %vm340, 0, %v350
      %352 = vst [vmem:[#allocation2 + $0x2c] sm:$0x1] %v351
      %v353 = vld [vmem:[#allocation2 + $0x38] sm:$0x1]
      %v354 = vsel %vm340, 0, %v353
      %355 = vst [vmem:[#allocation2 + $0x38] sm:$0x1] %v354
      %v356 = vld [vmem:[#allocation2 + $0x44] sm:$0x1]
      %v357 = vsel %vm340, 0, %v356
      %358 = vst [vmem:[#allocation2 + $0x44] sm:$0x1] %v357
      %v359 = vld [vmem:[#allocation2 + $0x50] sm:$0x1]
      %v360 = vsel %vm340, 0, %v359
      %361 = vst [vmem:[#allocation2 + $0x50] sm:$0x1] %v360
      %v362 = vld [vmem:[#allocation2 + $0x5c] sm:$0x1]
      %v363 = vsel %vm340, 0, %v362
      %364 = vst [vmem:[#allocation2 + $0x5c] sm:$0x1] %v363
      %v365 = vld [vmem:[#allocation2 + $0x68] sm:$0x1]
      %v366 = vsel %vm340, 0, %v365
      %367 = vst [vmem:[#allocation2 + $0x68] sm:$0x1] %v366
      %v368 = vld [vmem:[#allocation2 + $0x74] sm:$0x1]
      %v369 = vsel %vm340, 0, %v368
      %370 = vst [vmem:[#allocation2 + $0x74] sm:$0x1] %v369
      %v371 = vld [vmem:[#allocation2 + $0x80] sm:$0x1]
      %v372 = vsel %vm340, 0, %v371
      %373 = vst [vmem:[#allocation2 + $0x80] sm:$0x1] %v372
      %v374 = vld [vmem:[#allocation2 + $0x8c] sm:$0x1]
      %v375 = vsel %vm340, 0, %v374
      %376 = vst [vmem:[#allocation2 + $0x8c] sm:$0x1] %v375
      %v377 = vld [vmem:[#allocation2 + $0x98] sm:$0x1]
      %v378 = vsel %vm340, 0, %v377
      %379 = vst [vmem:[#allocation2 + $0x98] sm:$0x1] %v378
      %v380 = vld [vmem:[#allocation2 + $0xa4] sm:$0x1]
      %v381 = vsel %vm340, 0, %v380
      %382 = vst [vmem:[#allocation2 + $0xa4] sm:$0x1] %v381
      %v383 = vld [vmem:[#allocation2 + $0xb0] sm:$0x1]
      %v384 = vsel %vm340, 0, %v383
      %385 = vst [vmem:[#allocation2 + $0xb0] sm:$0x1] %v384
      %v386 = vld [vmem:[#allocation2 + $0xbc] sm:$0x1]
      %v387 = vsel %vm340, 0, %v386
      %388 = vst [vmem:[#allocation2 + $0xbc] sm:$0x1] %v387
      %v389 = vld [vmem:[#allocation2 + $0xc8] sm:$0x1]
      %v390 = vsel %vm340, 0, %v389
      %391 = vst [vmem:[#allocation2 + $0xc8] sm:$0x1] %v390
      %v392 = vld [vmem:[#allocation2 + $0xd4] sm:$0x1]
      %v393 = vsel %vm340, 0, %v392
      %394 = vst [vmem:[#allocation2 + $0xd4] sm:$0x1] %v393
      %395 = vst.msk [vmem:[#allocation3] sm:$0xf] %vm273, 0
      %396 = vst.msk [vmem:[#allocation3 + $0x4] sm:$0xf] %vm273, 0
      %397 = vst.msk [vmem:[#allocation3 + $0x8] sm:$0x1] %vm276, 0
      %s398 = scalar_lea.vmem [#allocation3], 204
      %399 = vst.msk [vmem:[%s398] sm:$0xf] %vm273, 0
      %400 = vst.msk [vmem:[%s398 + $0x4] sm:$0xf] %vm273, 0
      %401 = vst.msk [vmem:[%s398 + $0x8] sm:$0x1] %vm276, 0
      %v402 = vld [vmem:[#allocation3] sm:$0x1]
      %v403 = vsel %vm284, 0, %v402
      %404 = vst [vmem:[#allocation3] sm:$0x1] %v403
      %v405 = vld [vmem:[#allocation3 + $0xc] sm:$0x1]
      %v406 = vsel %vm284, 0, %v405
      %407 = vst [vmem:[#allocation3 + $0xc] sm:$0x1] %v406
      %v408 = vld [vmem:[#allocation3 + $0x18] sm:$0x1]
      %v409 = vsel %vm284, 0, %v408
      %410 = vst [vmem:[#allocation3 + $0x18] sm:$0x1] %v409
      %v411 = vld [vmem:[#allocation3 + $0x24] sm:$0x1]
      %v412 = vsel %vm284, 0, %v411
      %413 = vst [vmem:[#allocation3 + $0x24] sm:$0x1] %v412
      %v414 = vld [vmem:[#allocation3 + $0x30] sm:$0x1]
      %v415 = vsel %vm284, 0, %v414
      %416 = vst [vmem:[#allocation3 + $0x30] sm:$0x1] %v415
      %v417 = vld [vmem:[#allocation3 + $0x3c] sm:$0x1]
      %v418 = vsel %vm284, 0, %v417
      %419 = vst [vmem:[#allocation3 + $0x3c] sm:$0x1] %v418
      %v420 = vld [vmem:[#allocation3 + $0x48] sm:$0x1]
      %v421 = vsel %vm284, 0, %v420
      %422 = vst [vmem:[#allocation3 + $0x48] sm:$0x1] %v421
      %v423 = vld [vmem:[#allocation3 + $0x54] sm:$0x1]
      %v424 = vsel %vm284, 0, %v423
      %425 = vst [vmem:[#allocation3 + $0x54] sm:$0x1] %v424
      %v426 = vld [vmem:[#allocation3 + $0x60] sm:$0x1]
      %v427 = vsel %vm284, 0, %v426
      %428 = vst [vmem:[#allocation3 + $0x60] sm:$0x1] %v427
      %v429 = vld [vmem:[#allocation3 + $0x6c] sm:$0x1]
      %v430 = vsel %vm284, 0, %v429
      %431 = vst [vmem:[#allocation3 + $0x6c] sm:$0x1] %v430
      %v432 = vld [vmem:[#allocation3 + $0x78] sm:$0x1]
      %v433 = vsel %vm284, 0, %v432
      %434 = vst [vmem:[#allocation3 + $0x78] sm:$0x1] %v433
      %v435 = vld [vmem:[#allocation3 + $0x84] sm:$0x1]
      %v436 = vsel %vm284, 0, %v435
      %437 = vst [vmem:[#allocation3 + $0x84] sm:$0x1] %v436
      %v438 = vld [vmem:[#allocation3 + $0x90] sm:$0x1]
      %v439 = vsel %vm284, 0, %v438
      %440 = vst [vmem:[#allocation3 + $0x90] sm:$0x1] %v439
      %v441 = vld [vmem:[#allocation3 + $0x9c] sm:$0x1]
      %v442 = vsel %vm284, 0, %v441
      %443 = vst [vmem:[#allocation3 + $0x9c] sm:$0x1] %v442
      %v444 = vld [vmem:[#allocation3 + $0xa8] sm:$0x1]
      %v445 = vsel %vm284, 0, %v444
      %446 = vst [vmem:[#allocation3 + $0xa8] sm:$0x1] %v445
      %v447 = vld [vmem:[#allocation3 + $0xb4] sm:$0x1]
      %v448 = vsel %vm284, 0, %v447
      %449 = vst [vmem:[#allocation3 + $0xb4] sm:$0x1] %v448
      %v450 = vld [vmem:[#allocation3 + $0xc0] sm:$0x1]
      %v451 = vsel %vm284, 0, %v450
      %452 = vst [vmem:[#allocation3 + $0xc0] sm:$0x1] %v451
      %v453 = vld [vmem:[#allocation3 + $0xcc] sm:$0x1]
      %v454 = vsel %vm284, 0, %v453
      %455 = vst [vmem:[#allocation3 + $0xcc] sm:$0x1] %v454
      %v456 = vld [vmem:[#allocation3 + $0x8] sm:$0x1]
      %v457 = vsel %vm340, 0, %v456
      %458 = vst [vmem:[#allocation3 + $0x8] sm:$0x1] %v457
      %v459 = vld [vmem:[#allocation3 + $0x14] sm:$0x1]
      %v460 = vsel %vm340, 0, %v459
      %461 = vst [vmem:[#allocation3 + $0x14] sm:$0x1] %v460
      %v462 = vld [vmem:[#allocation3 + $0x20] sm:$0x1]
      %v463 = vsel %vm340, 0, %v462
      %464 = vst [vmem:[#allocation3 + $0x20] sm:$0x1] %v463
      %v465 = vld [vmem:[#allocation3 + $0x2c] sm:$0x1]
      %v466 = vsel %vm340, 0, %v465
      %467 = vst [vmem:[#allocation3 + $0x2c] sm:$0x1] %v466
      %v468 = vld [vmem:[#allocation3 + $0x38] sm:$0x1]
      %v469 = vsel %vm340, 0, %v468
      %470 = vst [vmem:[#allocation3 + $0x38] sm:$0x1] %v469
      %v471 = vld [vmem:[#allocation3 + $0x44] sm:$0x1]
      %v472 = vsel %vm340, 0, %v471
      %473 = vst [vmem:[#allocation3 + $0x44] sm:$0x1] %v472
      %v474 = vld [vmem:[#allocation3 + $0x50] sm:$0x1]
      %v475 = vsel %vm340, 0, %v474
      %476 = vst [vmem:[#allocation3 + $0x50] sm:$0x1] %v475
      %v477 = vld [vmem:[#allocation3 + $0x5c] sm:$0x1]
      %v478 = vsel %vm340, 0, %v477
      %479 = vst [vmem:[#allocation3 + $0x5c] sm:$0x1] %v478
      %v480 = vld [vmem:[#allocation3 + $0x68] sm:$0x1]
      %v481 = vsel %vm340, 0, %v480
      %482 = vst [vmem:[#allocation3 + $0x68] sm:$0x1] %v481
      %v483 = vld [vmem:[#allocation3 + $0x74] sm:$0x1]
      %v484 = vsel %vm340, 0, %v483
      %485 = vst [vmem:[#allocation3 + $0x74] sm:$0x1] %v484
      %v486 = vld [vmem:[#allocation3 + $0x80] sm:$0x1]
      %v487 = vsel %vm340, 0, %v486
      %488 = vst [vmem:[#allocation3 + $0x80] sm:$0x1] %v487
      %v489 = vld [vmem:[#allocation3 + $0x8c] sm:$0x1]
      %v490 = vsel %vm340, 0, %v489
      %491 = vst [vmem:[#allocation3 + $0x8c] sm:$0x1] %v490
      %v492 = vld [vmem:[#allocation3 + $0x98] sm:$0x1]
      %v493 = vsel %vm340, 0, %v492
      %494 = vst [vmem:[#allocation3 + $0x98] sm:$0x1] %v493
      %v495 = vld [vmem:[#allocation3 + $0xa4] sm:$0x1]
      %v496 = vsel %vm340, 0, %v495
      %497 = vst [vmem:[#allocation3 + $0xa4] sm:$0x1] %v496
      %v498 = vld [vmem:[#allocation3 + $0xb0] sm:$0x1]
      %v499 = vsel %vm340, 0, %v498
      %500 = vst [vmem:[#allocation3 + $0xb0] sm:$0x1] %v499
      %v501 = vld [vmem:[#allocation3 + $0xbc] sm:$0x1]
      %v502 = vsel %vm340, 0, %v501
      %503 = vst [vmem:[#allocation3 + $0xbc] sm:$0x1] %v502
      %v504 = vld [vmem:[#allocation3 + $0xc8] sm:$0x1]
      %v505 = vsel %vm340, 0, %v504
      %506 = vst [vmem:[#allocation3 + $0xc8] sm:$0x1] %v505
      %v507 = vld [vmem:[#allocation3 + $0xd4] sm:$0x1]
      %v508 = vsel %vm340, 0, %v507
      %509 = vst [vmem:[#allocation3 + $0xd4] sm:$0x1] %v508
      %v510 = vld [vmem:[%s261] sm:$0xf]
      %v511 = vld [vmem:[%s261 + $0x4] sm:$0xf]
      %v512 = vld [vmem:[%s261 + $0x8] sm:$0xf]
      %v513 = vld [vmem:[%s261 + $0xc] sm:$0xf]
      %v514 = vld [vmem:[%s261 + $0x10] sm:$0xf]
      %v515 = vld [vmem:[%s261 + $0x14] sm:$0xf]
      %v516 = vld [vmem:[%s261 + $0x18] sm:$0xf]
      %v517 = vld [vmem:[%s261 + $0x1c] sm:$0xf]
      %v518 = vld [vmem:[%s261 + $0x20] sm:$0xf]
      %v519 = vld [vmem:[%s261 + $0x24] sm:$0xf]
      %v520 = vld [vmem:[%s261 + $0x28] sm:$0xf]
      %v521 = vld [vmem:[%s261 + $0x2c] sm:$0xf]
      %v522 = vld [vmem:[%s261 + $0x30] sm:$0xf]
      %v523 = vld [vmem:[%s261 + $0x34] sm:$0xf]
      %v524 = vld [vmem:[%s261 + $0x38] sm:$0xf]
      %v525 = vld [vmem:[%s261 + $0x3c] sm:$0xf]
      %v526 = vld [vmem:[%s261 + $0x40] sm:$0xf]
      %v527 = vld [vmem:[%s261 + $0x44] sm:$0xf]
      %v528 = vld [vmem:[%s261 + $0x48] sm:$0xf]
      %v529 = vld [vmem:[%s261 + $0x4c] sm:$0xf]
      %v530 = vld [vmem:[%s261 + $0x50] sm:$0xf]
      %v531 = vld [vmem:[%s261 + $0x54] sm:$0xf]
      %v532 = vld [vmem:[%s261 + $0x58] sm:$0xf]
      %v533 = vld [vmem:[%s261 + $0x5c] sm:$0xf]
      %v534 = vld [vmem:[%s261 + $0x60] sm:$0xf]
      %v535 = vld [vmem:[%s261 + $0x64] sm:$0xf]
      %v536 = vld [vmem:[%s261 + $0x68] sm:$0xf]
      %v537 = vld [vmem:[%s261 + $0x6c] sm:$0xf]
      %v538 = vld [vmem:[%s261 + $0x70] sm:$0xf]
      %v539 = vld [vmem:[%s261 + $0x74] sm:$0xf]
      %v540 = vld [vmem:[%s261 + $0x78] sm:$0xf]
      %v541 = vld [vmem:[%s261 + $0x7c] sm:$0xf]
      %vm542 = vsmask.f32 4368
      %vm543 = vmor %vm283, %vm542
      %v545 = vshrl.u32 %v510, 16
      %v547 = vrot.slane %v545, 7
      %v548 = vshll.u32 %v510, 16
      %v550 = vor.u32 %v547, %v548
      %v551 = vrot.slane %v547, 4
      %v553 = vshrl.u32 %v511, 16
      %v555 = vrot.slane %v553, 7
      %v556 = vshll.u32 %v511, 16
      %v558 = vor.u32 %v555, %v556
      %v559 = vsel %vm543, %v551, %v558
      %v560 = vrot.slane %v555, 4
      %v562 = vshrl.u32 %v512, 16
      %v564 = vrot.slane %v562, 7
      %v565 = vshll.u32 %v512, 16
      %v567 = vor.u32 %v564, %v565
      %v568 = vrot.slane %v564, 4
      %v570 = vshrl.u32 %v513, 16
      %v572 = vrot.slane %v570, 7
      %v573 = vshll.u32 %v513, 16
      %v575 = vor.u32 %v572, %v573
      %v576 = vsel %vm543, %v568, %v575
      %v577 = vrot.slane %v572, 4
      %v579 = vshrl.u32 %v514, 16
      %v581 = vrot.slane %v579, 7
      %v582 = vshll.u32 %v514, 16
      %v584 = vor.u32 %v581, %v582
      %v585 = vrot.slane %v581, 4
      %v587 = vshrl.u32 %v515, 16
      %v589 = vrot.slane %v587, 7
      %v590 = vshll.u32 %v515, 16
      %v592 = vor.u32 %v589, %v590
      %v593 = vsel %vm543, %v585, %v592
      %v594 = vrot.slane %v589, 4
      %v596 = vshrl.u32 %v516, 16
      %v598 = vrot.slane %v596, 7
      %v599 = vshll.u32 %v516, 16
      %v601 = vor.u32 %v598, %v599
      %v602 = vrot.slane %v598, 4
      %v604 = vshrl.u32 %v517, 16
      %v606 = vrot.slane %v604, 7
      %v607 = vshll.u32 %v517, 16
      %v609 = vor.u32 %v606, %v607
      %v610 = vsel %vm543, %v602, %v609
      %v611 = vrot.slane %v606, 4
      %v613 = vshrl.u32 %v518, 16
      %v615 = vrot.slane %v613, 7
      %v616 = vshll.u32 %v518, 16
      %v618 = vor.u32 %v615, %v616
      %v619 = vrot.slane %v615, 4
      %v621 = vshrl.u32 %v519, 16
      %v623 = vrot.slane %v621, 7
      %v624 = vshll.u32 %v519, 16
      %v626 = vor.u32 %v623, %v624
      %v627 = vsel %vm543, %v619, %v626
      %v628 = vrot.slane %v623, 4
      %v630 = vshrl.u32 %v520, 16
      %v632 = vrot.slane %v630, 7
      %v633 = vshll.u32 %v520, 16
      %v635 = vor.u32 %v632, %v633
      %v636 = vrot.slane %v632, 4
      %v638 = vshrl.u32 %v521, 16
      %v640 = vrot.slane %v638, 7
      %v641 = vshll.u32 %v521, 16
      %v643 = vor.u32 %v640, %v641
      %v644 = vsel %vm543, %v636, %v643
      %v645 = vrot.slane %v640, 4
      %v647 = vshrl.u32 %v522, 16
      %v649 = vrot.slane %v647, 7
      %v650 = vshll.u32 %v522, 16
      %v652 = vor.u32 %v649, %v650
      %v653 = vrot.slane %v649, 4
      %v655 = vshrl.u32 %v523, 16
      %v657 = vrot.slane %v655, 7
      %v658 = vshll.u32 %v523, 16
      %v660 = vor.u32 %v657, %v658
      %v661 = vsel %vm543, %v653, %v660
      %v662 = vrot.slane %v657, 4
      %v664 = vshrl.u32 %v524, 16
      %v666 = vrot.slane %v664, 7
      %v667 = vshll.u32 %v524, 16
      %v669 = vor.u32 %v666, %v667
      %v670 = vrot.slane %v666, 4
      %v672 = vshrl.u32 %v525, 16
      %v674 = vrot.slane %v672, 7
      %v675 = vshll.u32 %v525, 16
      %v677 = vor.u32 %v674, %v675
      %v678 = vsel %vm543, %v670, %v677
      %v679 = vrot.slane %v674, 4
      %v681 = vshrl.u32 %v526, 16
      %v683 = vrot.slane %v681, 7
      %v684 = vshll.u32 %v526, 16
      %v686 = vor.u32 %v683, %v684
      %v687 = vrot.slane %v683, 4
      %v689 = vshrl.u32 %v527, 16
      %v691 = vrot.slane %v689, 7
      %v692 = vshll.u32 %v527, 16
      %v694 = vor.u32 %v691, %v692
      %v695 = vsel %vm543, %v687, %v694
      %v696 = vrot.slane %v691, 4
      %v698 = vshrl.u32 %v528, 16
      %v700 = vrot.slane %v698, 7
      %v701 = vshll.u32 %v528, 16
      %v703 = vor.u32 %v700, %v701
      %v704 = vrot.slane %v700, 4
      %v706 = vshrl.u32 %v529, 16
      %v708 = vrot.slane %v706, 7
      %v709 = vshll.u32 %v529, 16
      %v711 = vor.u32 %v708, %v709
      %v712 = vsel %vm543, %v704, %v711
      %v713 = vrot.slane %v708, 4
      %v715 = vshrl.u32 %v530, 16
      %v717 = vrot.slane %v715, 7
      %v718 = vshll.u32 %v530, 16
      %v720 = vor.u32 %v717, %v718
      %v721 = vrot.slane %v717, 4
      %v723 = vshrl.u32 %v531, 16
      %v725 = vrot.slane %v723, 7
      %v726 = vshll.u32 %v531, 16
      %v728 = vor.u32 %v725, %v726
      %v729 = vsel %vm543, %v721, %v728
      %v730 = vrot.slane %v725, 4
      %v732 = vshrl.u32 %v532, 16
      %v734 = vrot.slane %v732, 7
      %v735 = vshll.u32 %v532, 16
      %v737 = vor.u32 %v734, %v735
      %v738 = vrot.slane %v734, 4
      %v740 = vshrl.u32 %v533, 16
      %v742 = vrot.slane %v740, 7
      %v743 = vshll.u32 %v533, 16
      %v745 = vor.u32 %v742, %v743
      %v746 = vsel %vm543, %v738, %v745
      %v747 = vrot.slane %v742, 4
      %v749 = vshrl.u32 %v534, 16
      %v751 = vrot.slane %v749, 7
      %v752 = vshll.u32 %v534, 16
      %v754 = vor.u32 %v751, %v752
      %v755 = vrot.slane %v751, 4
      %v757 = vshrl.u32 %v535, 16
      %v759 = vrot.slane %v757, 7
      %v760 = vshll.u32 %v535, 16
      %v762 = vor.u32 %v759, %v760
      %v763 = vsel %vm543, %v755, %v762
      %v764 = vrot.slane %v759, 4
      %v766 = vshrl.u32 %v536, 16
      %v768 = vrot.slane %v766, 7
      %v769 = vshll.u32 %v536, 16
      %v771 = vor.u32 %v768, %v769
      %v772 = vrot.slane %v768, 4
      %v774 = vshrl.u32 %v537, 16
      %v776 = vrot.slane %v774, 7
      %v777 = vshll.u32 %v537, 16
      %v779 = vor.u32 %v776, %v777
      %v780 = vsel %vm543, %v772, %v779
      %v781 = vrot.slane %v776, 4
      %v783 = vshrl.u32 %v538, 16
      %v785 = vrot.slane %v783, 7
      %v786 = vshll.u32 %v538, 16
      %v788 = vor.u32 %v785, %v786
      %v789 = vrot.slane %v785, 4
      %v791 = vshrl.u32 %v539, 16
      %v793 = vrot.slane %v791, 7
      %v794 = vshll.u32 %v539, 16
      %v796 = vor.u32 %v793, %v794
      %v797 = vsel %vm543, %v789, %v796
      %v798 = vrot.slane %v793, 4
      %v800 = vshrl.u32 %v540, 16
      %v802 = vrot.slane %v800, 7
      %v803 = vshll.u32 %v540, 16
      %v805 = vor.u32 %v802, %v803
      %v806 = vrot.slane %v802, 4
      %v808 = vshrl.u32 %v541, 16
      %v810 = vrot.slane %v808, 7
      %v811 = vshll.u32 %v541, 16
      %v813 = vor.u32 %v810, %v811
      %v814 = vsel %vm543, %v806, %v813
      %v815 = vrot.slane %v810, 4
      %s864 = scalar_lea.vmem [#allocation2], 12
      %vm865 = vcmask 27648
      %vm866 = vmand %vm865, %vm339
      %v867 = vld [vmem:[%s864] sm:$0xf]
      %v868 = vsel %vm866, %v550, %v867
      %869 = vst [vmem:[%s864] sm:$0xf] %v868
      %vm870 = vcmask 27648
      %871 = vst.msk [vmem:[%s864 + $0x4] sm:$0xf] %vm870, %v559
      %vm872 = vcmask 24576
      %vm873 = vmand %vm872, %vm283
      %v874 = vld [vmem:[%s864 + $0x8] sm:$0x1]
      %v875 = vsel %vm873, %v560, %v874
      %876 = vst [vmem:[%s864 + $0x8] sm:$0x1] %v875
      %v877 = vld [vmem:[%s864 + $0xc] sm:$0xf]
      %v878 = vsel %vm866, %v567, %v877
      %879 = vst [vmem:[%s864 + $0xc] sm:$0xf] %v878
      %880 = vst.msk [vmem:[%s864 + $0x10] sm:$0xf] %vm870, %v576
      %v881 = vld [vmem:[%s864 + $0x14] sm:$0x1]
      %v882 = vsel %vm873, %v577, %v881
      %883 = vst [vmem:[%s864 + $0x14] sm:$0x1] %v882
      %v884 = vld [vmem:[%s864 + $0x18] sm:$0xf]
      %v885 = vsel %vm866, %v584, %v884
      %886 = vst [vmem:[%s864 + $0x18] sm:$0xf] %v885
      %887 = vst.msk [vmem:[%s864 + $0x1c] sm:$0xf] %vm870, %v593
      %v888 = vld [vmem:[%s864 + $0x20] sm:$0x1]
      %v889 = vsel %vm873, %v594, %v888
      %890 = vst [vmem:[%s864 + $0x20] sm:$0x1] %v889
      %v891 = vld [vmem:[%s864 + $0x24] sm:$0xf]
      %v892 = vsel %vm866, %v601, %v891
      %893 = vst [vmem:[%s864 + $0x24] sm:$0xf] %v892
      %894 = vst.msk [vmem:[%s864 + $0x28] sm:$0xf] %vm870, %v610
      %v895 = vld [vmem:[%s864 + $0x2c] sm:$0x1]
      %v896 = vsel %vm873, %v611, %v895
      %897 = vst [vmem:[%s864 + $0x2c] sm:$0x1] %v896
      %v898 = vld [vmem:[%s864 + $0x30] sm:$0xf]
      %v899 = vsel %vm866, %v618, %v898
      %900 = vst [vmem:[%s864 + $0x30] sm:$0xf] %v899
      %901 = vst.msk [vmem:[%s864 + $0x34] sm:$0xf] %vm870, %v627
      %v902 = vld [vmem:[%s864 + $0x38] sm:$0x1]
      %v903 = vsel %vm873, %v628, %v902
      %904 = vst [vmem:[%s864 + $0x38] sm:$0x1] %v903
      %v905 = vld [vmem:[%s864 + $0x3c] sm:$0xf]
      %v906 = vsel %vm866, %v635, %v905
      %907 = vst [vmem:[%s864 + $0x3c] sm:$0xf] %v906
      %908 = vst.msk [vmem:[%s864 + $0x40] sm:$0xf] %vm870, %v644
      %v909 = vld [vmem:[%s864 + $0x44] sm:$0x1]
      %v910 = vsel %vm873, %v645, %v909
      %911 = vst [vmem:[%s864 + $0x44] sm:$0x1] %v910
      %v912 = vld [vmem:[%s864 + $0x48] sm:$0xf]
      %v913 = vsel %vm866, %v652, %v912
      %914 = vst [vmem:[%s864 + $0x48] sm:$0xf] %v913
      %915 = vst.msk [vmem:[%s864 + $0x4c] sm:$0xf] %vm870, %v661
      %v916 = vld [vmem:[%s864 + $0x50] sm:$0x1]
      %v917 = vsel %vm873, %v662, %v916
      %918 = vst [vmem:[%s864 + $0x50] sm:$0x1] %v917
      %v919 = vld [vmem:[%s864 + $0x54] sm:$0xf]
      %v920 = vsel %vm866, %v669, %v919
      %921 = vst [vmem:[%s864 + $0x54] sm:$0xf] %v920
      %922 = vst.msk [vmem:[%s864 + $0x58] sm:$0xf] %vm870, %v678
      %v923 = vld [vmem:[%s864 + $0x5c] sm:$0x1]
      %v924 = vsel %vm873, %v679, %v923
      %925 = vst [vmem:[%s864 + $0x5c] sm:$0x1] %v924
      %v926 = vld [vmem:[%s864 + $0x60] sm:$0xf]
      %v927 = vsel %vm866, %v686, %v926
      %928 = vst [vmem:[%s864 + $0x60] sm:$0xf] %v927
      %929 = vst.msk [vmem:[%s864 + $0x64] sm:$0xf] %vm870, %v695
      %v930 = vld [vmem:[%s864 + $0x68] sm:$0x1]
      %v931 = vsel %vm873, %v696, %v930
      %932 = vst [vmem:[%s864 + $0x68] sm:$0x1] %v931
      %v933 = vld [vmem:[%s864 + $0x6c] sm:$0xf]
      %v934 = vsel %vm866, %v703, %v933
      %935 = vst [vmem:[%s864 + $0x6c] sm:$0xf] %v934
      %936 = vst.msk [vmem:[%s864 + $0x70] sm:$0xf] %vm870, %v712
      %v937 = vld [vmem:[%s864 + $0x74] sm:$0x1]
      %v938 = vsel %vm873, %v713, %v937
      %939 = vst [vmem:[%s864 + $0x74] sm:$0x1] %v938
      %v940 = vld [vmem:[%s864 + $0x78] sm:$0xf]
      %v941 = vsel %vm866, %v720, %v940
      %942 = vst [vmem:[%s864 + $0x78] sm:$0xf] %v941
      %943 = vst.msk [vmem:[%s864 + $0x7c] sm:$0xf] %vm870, %v729
      %v944 = vld [vmem:[%s864 + $0x80] sm:$0x1]
      %v945 = vsel %vm873, %v730, %v944
      %946 = vst [vmem:[%s864 + $0x80] sm:$0x1] %v945
      %v947 = vld [vmem:[%s864 + $0x84] sm:$0xf]
      %v948 = vsel %vm866, %v737, %v947
      %949 = vst [vmem:[%s864 + $0x84] sm:$0xf] %v948
      %950 = vst.msk [vmem:[%s864 + $0x88] sm:$0xf] %vm870, %v746
      %v951 = vld [vmem:[%s864 + $0x8c] sm:$0x1]
      %v952 = vsel %vm873, %v747, %v951
      %953 = vst [vmem:[%s864 + $0x8c] sm:$0x1] %v952
      %v954 = vld [vmem:[%s864 + $0x90] sm:$0xf]
      %v955 = vsel %vm866, %v754, %v954
      %956 = vst [vmem:[%s864 + $0x90] sm:$0xf] %v955
      %957 = vst.msk [vmem:[%s864 + $0x94] sm:$0xf] %vm870, %v763
      %v958 = vld [vmem:[%s864 + $0x98] sm:$0x1]
      %v959 = vsel %vm873, %v764, %v958
      %960 = vst [vmem:[%s864 + $0x98] sm:$0x1] %v959
      %v961 = vld [vmem:[%s864 + $0x9c] sm:$0xf]
      %v962 = vsel %vm866, %v771, %v961
      %963 = vst [vmem:[%s864 + $0x9c] sm:$0xf] %v962
      %964 = vst.msk [vmem:[%s864 + $0xa0] sm:$0xf] %vm870, %v780
      %v965 = vld [vmem:[%s864 + $0xa4] sm:$0x1]
      %v966 = vsel %vm873, %v781, %v965
      %967 = vst [vmem:[%s864 + $0xa4] sm:$0x1] %v966
      %v968 = vld [vmem:[%s864 + $0xa8] sm:$0xf]
      %v969 = vsel %vm866, %v788, %v968
      %970 = vst [vmem:[%s864 + $0xa8] sm:$0xf] %v969
      %971 = vst.msk [vmem:[%s864 + $0xac] sm:$0xf] %vm870, %v797
      %v972 = vld [vmem:[%s864 + $0xb0] sm:$0x1]
      %v973 = vsel %vm873, %v798, %v972
      %974 = vst [vmem:[%s864 + $0xb0] sm:$0x1] %v973
      %v975 = vld [vmem:[%s864 + $0xb4] sm:$0xf]
      %v976 = vsel %vm866, %v805, %v975
      %977 = vst [vmem:[%s864 + $0xb4] sm:$0xf] %v976
      %978 = vst.msk [vmem:[%s864 + $0xb8] sm:$0xf] %vm870, %v814
      %v979 = vld [vmem:[%s864 + $0xbc] sm:$0x1]
      %v980 = vsel %vm873, %v815, %v979
      %981 = vst [vmem:[%s864 + $0xbc] sm:$0x1] %v980
      %v982 = vld [vmem:[%s266] sm:$0xf]
      %v983 = vld [vmem:[%s266 + $0x4] sm:$0xf]
      %v984 = vld [vmem:[%s266 + $0x8] sm:$0xf]
      %v985 = vld [vmem:[%s266 + $0xc] sm:$0xf]
      %v986 = vld [vmem:[%s266 + $0x10] sm:$0xf]
      %v987 = vld [vmem:[%s266 + $0x14] sm:$0xf]
      %v988 = vld [vmem:[%s266 + $0x18] sm:$0xf]
      %v989 = vld [vmem:[%s266 + $0x1c] sm:$0xf]
      %v990 = vld [vmem:[%s266 + $0x20] sm:$0xf]
      %v991 = vld [vmem:[%s266 + $0x24] sm:$0xf]
      %v992 = vld [vmem:[%s266 + $0x28] sm:$0xf]
      %v993 = vld [vmem:[%s266 + $0x2c] sm:$0xf]
      %v994 = vld [vmem:[%s266 + $0x30] sm:$0xf]
      %v995 = vld [vmem:[%s266 + $0x34] sm:$0xf]
      %v996 = vld [vmem:[%s266 + $0x38] sm:$0xf]
      %v997 = vld [vmem:[%s266 + $0x3c] sm:$0xf]
      %v998 = vld [vmem:[%s266 + $0x40] sm:$0xf]
      %v999 = vld [vmem:[%s266 + $0x44] sm:$0xf]
      %v1000 = vld [vmem:[%s266 + $0x48] sm:$0xf]
      %v1001 = vld [vmem:[%s266 + $0x4c] sm:$0xf]
      %v1002 = vld [vmem:[%s266 + $0x50] sm:$0xf]
      %v1003 = vld [vmem:[%s266 + $0x54] sm:$0xf]
      %v1004 = vld [vmem:[%s266 + $0x58] sm:$0xf]
      %v1005 = vld [vmem:[%s266 + $0x5c] sm:$0xf]
      %v1006 = vld [vmem:[%s266 + $0x60] sm:$0xf]
      %v1007 = vld [vmem:[%s266 + $0x64] sm:$0xf]
      %v1008 = vld [vmem:[%s266 + $0x68] sm:$0xf]
      %v1009 = vld [vmem:[%s266 + $0x6c] sm:$0xf]
      %v1010 = vld [vmem:[%s266 + $0x70] sm:$0xf]
      %v1011 = vld [vmem:[%s266 + $0x74] sm:$0xf]
      %v1012 = vld [vmem:[%s266 + $0x78] sm:$0xf]
      %v1013 = vld [vmem:[%s266 + $0x7c] sm:$0xf]
      %v1015 = vshrl.u32 %v982, 16
      %v1017 = vrot.slane %v1015, 7
      %v1018 = vshll.u32 %v982, 16
      %v1020 = vor.u32 %v1017, %v1018
      %v1021 = vrot.slane %v1017, 4
      %v1023 = vshrl.u32 %v983, 16
      %v1025 = vrot.slane %v1023, 7
      %v1026 = vshll.u32 %v983, 16
      %v1028 = vor.u32 %v1025, %v1026
      %v1029 = vsel %vm543, %v1021, %v1028
      %v1030 = vrot.slane %v1025, 4
      %v1032 = vshrl.u32 %v984, 16
      %v1034 = vrot.slane %v1032, 7
      %v1035 = vshll.u32 %v984, 16
      %v1037 = vor.u32 %v1034, %v1035
      %v1038 = vrot.slane %v1034, 4
      %v1040 = vshrl.u32 %v985, 16
      %v1042 = vrot.slane %v1040, 7
      %v1043 = vshll.u32 %v985, 16
      %v1045 = vor.u32 %v1042, %v1043
      %v1046 = vsel %vm543, %v1038, %v1045
      %v1047 = vrot.slane %v1042, 4
      %v1049 = vshrl.u32 %v986, 16
      %v1051 = vrot.slane %v1049, 7
      %v1052 = vshll.u32 %v986, 16
      %v1054 = vor.u32 %v1051, %v1052
      %v1055 = vrot.slane %v1051, 4
      %v1057 = vshrl.u32 %v987, 16
      %v1059 = vrot.slane %v1057, 7
      %v1060 = vshll.u32 %v987, 16
      %v1062 = vor.u32 %v1059, %v1060
      %v1063 = vsel %vm543, %v1055, %v1062
      %v1064 = vrot.slane %v1059, 4
      %v1066 = vshrl.u32 %v988, 16
      %v1068 = vrot.slane %v1066, 7
      %v1069 = vshll.u32 %v988, 16
      %v1071 = vor.u32 %v1068, %v1069
      %v1072 = vrot.slane %v1068, 4
      %v1074 = vshrl.u32 %v989, 16
      %v1076 = vrot.slane %v1074, 7
      %v1077 = vshll.u32 %v989, 16
      %v1079 = vor.u32 %v1076, %v1077
      %v1080 = vsel %vm543, %v1072, %v1079
      %v1081 = vrot.slane %v1076, 4
      %v1083 = vshrl.u32 %v990, 16
      %v1085 = vrot.slane %v1083, 7
      %v1086 = vshll.u32 %v990, 16
      %v1088 = vor.u32 %v1085, %v1086
      %v1089 = vrot.slane %v1085, 4
      %v1091 = vshrl.u32 %v991, 16
      %v1093 = vrot.slane %v1091, 7
      %v1094 = vshll.u32 %v991, 16
      %v1096 = vor.u32 %v1093, %v1094
      %v1097 = vsel %vm543, %v1089, %v1096
      %v1098 = vrot.slane %v1093, 4
      %v1100 = vshrl.u32 %v992, 16
      %v1102 = vrot.slane %v1100, 7
      %v1103 = vshll.u32 %v992, 16
      %v1105 = vor.u32 %v1102, %v1103
      %v1106 = vrot.slane %v1102, 4
      %v1108 = vshrl.u32 %v993, 16
      %v1110 = vrot.slane %v1108, 7
      %v1111 = vshll.u32 %v993, 16
      %v1113 = vor.u32 %v1110, %v1111
      %v1114 = vsel %vm543, %v1106, %v1113
      %v1115 = vrot.slane %v1110, 4
      %v1117 = vshrl.u32 %v994, 16
      %v1119 = vrot.slane %v1117, 7
      %v1120 = vshll.u32 %v994, 16
      %v1122 = vor.u32 %v1119, %v1120
      %v1123 = vrot.slane %v1119, 4
      %v1125 = vshrl.u32 %v995, 16
      %v1127 = vrot.slane %v1125, 7
      %v1128 = vshll.u32 %v995, 16
      %v1130 = vor.u32 %v1127, %v1128
      %v1131 = vsel %vm543, %v1123, %v1130
      %v1132 = vrot.slane %v1127, 4
      %v1134 = vshrl.u32 %v996, 16
      %v1136 = vrot.slane %v1134, 7
      %v1137 = vshll.u32 %v996, 16
      %v1139 = vor.u32 %v1136, %v1137
      %v1140 = vrot.slane %v1136, 4
      %v1142 = vshrl.u32 %v997, 16
      %v1144 = vrot.slane %v1142, 7
      %v1145 = vshll.u32 %v997, 16
      %v1147 = vor.u32 %v1144, %v1145
      %v1148 = vsel %vm543, %v1140, %v1147
      %v1149 = vrot.slane %v1144, 4
      %v1151 = vshrl.u32 %v998, 16
      %v1153 = vrot.slane %v1151, 7
      %v1154 = vshll.u32 %v998, 16
      %v1156 = vor.u32 %v1153, %v1154
      %v1157 = vrot.slane %v1153, 4
      %v1159 = vshrl.u32 %v999, 16
      %v1161 = vrot.slane %v1159, 7
      %v1162 = vshll.u32 %v999, 16
      %v1164 = vor.u32 %v1161, %v1162
      %v1165 = vsel %vm543, %v1157, %v1164
      %v1166 = vrot.slane %v1161, 4
      %v1168 = vshrl.u32 %v1000, 16
      %v1170 = vrot.slane %v1168, 7
      %v1171 = vshll.u32 %v1000, 16
      %v1173 = vor.u32 %v1170, %v1171
      %v1174 = vrot.slane %v1170, 4
      %v1176 = vshrl.u32 %v1001, 16
      %v1178 = vrot.slane %v1176, 7
      %v1179 = vshll.u32 %v1001, 16
      %v1181 = vor.u32 %v1178, %v1179
      %v1182 = vsel %vm543, %v1174, %v1181
      %v1183 = vrot.slane %v1178, 4
      %v1185 = vshrl.u32 %v1002, 16
      %v1187 = vrot.slane %v1185, 7
      %v1188 = vshll.u32 %v1002, 16
      %v1190 = vor.u32 %v1187, %v1188
      %v1191 = vrot.slane %v1187, 4
      %v1193 = vshrl.u32 %v1003, 16
      %v1195 = vrot.slane %v1193, 7
      %v1196 = vshll.u32 %v1003, 16
      %v1198 = vor.u32 %v1195, %v1196
      %v1199 = vsel %vm543, %v1191, %v1198
      %v1200 = vrot.slane %v1195, 4
      %v1202 = vshrl.u32 %v1004, 16
      %v1204 = vrot.slane %v1202, 7
      %v1205 = vshll.u32 %v1004, 16
      %v1207 = vor.u32 %v1204, %v1205
      %v1208 = vrot.slane %v1204, 4
      %v1210 = vshrl.u32 %v1005, 16
      %v1212 = vrot.slane %v1210, 7
      %v1213 = vshll.u32 %v1005, 16
      %v1215 = vor.u32 %v1212, %v1213
      %v1216 = vsel %vm543, %v1208, %v1215
      %v1217 = vrot.slane %v1212, 4
      %v1219 = vshrl.u32 %v1006, 16
      %v1221 = vrot.slane %v1219, 7
      %v1222 = vshll.u32 %v1006, 16
      %v1224 = vor.u32 %v1221, %v1222
      %v1225 = vrot.slane %v1221, 4
      %v1227 = vshrl.u32 %v1007, 16
      %v1229 = vrot.slane %v1227, 7
      %v1230 = vshll.u32 %v1007, 16
      %v1232 = vor.u32 %v1229, %v1230
      %v1233 = vsel %vm543, %v1225, %v1232
      %v1234 = vrot.slane %v1229, 4
      %v1236 = vshrl.u32 %v1008, 16
      %v1238 = vrot.slane %v1236, 7
      %v1239 = vshll.u32 %v1008, 16
      %v1241 = vor.u32 %v1238, %v1239
      %v1242 = vrot.slane %v1238, 4
      %v1244 = vshrl.u32 %v1009, 16
      %v1246 = vrot.slane %v1244, 7
      %v1247 = vshll.u32 %v1009, 16
      %v1249 = vor.u32 %v1246, %v1247
      %v1250 = vsel %vm543, %v1242, %v1249
      %v1251 = vrot.slane %v1246, 4
      %v1253 = vshrl.u32 %v1010, 16
      %v1255 = vrot.slane %v1253, 7
      %v1256 = vshll.u32 %v1010, 16
      %v1258 = vor.u32 %v1255, %v1256
      %v1259 = vrot.slane %v1255, 4
      %v1261 = vshrl.u32 %v1011, 16
      %v1263 = vrot.slane %v1261, 7
      %v1264 = vshll.u32 %v1011, 16
      %v1266 = vor.u32 %v1263, %v1264
      %v1267 = vsel %vm543, %v1259, %v1266
      %v1268 = vrot.slane %v1263, 4
      %v1270 = vshrl.u32 %v1012, 16
      %v1272 = vrot.slane %v1270, 7
      %v1273 = vshll.u32 %v1012, 16
      %v1275 = vor.u32 %v1272, %v1273
      %v1276 = vrot.slane %v1272, 4
      %v1278 = vshrl.u32 %v1013, 16
      %v1280 = vrot.slane %v1278, 7
      %v1281 = vshll.u32 %v1013, 16
      %v1283 = vor.u32 %v1280, %v1281
      %v1284 = vsel %vm543, %v1276, %v1283
      %v1285 = vrot.slane %v1280, 4
      %1286 = vrot.lane.b32.xlu0 %v1020, 4
      %v1287 = vpop.permute.xlu0 %1286
      %1288 = vrot.lane.b32.xlu0 %v1029, 4
      %v1289 = vpop.permute.xlu0 %1288
      %1290 = vrot.lane.b32.xlu0 %v1030, 4
      %v1291 = vpop.permute.xlu0 %1290
      %1292 = vrot.lane.b32.xlu0 %v1037, 4
      %v1293 = vpop.permute.xlu0 %1292
      %1294 = vrot.lane.b32.xlu0 %v1046, 4
      %v1295 = vpop.permute.xlu0 %1294
      %1296 = vrot.lane.b32.xlu0 %v1047, 4
      %v1297 = vpop.permute.xlu0 %1296
      %1298 = vrot.lane.b32.xlu0 %v1054, 4
      %v1299 = vpop.permute.xlu0 %1298
      %1300 = vrot.lane.b32.xlu0 %v1063, 4
      %v1301 = vpop.permute.xlu0 %1300
      %1302 = vrot.lane.b32.xlu0 %v1064, 4
      %v1303 = vpop.permute.xlu0 %1302
      %1304 = vrot.lane.b32.xlu0 %v1071, 4
      %v1305 = vpop.permute.xlu0 %1304
      %1306 = vrot.lane.b32.xlu0 %v1080, 4
      %v1307 = vpop.permute.xlu0 %1306
      %1308 = vrot.lane.b32.xlu0 %v1081, 4
      %v1309 = vpop.permute.xlu0 %1308
      %1310 = vrot.lane.b32.xlu0 %v1088, 4
      %v1311 = vpop.permute.xlu0 %1310
      %1312 = vrot.lane.b32.xlu0 %v1097, 4
      %v1313 = vpop.permute.xlu0 %1312
      %1314 = vrot.lane.b32.xlu0 %v1098, 4
      %v1315 = vpop.permute.xlu0 %1314
      %1316 = vrot.lane.b32.xlu0 %v1105, 4
      %v1317 = vpop.permute.xlu0 %1316
      %1318 = vrot.lane.b32.xlu0 %v1114, 4
      %v1319 = vpop.permute.xlu0 %1318
      %1320 = vrot.lane.b32.xlu0 %v1115, 4
      %v1321 = vpop.permute.xlu0 %1320
      %1322 = vrot.lane.b32.xlu0 %v1122, 4
      %v1323 = vpop.permute.xlu0 %1322
      %1324 = vrot.lane.b32.xlu0 %v1131, 4
      %v1325 = vpop.permute.xlu0 %1324
      %1326 = vrot.lane.b32.xlu0 %v1132, 4
      %v1327 = vpop.permute.xlu0 %1326
      %1328 = vrot.lane.b32.xlu0 %v1139, 4
      %v1329 = vpop.permute.xlu0 %1328
      %1330 = vrot.lane.b32.xlu0 %v1148, 4
      %v1331 = vpop.permute.xlu0 %1330
      %1332 = vrot.lane.b32.xlu0 %v1149, 4
      %v1333 = vpop.permute.xlu0 %1332
      %1334 = vrot.lane.b32.xlu0 %v1156, 4
      %v1335 = vpop.permute.xlu0 %1334
      %1336 = vrot.lane.b32.xlu0 %v1165, 4
      %v1337 = vpop.permute.xlu0 %1336
      %1338 = vrot.lane.b32.xlu0 %v1166, 4
      %v1339 = vpop.permute.xlu0 %1338
      %1340 = vrot.lane.b32.xlu0 %v1173, 4
      %v1341 = vpop.permute.xlu0 %1340
      %1342 = vrot.lane.b32.xlu0 %v1182, 4
      %v1343 = vpop.permute.xlu0 %1342
      %1344 = vrot.lane.b32.xlu0 %v1183, 4
      %v1345 = vpop.permute.xlu0 %1344
      %1346 = vrot.lane.b32.xlu0 %v1190, 4
      %v1347 = vpop.permute.xlu0 %1346
      %1348 = vrot.lane.b32.xlu0 %v1199, 4
      %v1349 = vpop.permute.xlu0 %1348
      %1350 = vrot.lane.b32.xlu0 %v1200, 4
      %v1351 = vpop.permute.xlu0 %1350
      %1352 = vrot.lane.b32.xlu0 %v1207, 4
      %v1353 = vpop.permute.xlu0 %1352
      %1354 = vrot.lane.b32.xlu0 %v1216, 4
      %v1355 = vpop.permute.xlu0 %1354
      %1356 = vrot.lane.b32.xlu0 %v1217, 4
      %v1357 = vpop.permute.xlu0 %1356
      %1358 = vrot.lane.b32.xlu0 %v1224, 4
      %v1359 = vpop.permute.xlu0 %1358
      %1360 = vrot.lane.b32.xlu0 %v1233, 4
      %v1361 = vpop.permute.xlu0 %1360
      %1362 = vrot.lane.b32.xlu0 %v1234, 4
      %v1363 = vpop.permute.xlu0 %1362
      %1364 = vrot.lane.b32.xlu0 %v1241, 4
      %v1365 = vpop.permute.xlu0 %1364
      %1366 = vrot.lane.b32.xlu0 %v1250, 4
      %v1367 = vpop.permute.xlu0 %1366
      %1368 = vrot.lane.b32.xlu0 %v1251, 4
      %v1369 = vpop.permute.xlu0 %1368
      %1370 = vrot.lane.b32.xlu0 %v1258, 4
      %v1371 = vpop.permute.xlu0 %1370
      %1372 = vrot.lane.b32.xlu0 %v1267, 4
      %v1373 = vpop.permute.xlu0 %1372
      %1374 = vrot.lane.b32.xlu0 %v1268, 4
      %v1375 = vpop.permute.xlu0 %1374
      %1376 = vrot.lane.b32.xlu0 %v1275, 4
      %v1377 = vpop.permute.xlu0 %1376
      %1378 = vrot.lane.b32.xlu0 %v1284, 4
      %v1379 = vpop.permute.xlu0 %1378
      %1380 = vrot.lane.b32.xlu0 %v1285, 4
      %v1381 = vpop.permute.xlu0 %1380
      %vm1430 = vcmask 60448
      %vm1431 = vmand %vm1430, %vm339
      %v1432 = vld [vmem:[%s864] sm:$0xf]
      %v1433 = vsel %vm1431, %v1287, %v1432
      %1434 = vst [vmem:[%s864] sm:$0xf] %v1433
      %vm1435 = vcmask 60448
      %1436 = vst.msk [vmem:[%s864 + $0x4] sm:$0xf] %vm1435, %v1289
      %vm1437 = vcmask 57376
      %vm1438 = vmand %vm1437, %vm283
      %v1439 = vld [vmem:[%s864 + $0x8] sm:$0x1]
      %v1440 = vsel %vm1438, %v1291, %v1439
      %1441 = vst [vmem:[%s864 + $0x8] sm:$0x1] %v1440
      %v1442 = vld [vmem:[%s864 + $0xc] sm:$0xf]
      %v1443 = vsel %vm1431, %v1293, %v1442
      %1444 = vst [vmem:[%s864 + $0xc] sm:$0xf] %v1443
      %1445 = vst.msk [vmem:[%s864 + $0x10] sm:$0xf] %vm1435, %v1295
      %v1446 = vld [vmem:[%s864 + $0x14] sm:$0x1]
      %v1447 = vsel %vm1438, %v1297, %v1446
      %1448 = vst [vmem:[%s864 + $0x14] sm:$0x1] %v1447
      %v1449 = vld [vmem:[%s864 + $0x18] sm:$0xf]
      %v1450 = vsel %vm1431, %v1299, %v1449
      %1451 = vst [vmem:[%s864 + $0x18] sm:$0xf] %v1450
      %1452 = vst.msk [vmem:[%s864 + $0x1c] sm:$0xf] %vm1435, %v1301
      %v1453 = vld [vmem:[%s864 + $0x20] sm:$0x1]
      %v1454 = vsel %vm1438, %v1303, %v1453
      %1455 = vst [vmem:[%s864 + $0x20] sm:$0x1] %v1454
      %v1456 = vld [vmem:[%s864 + $0x24] sm:$0xf]
      %v1457 = vsel %vm1431, %v1305, %v1456
      %1458 = vst [vmem:[%s864 + $0x24] sm:$0xf] %v1457
      %1459 = vst.msk [vmem:[%s864 + $0x28] sm:$0xf] %vm1435, %v1307
      %v1460 = vld [vmem:[%s864 + $0x2c] sm:$0x1]
      %v1461 = vsel %vm1438, %v1309, %v1460
      %1462 = vst [vmem:[%s864 + $0x2c] sm:$0x1] %v1461
      %v1463 = vld [vmem:[%s864 + $0x30] sm:$0xf]
      %v1464 = vsel %vm1431, %v1311, %v1463
      %1465 = vst [vmem:[%s864 + $0x30] sm:$0xf] %v1464
      %1466 = vst.msk [vmem:[%s864 + $0x34] sm:$0xf] %vm1435, %v1313
      %v1467 = vld [vmem:[%s864 + $0x38] sm:$0x1]
      %v1468 = vsel %vm1438, %v1315, %v1467
      %1469 = vst [vmem:[%s864 + $0x38] sm:$0x1] %v1468
      %v1470 = vld [vmem:[%s864 + $0x3c] sm:$0xf]
      %v1471 = vsel %vm1431, %v1317, %v1470
      %1472 = vst [vmem:[%s864 + $0x3c] sm:$0xf] %v1471
      %1473 = vst.msk [vmem:[%s864 + $0x40] sm:$0xf] %vm1435, %v1319
      %v1474 = vld [vmem:[%s864 + $0x44] sm:$0x1]
      %v1475 = vsel %vm1438, %v1321, %v1474
      %1476 = vst [vmem:[%s864 + $0x44] sm:$0x1] %v1475
      %v1477 = vld [vmem:[%s864 + $0x48] sm:$0xf]
      %v1478 = vsel %vm1431, %v1323, %v1477
      %1479 = vst [vmem:[%s864 + $0x48] sm:$0xf] %v1478
      %1480 = vst.msk [vmem:[%s864 + $0x4c] sm:$0xf] %vm1435, %v1325
      %v1481 = vld [vmem:[%s864 + $0x50] sm:$0x1]
      %v1482 = vsel %vm1438, %v1327, %v1481
      %1483 = vst [vmem:[%s864 + $0x50] sm:$0x1] %v1482
      %v1484 = vld [vmem:[%s864 + $0x54] sm:$0xf]
      %v1485 = vsel %vm1431, %v1329, %v1484
      %1486 = vst [vmem:[%s864 + $0x54] sm:$0xf] %v1485
      %1487 = vst.msk [vmem:[%s864 + $0x58] sm:$0xf] %vm1435, %v1331
      %v1488 = vld [vmem:[%s864 + $0x5c] sm:$0x1]
      %v1489 = vsel %vm1438, %v1333, %v1488
      %1490 = vst [vmem:[%s864 + $0x5c] sm:$0x1] %v1489
      %v1491 = vld [vmem:[%s864 + $0x60] sm:$0xf]
      %v1492 = vsel %vm1431, %v1335, %v1491
      %1493 = vst [vmem:[%s864 + $0x60] sm:$0xf] %v1492
      %1494 = vst.msk [vmem:[%s864 + $0x64] sm:$0xf] %vm1435, %v1337
      %v1495 = vld [vmem:[%s864 + $0x68] sm:$0x1]
      %v1496 = vsel %vm1438, %v1339, %v1495
      %1497 = vst [vmem:[%s864 + $0x68] sm:$0x1] %v1496
      %v1498 = vld [vmem:[%s864 + $0x6c] sm:$0xf]
      %v1499 = vsel %vm1431, %v1341, %v1498
      %1500 = vst [vmem:[%s864 + $0x6c] sm:$0xf] %v1499
      %1501 = vst.msk [vmem:[%s864 + $0x70] sm:$0xf] %vm1435, %v1343
      %v1502 = vld [vmem:[%s864 + $0x74] sm:$0x1]
      %v1503 = vsel %vm1438, %v1345, %v1502
      %1504 = vst [vmem:[%s864 + $0x74] sm:$0x1] %v1503
      %v1505 = vld [vmem:[%s864 + $0x78] sm:$0xf]
      %v1506 = vsel %vm1431, %v1347, %v1505
      %1507 = vst [vmem:[%s864 + $0x78] sm:$0xf] %v1506
      %1508 = vst.msk [vmem:[%s864 + $0x7c] sm:$0xf] %vm1435, %v1349
      %v1509 = vld [vmem:[%s864 + $0x80] sm:$0x1]
      %v1510 = vsel %vm1438, %v1351, %v1509
      %1511 = vst [vmem:[%s864 + $0x80] sm:$0x1] %v1510
      %v1512 = vld [vmem:[%s864 + $0x84] sm:$0xf]
      %v1513 = vsel %vm1431, %v1353, %v1512
      %1514 = vst [vmem:[%s864 + $0x84] sm:$0xf] %v1513
      %1515 = vst.msk [vmem:[%s864 + $0x88] sm:$0xf] %vm1435, %v1355
      %v1516 = vld [vmem:[%s864 + $0x8c] sm:$0x1]
      %v1517 = vsel %vm1438, %v1357, %v1516
      %1518 = vst [vmem:[%s864 + $0x8c] sm:$0x1] %v1517
      %v1519 = vld [vmem:[%s864 + $0x90] sm:$0xf]
      %v1520 = vsel %vm1431, %v1359, %v1519
      %1521 = vst [vmem:[%s864 + $0x90] sm:$0xf] %v1520
      %1522 = vst.msk [vmem:[%s864 + $0x94] sm:$0xf] %vm1435, %v1361
      %v1523 = vld [vmem:[%s864 + $0x98] sm:$0x1]
      %v1524 = vsel %vm1438, %v1363, %v1523
      %1525 = vst [vmem:[%s864 + $0x98] sm:$0x1] %v1524
      %v1526 = vld [vmem:[%s864 + $0x9c] sm:$0xf]
      %v1527 = vsel %vm1431, %v1365, %v1526
      %1528 = vst [vmem:[%s864 + $0x9c] sm:$0xf] %v1527
      %1529 = vst.msk [vmem:[%s864 + $0xa0] sm:$0xf] %vm1435, %v1367
      %v1530 = vld [vmem:[%s864 + $0xa4] sm:$0x1]
      %v1531 = vsel %vm1438, %v1369, %v1530
      %1532 = vst [vmem:[%s864 + $0xa4] sm:$0x1] %v1531
      %v1533 = vld [vmem:[%s864 + $0xa8] sm:$0xf]
      %v1534 = vsel %vm1431, %v1371, %v1533
      %1535 = vst [vmem:[%s864 + $0xa8] sm:$0xf] %v1534
      %1536 = vst.msk [vmem:[%s864 + $0xac] sm:$0xf] %vm1435, %v1373
      %v1537 = vld [vmem:[%s864 + $0xb0] sm:$0x1]
      %v1538 = vsel %vm1438, %v1375, %v1537
      %1539 = vst [vmem:[%s864 + $0xb0] sm:$0x1] %v1538
      %v1540 = vld [vmem:[%s864 + $0xb4] sm:$0xf]
      %v1541 = vsel %vm1431, %v1377, %v1540
      %1542 = vst [vmem:[%s864 + $0xb4] sm:$0xf] %v1541
      %1543 = vst.msk [vmem:[%s864 + $0xb8] sm:$0xf] %vm1435, %v1379
      %v1544 = vld [vmem:[%s864 + $0xbc] sm:$0x1]
      %v1545 = vsel %vm1438, %v1381, %v1544
      %1546 = vst [vmem:[%s864 + $0xbc] sm:$0x1] %v1545
      %v1547 = vld [vmem:[#allocation2] sm:$0xf]
      %v1548 = vld [vmem:[#allocation2 + $0x4] sm:$0xf]
      %v1549 = vld [vmem:[#allocation2 + $0xc] sm:$0xf]
      %v1550 = vld [vmem:[#allocation2 + $0x10] sm:$0xf]
      %v1551 = vld [vmem:[#allocation2 + $0x18] sm:$0xf]
      %v1552 = vld [vmem:[#allocation2 + $0x1c] sm:$0xf]
      %v1553 = vld [vmem:[#allocation2 + $0x24] sm:$0xf]
      %v1554 = vld [vmem:[#allocation2 + $0x28] sm:$0xf]
      %v1555 = vld [vmem:[#allocation2 + $0x30] sm:$0xf]
      %v1556 = vld [vmem:[#allocation2 + $0x34] sm:$0xf]
      %v1557 = vld [vmem:[#allocation2 + $0x3c] sm:$0xf]
      %v1558 = vld [vmem:[#allocation2 + $0x40] sm:$0xf]
      %v1559 = vld [vmem:[#allocation2 + $0x48] sm:$0xf]
      %v1560 = vld [vmem:[#allocation2 + $0x4c] sm:$0xf]
      %v1561 = vld [vmem:[#allocation2 + $0x54] sm:$0xf]
      %v1562 = vld [vmem:[#allocation2 + $0x58] sm:$0xf]
      %v1563 = vld [vmem:[#allocation2 + $0x60] sm:$0xf]
      %v1564 = vld [vmem:[#allocation2 + $0x64] sm:$0xf]
      %v1565 = vld [vmem:[#allocation2 + $0x6c] sm:$0xf]
      %v1566 = vld [vmem:[#allocation2 + $0x70] sm:$0xf]
      %v1567 = vld [vmem:[#allocation2 + $0x78] sm:$0xf]
      %v1568 = vld [vmem:[#allocation2 + $0x7c] sm:$0xf]
      %v1569 = vld [vmem:[#allocation2 + $0x84] sm:$0xf]
      %v1570 = vld [vmem:[#allocation2 + $0x88] sm:$0xf]
      %v1571 = vld [vmem:[#allocation2 + $0x90] sm:$0xf]
      %v1572 = vld [vmem:[#allocation2 + $0x94] sm:$0xf]
      %v1573 = vld [vmem:[#allocation2 + $0x9c] sm:$0xf]
      %v1574 = vld [vmem:[#allocation2 + $0xa0] sm:$0xf]
      %v1575 = vld [vmem:[#allocation2 + $0xa8] sm:$0xf]
      %v1576 = vld [vmem:[#allocation2 + $0xac] sm:$0xf]
      %v1577 = vld [vmem:[#allocation2 + $0xb4] sm:$0xf]
      %v1578 = vld [vmem:[#allocation2 + $0xb8] sm:$0xf]
      %v1579 = vld [vmem:[#allocation2 + $0x8] sm:$0x1]
      %v1580 = vld [vmem:[#allocation2 + $0x14] sm:$0x1]
      %v1581 = vld [vmem:[#allocation2 + $0x20] sm:$0x1]
      %v1582 = vld [vmem:[#allocation2 + $0x2c] sm:$0x1]
      %v1583 = vld [vmem:[#allocation2 + $0x38] sm:$0x1]
      %v1584 = vld [vmem:[#allocation2 + $0x44] sm:$0x1]
      %v1585 = vld [vmem:[#allocation2 + $0x50] sm:$0x1]
      %v1586 = vld [vmem:[#allocation2 + $0x5c] sm:$0x1]
      %v1587 = vld [vmem:[#allocation2 + $0x68] sm:$0x1]
      %v1588 = vld [vmem:[#allocation2 + $0x74] sm:$0x1]
      %v1589 = vld [vmem:[#allocation2 + $0x80] sm:$0x1]
      %v1590 = vld [vmem:[#allocation2 + $0x8c] sm:$0x1]
      %v1591 = vld [vmem:[#allocation2 + $0x98] sm:$0x1]
      %v1592 = vld [vmem:[#allocation2 + $0xa4] sm:$0x1]
      %v1593 = vld [vmem:[#allocation2 + $0xb0] sm:$0x1]
      %v1594 = vld [vmem:[#allocation2 + $0xbc] sm:$0x1]
      %vm1595 = vsmask.f32 3328
      %vm1596 = vsmask.f32 7440
      %vm1597 = vmor %vm1595, %vm1596
      %v1599 = vshrl.u32 %v1547, 16
      %v1601 = vrot.slane %v1599, 4
      %v1602 = vshll.u32 %v1547, 16
      %v1604 = vrot.slane %v1602, 5
      %v1605 = vor.u32 %v1601, %v1604
      %v1606 = vrot.slane %v1605, 4
      %v1608 = vshll.u32 %v1548, 16
      %v1610 = vrot.slane %v1608, 5
      %v1611 = vsel %vm1597, %v1606, %v1610
      %v1612 = vshrl.u32 %v1548, 16
      %v1614 = vrot.slane %v1612, 4
      %v1615 = vor.u32 %v1614, %v1610
      %v1616 = vrot.slane %v1615, 4
      %v1618 = vshll.u32 %v1579, 16
      %v1620 = vrot.slane %v1618, 5
      %v1621 = vsel %vm1597, %v1616, %v1620
      %v1623 = vshrl.u32 %v1549, 16
      %v1625 = vrot.slane %v1623, 4
      %v1626 = vshll.u32 %v1549, 16
      %v1628 = vrot.slane %v1626, 5
      %v1629 = vor.u32 %v1625, %v1628
      %v1630 = vrot.slane %v1629, 4
      %v1632 = vshll.u32 %v1550, 16
      %v1634 = vrot.slane %v1632, 5
      %v1635 = vsel %vm1597, %v1630, %v1634
      %v1636 = vshrl.u32 %v1550, 16
      %v1638 = vrot.slane %v1636, 4
      %v1639 = vor.u32 %v1638, %v1634
      %v1640 = vrot.slane %v1639, 4
      %v1642 = vshll.u32 %v1580, 16
      %v1644 = vrot.slane %v1642, 5
      %v1645 = vsel %vm1597, %v1640, %v1644
      %v1647 = vshrl.u32 %v1551, 16
      %v1649 = vrot.slane %v1647, 4
      %v1650 = vshll.u32 %v1551, 16
      %v1652 = vrot.slane %v1650, 5
      %v1653 = vor.u32 %v1649, %v1652
      %v1654 = vrot.slane %v1653, 4
      %v1656 = vshll.u32 %v1552, 16
      %v1658 = vrot.slane %v1656, 5
      %v1659 = vsel %vm1597, %v1654, %v1658
      %v1660 = vshrl.u32 %v1552, 16
      %v1662 = vrot.slane %v1660, 4
      %v1663 = vor.u32 %v1662, %v1658
      %v1664 = vrot.slane %v1663, 4
      %v1666 = vshll.u32 %v1581, 16
      %v1668 = vrot.slane %v1666, 5
      %v1669 = vsel %vm1597, %v1664, %v1668
      %v1671 = vshrl.u32 %v1553, 16
      %v1673 = vrot.slane %v1671, 4
      %v1674 = vshll.u32 %v1553, 16
      %v1676 = vrot.slane %v1674, 5
      %v1677 = vor.u32 %v1673, %v1676
      %v1678 = vrot.slane %v1677, 4
      %v1680 = vshll.u32 %v1554, 16
      %v1682 = vrot.slane %v1680, 5
      %v1683 = vsel %vm1597, %v1678, %v1682
      %v1684 = vshrl.u32 %v1554, 16
      %v1686 = vrot.slane %v1684, 4
      %v1687 = vor.u32 %v1686, %v1682
      %v1688 = vrot.slane %v1687, 4
      %v1690 = vshll.u32 %v1582, 16
      %v1692 = vrot.slane %v1690, 5
      %v1693 = vsel %vm1597, %v1688, %v1692
      %v1695 = vshrl.u32 %v1555, 16
      %v1697 = vrot.slane %v1695, 4
      %v1698 = vshll.u32 %v1555, 16
      %v1700 = vrot.slane %v1698, 5
      %v1701 = vor.u32 %v1697, %v1700
      %v1702 = vrot.slane %v1701, 4
      %v1704 = vshll.u32 %v1556, 16
      %v1706 = vrot.slane %v1704, 5
      %v1707 = vsel %vm1597, %v1702, %v1706
      %v1708 = vshrl.u32 %v1556, 16
      %v1710 = vrot.slane %v1708, 4
      %v1711 = vor.u32 %v1710, %v1706
      %v1712 = vrot.slane %v1711, 4
      %v1714 = vshll.u32 %v1583, 16
      %v1716 = vrot.slane %v1714, 5
      %v1717 = vsel %vm1597, %v1712, %v1716
      %v1719 = vshrl.u32 %v1557, 16
      %v1721 = vrot.slane %v1719, 4
      %v1722 = vshll.u32 %v1557, 16
      %v1724 = vrot.slane %v1722, 5
      %v1725 = vor.u32 %v1721, %v1724
      %v1726 = vrot.slane %v1725, 4
      %v1728 = vshll.u32 %v1558, 16
      %v1730 = vrot.slane %v1728, 5
      %v1731 = vsel %vm1597, %v1726, %v1730
      %v1732 = vshrl.u32 %v1558, 16
      %v1734 = vrot.slane %v1732, 4
      %v1735 = vor.u32 %v1734, %v1730
      %v1736 = vrot.slane %v1735, 4
      %v1738 = vshll.u32 %v1584, 16
      %v1740 = vrot.slane %v1738, 5
      %v1741 = vsel %vm1597, %v1736, %v1740
      %v1743 = vshrl.u32 %v1559, 16
      %v1745 = vrot.slane %v1743, 4
      %v1746 = vshll.u32 %v1559, 16
      %v1748 = vrot.slane %v1746, 5
      %v1749 = vor.u32 %v1745, %v1748
      %v1750 = vrot.slane %v1749, 4
      %v1752 = vshll.u32 %v1560, 16
      %v1754 = vrot.slane %v1752, 5
      %v1755 = vsel %vm1597, %v1750, %v1754
      %v1756 = vshrl.u32 %v1560, 16
      %v1758 = vrot.slane %v1756, 4
      %v1759 = vor.u32 %v1758, %v1754
      %v1760 = vrot.slane %v1759, 4
      %v1762 = vshll.u32 %v1585, 16
      %v1764 = vrot.slane %v1762, 5
      %v1765 = vsel %vm1597, %v1760, %v1764
      %v1767 = vshrl.u32 %v1561, 16
      %v1769 = vrot.slane %v1767, 4
      %v1770 = vshll.u32 %v1561, 16
      %v1772 = vrot.slane %v1770, 5
      %v1773 = vor.u32 %v1769, %v1772
      %v1774 = vrot.slane %v1773, 4
      %v1776 = vshll.u32 %v1562, 16
      %v1778 = vrot.slane %v1776, 5
      %v1779 = vsel %vm1597, %v1774, %v1778
      %v1780 = vshrl.u32 %v1562, 16
      %v1782 = vrot.slane %v1780, 4
      %v1783 = vor.u32 %v1782, %v1778
      %v1784 = vrot.slane %v1783, 4
      %v1786 = vshll.u32 %v1586, 16
      %v1788 = vrot.slane %v1786, 5
      %v1789 = vsel %vm1597, %v1784, %v1788
      %v1791 = vshrl.u32 %v1563, 16
      %v1793 = vrot.slane %v1791, 4
      %v1794 = vshll.u32 %v1563, 16
      %v1796 = vrot.slane %v1794, 5
      %v1797 = vor.u32 %v1793, %v1796
      %v1798 = vrot.slane %v1797, 4
      %v1800 = vshll.u32 %v1564, 16
      %v1802 = vrot.slane %v1800, 5
      %v1803 = vsel %vm1597, %v1798, %v1802
      %v1804 = vshrl.u32 %v1564, 16
      %v1806 = vrot.slane %v1804, 4
      %v1807 = vor.u32 %v1806, %v1802
      %v1808 = vrot.slane %v1807, 4
      %v1810 = vshll.u32 %v1587, 16
      %v1812 = vrot.slane %v1810, 5
      %v1813 = vsel %vm1597, %v1808, %v1812
      %v1815 = vshrl.u32 %v1565, 16
      %v1817 = vrot.slane %v1815, 4
      %v1818 = vshll.u32 %v1565, 16
      %v1820 = vrot.slane %v1818, 5
      %v1821 = vor.u32 %v1817, %v1820
      %v1822 = vrot.slane %v1821, 4
      %v1824 = vshll.u32 %v1566, 16
      %v1826 = vrot.slane %v1824, 5
      %v1827 = vsel %vm1597, %v1822, %v1826
      %v1828 = vshrl.u32 %v1566, 16
      %v1830 = vrot.slane %v1828, 4
      %v1831 = vor.u32 %v1830, %v1826
      %v1832 = vrot.slane %v1831, 4
      %v1834 = vshll.u32 %v1588, 16
      %v1836 = vrot.slane %v1834, 5
      %v1837 = vsel %vm1597, %v1832, %v1836
      %v1839 = vshrl.u32 %v1567, 16
      %v1841 = vrot.slane %v1839, 4
      %v1842 = vshll.u32 %v1567, 16
      %v1844 = vrot.slane %v1842, 5
      %v1845 = vor.u32 %v1841, %v1844
      %v1846 = vrot.slane %v1845, 4
      %v1848 = vshll.u32 %v1568, 16
      %v1850 = vrot.slane %v1848, 5
      %v1851 = vsel %vm1597, %v1846, %v1850
      %v1852 = vshrl.u32 %v1568, 16
      %v1854 = vrot.slane %v1852, 4
      %v1855 = vor.u32 %v1854, %v1850
      %v1856 = vrot.slane %v1855, 4
      %v1858 = vshll.u32 %v1589, 16
      %v1860 = vrot.slane %v1858, 5
      %v1861 = vsel %vm1597, %v1856, %v1860
      %v1863 = vshrl.u32 %v1569, 16
      %v1865 = vrot.slane %v1863, 4
      %v1866 = vshll.u32 %v1569, 16
      %v1868 = vrot.slane %v1866, 5
      %v1869 = vor.u32 %v1865, %v1868
      %v1870 = vrot.slane %v1869, 4
      %v1872 = vshll.u32 %v1570, 16
      %v1874 = vrot.slane %v1872, 5
      %v1875 = vsel %vm1597, %v1870, %v1874
      %v1876 = vshrl.u32 %v1570, 16
      %v1878 = vrot.slane %v1876, 4
      %v1879 = vor.u32 %v1878, %v1874
      %v1880 = vrot.slane %v1879, 4
      %v1882 = vshll.u32 %v1590, 16
      %v1884 = vrot.slane %v1882, 5
      %v1885 = vsel %vm1597, %v1880, %v1884
      %v1887 = vshrl.u32 %v1571, 16
      %v1889 = vrot.slane %v1887, 4
      %v1890 = vshll.u32 %v1571, 16
      %v1892 = vrot.slane %v1890, 5
      %v1893 = vor.u32 %v1889, %v1892
      %v1894 = vrot.slane %v1893, 4
      %v1896 = vshll.u32 %v1572, 16
      %v1898 = vrot.slane %v1896, 5
      %v1899 = vsel %vm1597, %v1894, %v1898
      %v1900 = vshrl.u32 %v1572, 16
      %v1902 = vrot.slane %v1900, 4
      %v1903 = vor.u32 %v1902, %v1898
      %v1904 = vrot.slane %v1903, 4
      %v1906 = vshll.u32 %v1591, 16
      %v1908 = vrot.slane %v1906, 5
      %v1909 = vsel %vm1597, %v1904, %v1908
      %v1911 = vshrl.u32 %v1573, 16
      %v1913 = vrot.slane %v1911, 4
      %v1914 = vshll.u32 %v1573, 16
      %v1916 = vrot.slane %v1914, 5
      %v1917 = vor.u32 %v1913, %v1916
      %v1918 = vrot.slane %v1917, 4
      %v1920 = vshll.u32 %v1574, 16
      %v1922 = vrot.slane %v1920, 5
      %v1923 = vsel %vm1597, %v1918, %v1922
      %v1924 = vshrl.u32 %v1574, 16
      %v1926 = vrot.slane %v1924, 4
      %v1927 = vor.u32 %v1926, %v1922
      %v1928 = vrot.slane %v1927, 4
      %v1930 = vshll.u32 %v1592, 16
      %v1932 = vrot.slane %v1930, 5
      %v1933 = vsel %vm1597, %v1928, %v1932
      %v1935 = vshrl.u32 %v1575, 16
      %v1937 = vrot.slane %v1935, 4
      %v1938 = vshll.u32 %v1575, 16
      %v1940 = vrot.slane %v1938, 5
      %v1941 = vor.u32 %v1937, %v1940
      %v1942 = vrot.slane %v1941, 4
      %v1944 = vshll.u32 %v1576, 16
      %v1946 = vrot.slane %v1944, 5
      %v1947 = vsel %vm1597, %v1942, %v1946
      %v1948 = vshrl.u32 %v1576, 16
      %v1950 = vrot.slane %v1948, 4
      %v1951 = vor.u32 %v1950, %v1946
      %v1952 = vrot.slane %v1951, 4
      %v1954 = vshll.u32 %v1593, 16
      %v1956 = vrot.slane %v1954, 5
      %v1957 = vsel %vm1597, %v1952, %v1956
      %v1959 = vshrl.u32 %v1577, 16
      %v1961 = vrot.slane %v1959, 4
      %v1962 = vshll.u32 %v1577, 16
      %v1964 = vrot.slane %v1962, 5
      %v1965 = vor.u32 %v1961, %v1964
      %v1966 = vrot.slane %v1965, 4
      %v1968 = vshll.u32 %v1578, 16
      %v1970 = vrot.slane %v1968, 5
      %v1971 = vsel %vm1597, %v1966, %v1970
      %v1972 = vshrl.u32 %v1578, 16
      %v1974 = vrot.slane %v1972, 4
      %v1975 = vor.u32 %v1974, %v1970
      %v1976 = vrot.slane %v1975, 4
      %v1978 = vshll.u32 %v1594, 16
      %v1980 = vrot.slane %v1978, 5
      %v1981 = vsel %vm1597, %v1976, %v1980
      %v1982 = vld [vmem:[#allocation2] sm:$0xe]
      %v1983 = vld [vmem:[#allocation2 + $0xc] sm:$0xe]
      %v1984 = vld [vmem:[#allocation2 + $0x18] sm:$0xe]
      %v1985 = vld [vmem:[#allocation2 + $0x24] sm:$0xe]
      %v1986 = vld [vmem:[#allocation2 + $0x30] sm:$0xe]
      %v1987 = vld [vmem:[#allocation2 + $0x3c] sm:$0xe]
      %v1988 = vld [vmem:[#allocation2 + $0x48] sm:$0xe]
      %v1989 = vld [vmem:[#allocation2 + $0x54] sm:$0xe]
      %v1990 = vld [vmem:[#allocation2 + $0x60] sm:$0xe]
      %v1991 = vld [vmem:[#allocation2 + $0x6c] sm:$0xe]
      %v1992 = vld [vmem:[#allocation2 + $0x78] sm:$0xe]
      %v1993 = vld [vmem:[#allocation2 + $0x84] sm:$0xe]
      %v1994 = vld [vmem:[#allocation2 + $0x90] sm:$0xe]
      %v1995 = vld [vmem:[#allocation2 + $0x9c] sm:$0xe]
      %v1996 = vld [vmem:[#allocation2 + $0xa8] sm:$0xe]
      %v1997 = vld [vmem:[#allocation2 + $0xb4] sm:$0xe]
      %vm2046 = vcmask 1042432
      %vm2047 = vcmask 1046532
      %vm2048 = vmor %vm2046, %vm2047
      %v2049 = vrot.slane %v1982, 5
      %v2050 = vrot.slane %v2049, 4
      %v2051 = vrot.slane %v1548, 5
      %v2052 = vsel %vm2048, %v2050, %v2051
      %v2053 = vrot.slane %v2051, 4
      %v2054 = vrot.slane %v1579, 5
      %v2055 = vsel %vm2048, %v2053, %v2054
      %v2056 = vrot.slane %v1983, 5
      %v2057 = vrot.slane %v2056, 4
      %v2058 = vrot.slane %v1550, 5
      %v2059 = vsel %vm2048, %v2057, %v2058
      %v2060 = vrot.slane %v2058, 4
      %v2061 = vrot.slane %v1580, 5
      %v2062 = vsel %vm2048, %v2060, %v2061
      %v2063 = vrot.slane %v1984, 5
      %v2064 = vrot.slane %v2063, 4
      %v2065 = vrot.slane %v1552, 5
      %v2066 = vsel %vm2048, %v2064, %v2065
      %v2067 = vrot.slane %v2065, 4
      %v2068 = vrot.slane %v1581, 5
      %v2069 = vsel %vm2048, %v2067, %v2068
      %v2070 = vrot.slane %v1985, 5
      %v2071 = vrot.slane %v2070, 4
      %v2072 = vrot.slane %v1554, 5
      %v2073 = vsel %vm2048, %v2071, %v2072
      %v2074 = vrot.slane %v2072, 4
      %v2075 = vrot.slane %v1582, 5
      %v2076 = vsel %vm2048, %v2074, %v2075
      %v2077 = vrot.slane %v1986, 5
      %v2078 = vrot.slane %v2077, 4
      %v2079 = vrot.slane %v1556, 5
      %v2080 = vsel %vm2048, %v2078, %v2079
      %v2081 = vrot.slane %v2079, 4
      %v2082 = vrot.slane %v1583, 5
      %v2083 = vsel %vm2048, %v2081, %v2082
      %v2084 = vrot.slane %v1987, 5
      %v2085 = vrot.slane %v2084, 4
      %v2086 = vrot.slane %v1558, 5
      %v2087 = vsel %vm2048, %v2085, %v2086
      %v2088 = vrot.slane %v2086, 4
      %v2089 = vrot.slane %v1584, 5
      %v2090 = vsel %vm2048, %v2088, %v2089
      %v2091 = vrot.slane %v1988, 5
      %v2092 = vrot.slane %v2091, 4
      %v2093 = vrot.slane %v1560, 5
      %v2094 = vsel %vm2048, %v2092, %v2093
      %v2095 = vrot.slane %v2093, 4
      %v2096 = vrot.slane %v1585, 5
      %v2097 = vsel %vm2048, %v2095, %v2096
      %v2098 = vrot.slane %v1989, 5
      %v2099 = vrot.slane %v2098, 4
      %v2100 = vrot.slane %v1562, 5
      %v2101 = vsel %vm2048, %v2099, %v2100
      %v2102 = vrot.slane %v2100, 4
      %v2103 = vrot.slane %v1586, 5
      %v2104 = vsel %vm2048, %v2102, %v2103
      %v2105 = vrot.slane %v1990, 5
      %v2106 = vrot.slane %v2105, 4
      %v2107 = vrot.slane %v1564, 5
      %v2108 = vsel %vm2048, %v2106, %v2107
      %v2109 = vrot.slane %v2107, 4
      %v2110 = vrot.slane %v1587, 5
      %v2111 = vsel %vm2048, %v2109, %v2110
      %v2112 = vrot.slane %v1991, 5
      %v2113 = vrot.slane %v2112, 4
      %v2114 = vrot.slane %v1566, 5
      %v2115 = vsel %vm2048, %v2113, %v2114
      %v2116 = vrot.slane %v2114, 4
      %v2117 = vrot.slane %v1588, 5
      %v2118 = vsel %vm2048, %v2116, %v2117
      %v2119 = vrot.slane %v1992, 5
      %v2120 = vrot.slane %v2119, 4
      %v2121 = vrot.slane %v1568, 5
      %v2122 = vsel %vm2048, %v2120, %v2121
      %v2123 = vrot.slane %v2121, 4
      %v2124 = vrot.slane %v1589, 5
      %v2125 = vsel %vm2048, %v2123, %v2124
      %v2126 = vrot.slane %v1993, 5
      %v2127 = vrot.slane %v2126, 4
      %v2128 = vrot.slane %v1570, 5
      %v2129 = vsel %vm2048, %v2127, %v2128
      %v2130 = vrot.slane %v2128, 4
      %v2131 = vrot.slane %v1590, 5
      %v2132 = vsel %vm2048, %v2130, %v2131
      %v2133 = vrot.slane %v1994, 5
      %v2134 = vrot.slane %v2133, 4
      %v2135 = vrot.slane %v1572, 5
      %v2136 = vsel %vm2048, %v2134, %v2135
      %v2137 = vrot.slane %v2135, 4
      %v2138 = vrot.slane %v1591, 5
      %v2139 = vsel %vm2048, %v2137, %v2138
      %v2140 = vrot.slane %v1995, 5
      %v2141 = vrot.slane %v2140, 4
      %v2142 = vrot.slane %v1574, 5
      %v2143 = vsel %vm2048, %v2141, %v2142
      %v2144 = vrot.slane %v2142, 4
      %v2145 = vrot.slane %v1592, 5
      %v2146 = vsel %vm2048, %v2144, %v2145
      %v2147 = vrot.slane %v1996, 5
      %v2148 = vrot.slane %v2147, 4
      %v2149 = vrot.slane %v1576, 5
      %v2150 = vsel %vm2048, %v2148, %v2149
      %v2151 = vrot.slane %v2149, 4
      %v2152 = vrot.slane %v1593, 5
      %v2153 = vsel %vm2048, %v2151, %v2152
      %v2154 = vrot.slane %v1997, 5
      %v2155 = vrot.slane %v2154, 4
      %v2156 = vrot.slane %v1578, 5
      %v2157 = vsel %vm2048, %v2155, %v2156
      %v2158 = vrot.slane %v2156, 4
      %v2159 = vrot.slane %v1594, 5
      %v2160 = vsel %vm2048, %v2158, %v2159
      %v2161 = vld [vmem:[%s864] sm:$0xf]
      %v2162 = vld [vmem:[%s864 + $0x4] sm:$0xf]
      %v2163 = vld [vmem:[%s864 + $0xc] sm:$0xf]
      %v2164 = vld [vmem:[%s864 + $0x10] sm:$0xf]
      %v2165 = vld [vmem:[%s864 + $0x18] sm:$0xf]
      %v2166 = vld [vmem:[%s864 + $0x1c] sm:$0xf]
      %v2167 = vld [vmem:[%s864 + $0x24] sm:$0xf]
      %v2168 = vld [vmem:[%s864 + $0x28] sm:$0xf]
      %v2169 = vld [vmem:[%s864 + $0x30] sm:$0xf]
      %v2170 = vld [vmem:[%s864 + $0x34] sm:$0xf]
      %v2171 = vld [vmem:[%s864 + $0x3c] sm:$0xf]
      %v2172 = vld [vmem:[%s864 + $0x40] sm:$0xf]
      %v2173 = vld [vmem:[%s864 + $0x48] sm:$0xf]
      %v2174 = vld [vmem:[%s864 + $0x4c] sm:$0xf]
      %v2175 = vld [vmem:[%s864 + $0x54] sm:$0xf]
      %v2176 = vld [vmem:[%s864 + $0x58] sm:$0xf]
      %v2177 = vld [vmem:[%s864 + $0x60] sm:$0xf]
      %v2178 = vld [vmem:[%s864 + $0x64] sm:$0xf]
      %v2179 = vld [vmem:[%s864 + $0x6c] sm:$0xf]
      %v2180 = vld [vmem:[%s864 + $0x70] sm:$0xf]
      %v2181 = vld [vmem:[%s864 + $0x78] sm:$0xf]
      %v2182 = vld [vmem:[%s864 + $0x7c] sm:$0xf]
      %v2183 = vld [vmem:[%s864 + $0x84] sm:$0xf]
      %v2184 = vld [vmem:[%s864 + $0x88] sm:$0xf]
      %v2185 = vld [vmem:[%s864 + $0x90] sm:$0xf]
      %v2186 = vld [vmem:[%s864 + $0x94] sm:$0xf]
      %v2187 = vld [vmem:[%s864 + $0x9c] sm:$0xf]
      %v2188 = vld [vmem:[%s864 + $0xa0] sm:$0xf]
      %v2189 = vld [vmem:[%s864 + $0xa8] sm:$0xf]
      %v2190 = vld [vmem:[%s864 + $0xac] sm:$0xf]
      %v2191 = vld [vmem:[%s864 + $0xb4] sm:$0xf]
      %v2192 = vld [vmem:[%s864 + $0xb8] sm:$0xf]
      %v2193 = vld [vmem:[%s864 + $0x8] sm:$0x1]
      %v2194 = vld [vmem:[%s864 + $0x14] sm:$0x1]
      %v2195 = vld [vmem:[%s864 + $0x20] sm:$0x1]
      %v2196 = vld [vmem:[%s864 + $0x2c] sm:$0x1]
      %v2197 = vld [vmem:[%s864 + $0x38] sm:$0x1]
      %v2198 = vld [vmem:[%s864 + $0x44] sm:$0x1]
      %v2199 = vld [vmem:[%s864 + $0x50] sm:$0x1]
      %v2200 = vld [vmem:[%s864 + $0x5c] sm:$0x1]
      %v2201 = vld [vmem:[%s864 + $0x68] sm:$0x1]
      %v2202 = vld [vmem:[%s864 + $0x74] sm:$0x1]
      %v2203 = vld [vmem:[%s864 + $0x80] sm:$0x1]
      %v2204 = vld [vmem:[%s864 + $0x8c] sm:$0x1]
      %v2205 = vld [vmem:[%s864 + $0x98] sm:$0x1]
      %v2206 = vld [vmem:[%s864 + $0xa4] sm:$0x1]
      %v2207 = vld [vmem:[%s864 + $0xb0] sm:$0x1]
      %v2208 = vld [vmem:[%s864 + $0xbc] sm:$0x1]
      %v2210 = vshrl.u32 %v2161, 16
      %v2212 = vrot.slane %v2210, 4
      %v2213 = vshll.u32 %v2161, 16
      %v2215 = vrot.slane %v2213, 5
      %v2216 = vor.u32 %v2212, %v2215
      %v2217 = vrot.slane %v2216, 4
      %v2219 = vshll.u32 %v2162, 16
      %v2221 = vrot.slane %v2219, 5
      %v2222 = vsel %vm1597, %v2217, %v2221
      %v2223 = vshrl.u32 %v2162, 16
      %v2225 = vrot.slane %v2223, 4
      %v2226 = vor.u32 %v2225, %v2221
      %v2227 = vrot.slane %v2226, 4
      %v2229 = vshll.u32 %v2193, 16
      %v2231 = vrot.slane %v2229, 5
      %v2232 = vsel %vm1597, %v2227, %v2231
      %v2234 = vshrl.u32 %v2163, 16
      %v2236 = vrot.slane %v2234, 4
      %v2237 = vshll.u32 %v2163, 16
      %v2239 = vrot.slane %v2237, 5
      %v2240 = vor.u32 %v2236, %v2239
      %v2241 = vrot.slane %v2240, 4
      %v2243 = vshll.u32 %v2164, 16
      %v2245 = vrot.slane %v2243, 5
      %v2246 = vsel %vm1597, %v2241, %v2245
      %v2247 = vshrl.u32 %v2164, 16
      %v2249 = vrot.slane %v2247, 4
      %v2250 = vor.u32 %v2249, %v2245
      %v2251 = vrot.slane %v2250, 4
      %v2253 = vshll.u32 %v2194, 16
      %v2255 = vrot.slane %v2253, 5
      %v2256 = vsel %vm1597, %v2251, %v2255
      %v2258 = vshrl.u32 %v2165, 16
      %v2260 = vrot.slane %v2258, 4
      %v2261 = vshll.u32 %v2165, 16
      %v2263 = vrot.slane %v2261, 5
      %v2264 = vor.u32 %v2260, %v2263
      %v2265 = vrot.slane %v2264, 4
      %v2267 = vshll.u32 %v2166, 16
      %v2269 = vrot.slane %v2267, 5
      %v2270 = vsel %vm1597, %v2265, %v2269
      %v2271 = vshrl.u32 %v2166, 16
      %v2273 = vrot.slane %v2271, 4
      %v2274 = vor.u32 %v2273, %v2269
      %v2275 = vrot.slane %v2274, 4
      %v2277 = vshll.u32 %v2195, 16
      %v2279 = vrot.slane %v2277, 5
      %v2280 = vsel %vm1597, %v2275, %v2279
      %v2282 = vshrl.u32 %v2167, 16
      %v2284 = vrot.slane %v2282, 4
      %v2285 = vshll.u32 %v2167, 16
      %v2287 = vrot.slane %v2285, 5
      %v2288 = vor.u32 %v2284, %v2287
      %v2289 = vrot.slane %v2288, 4
      %v2291 = vshll.u32 %v2168, 16
      %v2293 = vrot.slane %v2291, 5
      %v2294 = vsel %vm1597, %v2289, %v2293
      %v2295 = vshrl.u32 %v2168, 16
      %v2297 = vrot.slane %v2295, 4
      %v2298 = vor.u32 %v2297, %v2293
      %v2299 = vrot.slane %v2298, 4
      %v2301 = vshll.u32 %v2196, 16
      %v2303 = vrot.slane %v2301, 5
      %v2304 = vsel %vm1597, %v2299, %v2303
      %v2306 = vshrl.u32 %v2169, 16
      %v2308 = vrot.slane %v2306, 4
      %v2309 = vshll.u32 %v2169, 16
      %v2311 = vrot.slane %v2309, 5
      %v2312 = vor.u32 %v2308, %v2311
      %v2313 = vrot.slane %v2312, 4
      %v2315 = vshll.u32 %v2170, 16
      %v2317 = vrot.slane %v2315, 5
      %v2318 = vsel %vm1597, %v2313, %v2317
      %v2319 = vshrl.u32 %v2170, 16
      %v2321 = vrot.slane %v2319, 4
      %v2322 = vor.u32 %v2321, %v2317
      %v2323 = vrot.slane %v2322, 4
      %v2325 = vshll.u32 %v2197, 16
      %v2327 = vrot.slane %v2325, 5
      %v2328 = vsel %vm1597, %v2323, %v2327
      %v2330 = vshrl.u32 %v2171, 16
      %v2332 = vrot.slane %v2330, 4
      %v2333 = vshll.u32 %v2171, 16
      %v2335 = vrot.slane %v2333, 5
      %v2336 = vor.u32 %v2332, %v2335
      %v2337 = vrot.slane %v2336, 4
      %v2339 = vshll.u32 %v2172, 16
      %v2341 = vrot.slane %v2339, 5
      %v2342 = vsel %vm1597, %v2337, %v2341
      %v2343 = vshrl.u32 %v2172, 16
      %v2345 = vrot.slane %v2343, 4
      %v2346 = vor.u32 %v2345, %v2341
      %v2347 = vrot.slane %v2346, 4
      %v2349 = vshll.u32 %v2198, 16
      %v2351 = vrot.slane %v2349, 5
      %v2352 = vsel %vm1597, %v2347, %v2351
      %v2354 = vshrl.u32 %v2173, 16
      %v2356 = vrot.slane %v2354, 4
      %v2357 = vshll.u32 %v2173, 16
      %v2359 = vrot.slane %v2357, 5
      %v2360 = vor.u32 %v2356, %v2359
      %v2361 = vrot.slane %v2360, 4
      %v2363 = vshll.u32 %v2174, 16
      %v2365 = vrot.slane %v2363, 5
      %v2366 = vsel %vm1597, %v2361, %v2365
      %v2367 = vshrl.u32 %v2174, 16
      %v2369 = vrot.slane %v2367, 4
      %v2370 = vor.u32 %v2369, %v2365
      %v2371 = vrot.slane %v2370, 4
      %v2373 = vshll.u32 %v2199, 16
      %v2375 = vrot.slane %v2373, 5
      %v2376 = vsel %vm1597, %v2371, %v2375
      %v2378 = vshrl.u32 %v2175, 16
      %v2380 = vrot.slane %v2378, 4
      %v2381 = vshll.u32 %v2175, 16
      %v2383 = vrot.slane %v2381, 5
      %v2384 = vor.u32 %v2380, %v2383
      %v2385 = vrot.slane %v2384, 4
      %v2387 = vshll.u32 %v2176, 16
      %v2389 = vrot.slane %v2387, 5
      %v2390 = vsel %vm1597, %v2385, %v2389
      %v2391 = vshrl.u32 %v2176, 16
      %v2393 = vrot.slane %v2391, 4
      %v2394 = vor.u32 %v2393, %v2389
      %v2395 = vrot.slane %v2394, 4
      %v2397 = vshll.u32 %v2200, 16
      %v2399 = vrot.slane %v2397, 5
      %v2400 = vsel %vm1597, %v2395, %v2399
      %v2402 = vshrl.u32 %v2177, 16
      %v2404 = vrot.slane %v2402, 4
      %v2405 = vshll.u32 %v2177, 16
      %v2407 = vrot.slane %v2405, 5
      %v2408 = vor.u32 %v2404, %v2407
      %v2409 = vrot.slane %v2408, 4
      %v2411 = vshll.u32 %v2178, 16
      %v2413 = vrot.slane %v2411, 5
      %v2414 = vsel %vm1597, %v2409, %v2413
      %v2415 = vshrl.u32 %v2178, 16
      %v2417 = vrot.slane %v2415, 4
      %v2418 = vor.u32 %v2417, %v2413
      %v2419 = vrot.slane %v2418, 4
      %v2421 = vshll.u32 %v2201, 16
      %v2423 = vrot.slane %v2421, 5
      %v2424 = vsel %vm1597, %v2419, %v2423
      %v2426 = vshrl.u32 %v2179, 16
      %v2428 = vrot.slane %v2426, 4
      %v2429 = vshll.u32 %v2179, 16
      %v2431 = vrot.slane %v2429, 5
      %v2432 = vor.u32 %v2428, %v2431
      %v2433 = vrot.slane %v2432, 4
      %v2435 = vshll.u32 %v2180, 16
      %v2437 = vrot.slane %v2435, 5
      %v2438 = vsel %vm1597, %v2433, %v2437
      %v2439 = vshrl.u32 %v2180, 16
      %v2441 = vrot.slane %v2439, 4
      %v2442 = vor.u32 %v2441, %v2437
      %v2443 = vrot.slane %v2442, 4
      %v2445 = vshll.u32 %v2202, 16
      %v2447 = vrot.slane %v2445, 5
      %v2448 = vsel %vm1597, %v2443, %v2447
      %v2450 = vshrl.u32 %v2181, 16
      %v2452 = vrot.slane %v2450, 4
      %v2453 = vshll.u32 %v2181, 16
      %v2455 = vrot.slane %v2453, 5
      %v2456 = vor.u32 %v2452, %v2455
      %v2457 = vrot.slane %v2456, 4
      %v2459 = vshll.u32 %v2182, 16
      %v2461 = vrot.slane %v2459, 5
      %v2462 = vsel %vm1597, %v2457, %v2461
      %v2463 = vshrl.u32 %v2182, 16
      %v2465 = vrot.slane %v2463, 4
      %v2466 = vor.u32 %v2465, %v2461
      %v2467 = vrot.slane %v2466, 4
      %v2469 = vshll.u32 %v2203, 16
      %v2471 = vrot.slane %v2469, 5
      %v2472 = vsel %vm1597, %v2467, %v2471
      %v2474 = vshrl.u32 %v2183, 16
      %v2476 = vrot.slane %v2474, 4
      %v2477 = vshll.u32 %v2183, 16
      %v2479 = vrot.slane %v2477, 5
      %v2480 = vor.u32 %v2476, %v2479
      %v2481 = vrot.slane %v2480, 4
      %v2483 = vshll.u32 %v2184, 16
      %v2485 = vrot.slane %v2483, 5
      %v2486 = vsel %vm1597, %v2481, %v2485
      %v2487 = vshrl.u32 %v2184, 16
      %v2489 = vrot.slane %v2487, 4
      %v2490 = vor.u32 %v2489, %v2485
      %v2491 = vrot.slane %v2490, 4
      %v2493 = vshll.u32 %v2204, 16
      %v2495 = vrot.slane %v2493, 5
      %v2496 = vsel %vm1597, %v2491, %v2495
      %v2498 = vshrl.u32 %v2185, 16
      %v2500 = vrot.slane %v2498, 4
      %v2501 = vshll.u32 %v2185, 16
      %v2503 = vrot.slane %v2501, 5
      %v2504 = vor.u32 %v2500, %v2503
      %v2505 = vrot.slane %v2504, 4
      %v2507 = vshll.u32 %v2186, 16
      %v2509 = vrot.slane %v2507, 5
      %v2510 = vsel %vm1597, %v2505, %v2509
      %v2511 = vshrl.u32 %v2186, 16
      %v2513 = vrot.slane %v2511, 4
      %v2514 = vor.u32 %v2513, %v2509
      %v2515 = vrot.slane %v2514, 4
      %v2517 = vshll.u32 %v2205, 16
      %v2519 = vrot.slane %v2517, 5
      %v2520 = vsel %vm1597, %v2515, %v2519
      %v2522 = vshrl.u32 %v2187, 16
      %v2524 = vrot.slane %v2522, 4
      %v2525 = vshll.u32 %v2187, 16
      %v2527 = vrot.slane %v2525, 5
      %v2528 = vor.u32 %v2524, %v2527
      %v2529 = vrot.slane %v2528, 4
      %v2531 = vshll.u32 %v2188, 16
      %v2533 = vrot.slane %v2531, 5
      %v2534 = vsel %vm1597, %v2529, %v2533
      %v2535 = vshrl.u32 %v2188, 16
      %v2537 = vrot.slane %v2535, 4
      %v2538 = vor.u32 %v2537, %v2533
      %v2539 = vrot.slane %v2538, 4
      %v2541 = vshll.u32 %v2206, 16
      %v2543 = vrot.slane %v2541, 5
      %v2544 = vsel %vm1597, %v2539, %v2543
      %v2546 = vshrl.u32 %v2189, 16
      %v2548 = vrot.slane %v2546, 4
      %v2549 = vshll.u32 %v2189, 16
      %v2551 = vrot.slane %v2549, 5
      %v2552 = vor.u32 %v2548, %v2551
      %v2553 = vrot.slane %v2552, 4
      %v2555 = vshll.u32 %v2190, 16
      %v2557 = vrot.slane %v2555, 5
      %v2558 = vsel %vm1597, %v2553, %v2557
      %v2559 = vshrl.u32 %v2190, 16
      %v2561 = vrot.slane %v2559, 4
      %v2562 = vor.u32 %v2561, %v2557
      %v2563 = vrot.slane %v2562, 4
      %v2565 = vshll.u32 %v2207, 16
      %v2567 = vrot.slane %v2565, 5
      %v2568 = vsel %vm1597, %v2563, %v2567
      %v2570 = vshrl.u32 %v2191, 16
      %v2572 = vrot.slane %v2570, 4
      %v2573 = vshll.u32 %v2191, 16
      %v2575 = vrot.slane %v2573, 5
      %v2576 = vor.u32 %v2572, %v2575
      %v2577 = vrot.slane %v2576, 4
      %v2579 = vshll.u32 %v2192, 16
      %v2581 = vrot.slane %v2579, 5
      %v2582 = vsel %vm1597, %v2577, %v2581
      %v2583 = vshrl.u32 %v2192, 16
      %v2585 = vrot.slane %v2583, 4
      %v2586 = vor.u32 %v2585, %v2581
      %v2587 = vrot.slane %v2586, 4
      %v2589 = vshll.u32 %v2208, 16
      %v2591 = vrot.slane %v2589, 5
      %v2592 = vsel %vm1597, %v2587, %v2591
      %v2593 = vld [vmem:[%s864] sm:$0xe]
      %v2594 = vld [vmem:[%s864 + $0xc] sm:$0xe]
      %v2595 = vld [vmem:[%s864 + $0x18] sm:$0xe]
      %v2596 = vld [vmem:[%s864 + $0x24] sm:$0xe]
      %v2597 = vld [vmem:[%s864 + $0x30] sm:$0xe]
      %v2598 = vld [vmem:[%s864 + $0x3c] sm:$0xe]
      %v2599 = vld [vmem:[%s864 + $0x48] sm:$0xe]
      %v2600 = vld [vmem:[%s864 + $0x54] sm:$0xe]
      %v2601 = vld [vmem:[%s864 + $0x60] sm:$0xe]
      %v2602 = vld [vmem:[%s864 + $0x6c] sm:$0xe]
      %v2603 = vld [vmem:[%s864 + $0x78] sm:$0xe]
      %v2604 = vld [vmem:[%s864 + $0x84] sm:$0xe]
      %v2605 = vld [vmem:[%s864 + $0x90] sm:$0xe]
      %v2606 = vld [vmem:[%s864 + $0x9c] sm:$0xe]
      %v2607 = vld [vmem:[%s864 + $0xa8] sm:$0xe]
      %v2608 = vld [vmem:[%s864 + $0xb4] sm:$0xe]
      %v2657 = vrot.slane %v2593, 5
      %v2658 = vrot.slane %v2657, 4
      %v2659 = vrot.slane %v2162, 5
      %v2660 = vsel %vm2048, %v2658, %v2659
      %v2661 = vrot.slane %v2659, 4
      %v2662 = vrot.slane %v2193, 5
      %v2663 = vsel %vm2048, %v2661, %v2662
      %v2664 = vrot.slane %v2594, 5
      %v2665 = vrot.slane %v2664, 4
      %v2666 = vrot.slane %v2164, 5
      %v2667 = vsel %vm2048, %v2665, %v2666
      %v2668 = vrot.slane %v2666, 4
      %v2669 = vrot.slane %v2194, 5
      %v2670 = vsel %vm2048, %v2668, %v2669
      %v2671 = vrot.slane %v2595, 5
      %v2672 = vrot.slane %v2671, 4
      %v2673 = vrot.slane %v2166, 5
      %v2674 = vsel %vm2048, %v2672, %v2673
      %v2675 = vrot.slane %v2673, 4
      %v2676 = vrot.slane %v2195, 5
      %v2677 = vsel %vm2048, %v2675, %v2676
      %v2678 = vrot.slane %v2596, 5
      %v2679 = vrot.slane %v2678, 4
      %v2680 = vrot.slane %v2168, 5
      %v2681 = vsel %vm2048, %v2679, %v2680
      %v2682 = vrot.slane %v2680, 4
      %v2683 = vrot.slane %v2196, 5
      %v2684 = vsel %vm2048, %v2682, %v2683
      %v2685 = vrot.slane %v2597, 5
      %v2686 = vrot.slane %v2685, 4
      %v2687 = vrot.slane %v2170, 5
      %v2688 = vsel %vm2048, %v2686, %v2687
      %v2689 = vrot.slane %v2687, 4
      %v2690 = vrot.slane %v2197, 5
      %v2691 = vsel %vm2048, %v2689, %v2690
      %v2692 = vrot.slane %v2598, 5
      %v2693 = vrot.slane %v2692, 4
      %v2694 = vrot.slane %v2172, 5
      %v2695 = vsel %vm2048, %v2693, %v2694
      %v2696 = vrot.slane %v2694, 4
      %v2697 = vrot.slane %v2198, 5
      %v2698 = vsel %vm2048, %v2696, %v2697
      %v2699 = vrot.slane %v2599, 5
      %v2700 = vrot.slane %v2699, 4
      %v2701 = vrot.slane %v2174, 5
      %v2702 = vsel %vm2048, %v2700, %v2701
      %v2703 = vrot.slane %v2701, 4
      %v2704 = vrot.slane %v2199, 5
      %v2705 = vsel %vm2048, %v2703, %v2704
      %v2706 = vrot.slane %v2600, 5
      %v2707 = vrot.slane %v2706, 4
      %v2708 = vrot.slane %v2176, 5
      %v2709 = vsel %vm2048, %v2707, %v2708
      %v2710 = vrot.slane %v2708, 4
      %v2711 = vrot.slane %v2200, 5
      %v2712 = vsel %vm2048, %v2710, %v2711
      %v2713 = vrot.slane %v2601, 5
      %v2714 = vrot.slane %v2713, 4
      %v2715 = vrot.slane %v2178, 5
      %v2716 = vsel %vm2048, %v2714, %v2715
      %v2717 = vrot.slane %v2715, 4
      %v2718 = vrot.slane %v2201, 5
      %v2719 = vsel %vm2048, %v2717, %v2718
      %v2720 = vrot.slane %v2602, 5
      %v2721 = vrot.slane %v2720, 4
      %v2722 = vrot.slane %v2180, 5
      %v2723 = vsel %vm2048, %v2721, %v2722
      %v2724 = vrot.slane %v2722, 4
      %v2725 = vrot.slane %v2202, 5
      %v2726 = vsel %vm2048, %v2724, %v2725
      %v2727 = vrot.slane %v2603, 5
      %v2728 = vrot.slane %v2727, 4
      %v2729 = vrot.slane %v2182, 5
      %v2730 = vsel %vm2048, %v2728, %v2729
      %v2731 = vrot.slane %v2729, 4
      %v2732 = vrot.slane %v2203, 5
      %v2733 = vsel %vm2048, %v2731, %v2732
      %v2734 = vrot.slane %v2604, 5
      %v2735 = vrot.slane %v2734, 4
      %v2736 = vrot.slane %v2184, 5
      %v2737 = vsel %vm2048, %v2735, %v2736
      %v2738 = vrot.slane %v2736, 4
      %v2739 = vrot.slane %v2204, 5
      %v2740 = vsel %vm2048, %v2738, %v2739
      %v2741 = vrot.slane %v2605, 5
      %v2742 = vrot.slane %v2741, 4
      %v2743 = vrot.slane %v2186, 5
      %v2744 = vsel %vm2048, %v2742, %v2743
      %v2745 = vrot.slane %v2743, 4
      %v2746 = vrot.slane %v2205, 5
      %v2747 = vsel %vm2048, %v2745, %v2746
      %v2748 = vrot.slane %v2606, 5
      %v2749 = vrot.slane %v2748, 4
      %v2750 = vrot.slane %v2188, 5
      %v2751 = vsel %vm2048, %v2749, %v2750
      %v2752 = vrot.slane %v2750, 4
      %v2753 = vrot.slane %v2206, 5
      %v2754 = vsel %vm2048, %v2752, %v2753
      %v2755 = vrot.slane %v2607, 5
      %v2756 = vrot.slane %v2755, 4
      %v2757 = vrot.slane %v2190, 5
      %v2758 = vsel %vm2048, %v2756, %v2757
      %v2759 = vrot.slane %v2757, 4
      %v2760 = vrot.slane %v2207, 5
      %v2761 = vsel %vm2048, %v2759, %v2760
      %v2762 = vrot.slane %v2608, 5
      %v2763 = vrot.slane %v2762, 4
      %v2764 = vrot.slane %v2192, 5
      %v2765 = vsel %vm2048, %v2763, %v2764
      %v2766 = vrot.slane %v2764, 4
      %v2767 = vrot.slane %v2208, 5
      %v2768 = vsel %vm2048, %v2766, %v2767
      %s2769 = scalar_lea.vmem [#allocation2], 24
      %v2770 = vld [vmem:[%s2769] sm:$0xf]
      %v2771 = vld [vmem:[%s2769 + $0x4] sm:$0xf]
      %v2772 = vld [vmem:[%s2769 + $0xc] sm:$0xf]
      %v2773 = vld [vmem:[%s2769 + $0x10] sm:$0xf]
      %v2774 = vld [vmem:[%s2769 + $0x18] sm:$0xf]
      %v2775 = vld [vmem:[%s2769 + $0x1c] sm:$0xf]
      %v2776 = vld [vmem:[%s2769 + $0x24] sm:$0xf]
      %v2777 = vld [vmem:[%s2769 + $0x28] sm:$0xf]
      %v2778 = vld [vmem:[%s2769 + $0x30] sm:$0xf]
      %v2779 = vld [vmem:[%s2769 + $0x34] sm:$0xf]
      %v2780 = vld [vmem:[%s2769 + $0x3c] sm:$0xf]
      %v2781 = vld [vmem:[%s2769 + $0x40] sm:$0xf]
      %v2782 = vld [vmem:[%s2769 + $0x48] sm:$0xf]
      %v2783 = vld [vmem:[%s2769 + $0x4c] sm:$0xf]
      %v2784 = vld [vmem:[%s2769 + $0x54] sm:$0xf]
      %v2785 = vld [vmem:[%s2769 + $0x58] sm:$0xf]
      %v2786 = vld [vmem:[%s2769 + $0x60] sm:$0xf]
      %v2787 = vld [vmem:[%s2769 + $0x64] sm:$0xf]
      %v2788 = vld [vmem:[%s2769 + $0x6c] sm:$0xf]
      %v2789 = vld [vmem:[%s2769 + $0x70] sm:$0xf]
      %v2790 = vld [vmem:[%s2769 + $0x78] sm:$0xf]
      %v2791 = vld [vmem:[%s2769 + $0x7c] sm:$0xf]
      %v2792 = vld [vmem:[%s2769 + $0x84] sm:$0xf]
      %v2793 = vld [vmem:[%s2769 + $0x88] sm:$0xf]
      %v2794 = vld [vmem:[%s2769 + $0x90] sm:$0xf]
      %v2795 = vld [vmem:[%s2769 + $0x94] sm:$0xf]
      %v2796 = vld [vmem:[%s2769 + $0x9c] sm:$0xf]
      %v2797 = vld [vmem:[%s2769 + $0xa0] sm:$0xf]
      %v2798 = vld [vmem:[%s2769 + $0xa8] sm:$0xf]
      %v2799 = vld [vmem:[%s2769 + $0xac] sm:$0xf]
      %v2800 = vld [vmem:[%s2769 + $0xb4] sm:$0xf]
      %v2801 = vld [vmem:[%s2769 + $0xb8] sm:$0xf]
      %v2802 = vld [vmem:[%s2769 + $0x8] sm:$0x1]
      %v2803 = vld [vmem:[%s2769 + $0x14] sm:$0x1]
      %v2804 = vld [vmem:[%s2769 + $0x20] sm:$0x1]
      %v2805 = vld [vmem:[%s2769 + $0x2c] sm:$0x1]
      %v2806 = vld [vmem:[%s2769 + $0x38] sm:$0x1]
      %v2807 = vld [vmem:[%s2769 + $0x44] sm:$0x1]
      %v2808 = vld [vmem:[%s2769 + $0x50] sm:$0x1]
      %v2809 = vld [vmem:[%s2769 + $0x5c] sm:$0x1]
      %v2810 = vld [vmem:[%s2769 + $0x68] sm:$0x1]
      %v2811 = vld [vmem:[%s2769 + $0x74] sm:$0x1]
      %v2812 = vld [vmem:[%s2769 + $0x80] sm:$0x1]
      %v2813 = vld [vmem:[%s2769 + $0x8c] sm:$0x1]
      %v2814 = vld [vmem:[%s2769 + $0x98] sm:$0x1]
      %v2815 = vld [vmem:[%s2769 + $0xa4] sm:$0x1]
      %v2816 = vld [vmem:[%s2769 + $0xb0] sm:$0x1]
      %v2817 = vld [vmem:[%s2769 + $0xbc] sm:$0x1]
      %v2819 = vshrl.u32 %v2770, 16
      %v2821 = vrot.slane %v2819, 4
      %v2822 = vshll.u32 %v2770, 16
      %v2824 = vrot.slane %v2822, 5
      %v2825 = vor.u32 %v2821, %v2824
      %v2826 = vrot.slane %v2825, 4
      %v2828 = vshll.u32 %v2771, 16
      %v2830 = vrot.slane %v2828, 5
      %v2831 = vsel %vm1597, %v2826, %v2830
      %v2832 = vshrl.u32 %v2771, 16
      %v2834 = vrot.slane %v2832, 4
      %v2835 = vor.u32 %v2834, %v2830
      %v2836 = vrot.slane %v2835, 4
      %v2838 = vshll.u32 %v2802, 16
      %v2840 = vrot.slane %v2838, 5
      %v2841 = vsel %vm1597, %v2836, %v2840
      %v2843 = vshrl.u32 %v2772, 16
      %v2845 = vrot.slane %v2843, 4
      %v2846 = vshll.u32 %v2772, 16
      %v2848 = vrot.slane %v2846, 5
      %v2849 = vor.u32 %v2845, %v2848
      %v2850 = vrot.slane %v2849, 4
      %v2852 = vshll.u32 %v2773, 16
      %v2854 = vrot.slane %v2852, 5
      %v2855 = vsel %vm1597, %v2850, %v2854
      %v2856 = vshrl.u32 %v2773, 16
      %v2858 = vrot.slane %v2856, 4
      %v2859 = vor.u32 %v2858, %v2854
      %v2860 = vrot.slane %v2859, 4
      %v2862 = vshll.u32 %v2803, 16
      %v2864 = vrot.slane %v2862, 5
      %v2865 = vsel %vm1597, %v2860, %v2864
      %v2867 = vshrl.u32 %v2774, 16
      %v2869 = vrot.slane %v2867, 4
      %v2870 = vshll.u32 %v2774, 16
      %v2872 = vrot.slane %v2870, 5
      %v2873 = vor.u32 %v2869, %v2872
      %v2874 = vrot.slane %v2873, 4
      %v2876 = vshll.u32 %v2775, 16
      %v2878 = vrot.slane %v2876, 5
      %v2879 = vsel %vm1597, %v2874, %v2878
      %v2880 = vshrl.u32 %v2775, 16
      %v2882 = vrot.slane %v2880, 4
      %v2883 = vor.u32 %v2882, %v2878
      %v2884 = vrot.slane %v2883, 4
      %v2886 = vshll.u32 %v2804, 16
      %v2888 = vrot.slane %v2886, 5
      %v2889 = vsel %vm1597, %v2884, %v2888
      %v2891 = vshrl.u32 %v2776, 16
      %v2893 = vrot.slane %v2891, 4
      %v2894 = vshll.u32 %v2776, 16
      %v2896 = vrot.slane %v2894, 5
      %v2897 = vor.u32 %v2893, %v2896
      %v2898 = vrot.slane %v2897, 4
      %v2900 = vshll.u32 %v2777, 16
      %v2902 = vrot.slane %v2900, 5
      %v2903 = vsel %vm1597, %v2898, %v2902
      %v2904 = vshrl.u32 %v2777, 16
      %v2906 = vrot.slane %v2904, 4
      %v2907 = vor.u32 %v2906, %v2902
      %v2908 = vrot.slane %v2907, 4
      %v2910 = vshll.u32 %v2805, 16
      %v2912 = vrot.slane %v2910, 5
      %v2913 = vsel %vm1597, %v2908, %v2912
      %v2915 = vshrl.u32 %v2778, 16
      %v2917 = vrot.slane %v2915, 4
      %v2918 = vshll.u32 %v2778, 16
      %v2920 = vrot.slane %v2918, 5
      %v2921 = vor.u32 %v2917, %v2920
      %v2922 = vrot.slane %v2921, 4
      %v2924 = vshll.u32 %v2779, 16
      %v2926 = vrot.slane %v2924, 5
      %v2927 = vsel %vm1597, %v2922, %v2926
      %v2928 = vshrl.u32 %v2779, 16
      %v2930 = vrot.slane %v2928, 4
      %v2931 = vor.u32 %v2930, %v2926
      %v2932 = vrot.slane %v2931, 4
      %v2934 = vshll.u32 %v2806, 16
      %v2936 = vrot.slane %v2934, 5
      %v2937 = vsel %vm1597, %v2932, %v2936
      %v2939 = vshrl.u32 %v2780, 16
      %v2941 = vrot.slane %v2939, 4
      %v2942 = vshll.u32 %v2780, 16
      %v2944 = vrot.slane %v2942, 5
      %v2945 = vor.u32 %v2941, %v2944
      %v2946 = vrot.slane %v2945, 4
      %v2948 = vshll.u32 %v2781, 16
      %v2950 = vrot.slane %v2948, 5
      %v2951 = vsel %vm1597, %v2946, %v2950
      %v2952 = vshrl.u32 %v2781, 16
      %v2954 = vrot.slane %v2952, 4
      %v2955 = vor.u32 %v2954, %v2950
      %v2956 = vrot.slane %v2955, 4
      %v2958 = vshll.u32 %v2807, 16
      %v2960 = vrot.slane %v2958, 5
      %v2961 = vsel %vm1597, %v2956, %v2960
      %v2963 = vshrl.u32 %v2782, 16
      %v2965 = vrot.slane %v2963, 4
      %v2966 = vshll.u32 %v2782, 16
      %v2968 = vrot.slane %v2966, 5
      %v2969 = vor.u32 %v2965, %v2968
      %v2970 = vrot.slane %v2969, 4
      %v2972 = vshll.u32 %v2783, 16
      %v2974 = vrot.slane %v2972, 5
      %v2975 = vsel %vm1597, %v2970, %v2974
      %v2976 = vshrl.u32 %v2783, 16
      %v2978 = vrot.slane %v2976, 4
      %v2979 = vor.u32 %v2978, %v2974
      %v2980 = vrot.slane %v2979, 4
      %v2982 = vshll.u32 %v2808, 16
      %v2984 = vrot.slane %v2982, 5
      %v2985 = vsel %vm1597, %v2980, %v2984
      %v2987 = vshrl.u32 %v2784, 16
      %v2989 = vrot.slane %v2987, 4
      %v2990 = vshll.u32 %v2784, 16
      %v2992 = vrot.slane %v2990, 5
      %v2993 = vor.u32 %v2989, %v2992
      %v2994 = vrot.slane %v2993, 4
      %v2996 = vshll.u32 %v2785, 16
      %v2998 = vrot.slane %v2996, 5
      %v2999 = vsel %vm1597, %v2994, %v2998
      %v3000 = vshrl.u32 %v2785, 16
      %v3002 = vrot.slane %v3000, 4
      %v3003 = vor.u32 %v3002, %v2998
      %v3004 = vrot.slane %v3003, 4
      %v3006 = vshll.u32 %v2809, 16
      %v3008 = vrot.slane %v3006, 5
      %v3009 = vsel %vm1597, %v3004, %v3008
      %v3011 = vshrl.u32 %v2786, 16
      %v3013 = vrot.slane %v3011, 4
      %v3014 = vshll.u32 %v2786, 16
      %v3016 = vrot.slane %v3014, 5
      %v3017 = vor.u32 %v3013, %v3016
      %v3018 = vrot.slane %v3017, 4
      %v3020 = vshll.u32 %v2787, 16
      %v3022 = vrot.slane %v3020, 5
      %v3023 = vsel %vm1597, %v3018, %v3022
      %v3024 = vshrl.u32 %v2787, 16
      %v3026 = vrot.slane %v3024, 4
      %v3027 = vor.u32 %v3026, %v3022
      %v3028 = vrot.slane %v3027, 4
      %v3030 = vshll.u32 %v2810, 16
      %v3032 = vrot.slane %v3030, 5
      %v3033 = vsel %vm1597, %v3028, %v3032
      %v3035 = vshrl.u32 %v2788, 16
      %v3037 = vrot.slane %v3035, 4
      %v3038 = vshll.u32 %v2788, 16
      %v3040 = vrot.slane %v3038, 5
      %v3041 = vor.u32 %v3037, %v3040
      %v3042 = vrot.slane %v3041, 4
      %v3044 = vshll.u32 %v2789, 16
      %v3046 = vrot.slane %v3044, 5
      %v3047 = vsel %vm1597, %v3042, %v3046
      %v3048 = vshrl.u32 %v2789, 16
      %v3050 = vrot.slane %v3048, 4
      %v3051 = vor.u32 %v3050, %v3046
      %v3052 = vrot.slane %v3051, 4
      %v3054 = vshll.u32 %v2811, 16
      %v3056 = vrot.slane %v3054, 5
      %v3057 = vsel %vm1597, %v3052, %v3056
      %v3059 = vshrl.u32 %v2790, 16
      %v3061 = vrot.slane %v3059, 4
      %v3062 = vshll.u32 %v2790, 16
      %v3064 = vrot.slane %v3062, 5
      %v3065 = vor.u32 %v3061, %v3064
      %v3066 = vrot.slane %v3065, 4
      %v3068 = vshll.u32 %v2791, 16
      %v3070 = vrot.slane %v3068, 5
      %v3071 = vsel %vm1597, %v3066, %v3070
      %v3072 = vshrl.u32 %v2791, 16
      %v3074 = vrot.slane %v3072, 4
      %v3075 = vor.u32 %v3074, %v3070
      %v3076 = vrot.slane %v3075, 4
      %v3078 = vshll.u32 %v2812, 16
      %v3080 = vrot.slane %v3078, 5
      %v3081 = vsel %vm1597, %v3076, %v3080
      %v3083 = vshrl.u32 %v2792, 16
      %v3085 = vrot.slane %v3083, 4
      %v3086 = vshll.u32 %v2792, 16
      %v3088 = vrot.slane %v3086, 5
      %v3089 = vor.u32 %v3085, %v3088
      %v3090 = vrot.slane %v3089, 4
      %v3092 = vshll.u32 %v2793, 16
      %v3094 = vrot.slane %v3092, 5
      %v3095 = vsel %vm1597, %v3090, %v3094
      %v3096 = vshrl.u32 %v2793, 16
      %v3098 = vrot.slane %v3096, 4
      %v3099 = vor.u32 %v3098, %v3094
      %v3100 = vrot.slane %v3099, 4
      %v3102 = vshll.u32 %v2813, 16
      %v3104 = vrot.slane %v3102, 5
      %v3105 = vsel %vm1597, %v3100, %v3104
      %v3107 = vshrl.u32 %v2794, 16
      %v3109 = vrot.slane %v3107, 4
      %v3110 = vshll.u32 %v2794, 16
      %v3112 = vrot.slane %v3110, 5
      %v3113 = vor.u32 %v3109, %v3112
      %v3114 = vrot.slane %v3113, 4
      %v3116 = vshll.u32 %v2795, 16
      %v3118 = vrot.slane %v3116, 5
      %v3119 = vsel %vm1597, %v3114, %v3118
      %v3120 = vshrl.u32 %v2795, 16
      %v3122 = vrot.slane %v3120, 4
      %v3123 = vor.u32 %v3122, %v3118
      %v3124 = vrot.slane %v3123, 4
      %v3126 = vshll.u32 %v2814, 16
      %v3128 = vrot.slane %v3126, 5
      %v3129 = vsel %vm1597, %v3124, %v3128
      %v3131 = vshrl.u32 %v2796, 16
      %v3133 = vrot.slane %v3131, 4
      %v3134 = vshll.u32 %v2796, 16
      %v3136 = vrot.slane %v3134, 5
      %v3137 = vor.u32 %v3133, %v3136
      %v3138 = vrot.slane %v3137, 4
      %v3140 = vshll.u32 %v2797, 16
      %v3142 = vrot.slane %v3140, 5
      %v3143 = vsel %vm1597, %v3138, %v3142
      %v3144 = vshrl.u32 %v2797, 16
      %v3146 = vrot.slane %v3144, 4
      %v3147 = vor.u32 %v3146, %v3142
      %v3148 = vrot.slane %v3147, 4
      %v3150 = vshll.u32 %v2815, 16
      %v3152 = vrot.slane %v3150, 5
      %v3153 = vsel %vm1597, %v3148, %v3152
      %v3155 = vshrl.u32 %v2798, 16
      %v3157 = vrot.slane %v3155, 4
      %v3158 = vshll.u32 %v2798, 16
      %v3160 = vrot.slane %v3158, 5
      %v3161 = vor.u32 %v3157, %v3160
      %v3162 = vrot.slane %v3161, 4
      %v3164 = vshll.u32 %v2799, 16
      %v3166 = vrot.slane %v3164, 5
      %v3167 = vsel %vm1597, %v3162, %v3166
      %v3168 = vshrl.u32 %v2799, 16
      %v3170 = vrot.slane %v3168, 4
      %v3171 = vor.u32 %v3170, %v3166
      %v3172 = vrot.slane %v3171, 4
      %v3174 = vshll.u32 %v2816, 16
      %v3176 = vrot.slane %v3174, 5
      %v3177 = vsel %vm1597, %v3172, %v3176
      %v3179 = vshrl.u32 %v2800, 16
      %v3181 = vrot.slane %v3179, 4
      %v3182 = vshll.u32 %v2800, 16
      %v3184 = vrot.slane %v3182, 5
      %v3185 = vor.u32 %v3181, %v3184
      %v3186 = vrot.slane %v3185, 4
      %v3188 = vshll.u32 %v2801, 16
      %v3190 = vrot.slane %v3188, 5
      %v3191 = vsel %vm1597, %v3186, %v3190
      %v3192 = vshrl.u32 %v2801, 16
      %v3194 = vrot.slane %v3192, 4
      %v3195 = vor.u32 %v3194, %v3190
      %v3196 = vrot.slane %v3195, 4
      %v3198 = vshll.u32 %v2817, 16
      %v3200 = vrot.slane %v3198, 5
      %v3201 = vsel %vm1597, %v3196, %v3200
      %v3202 = vld [vmem:[%s2769] sm:$0xe]
      %v3203 = vld [vmem:[%s2769 + $0xc] sm:$0xe]
      %v3204 = vld [vmem:[%s2769 + $0x18] sm:$0xe]
      %v3205 = vld [vmem:[%s2769 + $0x24] sm:$0xe]
      %v3206 = vld [vmem:[%s2769 + $0x30] sm:$0xe]
      %v3207 = vld [vmem:[%s2769 + $0x3c] sm:$0xe]
      %v3208 = vld [vmem:[%s2769 + $0x48] sm:$0xe]
      %v3209 = vld [vmem:[%s2769 + $0x54] sm:$0xe]
      %v3210 = vld [vmem:[%s2769 + $0x60] sm:$0xe]
      %v3211 = vld [vmem:[%s2769 + $0x6c] sm:$0xe]
      %v3212 = vld [vmem:[%s2769 + $0x78] sm:$0xe]
      %v3213 = vld [vmem:[%s2769 + $0x84] sm:$0xe]
      %v3214 = vld [vmem:[%s2769 + $0x90] sm:$0xe]
      %v3215 = vld [vmem:[%s2769 + $0x9c] sm:$0xe]
      %v3216 = vld [vmem:[%s2769 + $0xa8] sm:$0xe]
      %v3217 = vld [vmem:[%s2769 + $0xb4] sm:$0xe]
      %v3266 = vrot.slane %v3202, 5
      %v3267 = vrot.slane %v3266, 4
      %v3268 = vrot.slane %v2771, 5
      %v3269 = vsel %vm2048, %v3267, %v3268
      %v3270 = vrot.slane %v3268, 4
      %v3271 = vrot.slane %v2802, 5
      %v3272 = vsel %vm2048, %v3270, %v3271
      %v3273 = vrot.slane %v3203, 5
      %v3274 = vrot.slane %v3273, 4
      %v3275 = vrot.slane %v2773, 5
      %v3276 = vsel %vm2048, %v3274, %v3275
      %v3277 = vrot.slane %v3275, 4
      %v3278 = vrot.slane %v2803, 5
      %v3279 = vsel %vm2048, %v3277, %v3278
      %v3280 = vrot.slane %v3204, 5
      %v3281 = vrot.slane %v3280, 4
      %v3282 = vrot.slane %v2775, 5
      %v3283 = vsel %vm2048, %v3281, %v3282
      %v3284 = vrot.slane %v3282, 4
      %v3285 = vrot.slane %v2804, 5
      %v3286 = vsel %vm2048, %v3284, %v3285
      %v3287 = vrot.slane %v3205, 5
      %v3288 = vrot.slane %v3287, 4
      %v3289 = vrot.slane %v2777, 5
      %v3290 = vsel %vm2048, %v3288, %v3289
      %v3291 = vrot.slane %v3289, 4
      %v3292 = vrot.slane %v2805, 5
      %v3293 = vsel %vm2048, %v3291, %v3292
      %v3294 = vrot.slane %v3206, 5
      %v3295 = vrot.slane %v3294, 4
      %v3296 = vrot.slane %v2779, 5
      %v3297 = vsel %vm2048, %v3295, %v3296
      %v3298 = vrot.slane %v3296, 4
      %v3299 = vrot.slane %v2806, 5
      %v3300 = vsel %vm2048, %v3298, %v3299
      %v3301 = vrot.slane %v3207, 5
      %v3302 = vrot.slane %v3301, 4
      %v3303 = vrot.slane %v2781, 5
      %v3304 = vsel %vm2048, %v3302, %v3303
      %v3305 = vrot.slane %v3303, 4
      %v3306 = vrot.slane %v2807, 5
      %v3307 = vsel %vm2048, %v3305, %v3306
      %v3308 = vrot.slane %v3208, 5
      %v3309 = vrot.slane %v3308, 4
      %v3310 = vrot.slane %v2783, 5
      %v3311 = vsel %vm2048, %v3309, %v3310
      %v3312 = vrot.slane %v3310, 4
      %v3313 = vrot.slane %v2808, 5
      %v3314 = vsel %vm2048, %v3312, %v3313
      %v3315 = vrot.slane %v3209, 5
      %v3316 = vrot.slane %v3315, 4
      %v3317 = vrot.slane %v2785, 5
      %v3318 = vsel %vm2048, %v3316, %v3317
      %v3319 = vrot.slane %v3317, 4
      %v3320 = vrot.slane %v2809, 5
      %v3321 = vsel %vm2048, %v3319, %v3320
      %v3322 = vrot.slane %v3210, 5
      %v3323 = vrot.slane %v3322, 4
      %v3324 = vrot.slane %v2787, 5
      %v3325 = vsel %vm2048, %v3323, %v3324
      %v3326 = vrot.slane %v3324, 4
      %v3327 = vrot.slane %v2810, 5
      %v3328 = vsel %vm2048, %v3326, %v3327
      %v3329 = vrot.slane %v3211, 5
      %v3330 = vrot.slane %v3329, 4
      %v3331 = vrot.slane %v2789, 5
      %v3332 = vsel %vm2048, %v3330, %v3331
      %v3333 = vrot.slane %v3331, 4
      %v3334 = vrot.slane %v2811, 5
      %v3335 = vsel %vm2048, %v3333, %v3334
      %v3336 = vrot.slane %v3212, 5
      %v3337 = vrot.slane %v3336, 4
      %v3338 = vrot.slane %v2791, 5
      %v3339 = vsel %vm2048, %v3337, %v3338
      %v3340 = vrot.slane %v3338, 4
      %v3341 = vrot.slane %v2812, 5
      %v3342 = vsel %vm2048, %v3340, %v3341
      %v3343 = vrot.slane %v3213, 5
      %v3344 = vrot.slane %v3343, 4
      %v3345 = vrot.slane %v2793, 5
      %v3346 = vsel %vm2048, %v3344, %v3345
      %v3347 = vrot.slane %v3345, 4
      %v3348 = vrot.slane %v2813, 5
      %v3349 = vsel %vm2048, %v3347, %v3348
      %v3350 = vrot.slane %v3214, 5
      %v3351 = vrot.slane %v3350, 4
      %v3352 = vrot.slane %v2795, 5
      %v3353 = vsel %vm2048, %v3351, %v3352
      %v3354 = vrot.slane %v3352, 4
      %v3355 = vrot.slane %v2814, 5
      %v3356 = vsel %vm2048, %v3354, %v3355
      %v3357 = vrot.slane %v3215, 5
      %v3358 = vrot.slane %v3357, 4
      %v3359 = vrot.slane %v2797, 5
      %v3360 = vsel %vm2048, %v3358, %v3359
      %v3361 = vrot.slane %v3359, 4
      %v3362 = vrot.slane %v2815, 5
      %v3363 = vsel %vm2048, %v3361, %v3362
      %v3364 = vrot.slane %v3216, 5
      %v3365 = vrot.slane %v3364, 4
      %v3366 = vrot.slane %v2799, 5
      %v3367 = vsel %vm2048, %v3365, %v3366
      %v3368 = vrot.slane %v3366, 4
      %v3369 = vrot.slane %v2816, 5
      %v3370 = vsel %vm2048, %v3368, %v3369
      %v3371 = vrot.slane %v3217, 5
      %v3372 = vrot.slane %v3371, 4
      %v3373 = vrot.slane %v2801, 5
      %v3374 = vsel %vm2048, %v3372, %v3373
      %v3375 = vrot.slane %v3373, 4
      %v3376 = vrot.slane %v2817, 5
      %v3377 = vsel %vm2048, %v3375, %v3376
      %v3394 = vunpack.c.l.b16 %v1547
      %v3395 = vunpack.c.l.b16 %v1548
      %v3396 = vunpack.c.l.b16 %v1549
      %v3397 = vunpack.c.l.b16 %v1550
      %v3398 = vunpack.c.l.b16 %v1551
      %v3399 = vunpack.c.l.b16 %v1552
      %v3400 = vunpack.c.l.b16 %v1553
      %v3401 = vunpack.c.l.b16 %v1554
      %v3402 = vunpack.c.l.b16 %v1555
      %v3403 = vunpack.c.l.b16 %v1556
      %v3404 = vunpack.c.l.b16 %v1557
      %v3405 = vunpack.c.l.b16 %v1558
      %v3406 = vunpack.c.l.b16 %v1559
      %v3407 = vunpack.c.l.b16 %v1560
      %v3408 = vunpack.c.l.b16 %v1561
      %v3409 = vunpack.c.l.b16 %v1562
      %v3410 = vunpack.c.l.b16 %v1563
      %v3411 = vunpack.c.l.b16 %v1564
      %v3412 = vunpack.c.l.b16 %v1565
      %v3413 = vunpack.c.l.b16 %v1566
      %v3414 = vunpack.c.l.b16 %v1567
      %v3415 = vunpack.c.l.b16 %v1568
      %v3416 = vunpack.c.l.b16 %v1569
      %v3417 = vunpack.c.l.b16 %v1570
      %v3418 = vunpack.c.l.b16 %v1571
      %v3419 = vunpack.c.l.b16 %v1572
      %v3420 = vunpack.c.l.b16 %v1573
      %v3421 = vunpack.c.l.b16 %v1574
      %v3422 = vunpack.c.l.b16 %v1575
      %v3423 = vunpack.c.l.b16 %v1576
      %v3424 = vunpack.c.l.b16 %v1577
      %v3425 = vunpack.c.l.b16 %v1578
      %v3426 = vpack.c.b16 %v3395, %v3394
      %v3427 = vpack.c.b16 %v3397, %v3396
      %v3428 = vpack.c.b16 %v3399, %v3398
      %v3429 = vpack.c.b16 %v3401, %v3400
      %v3430 = vpack.c.b16 %v3403, %v3402
      %v3431 = vpack.c.b16 %v3405, %v3404
      %v3432 = vpack.c.b16 %v3407, %v3406
      %v3433 = vpack.c.b16 %v3409, %v3408
      %v3434 = vpack.c.b16 %v3411, %v3410
      %v3435 = vpack.c.b16 %v3413, %v3412
      %v3436 = vpack.c.b16 %v3415, %v3414
      %v3437 = vpack.c.b16 %v3417, %v3416
      %v3438 = vpack.c.b16 %v3419, %v3418
      %v3439 = vpack.c.b16 %v3421, %v3420
      %v3440 = vpack.c.b16 %v3423, %v3422
      %v3441 = vpack.c.b16 %v3425, %v3424
      %v3442 = vunpack.c.l.b16 %v1611
      %v3443 = vunpack.c.l.b16 %v1621
      %v3444 = vunpack.c.l.b16 %v1635
      %v3445 = vunpack.c.l.b16 %v1645
      %v3446 = vunpack.c.l.b16 %v1659
      %v3447 = vunpack.c.l.b16 %v1669
      %v3448 = vunpack.c.l.b16 %v1683
      %v3449 = vunpack.c.l.b16 %v1693
      %v3450 = vunpack.c.l.b16 %v1707
      %v3451 = vunpack.c.l.b16 %v1717
      %v3452 = vunpack.c.l.b16 %v1731
      %v3453 = vunpack.c.l.b16 %v1741
      %v3454 = vunpack.c.l.b16 %v1755
      %v3455 = vunpack.c.l.b16 %v1765
      %v3456 = vunpack.c.l.b16 %v1779
      %v3457 = vunpack.c.l.b16 %v1789
      %v3458 = vunpack.c.l.b16 %v1803
      %v3459 = vunpack.c.l.b16 %v1813
      %v3460 = vunpack.c.l.b16 %v1827
      %v3461 = vunpack.c.l.b16 %v1837
      %v3462 = vunpack.c.l.b16 %v1851
      %v3463 = vunpack.c.l.b16 %v1861
      %v3464 = vunpack.c.l.b16 %v1875
      %v3465 = vunpack.c.l.b16 %v1885
      %v3466 = vunpack.c.l.b16 %v1899
      %v3467 = vunpack.c.l.b16 %v1909
      %v3468 = vunpack.c.l.b16 %v1923
      %v3469 = vunpack.c.l.b16 %v1933
      %v3470 = vunpack.c.l.b16 %v1947
      %v3471 = vunpack.c.l.b16 %v1957
      %v3472 = vunpack.c.l.b16 %v1971
      %v3473 = vunpack.c.l.b16 %v1981
      %v3474 = vpack.c.b16 %v3443, %v3442
      %v3475 = vpack.c.b16 %v3445, %v3444
      %v3476 = vpack.c.b16 %v3447, %v3446
      %v3477 = vpack.c.b16 %v3449, %v3448
      %v3478 = vpack.c.b16 %v3451, %v3450
      %v3479 = vpack.c.b16 %v3453, %v3452
      %v3480 = vpack.c.b16 %v3455, %v3454
      %v3481 = vpack.c.b16 %v3457, %v3456
      %v3482 = vpack.c.b16 %v3459, %v3458
      %v3483 = vpack.c.b16 %v3461, %v3460
      %v3484 = vpack.c.b16 %v3463, %v3462
      %v3485 = vpack.c.b16 %v3465, %v3464
      %v3486 = vpack.c.b16 %v3467, %v3466
      %v3487 = vpack.c.b16 %v3469, %v3468
      %v3488 = vpack.c.b16 %v3471, %v3470
      %v3489 = vpack.c.b16 %v3473, %v3472
      %3490 = vrot.lane.b32.xlu0 %v3474, 8
      %v3491 = vpop.permute.xlu0 %3490
      %3492 = vrot.lane.b32.xlu0 %v3475, 8
      %v3493 = vpop.permute.xlu0 %3492
      %3494 = vrot.lane.b32.xlu0 %v3476, 8
      %v3495 = vpop.permute.xlu0 %3494
      %3496 = vrot.lane.b32.xlu0 %v3477, 8
      %v3497 = vpop.permute.xlu0 %3496
      %3498 = vrot.lane.b32.xlu0 %v3478, 8
      %v3499 = vpop.permute.xlu0 %3498
      %3500 = vrot.lane.b32.xlu0 %v3479, 8
      %v3501 = vpop.permute.xlu0 %3500
      %3502 = vrot.lane.b32.xlu0 %v3480, 8
      %v3503 = vpop.permute.xlu0 %3502
      %3504 = vrot.lane.b32.xlu0 %v3481, 8
      %v3505 = vpop.permute.xlu0 %3504
      %3506 = vrot.lane.b32.xlu0 %v3482, 8
      %v3507 = vpop.permute.xlu0 %3506
      %3508 = vrot.lane.b32.xlu0 %v3483, 8
      %v3509 = vpop.permute.xlu0 %3508
      %3510 = vrot.lane.b32.xlu0 %v3484, 8
      %v3511 = vpop.permute.xlu0 %3510
      %3512 = vrot.lane.b32.xlu0 %v3485, 8
      %v3513 = vpop.permute.xlu0 %3512
      %3514 = vrot.lane.b32.xlu0 %v3486, 8
      %v3515 = vpop.permute.xlu0 %3514
      %3516 = vrot.lane.b32.xlu0 %v3487, 8
      %v3517 = vpop.permute.xlu0 %3516
      %3518 = vrot.lane.b32.xlu0 %v3488, 8
      %v3519 = vpop.permute.xlu0 %3518
      %3520 = vrot.lane.b32.xlu0 %v3489, 8
      %v3521 = vpop.permute.xlu0 %3520
      %v3522 = vunpack.c.l.b16 %v2052
      %v3523 = vunpack.c.l.b16 %v2055
      %v3524 = vunpack.c.l.b16 %v2059
      %v3525 = vunpack.c.l.b16 %v2062
      %v3526 = vunpack.c.l.b16 %v2066
      %v3527 = vunpack.c.l.b16 %v2069
      %v3528 = vunpack.c.l.b16 %v2073
      %v3529 = vunpack.c.l.b16 %v2076
      %v3530 = vunpack.c.l.b16 %v2080
      %v3531 = vunpack.c.l.b16 %v2083
      %v3532 = vunpack.c.l.b16 %v2087
      %v3533 = vunpack.c.l.b16 %v2090
      %v3534 = vunpack.c.l.b16 %v2094
      %v3535 = vunpack.c.l.b16 %v2097
      %v3536 = vunpack.c.l.b16 %v2101
      %v3537 = vunpack.c.l.b16 %v2104
      %v3538 = vunpack.c.l.b16 %v2108
      %v3539 = vunpack.c.l.b16 %v2111
      %v3540 = vunpack.c.l.b16 %v2115
      %v3541 = vunpack.c.l.b16 %v2118
      %v3542 = vunpack.c.l.b16 %v2122
      %v3543 = vunpack.c.l.b16 %v2125
      %v3544 = vunpack.c.l.b16 %v2129
      %v3545 = vunpack.c.l.b16 %v2132
      %v3546 = vunpack.c.l.b16 %v2136
      %v3547 = vunpack.c.l.b16 %v2139
      %v3548 = vunpack.c.l.b16 %v2143
      %v3549 = vunpack.c.l.b16 %v2146
      %v3550 = vunpack.c.l.b16 %v2150
      %v3551 = vunpack.c.l.b16 %v2153
      %v3552 = vunpack.c.l.b16 %v2157
      %v3553 = vunpack.c.l.b16 %v2160
      %v3554 = vpack.c.b16 %v3523, %v3522
      %v3555 = vpack.c.b16 %v3525, %v3524
      %v3556 = vpack.c.b16 %v3527, %v3526
      %v3557 = vpack.c.b16 %v3529, %v3528
      %v3558 = vpack.c.b16 %v3531, %v3530
      %v3559 = vpack.c.b16 %v3533, %v3532
      %v3560 = vpack.c.b16 %v3535, %v3534
      %v3561 = vpack.c.b16 %v3537, %v3536
      %v3562 = vpack.c.b16 %v3539, %v3538
      %v3563 = vpack.c.b16 %v3541, %v3540
      %v3564 = vpack.c.b16 %v3543, %v3542
      %v3565 = vpack.c.b16 %v3545, %v3544
      %v3566 = vpack.c.b16 %v3547, %v3546
      %v3567 = vpack.c.b16 %v3549, %v3548
      %v3568 = vpack.c.b16 %v3551, %v3550
      %v3569 = vpack.c.b16 %v3553, %v3552
      %3570 = vrot.lane.b32.xlu0 %v3554, 16
      %v3571 = vpop.permute.xlu0 %3570
      %3572 = vrot.lane.b32.xlu0 %v3555, 16
      %v3573 = vpop.permute.xlu0 %3572
      %3574 = vrot.lane.b32.xlu0 %v3556, 16
      %v3575 = vpop.permute.xlu0 %3574
      %3576 = vrot.lane.b32.xlu0 %v3557, 16
      %v3577 = vpop.permute.xlu0 %3576
      %3578 = vrot.lane.b32.xlu0 %v3558, 16
      %v3579 = vpop.permute.xlu0 %3578
      %3580 = vrot.lane.b32.xlu0 %v3559, 16
      %v3581 = vpop.permute.xlu0 %3580
      %3582 = vrot.lane.b32.xlu0 %v3560, 16
      %v3583 = vpop.permute.xlu0 %3582
      %3584 = vrot.lane.b32.xlu0 %v3561, 16
      %v3585 = vpop.permute.xlu0 %3584
      %3586 = vrot.lane.b32.xlu0 %v3562, 16
      %v3587 = vpop.permute.xlu0 %3586
      %3588 = vrot.lane.b32.xlu0 %v3563, 16
      %v3589 = vpop.permute.xlu0 %3588
      %3590 = vrot.lane.b32.xlu0 %v3564, 16
      %v3591 = vpop.permute.xlu0 %3590
      %3592 = vrot.lane.b32.xlu0 %v3565, 16
      %v3593 = vpop.permute.xlu0 %3592
      %3594 = vrot.lane.b32.xlu0 %v3566, 16
      %v3595 = vpop.permute.xlu0 %3594
      %3596 = vrot.lane.b32.xlu0 %v3567, 16
      %v3597 = vpop.permute.xlu0 %3596
      %3598 = vrot.lane.b32.xlu0 %v3568, 16
      %v3599 = vpop.permute.xlu0 %3598
      %3600 = vrot.lane.b32.xlu0 %v3569, 16
      %v3601 = vpop.permute.xlu0 %3600
      %v3618 = vunpack.c.l.b16 %v2161
      %v3619 = vunpack.c.l.b16 %v2162
      %v3620 = vunpack.c.l.b16 %v2163
      %v3621 = vunpack.c.l.b16 %v2164
      %v3622 = vunpack.c.l.b16 %v2165
      %v3623 = vunpack.c.l.b16 %v2166
      %v3624 = vunpack.c.l.b16 %v2167
      %v3625 = vunpack.c.l.b16 %v2168
      %v3626 = vunpack.c.l.b16 %v2169
      %v3627 = vunpack.c.l.b16 %v2170
      %v3628 = vunpack.c.l.b16 %v2171
      %v3629 = vunpack.c.l.b16 %v2172
      %v3630 = vunpack.c.l.b16 %v2173
      %v3631 = vunpack.c.l.b16 %v2174
      %v3632 = vunpack.c.l.b16 %v2175
      %v3633 = vunpack.c.l.b16 %v2176
      %v3634 = vunpack.c.l.b16 %v2177
      %v3635 = vunpack.c.l.b16 %v2178
      %v3636 = vunpack.c.l.b16 %v2179
      %v3637 = vunpack.c.l.b16 %v2180
      %v3638 = vunpack.c.l.b16 %v2181
      %v3639 = vunpack.c.l.b16 %v2182
      %v3640 = vunpack.c.l.b16 %v2183
      %v3641 = vunpack.c.l.b16 %v2184
      %v3642 = vunpack.c.l.b16 %v2185
      %v3643 = vunpack.c.l.b16 %v2186
      %v3644 = vunpack.c.l.b16 %v2187
      %v3645 = vunpack.c.l.b16 %v2188
      %v3646 = vunpack.c.l.b16 %v2189
      %v3647 = vunpack.c.l.b16 %v2190
      %v3648 = vunpack.c.l.b16 %v2191
      %v3649 = vunpack.c.l.b16 %v2192
      %v3650 = vpack.c.b16 %v3619, %v3618
      %v3651 = vpack.c.b16 %v3621, %v3620
      %v3652 = vpack.c.b16 %v3623, %v3622
      %v3653 = vpack.c.b16 %v3625, %v3624
      %v3654 = vpack.c.b16 %v3627, %v3626
      %v3655 = vpack.c.b16 %v3629, %v3628
      %v3656 = vpack.c.b16 %v3631, %v3630
      %v3657 = vpack.c.b16 %v3633, %v3632
      %v3658 = vpack.c.b16 %v3635, %v3634
      %v3659 = vpack.c.b16 %v3637, %v3636
      %v3660 = vpack.c.b16 %v3639, %v3638
      %v3661 = vpack.c.b16 %v3641, %v3640
      %v3662 = vpack.c.b16 %v3643, %v3642
      %v3663 = vpack.c.b16 %v3645, %v3644
      %v3664 = vpack.c.b16 %v3647, %v3646
      %v3665 = vpack.c.b16 %v3649, %v3648
      %3666 = vrot.lane.b32.xlu0 %v3650, 24
      %v3667 = vpop.permute.xlu0 %3666
      %3668 = vrot.lane.b32.xlu0 %v3651, 24
      %v3669 = vpop.permute.xlu0 %3668
      %3670 = vrot.lane.b32.xlu0 %v3652, 24
      %v3671 = vpop.permute.xlu0 %3670
      %3672 = vrot.lane.b32.xlu0 %v3653, 24
      %v3673 = vpop.permute.xlu0 %3672
      %3674 = vrot.lane.b32.xlu0 %v3654, 24
      %v3675 = vpop.permute.xlu0 %3674
      %3676 = vrot.lane.b32.xlu0 %v3655, 24
      %v3677 = vpop.permute.xlu0 %3676
      %3678 = vrot.lane.b32.xlu0 %v3656, 24
      %v3679 = vpop.permute.xlu0 %3678
      %3680 = vrot.lane.b32.xlu0 %v3657, 24
      %v3681 = vpop.permute.xlu0 %3680
      %3682 = vrot.lane.b32.xlu0 %v3658, 24
      %v3683 = vpop.permute.xlu0 %3682
      %3684 = vrot.lane.b32.xlu0 %v3659, 24
      %v3685 = vpop.permute.xlu0 %3684
      %3686 = vrot.lane.b32.xlu0 %v3660, 24
      %v3687 = vpop.permute.xlu0 %3686
      %3688 = vrot.lane.b32.xlu0 %v3661, 24
      %v3689 = vpop.permute.xlu0 %3688
      %3690 = vrot.lane.b32.xlu0 %v3662, 24
      %v3691 = vpop.permute.xlu0 %3690
      %3692 = vrot.lane.b32.xlu0 %v3663, 24
      %v3693 = vpop.permute.xlu0 %3692
      %3694 = vrot.lane.b32.xlu0 %v3664, 24
      %v3695 = vpop.permute.xlu0 %3694
      %3696 = vrot.lane.b32.xlu0 %v3665, 24
      %v3697 = vpop.permute.xlu0 %3696
      %v3698 = vunpack.c.l.b16 %v2222
      %v3699 = vunpack.c.l.b16 %v2232
      %v3700 = vunpack.c.l.b16 %v2246
      %v3701 = vunpack.c.l.b16 %v2256
      %v3702 = vunpack.c.l.b16 %v2270
      %v3703 = vunpack.c.l.b16 %v2280
      %v3704 = vunpack.c.l.b16 %v2294
      %v3705 = vunpack.c.l.b16 %v2304
      %v3706 = vunpack.c.l.b16 %v2318
      %v3707 = vunpack.c.l.b16 %v2328
      %v3708 = vunpack.c.l.b16 %v2342
      %v3709 = vunpack.c.l.b16 %v2352
      %v3710 = vunpack.c.l.b16 %v2366
      %v3711 = vunpack.c.l.b16 %v2376
      %v3712 = vunpack.c.l.b16 %v2390
      %v3713 = vunpack.c.l.b16 %v2400
      %v3714 = vunpack.c.l.b16 %v2414
      %v3715 = vunpack.c.l.b16 %v2424
      %v3716 = vunpack.c.l.b16 %v2438
      %v3717 = vunpack.c.l.b16 %v2448
      %v3718 = vunpack.c.l.b16 %v2462
      %v3719 = vunpack.c.l.b16 %v2472
      %v3720 = vunpack.c.l.b16 %v2486
      %v3721 = vunpack.c.l.b16 %v2496
      %v3722 = vunpack.c.l.b16 %v2510
      %v3723 = vunpack.c.l.b16 %v2520
      %v3724 = vunpack.c.l.b16 %v2534
      %v3725 = vunpack.c.l.b16 %v2544
      %v3726 = vunpack.c.l.b16 %v2558
      %v3727 = vunpack.c.l.b16 %v2568
      %v3728 = vunpack.c.l.b16 %v2582
      %v3729 = vunpack.c.l.b16 %v2592
      %v3730 = vpack.c.b16 %v3699, %v3698
      %v3731 = vpack.c.b16 %v3701, %v3700
      %v3732 = vpack.c.b16 %v3703, %v3702
      %v3733 = vpack.c.b16 %v3705, %v3704
      %v3734 = vpack.c.b16 %v3707, %v3706
      %v3735 = vpack.c.b16 %v3709, %v3708
      %v3736 = vpack.c.b16 %v3711, %v3710
      %v3737 = vpack.c.b16 %v3713, %v3712
      %v3738 = vpack.c.b16 %v3715, %v3714
      %v3739 = vpack.c.b16 %v3717, %v3716
      %v3740 = vpack.c.b16 %v3719, %v3718
      %v3741 = vpack.c.b16 %v3721, %v3720
      %v3742 = vpack.c.b16 %v3723, %v3722
      %v3743 = vpack.c.b16 %v3725, %v3724
      %v3744 = vpack.c.b16 %v3727, %v3726
      %v3745 = vpack.c.b16 %v3729, %v3728
      %3746 = vrot.lane.b32.xlu0 %v3730, 32
      %v3747 = vpop.permute.xlu0 %3746
      %3748 = vrot.lane.b32.xlu0 %v3731, 32
      %v3749 = vpop.permute.xlu0 %3748
      %3750 = vrot.lane.b32.xlu0 %v3732, 32
      %v3751 = vpop.permute.xlu0 %3750
      %3752 = vrot.lane.b32.xlu0 %v3733, 32
      %v3753 = vpop.permute.xlu0 %3752
      %3754 = vrot.lane.b32.xlu0 %v3734, 32
      %v3755 = vpop.permute.xlu0 %3754
      %3756 = vrot.lane.b32.xlu0 %v3735, 32
      %v3757 = vpop.permute.xlu0 %3756
      %3758 = vrot.lane.b32.xlu0 %v3736, 32
      %v3759 = vpop.permute.xlu0 %3758
      %3760 = vrot.lane.b32.xlu0 %v3737, 32
      %v3761 = vpop.permute.xlu0 %3760
      %3762 = vrot.lane.b32.xlu0 %v3738, 32
      %v3763 = vpop.permute.xlu0 %3762
      %3764 = vrot.lane.b32.xlu0 %v3739, 32
      %v3765 = vpop.permute.xlu0 %3764
      %3766 = vrot.lane.b32.xlu0 %v3740, 32
      %v3767 = vpop.permute.xlu0 %3766
      %3768 = vrot.lane.b32.xlu0 %v3741, 32
      %v3769 = vpop.permute.xlu0 %3768
      %3770 = vrot.lane.b32.xlu0 %v3742, 32
      %v3771 = vpop.permute.xlu0 %3770
      %3772 = vrot.lane.b32.xlu0 %v3743, 32
      %v3773 = vpop.permute.xlu0 %3772
      %3774 = vrot.lane.b32.xlu0 %v3744, 32
      %v3775 = vpop.permute.xlu0 %3774
      %3776 = vrot.lane.b32.xlu0 %v3745, 32
      %v3777 = vpop.permute.xlu0 %3776
      %v3778 = vunpack.c.l.b16 %v2660
      %v3779 = vunpack.c.l.b16 %v2663
      %v3780 = vunpack.c.l.b16 %v2667
      %v3781 = vunpack.c.l.b16 %v2670
      %v3782 = vunpack.c.l.b16 %v2674
      %v3783 = vunpack.c.l.b16 %v2677
      %v3784 = vunpack.c.l.b16 %v2681
      %v3785 = vunpack.c.l.b16 %v2684
      %v3786 = vunpack.c.l.b16 %v2688
      %v3787 = vunpack.c.l.b16 %v2691
      %v3788 = vunpack.c.l.b16 %v2695
      %v3789 = vunpack.c.l.b16 %v2698
      %v3790 = vunpack.c.l.b16 %v2702
      %v3791 = vunpack.c.l.b16 %v2705
      %v3792 = vunpack.c.l.b16 %v2709
      %v3793 = vunpack.c.l.b16 %v2712
      %v3794 = vunpack.c.l.b16 %v2716
      %v3795 = vunpack.c.l.b16 %v2719
      %v3796 = vunpack.c.l.b16 %v2723
      %v3797 = vunpack.c.l.b16 %v2726
      %v3798 = vunpack.c.l.b16 %v2730
      %v3799 = vunpack.c.l.b16 %v2733
      %v3800 = vunpack.c.l.b16 %v2737
      %v3801 = vunpack.c.l.b16 %v2740
      %v3802 = vunpack.c.l.b16 %v2744
      %v3803 = vunpack.c.l.b16 %v2747
      %v3804 = vunpack.c.l.b16 %v2751
      %v3805 = vunpack.c.l.b16 %v2754
      %v3806 = vunpack.c.l.b16 %v2758
      %v3807 = vunpack.c.l.b16 %v2761
      %v3808 = vunpack.c.l.b16 %v2765
      %v3809 = vunpack.c.l.b16 %v2768
      %v3810 = vpack.c.b16 %v3779, %v3778
      %v3811 = vpack.c.b16 %v3781, %v3780
      %v3812 = vpack.c.b16 %v3783, %v3782
      %v3813 = vpack.c.b16 %v3785, %v3784
      %v3814 = vpack.c.b16 %v3787, %v3786
      %v3815 = vpack.c.b16 %v3789, %v3788
      %v3816 = vpack.c.b16 %v3791, %v3790
      %v3817 = vpack.c.b16 %v3793, %v3792
      %v3818 = vpack.c.b16 %v3795, %v3794
      %v3819 = vpack.c.b16 %v3797, %v3796
      %v3820 = vpack.c.b16 %v3799, %v3798
      %v3821 = vpack.c.b16 %v3801, %v3800
      %v3822 = vpack.c.b16 %v3803, %v3802
      %v3823 = vpack.c.b16 %v3805, %v3804
      %v3824 = vpack.c.b16 %v3807, %v3806
      %v3825 = vpack.c.b16 %v3809, %v3808
      %3826 = vrot.lane.b32.xlu0 %v3810, 40
      %v3827 = vpop.permute.xlu0 %3826
      %3828 = vrot.lane.b32.xlu0 %v3811, 40
      %v3829 = vpop.permute.xlu0 %3828
      %3830 = vrot.lane.b32.xlu0 %v3812, 40
      %v3831 = vpop.permute.xlu0 %3830
      %3832 = vrot.lane.b32.xlu0 %v3813, 40
      %v3833 = vpop.permute.xlu0 %3832
      %3834 = vrot.lane.b32.xlu0 %v3814, 40
      %v3835 = vpop.permute.xlu0 %3834
      %3836 = vrot.lane.b32.xlu0 %v3815, 40
      %v3837 = vpop.permute.xlu0 %3836
      %3838 = vrot.lane.b32.xlu0 %v3816, 40
      %v3839 = vpop.permute.xlu0 %3838
      %3840 = vrot.lane.b32.xlu0 %v3817, 40
      %v3841 = vpop.permute.xlu0 %3840
      %3842 = vrot.lane.b32.xlu0 %v3818, 40
      %v3843 = vpop.permute.xlu0 %3842
      %3844 = vrot.lane.b32.xlu0 %v3819, 40
      %v3845 = vpop.permute.xlu0 %3844
      %3846 = vrot.lane.b32.xlu0 %v3820, 40
      %v3847 = vpop.permute.xlu0 %3846
      %3848 = vrot.lane.b32.xlu0 %v3821, 40
      %v3849 = vpop.permute.xlu0 %3848
      %3850 = vrot.lane.b32.xlu0 %v3822, 40
      %v3851 = vpop.permute.xlu0 %3850
      %3852 = vrot.lane.b32.xlu0 %v3823, 40
      %v3853 = vpop.permute.xlu0 %3852
      %3854 = vrot.lane.b32.xlu0 %v3824, 40
      %v3855 = vpop.permute.xlu0 %3854
      %3856 = vrot.lane.b32.xlu0 %v3825, 40
      %v3857 = vpop.permute.xlu0 %3856
      %v3874 = vunpack.c.l.b16 %v2770
      %v3875 = vunpack.c.l.b16 %v2771
      %v3876 = vunpack.c.l.b16 %v2772
      %v3877 = vunpack.c.l.b16 %v2773
      %v3878 = vunpack.c.l.b16 %v2774
      %v3879 = vunpack.c.l.b16 %v2775
      %v3880 = vunpack.c.l.b16 %v2776
      %v3881 = vunpack.c.l.b16 %v2777
      %v3882 = vunpack.c.l.b16 %v2778
      %v3883 = vunpack.c.l.b16 %v2779
      %v3884 = vunpack.c.l.b16 %v2780
      %v3885 = vunpack.c.l.b16 %v2781
      %v3886 = vunpack.c.l.b16 %v2782
      %v3887 = vunpack.c.l.b16 %v2783
      %v3888 = vunpack.c.l.b16 %v2784
      %v3889 = vunpack.c.l.b16 %v2785
      %v3890 = vunpack.c.l.b16 %v2786
      %v3891 = vunpack.c.l.b16 %v2787
      %v3892 = vunpack.c.l.b16 %v2788
      %v3893 = vunpack.c.l.b16 %v2789
      %v3894 = vunpack.c.l.b16 %v2790
      %v3895 = vunpack.c.l.b16 %v2791
      %v3896 = vunpack.c.l.b16 %v2792
      %v3897 = vunpack.c.l.b16 %v2793
      %v3898 = vunpack.c.l.b16 %v2794
      %v3899 = vunpack.c.l.b16 %v2795
      %v3900 = vunpack.c.l.b16 %v2796
      %v3901 = vunpack.c.l.b16 %v2797
      %v3902 = vunpack.c.l.b16 %v2798
      %v3903 = vunpack.c.l.b16 %v2799
      %v3904 = vunpack.c.l.b16 %v2800
      %v3905 = vunpack.c.l.b16 %v2801
      %v3906 = vpack.c.b16 %v3875, %v3874
      %v3907 = vpack.c.b16 %v3877, %v3876
      %v3908 = vpack.c.b16 %v3879, %v3878
      %v3909 = vpack.c.b16 %v3881, %v3880
      %v3910 = vpack.c.b16 %v3883, %v3882
      %v3911 = vpack.c.b16 %v3885, %v3884
      %v3912 = vpack.c.b16 %v3887, %v3886
      %v3913 = vpack.c.b16 %v3889, %v3888
      %v3914 = vpack.c.b16 %v3891, %v3890
      %v3915 = vpack.c.b16 %v3893, %v3892
      %v3916 = vpack.c.b16 %v3895, %v3894
      %v3917 = vpack.c.b16 %v3897, %v3896
      %v3918 = vpack.c.b16 %v3899, %v3898
      %v3919 = vpack.c.b16 %v3901, %v3900
      %v3920 = vpack.c.b16 %v3903, %v3902
      %v3921 = vpack.c.b16 %v3905, %v3904
      %3922 = vrot.lane.b32.xlu0 %v3906, 48
      %v3923 = vpop.permute.xlu0 %3922
      %3924 = vrot.lane.b32.xlu0 %v3907, 48
      %v3925 = vpop.permute.xlu0 %3924
      %3926 = vrot.lane.b32.xlu0 %v3908, 48
      %v3927 = vpop.permute.xlu0 %3926
      %3928 = vrot.lane.b32.xlu0 %v3909, 48
      %v3929 = vpop.permute.xlu0 %3928
      %3930 = vrot.lane.b32.xlu0 %v3910, 48
      %v3931 = vpop.permute.xlu0 %3930
      %3932 = vrot.lane.b32.xlu0 %v3911, 48
      %v3933 = vpop.permute.xlu0 %3932
      %3934 = vrot.lane.b32.xlu0 %v3912, 48
      %v3935 = vpop.permute.xlu0 %3934
      %3936 = vrot.lane.b32.xlu0 %v3913, 48
      %v3937 = vpop.permute.xlu0 %3936
      %3938 = vrot.lane.b32.xlu0 %v3914, 48
      %v3939 = vpop.permute.xlu0 %3938
      %3940 = vrot.lane.b32.xlu0 %v3915, 48
      %v3941 = vpop.permute.xlu0 %3940
      %3942 = vrot.lane.b32.xlu0 %v3916, 48
      %v3943 = vpop.permute.xlu0 %3942
      %3944 = vrot.lane.b32.xlu0 %v3917, 48
      %v3945 = vpop.permute.xlu0 %3944
      %3946 = vrot.lane.b32.xlu0 %v3918, 48
      %v3947 = vpop.permute.xlu0 %3946
      %3948 = vrot.lane.b32.xlu0 %v3919, 48
      %v3949 = vpop.permute.xlu0 %3948
      %3950 = vrot.lane.b32.xlu0 %v3920, 48
      %v3951 = vpop.permute.xlu0 %3950
      %3952 = vrot.lane.b32.xlu0 %v3921, 48
      %v3953 = vpop.permute.xlu0 %3952
      %v3954 = vunpack.c.l.b16 %v2831
      %v3955 = vunpack.c.l.b16 %v2841
      %v3956 = vunpack.c.l.b16 %v2855
      %v3957 = vunpack.c.l.b16 %v2865
      %v3958 = vunpack.c.l.b16 %v2879
      %v3959 = vunpack.c.l.b16 %v2889
      %v3960 = vunpack.c.l.b16 %v2903
      %v3961 = vunpack.c.l.b16 %v2913
      %v3962 = vunpack.c.l.b16 %v2927
      %v3963 = vunpack.c.l.b16 %v2937
      %v3964 = vunpack.c.l.b16 %v2951
      %v3965 = vunpack.c.l.b16 %v2961
      %v3966 = vunpack.c.l.b16 %v2975
      %v3967 = vunpack.c.l.b16 %v2985
      %v3968 = vunpack.c.l.b16 %v2999
      %v3969 = vunpack.c.l.b16 %v3009
      %v3970 = vunpack.c.l.b16 %v3023
      %v3971 = vunpack.c.l.b16 %v3033
      %v3972 = vunpack.c.l.b16 %v3047
      %v3973 = vunpack.c.l.b16 %v3057
      %v3974 = vunpack.c.l.b16 %v3071
      %v3975 = vunpack.c.l.b16 %v3081
      %v3976 = vunpack.c.l.b16 %v3095
      %v3977 = vunpack.c.l.b16 %v3105
      %v3978 = vunpack.c.l.b16 %v3119
      %v3979 = vunpack.c.l.b16 %v3129
      %v3980 = vunpack.c.l.b16 %v3143
      %v3981 = vunpack.c.l.b16 %v3153
      %v3982 = vunpack.c.l.b16 %v3167
      %v3983 = vunpack.c.l.b16 %v3177
      %v3984 = vunpack.c.l.b16 %v3191
      %v3985 = vunpack.c.l.b16 %v3201
      %v3986 = vpack.c.b16 %v3955, %v3954
      %v3987 = vpack.c.b16 %v3957, %v3956
      %v3988 = vpack.c.b16 %v3959, %v3958
      %v3989 = vpack.c.b16 %v3961, %v3960
      %v3990 = vpack.c.b16 %v3963, %v3962
      %v3991 = vpack.c.b16 %v3965, %v3964
      %v3992 = vpack.c.b16 %v3967, %v3966
      %v3993 = vpack.c.b16 %v3969, %v3968
      %v3994 = vpack.c.b16 %v3971, %v3970
      %v3995 = vpack.c.b16 %v3973, %v3972
      %v3996 = vpack.c.b16 %v3975, %v3974
      %v3997 = vpack.c.b16 %v3977, %v3976
      %v3998 = vpack.c.b16 %v3979, %v3978
      %v3999 = vpack.c.b16 %v3981, %v3980
      %v4000 = vpack.c.b16 %v3983, %v3982
      %v4001 = vpack.c.b16 %v3985, %v3984
      %4002 = vrot.lane.b32.xlu0 %v3986, 56
      %v4003 = vpop.permute.xlu0 %4002
      %4004 = vrot.lane.b32.xlu0 %v3987, 56
      %v4005 = vpop.permute.xlu0 %4004
      %4006 = vrot.lane.b32.xlu0 %v3988, 56
      %v4007 = vpop.permute.xlu0 %4006
      %4008 = vrot.lane.b32.xlu0 %v3989, 56
      %v4009 = vpop.permute.xlu0 %4008
      %4010 = vrot.lane.b32.xlu0 %v3990, 56
      %v4011 = vpop.permute.xlu0 %4010
      %4012 = vrot.lane.b32.xlu0 %v3991, 56
      %v4013 = vpop.permute.xlu0 %4012
      %4014 = vrot.lane.b32.xlu0 %v3992, 56
      %v4015 = vpop.permute.xlu0 %4014
      %4016 = vrot.lane.b32.xlu0 %v3993, 56
      %v4017 = vpop.permute.xlu0 %4016
      %4018 = vrot.lane.b32.xlu0 %v3994, 56
      %v4019 = vpop.permute.xlu0 %4018
      %4020 = vrot.lane.b32.xlu0 %v3995, 56
      %v4021 = vpop.permute.xlu0 %4020
      %4022 = vrot.lane.b32.xlu0 %v3996, 56
      %v4023 = vpop.permute.xlu0 %4022
      %4024 = vrot.lane.b32.xlu0 %v3997, 56
      %v4025 = vpop.permute.xlu0 %4024
      %4026 = vrot.lane.b32.xlu0 %v3998, 56
      %v4027 = vpop.permute.xlu0 %4026
      %4028 = vrot.lane.b32.xlu0 %v3999, 56
      %v4029 = vpop.permute.xlu0 %4028
      %4030 = vrot.lane.b32.xlu0 %v4000, 56
      %v4031 = vpop.permute.xlu0 %4030
      %4032 = vrot.lane.b32.xlu0 %v4001, 56
      %v4033 = vpop.permute.xlu0 %4032
      %v4034 = vunpack.c.l.b16 %v3269
      %v4035 = vunpack.c.l.b16 %v3272
      %v4036 = vunpack.c.l.b16 %v3276
      %v4037 = vunpack.c.l.b16 %v3279
      %v4038 = vunpack.c.l.b16 %v3283
      %v4039 = vunpack.c.l.b16 %v3286
      %v4040 = vunpack.c.l.b16 %v3290
      %v4041 = vunpack.c.l.b16 %v3293
      %v4042 = vunpack.c.l.b16 %v3297
      %v4043 = vunpack.c.l.b16 %v3300
      %v4044 = vunpack.c.l.b16 %v3304
      %v4045 = vunpack.c.l.b16 %v3307
      %v4046 = vunpack.c.l.b16 %v3311
      %v4047 = vunpack.c.l.b16 %v3314
      %v4048 = vunpack.c.l.b16 %v3318
      %v4049 = vunpack.c.l.b16 %v3321
      %v4050 = vunpack.c.l.b16 %v3325
      %v4051 = vunpack.c.l.b16 %v3328
      %v4052 = vunpack.c.l.b16 %v3332
      %v4053 = vunpack.c.l.b16 %v3335
      %v4054 = vunpack.c.l.b16 %v3339
      %v4055 = vunpack.c.l.b16 %v3342
      %v4056 = vunpack.c.l.b16 %v3346
      %v4057 = vunpack.c.l.b16 %v3349
      %v4058 = vunpack.c.l.b16 %v3353
      %v4059 = vunpack.c.l.b16 %v3356
      %v4060 = vunpack.c.l.b16 %v3360
      %v4061 = vunpack.c.l.b16 %v3363
      %v4062 = vunpack.c.l.b16 %v3367
      %v4063 = vunpack.c.l.b16 %v3370
      %v4064 = vunpack.c.l.b16 %v3374
      %v4065 = vunpack.c.l.b16 %v3377
      %v4066 = vpack.c.b16 %v4035, %v4034
      %v4067 = vpack.c.b16 %v4037, %v4036
      %v4068 = vpack.c.b16 %v4039, %v4038
      %v4069 = vpack.c.b16 %v4041, %v4040
      %v4070 = vpack.c.b16 %v4043, %v4042
      %v4071 = vpack.c.b16 %v4045, %v4044
      %v4072 = vpack.c.b16 %v4047, %v4046
      %v4073 = vpack.c.b16 %v4049, %v4048
      %v4074 = vpack.c.b16 %v4051, %v4050
      %v4075 = vpack.c.b16 %v4053, %v4052
      %v4076 = vpack.c.b16 %v4055, %v4054
      %v4077 = vpack.c.b16 %v4057, %v4056
      %v4078 = vpack.c.b16 %v4059, %v4058
      %v4079 = vpack.c.b16 %v4061, %v4060
      %v4080 = vpack.c.b16 %v4063, %v4062
      %v4081 = vpack.c.b16 %v4065, %v4064
      %4082 = vrot.lane.b32.xlu0 %v4066, 64
      %v4083 = vpop.permute.xlu0 %4082
      %4084 = vrot.lane.b32.xlu0 %v4067, 64
      %v4085 = vpop.permute.xlu0 %4084
      %4086 = vrot.lane.b32.xlu0 %v4068, 64
      %v4087 = vpop.permute.xlu0 %4086
      %4088 = vrot.lane.b32.xlu0 %v4069, 64
      %v4089 = vpop.permute.xlu0 %4088
      %4090 = vrot.lane.b32.xlu0 %v4070, 64
      %v4091 = vpop.permute.xlu0 %4090
      %4092 = vrot.lane.b32.xlu0 %v4071, 64
      %v4093 = vpop.permute.xlu0 %4092
      %4094 = vrot.lane.b32.xlu0 %v4072, 64
      %v4095 = vpop.permute.xlu0 %4094
      %4096 = vrot.lane.b32.xlu0 %v4073, 64
      %v4097 = vpop.permute.xlu0 %4096
      %4098 = vrot.lane.b32.xlu0 %v4074, 64
      %v4099 = vpop.permute.xlu0 %4098
      %4100 = vrot.lane.b32.xlu0 %v4075, 64
      %v4101 = vpop.permute.xlu0 %4100
      %4102 = vrot.lane.b32.xlu0 %v4076, 64
      %v4103 = vpop.permute.xlu0 %4102
      %4104 = vrot.lane.b32.xlu0 %v4077, 64
      %v4105 = vpop.permute.xlu0 %4104
      %4106 = vrot.lane.b32.xlu0 %v4078, 64
      %v4107 = vpop.permute.xlu0 %4106
      %4108 = vrot.lane.b32.xlu0 %v4079, 64
      %v4109 = vpop.permute.xlu0 %4108
      %4110 = vrot.lane.b32.xlu0 %v4080, 64
      %v4111 = vpop.permute.xlu0 %4110
      %4112 = vrot.lane.b32.xlu0 %v4081, 64
      %v4113 = vpop.permute.xlu0 %4112
      %vm4114 = vcmask 64512
      %v4117 = vsel %vm4114, %v3426, %v3491
      %v4120 = vsel %vm4114, %v3427, %v3493
      %v4123 = vsel %vm4114, %v3428, %v3495
      %v4126 = vsel %vm4114, %v3429, %v3497
      %v4129 = vsel %vm4114, %v3430, %v3499
      %v4132 = vsel %vm4114, %v3431, %v3501
      %v4135 = vsel %vm4114, %v3432, %v3503
      %v4138 = vsel %vm4114, %v3433, %v3505
      %v4141 = vsel %vm4114, %v3434, %v3507
      %v4144 = vsel %vm4114, %v3435, %v3509
      %v4147 = vsel %vm4114, %v3436, %v3511
      %v4150 = vsel %vm4114, %v3437, %v3513
      %v4153 = vsel %vm4114, %v3438, %v3515
      %v4156 = vsel %vm4114, %v3439, %v3517
      %v4159 = vsel %vm4114, %v3440, %v3519
      %v4162 = vsel %vm4114, %v3441, %v3521
      %vm4163 = vcmask 130048
      %v4165 = vsel %vm4163, %v4117, %v3571
      %v4167 = vsel %vm4163, %v4120, %v3573
      %v4169 = vsel %vm4163, %v4123, %v3575
      %v4171 = vsel %vm4163, %v4126, %v3577
      %v4173 = vsel %vm4163, %v4129, %v3579
      %v4175 = vsel %vm4163, %v4132, %v3581
      %v4177 = vsel %vm4163, %v4135, %v3583
      %v4179 = vsel %vm4163, %v4138, %v3585
      %v4181 = vsel %vm4163, %v4141, %v3587
      %v4183 = vsel %vm4163, %v4144, %v3589
      %v4185 = vsel %vm4163, %v4147, %v3591
      %v4187 = vsel %vm4163, %v4150, %v3593
      %v4189 = vsel %vm4163, %v4153, %v3595
      %v4191 = vsel %vm4163, %v4156, %v3597
      %v4193 = vsel %vm4163, %v4159, %v3599
      %v4195 = vsel %vm4163, %v4162, %v3601
      %vm4196 = vcmask 195584
      %v4198 = vsel %vm4196, %v4165, %v3667
      %v4200 = vsel %vm4196, %v4167, %v3669
      %v4202 = vsel %vm4196, %v4169, %v3671
      %v4204 = vsel %vm4196, %v4171, %v3673
      %v4206 = vsel %vm4196, %v4173, %v3675
      %v4208 = vsel %vm4196, %v4175, %v3677
      %v4210 = vsel %vm4196, %v4177, %v3679
      %v4212 = vsel %vm4196, %v4179, %v3681
      %v4214 = vsel %vm4196, %v4181, %v3683
      %v4216 = vsel %vm4196, %v4183, %v3685
      %v4218 = vsel %vm4196, %v4185, %v3687
      %v4220 = vsel %vm4196, %v4187, %v3689
      %v4222 = vsel %vm4196, %v4189, %v3691
      %v4224 = vsel %vm4196, %v4191, %v3693
      %v4226 = vsel %vm4196, %v4193, %v3695
      %v4228 = vsel %vm4196, %v4195, %v3697
      %vm4229 = vcmask 261120
      %v4231 = vsel %vm4229, %v4198, %v3747
      %v4233 = vsel %vm4229, %v4200, %v3749
      %v4235 = vsel %vm4229, %v4202, %v3751
      %v4237 = vsel %vm4229, %v4204, %v3753
      %v4239 = vsel %vm4229, %v4206, %v3755
      %v4241 = vsel %vm4229, %v4208, %v3757
      %v4243 = vsel %vm4229, %v4210, %v3759
      %v4245 = vsel %vm4229, %v4212, %v3761
      %v4247 = vsel %vm4229, %v4214, %v3763
      %v4249 = vsel %vm4229, %v4216, %v3765
      %v4251 = vsel %vm4229, %v4218, %v3767
      %v4253 = vsel %vm4229, %v4220, %v3769
      %v4255 = vsel %vm4229, %v4222, %v3771
      %v4257 = vsel %vm4229, %v4224, %v3773
      %v4259 = vsel %vm4229, %v4226, %v3775
      %v4261 = vsel %vm4229, %v4228, %v3777
      %vm4262 = vcmask 326656
      %v4264 = vsel %vm4262, %v4231, %v3827
      %v4266 = vsel %vm4262, %v4233, %v3829
      %v4268 = vsel %vm4262, %v4235, %v3831
      %v4270 = vsel %vm4262, %v4237, %v3833
      %v4272 = vsel %vm4262, %v4239, %v3835
      %v4274 = vsel %vm4262, %v4241, %v3837
      %v4276 = vsel %vm4262, %v4243, %v3839
      %v4278 = vsel %vm4262, %v4245, %v3841
      %v4280 = vsel %vm4262, %v4247, %v3843
      %v4282 = vsel %vm4262, %v4249, %v3845
      %v4284 = vsel %vm4262, %v4251, %v3847
      %v4286 = vsel %vm4262, %v4253, %v3849
      %v4288 = vsel %vm4262, %v4255, %v3851
      %v4290 = vsel %vm4262, %v4257, %v3853
      %v4292 = vsel %vm4262, %v4259, %v3855
      %v4294 = vsel %vm4262, %v4261, %v3857
      %vm4295 = vcmask 392192
      %v4297 = vsel %vm4295, %v4264, %v3923
      %v4299 = vsel %vm4295, %v4266, %v3925
      %v4301 = vsel %vm4295, %v4268, %v3927
      %v4303 = vsel %vm4295, %v4270, %v3929
      %v4305 = vsel %vm4295, %v4272, %v3931
      %v4307 = vsel %vm4295, %v4274, %v3933
      %v4309 = vsel %vm4295, %v4276, %v3935
      %v4311 = vsel %vm4295, %v4278, %v3937
      %v4313 = vsel %vm4295, %v4280, %v3939
      %v4315 = vsel %vm4295, %v4282, %v3941
      %v4317 = vsel %vm4295, %v4284, %v3943
      %v4319 = vsel %vm4295, %v4286, %v3945
      %v4321 = vsel %vm4295, %v4288, %v3947
      %v4323 = vsel %vm4295, %v4290, %v3949
      %v4325 = vsel %vm4295, %v4292, %v3951
      %v4327 = vsel %vm4295, %v4294, %v3953
      %vm4328 = vcmask 457728
      %v4330 = vsel %vm4328, %v4297, %v4003
      %v4332 = vsel %vm4328, %v4299, %v4005
      %v4334 = vsel %vm4328, %v4301, %v4007
      %v4336 = vsel %vm4328, %v4303, %v4009
      %v4338 = vsel %vm4328, %v4305, %v4011
      %v4340 = vsel %vm4328, %v4307, %v4013
      %v4342 = vsel %vm4328, %v4309, %v4015
      %v4344 = vsel %vm4328, %v4311, %v4017
      %v4346 = vsel %vm4328, %v4313, %v4019
      %v4348 = vsel %vm4328, %v4315, %v4021
      %v4350 = vsel %vm4328, %v4317, %v4023
      %v4352 = vsel %vm4328, %v4319, %v4025
      %v4354 = vsel %vm4328, %v4321, %v4027
      %v4356 = vsel %vm4328, %v4323, %v4029
      %v4358 = vsel %vm4328, %v4325, %v4031
      %v4360 = vsel %vm4328, %v4327, %v4033
      %vm4361 = vcmask 523264
      %v4363 = vsel %vm4361, %v4330, %v4083
      %v4365 = vsel %vm4361, %v4332, %v4085
      %v4367 = vsel %vm4361, %v4334, %v4087
      %v4369 = vsel %vm4361, %v4336, %v4089
      %v4371 = vsel %vm4361, %v4338, %v4091
      %v4373 = vsel %vm4361, %v4340, %v4093
      %v4375 = vsel %vm4361, %v4342, %v4095
      %v4377 = vsel %vm4361, %v4344, %v4097
      %v4379 = vsel %vm4361, %v4346, %v4099
      %v4381 = vsel %vm4361, %v4348, %v4101
      %v4383 = vsel %vm4361, %v4350, %v4103
      %v4385 = vsel %vm4361, %v4352, %v4105
      %v4387 = vsel %vm4361, %v4354, %v4107
      %v4389 = vsel %vm4361, %v4356, %v4109
      %v4391 = vsel %vm4361, %v4358, %v4111
      %v4393 = vsel %vm4361, %v4360, %v4113
      %v4394 = vld [vmem:[%s2] sm:$0xf]
      %v4395 = vld [vmem:[%s2 + $0x4] sm:$0xf]
      %v4396 = vld [vmem:[%s2 + $0x8] sm:$0xf]
      %v4397 = vld [vmem:[%s2 + $0xc] sm:$0xf]
      %v4398 = vld [vmem:[%s2 + $0x10] sm:$0xf]
      %v4399 = vld [vmem:[%s2 + $0x14] sm:$0xf]
      %v4400 = vld [vmem:[%s2 + $0x18] sm:$0xf]
      %v4401 = vld [vmem:[%s2 + $0x1c] sm:$0xf]
      %v4402 = vld [vmem:[%s2 + $0x20] sm:$0xf]
      %v4403 = vld [vmem:[%s3] sm:$0x1]
      %v4405 = vlaneseq
      %v4406 = vshrl.u32 %v4405, 7
      %v4407 = vsub.s32 0, %v4406
      %v4408 = vrot.slane %v4403, %v4407
      %v4419 = vunpack.c.l.b16 %v4394
      %v4420 = vunpack.c.l.b16 %v4395
      %v4421 = vunpack.c.l.b16 %v4396
      %v4422 = vunpack.c.l.b16 %v4397
      %v4423 = vunpack.c.l.b16 %v4398
      %v4424 = vunpack.c.l.b16 %v4399
      %v4425 = vunpack.c.l.b16 %v4400
      %v4426 = vunpack.c.l.b16 %v4401
      %v4427 = vunpack.c.l.b16 %v4402
      %v4428 = vpack.c.b16 %v4420, %v4419
      %v4429 = vpack.c.b16 %v4422, %v4421
      %v4430 = vpack.c.b16 %v4424, %v4423
      %v4431 = vpack.c.b16 %v4426, %v4425
      %v4432 = vpack.c.b16 %v4427, %v4427
      %vm4437 = vcmask 588800
      %v4438 = vsel %vm4437, %v4363, 0
      %v4440 = vsel %vm4437, %v4365, 0
      %v4442 = vsel %vm4437, %v4367, 0
      %v4444 = vsel %vm4437, %v4369, 0
      %v4446 = vsel %vm4437, %v4371, 0
      %v4448 = vsel %vm4437, %v4373, 0
      %v4450 = vsel %vm4437, %v4375, 0
      %v4452 = vsel %vm4437, %v4377, 0
      %v4454 = vsel %vm4437, %v4379, 0
      %v4456 = vsel %vm4437, %v4381, 0
      %v4458 = vsel %vm4437, %v4383, 0
      %v4460 = vsel %vm4437, %v4385, 0
      %v4462 = vsel %vm4437, %v4387, 0
      %v4464 = vsel %vm4437, %v4389, 0
      %v4466 = vsel %vm4437, %v4391, 0
      %v4468 = vsel %vm4437, %v4393, 0
      %vm4470 = vcmask 1043456
      %v4472 = vsel %vm4470, %v4432, 0
      %4474 = vmatprep.subr.bf16.mxu0 0
      %4475 = vmatpush1.bf16.msra.mxu0 0
      %4476 = vmatprep.subr.bf16.mxu0 0
      %4477 = vmatpush1.bf16.msra.mxu0 0
      %4478 = vmatprep.subr.bf16.mxu0 0
      %4479 = vmatpush1.bf16.msra.mxu0 0
      %4480 = vmatprep.subr.bf16.mxu0 0
      %4481 = vmatpush1.bf16.msra.mxu0 %v4472
      %4482 = vmatprep.subr.bf16.mxu0 0
      %4483 = vmatpush1.bf16.msra.mxu0 %v4431
      %4484 = vmatprep.subr.bf16.mxu0 0
      %4485 = vmatpush1.bf16.msra.mxu0 %v4430
      %4486 = vmatprep.subr.bf16.mxu0 0
      %4487 = vmatpush1.bf16.msra.mxu0 %v4429
      %4488 = vmatprep.subr.bf16.mxu0 0
      %4489 = vmatpush1.bf16.msra.mxu0 %v4428
      %4490 = vmatprep.subr.bf16.mxu0 0
      %4491 = vmatpush2.bf16.msra.mxu0 0
      %4492 = vmatprep.subr.bf16.mxu0 0
      %4493 = vmatpush2.bf16.msra.mxu0 0
      %4494 = vmatprep.subr.bf16.mxu0 0
      %4495 = vmatpush2.bf16.msra.mxu0 0
      %4496 = vmatprep.subr.bf16.mxu0 0
      %4497 = vmatpush2.bf16.msra.mxu0 0
      %4498 = vmatprep.subr.bf16.mxu0 0
      %4499 = vmatpush2.bf16.msra.mxu0 0
      %4500 = vmatprep.subr.bf16.mxu0 0
      %4501 = vmatpush2.bf16.msra.mxu0 0
      %4502 = vmatprep.subr.bf16.mxu0 0
      %4503 = vmatpush2.bf16.msra.mxu0 0
      %4504 = vmatprep.subr.bf16.mxu0 0
      %4505 = vmatpush2.bf16.msra.mxu0 0
      %4506 = vmatprep.mubr.bf16.mxu0 0
      %4507 = vmatmul.mubr.bf16.gmra.mxu0 %v4438
      %v4508 = vpop.f32.mrf.mxu0
      %v4509 = vadd.f32 %v4408, %v4508
      %v4510 = vpop.f32.mrf.mxu0
      %v4511 = vpop.f32.mrf.mxu0
      %v4512 = vadd.f32 %v4408, %v4511
      %v4513 = vpop.f32.mrf.mxu0
      %4514 = vmatprep.mubr.bf16.mxu0 0
      %4515 = vmatmul.mubr.bf16.gmra.mxu0 %v4440
      %v4516 = vpop.f32.mrf.mxu0
      %v4517 = vadd.f32 %v4408, %v4516
      %v4518 = vpop.f32.mrf.mxu0
      %v4519 = vpop.f32.mrf.mxu0
      %v4520 = vadd.f32 %v4408, %v4519
      %v4521 = vpop.f32.mrf.mxu0
      %4522 = vmatprep.mubr.bf16.mxu0 0
      %4523 = vmatmul.mubr.bf16.gmra.mxu0 %v4442
      %v4524 = vpop.f32.mrf.mxu0
      %v4525 = vadd.f32 %v4408, %v4524
      %v4526 = vpop.f32.mrf.mxu0
      %v4527 = vpop.f32.mrf.mxu0
      %v4528 = vadd.f32 %v4408, %v4527
      %v4529 = vpop.f32.mrf.mxu0
      %4530 = vmatprep.mubr.bf16.mxu0 0
      %4531 = vmatmul.mubr.bf16.gmra.mxu0 %v4444
      %v4532 = vpop.f32.mrf.mxu0
      %v4533 = vadd.f32 %v4408, %v4532
      %v4534 = vpop.f32.mrf.mxu0
      %v4535 = vpop.f32.mrf.mxu0
      %v4536 = vadd.f32 %v4408, %v4535
      %v4537 = vpop.f32.mrf.mxu0
      %4538 = vmatprep.mubr.bf16.mxu0 0
      %4539 = vmatmul.mubr.bf16.gmra.mxu0 %v4446
      %v4540 = vpop.f32.mrf.mxu0
      %v4541 = vadd.f32 %v4408, %v4540
      %v4542 = vpop.f32.mrf.mxu0
      %v4543 = vpop.f32.mrf.mxu0
      %v4544 = vadd.f32 %v4408, %v4543
      %v4545 = vpop.f32.mrf.mxu0
      %4546 = vmatprep.mubr.bf16.mxu0 0
      %4547 = vmatmul.mubr.bf16.gmra.mxu0 %v4448
      %v4548 = vpop.f32.mrf.mxu0
      %v4549 = vadd.f32 %v4408, %v4548
      %v4550 = vpop.f32.mrf.mxu0
      %v4551 = vpop.f32.mrf.mxu0
      %v4552 = vadd.f32 %v4408, %v4551
      %v4553 = vpop.f32.mrf.mxu0
      %4554 = vmatprep.mubr.bf16.mxu0 0
      %4555 = vmatmul.mubr.bf16.gmra.mxu0 %v4450
      %v4556 = vpop.f32.mrf.mxu0
      %v4557 = vadd.f32 %v4408, %v4556
      %v4558 = vpop.f32.mrf.mxu0
      %v4559 = vpop.f32.mrf.mxu0
      %v4560 = vadd.f32 %v4408, %v4559
      %v4561 = vpop.f32.mrf.mxu0
      %4562 = vmatprep.mubr.bf16.mxu0 0
      %4563 = vmatmul.mubr.bf16.gmra.mxu0 %v4452
      %v4564 = vpop.f32.mrf.mxu0
      %v4565 = vadd.f32 %v4408, %v4564
      %v4566 = vpop.f32.mrf.mxu0
      %v4567 = vpop.f32.mrf.mxu0
      %v4568 = vadd.f32 %v4408, %v4567
      %v4569 = vpop.f32.mrf.mxu0
      %4570 = vmatprep.mubr.bf16.mxu0 0
      %4571 = vmatmul.mubr.bf16.gmra.mxu0 %v4454
      %v4572 = vpop.f32.mrf.mxu0
      %v4573 = vadd.f32 %v4408, %v4572
      %v4574 = vpop.f32.mrf.mxu0
      %v4575 = vpop.f32.mrf.mxu0
      %v4576 = vadd.f32 %v4408, %v4575
      %v4577 = vpop.f32.mrf.mxu0
      %4578 = vmatprep.mubr.bf16.mxu0 0
      %4579 = vmatmul.mubr.bf16.gmra.mxu0 %v4456
      %v4580 = vpop.f32.mrf.mxu0
      %v4581 = vadd.f32 %v4408, %v4580
      %v4582 = vpop.f32.mrf.mxu0
      %v4583 = vpop.f32.mrf.mxu0
      %v4584 = vadd.f32 %v4408, %v4583
      %v4585 = vpop.f32.mrf.mxu0
      %4586 = vmatprep.mubr.bf16.mxu0 0
      %4587 = vmatmul.mubr.bf16.gmra.mxu0 %v4458
      %v4588 = vpop.f32.mrf.mxu0
      %v4589 = vadd.f32 %v4408, %v4588
      %v4590 = vpop.f32.mrf.mxu0
      %v4591 = vpop.f32.mrf.mxu0
      %v4592 = vadd.f32 %v4408, %v4591
      %v4593 = vpop.f32.mrf.mxu0
      %4594 = vmatprep.mubr.bf16.mxu0 0
      %4595 = vmatmul.mubr.bf16.gmra.mxu0 %v4460
      %v4596 = vpop.f32.mrf.mxu0
      %v4597 = vadd.f32 %v4408, %v4596
      %v4598 = vpop.f32.mrf.mxu0
      %v4599 = vpop.f32.mrf.mxu0
      %v4600 = vadd.f32 %v4408, %v4599
      %v4601 = vpop.f32.mrf.mxu0
      %4602 = vmatprep.mubr.bf16.mxu0 0
      %4603 = vmatmul.mubr.bf16.gmra.mxu0 %v4462
      %v4604 = vpop.f32.mrf.mxu0
      %v4605 = vadd.f32 %v4408, %v4604
      %v4606 = vpop.f32.mrf.mxu0
      %v4607 = vpop.f32.mrf.mxu0
      %v4608 = vadd.f32 %v4408, %v4607
      %v4609 = vpop.f32.mrf.mxu0
      %4610 = vmatprep.mubr.bf16.mxu0 0
      %4611 = vmatmul.mubr.bf16.gmra.mxu0 %v4464
      %v4612 = vpop.f32.mrf.mxu0
      %v4613 = vadd.f32 %v4408, %v4612
      %v4614 = vpop.f32.mrf.mxu0
      %v4615 = vpop.f32.mrf.mxu0
      %v4616 = vadd.f32 %v4408, %v4615
      %v4617 = vpop.f32.mrf.mxu0
      %4618 = vmatprep.mubr.bf16.mxu0 0
      %4619 = vmatmul.mubr.bf16.gmra.mxu0 %v4466
      %v4620 = vpop.f32.mrf.mxu0
      %v4621 = vadd.f32 %v4408, %v4620
      %v4622 = vpop.f32.mrf.mxu0
      %v4623 = vpop.f32.mrf.mxu0
      %v4624 = vadd.f32 %v4408, %v4623
      %v4625 = vpop.f32.mrf.mxu0
      %4626 = vmatprep.mubr.bf16.mxu0 0
      %4627 = vmatmul.mubr.bf16.gmra.mxu0 %v4468
      %v4628 = vpop.f32.mrf.mxu0
      %v4629 = vadd.f32 %v4408, %v4628
      %v4630 = vpop.f32.mrf.mxu0
      %v4631 = vpop.f32.mrf.mxu0
      %v4632 = vadd.f32 %v4408, %v4631
      %v4633 = vpop.f32.mrf.mxu0
      %4634 = vdwg.mxu0
      %v4635 = vmax.f32 %v4509, 0.0
      %v4636 = vmax.f32 %v4512, 0.0
      %v4637 = vmax.f32 %v4517, 0.0
      %v4638 = vmax.f32 %v4520, 0.0
      %v4639 = vmax.f32 %v4525, 0.0
      %v4640 = vmax.f32 %v4528, 0.0
      %v4641 = vmax.f32 %v4533, 0.0
      %v4642 = vmax.f32 %v4536, 0.0
      %v4643 = vmax.f32 %v4541, 0.0
      %v4644 = vmax.f32 %v4544, 0.0
      %v4645 = vmax.f32 %v4549, 0.0
      %v4646 = vmax.f32 %v4552, 0.0
      %v4647 = vmax.f32 %v4557, 0.0
      %v4648 = vmax.f32 %v4560, 0.0
      %v4649 = vmax.f32 %v4565, 0.0
      %v4650 = vmax.f32 %v4568, 0.0
      %v4651 = vmax.f32 %v4573, 0.0
      %v4652 = vmax.f32 %v4576, 0.0
      %v4653 = vmax.f32 %v4581, 0.0
      %v4654 = vmax.f32 %v4584, 0.0
      %v4655 = vmax.f32 %v4589, 0.0
      %v4656 = vmax.f32 %v4592, 0.0
      %v4657 = vmax.f32 %v4597, 0.0
      %v4658 = vmax.f32 %v4600, 0.0
      %v4659 = vmax.f32 %v4605, 0.0
      %v4660 = vmax.f32 %v4608, 0.0
      %v4661 = vmax.f32 %v4613, 0.0
      %v4662 = vmax.f32 %v4616, 0.0
      %v4663 = vmax.f32 %v4621, 0.0
      %v4664 = vmax.f32 %v4624, 0.0
      %v4665 = vmax.f32 %v4629, 0.0
      %v4666 = vmax.f32 %v4632, 0.0
      %v4667 = vpack.c.bf16 %v4636, %v4635
      %v4668 = vpack.c.bf16 %v4638, %v4637
      %v4669 = vpack.c.bf16 %v4640, %v4639
      %v4670 = vpack.c.bf16 %v4642, %v4641
      %v4671 = vpack.c.bf16 %v4644, %v4643
      %v4672 = vpack.c.bf16 %v4646, %v4645
      %v4673 = vpack.c.bf16 %v4648, %v4647
      %v4674 = vpack.c.bf16 %v4650, %v4649
      %v4675 = vpack.c.bf16 %v4652, %v4651
      %v4676 = vpack.c.bf16 %v4654, %v4653
      %v4677 = vpack.c.bf16 %v4656, %v4655
      %v4678 = vpack.c.bf16 %v4658, %v4657
      %v4679 = vpack.c.bf16 %v4660, %v4659
      %v4680 = vpack.c.bf16 %v4662, %v4661
      %v4681 = vpack.c.bf16 %v4664, %v4663
      %v4682 = vpack.c.bf16 %v4666, %v4665
      %v4699 = vunpack.c.l.b16 %v4667
      %v4700 = vunpack.c.h.b16 %v4667
      %v4701 = vunpack.c.l.b16 %v4668
      %v4702 = vunpack.c.h.b16 %v4668
      %v4703 = vunpack.c.l.b16 %v4669
      %v4704 = vunpack.c.h.b16 %v4669
      %v4705 = vunpack.c.l.b16 %v4670
      %v4706 = vunpack.c.h.b16 %v4670
      %v4707 = vunpack.c.l.b16 %v4671
      %v4708 = vunpack.c.h.b16 %v4671
      %v4709 = vunpack.c.l.b16 %v4672
      %v4710 = vunpack.c.h.b16 %v4672
      %v4711 = vunpack.c.l.b16 %v4673
      %v4712 = vunpack.c.h.b16 %v4673
      %v4713 = vunpack.c.l.b16 %v4674
      %v4714 = vunpack.c.h.b16 %v4674
      %v4715 = vunpack.c.l.b16 %v4675
      %v4716 = vunpack.c.h.b16 %v4675
      %v4717 = vunpack.c.l.b16 %v4676
      %v4718 = vunpack.c.h.b16 %v4676
      %v4719 = vunpack.c.l.b16 %v4677
      %v4720 = vunpack.c.h.b16 %v4677
      %v4721 = vunpack.c.l.b16 %v4678
      %v4722 = vunpack.c.h.b16 %v4678
      %v4723 = vunpack.c.l.b16 %v4679
      %v4724 = vunpack.c.h.b16 %v4679
      %v4725 = vunpack.c.l.b16 %v4680
      %v4726 = vunpack.c.h.b16 %v4680
      %v4727 = vunpack.c.l.b16 %v4681
      %v4728 = vunpack.c.h.b16 %v4681
      %v4729 = vunpack.c.l.b16 %v4682
      %v4730 = vunpack.c.h.b16 %v4682
      %v4731 = vpack.c.b16 %v4699, %v4699
      %v4732 = vpack.c.b16 %v4700, %v4700
      %v4733 = vpack.c.b16 %v4701, %v4701
      %v4734 = vpack.c.b16 %v4702, %v4702
      %v4735 = vpack.c.b16 %v4703, %v4703
      %v4736 = vpack.c.b16 %v4704, %v4704
      %v4737 = vpack.c.b16 %v4705, %v4705
      %v4738 = vpack.c.b16 %v4706, %v4706
      %v4739 = vpack.c.b16 %v4707, %v4707
      %v4740 = vpack.c.b16 %v4708, %v4708
      %v4741 = vpack.c.b16 %v4709, %v4709
      %v4742 = vpack.c.b16 %v4710, %v4710
      %v4743 = vpack.c.b16 %v4711, %v4711
      %v4744 = vpack.c.b16 %v4712, %v4712
      %v4745 = vpack.c.b16 %v4713, %v4713
      %v4746 = vpack.c.b16 %v4714, %v4714
      %v4747 = vpack.c.b16 %v4715, %v4715
      %v4748 = vpack.c.b16 %v4716, %v4716
      %v4749 = vpack.c.b16 %v4717, %v4717
      %v4750 = vpack.c.b16 %v4718, %v4718
      %v4751 = vpack.c.b16 %v4719, %v4719
      %v4752 = vpack.c.b16 %v4720, %v4720
      %v4753 = vpack.c.b16 %v4721, %v4721
      %v4754 = vpack.c.b16 %v4722, %v4722
      %v4755 = vpack.c.b16 %v4723, %v4723
      %v4756 = vpack.c.b16 %v4724, %v4724
      %v4757 = vpack.c.b16 %v4725, %v4725
      %v4758 = vpack.c.b16 %v4726, %v4726
      %v4759 = vpack.c.b16 %v4727, %v4727
      %v4760 = vpack.c.b16 %v4728, %v4728
      %v4761 = vpack.c.b16 %v4729, %v4729
      %v4762 = vpack.c.b16 %v4730, %v4730
      %v4764 = vshrl.u32 %v4731, 16
      %v4766 = vrot.slane %v4764, 7
      %v4767 = vshll.u32 %v4731, 16
      %v4769 = vor.u32 %v4766, %v4767
      %v4770 = vrot.slane %v4766, 4
      %v4772 = vshrl.u32 %v4732, 16
      %v4774 = vrot.slane %v4772, 7
      %v4775 = vshll.u32 %v4732, 16
      %v4777 = vor.u32 %v4774, %v4775
      %v4778 = vsel %vm543, %v4770, %v4777
      %v4779 = vrot.slane %v4774, 4
      %v4781 = vshrl.u32 %v4733, 16
      %v4783 = vrot.slane %v4781, 7
      %v4784 = vshll.u32 %v4733, 16
      %v4786 = vor.u32 %v4783, %v4784
      %v4787 = vrot.slane %v4783, 4
      %v4789 = vshrl.u32 %v4734, 16
      %v4791 = vrot.slane %v4789, 7
      %v4792 = vshll.u32 %v4734, 16
      %v4794 = vor.u32 %v4791, %v4792
      %v4795 = vsel %vm543, %v4787, %v4794
      %v4796 = vrot.slane %v4791, 4
      %v4798 = vshrl.u32 %v4735, 16
      %v4800 = vrot.slane %v4798, 7
      %v4801 = vshll.u32 %v4735, 16
      %v4803 = vor.u32 %v4800, %v4801
      %v4804 = vrot.slane %v4800, 4
      %v4806 = vshrl.u32 %v4736, 16
      %v4808 = vrot.slane %v4806, 7
      %v4809 = vshll.u32 %v4736, 16
      %v4811 = vor.u32 %v4808, %v4809
      %v4812 = vsel %vm543, %v4804, %v4811
      %v4813 = vrot.slane %v4808, 4
      %v4815 = vshrl.u32 %v4737, 16
      %v4817 = vrot.slane %v4815, 7
      %v4818 = vshll.u32 %v4737, 16
      %v4820 = vor.u32 %v4817, %v4818
      %v4821 = vrot.slane %v4817, 4
      %v4823 = vshrl.u32 %v4738, 16
      %v4825 = vrot.slane %v4823, 7
      %v4826 = vshll.u32 %v4738, 16
      %v4828 = vor.u32 %v4825, %v4826
      %v4829 = vsel %vm543, %v4821, %v4828
      %v4830 = vrot.slane %v4825, 4
      %v4832 = vshrl.u32 %v4739, 16
      %v4834 = vrot.slane %v4832, 7
      %v4835 = vshll.u32 %v4739, 16
      %v4837 = vor.u32 %v4834, %v4835
      %v4838 = vrot.slane %v4834, 4
      %v4840 = vshrl.u32 %v4740, 16
      %v4842 = vrot.slane %v4840, 7
      %v4843 = vshll.u32 %v4740, 16
      %v4845 = vor.u32 %v4842, %v4843
      %v4846 = vsel %vm543, %v4838, %v4845
      %v4847 = vrot.slane %v4842, 4
      %v4849 = vshrl.u32 %v4741, 16
      %v4851 = vrot.slane %v4849, 7
      %v4852 = vshll.u32 %v4741, 16
      %v4854 = vor.u32 %v4851, %v4852
      %v4855 = vrot.slane %v4851, 4
      %v4857 = vshrl.u32 %v4742, 16
      %v4859 = vrot.slane %v4857, 7
      %v4860 = vshll.u32 %v4742, 16
      %v4862 = vor.u32 %v4859, %v4860
      %v4863 = vsel %vm543, %v4855, %v4862
      %v4864 = vrot.slane %v4859, 4
      %v4866 = vshrl.u32 %v4743, 16
      %v4868 = vrot.slane %v4866, 7
      %v4869 = vshll.u32 %v4743, 16
      %v4871 = vor.u32 %v4868, %v4869
      %v4872 = vrot.slane %v4868, 4
      %v4874 = vshrl.u32 %v4744, 16
      %v4876 = vrot.slane %v4874, 7
      %v4877 = vshll.u32 %v4744, 16
      %v4879 = vor.u32 %v4876, %v4877
      %v4880 = vsel %vm543, %v4872, %v4879
      %v4881 = vrot.slane %v4876, 4
      %v4883 = vshrl.u32 %v4745, 16
      %v4885 = vrot.slane %v4883, 7
      %v4886 = vshll.u32 %v4745, 16
      %v4888 = vor.u32 %v4885, %v4886
      %v4889 = vrot.slane %v4885, 4
      %v4891 = vshrl.u32 %v4746, 16
      %v4893 = vrot.slane %v4891, 7
      %v4894 = vshll.u32 %v4746, 16
      %v4896 = vor.u32 %v4893, %v4894
      %v4897 = vsel %vm543, %v4889, %v4896
      %v4898 = vrot.slane %v4893, 4
      %v4900 = vshrl.u32 %v4747, 16
      %v4902 = vrot.slane %v4900, 7
      %v4903 = vshll.u32 %v4747, 16
      %v4905 = vor.u32 %v4902, %v4903
      %v4906 = vrot.slane %v4902, 4
      %v4908 = vshrl.u32 %v4748, 16
      %v4910 = vrot.slane %v4908, 7
      %v4911 = vshll.u32 %v4748, 16
      %v4913 = vor.u32 %v4910, %v4911
      %v4914 = vsel %vm543, %v4906, %v4913
      %v4915 = vrot.slane %v4910, 4
      %v4917 = vshrl.u32 %v4749, 16
      %v4919 = vrot.slane %v4917, 7
      %v4920 = vshll.u32 %v4749, 16
      %v4922 = vor.u32 %v4919, %v4920
      %v4923 = vrot.slane %v4919, 4
      %v4925 = vshrl.u32 %v4750, 16
      %v4927 = vrot.slane %v4925, 7
      %v4928 = vshll.u32 %v4750, 16
      %v4930 = vor.u32 %v4927, %v4928
      %v4931 = vsel %vm543, %v4923, %v4930
      %v4932 = vrot.slane %v4927, 4
      %v4934 = vshrl.u32 %v4751, 16
      %v4936 = vrot.slane %v4934, 7
      %v4937 = vshll.u32 %v4751, 16
      %v4939 = vor.u32 %v4936, %v4937
      %v4940 = vrot.slane %v4936, 4
      %v4942 = vshrl.u32 %v4752, 16
      %v4944 = vrot.slane %v4942, 7
      %v4945 = vshll.u32 %v4752, 16
      %v4947 = vor.u32 %v4944, %v4945
      %v4948 = vsel %vm543, %v4940, %v4947
      %v4949 = vrot.slane %v4944, 4
      %v4951 = vshrl.u32 %v4753, 16
      %v4953 = vrot.slane %v4951, 7
      %v4954 = vshll.u32 %v4753, 16
      %v4956 = vor.u32 %v4953, %v4954
      %v4957 = vrot.slane %v4953, 4
      %v4959 = vshrl.u32 %v4754, 16
      %v4961 = vrot.slane %v4959, 7
      %v4962 = vshll.u32 %v4754, 16
      %v4964 = vor.u32 %v4961, %v4962
      %v4965 = vsel %vm543, %v4957, %v4964
      %v4966 = vrot.slane %v4961, 4
      %v4968 = vshrl.u32 %v4755, 16
      %v4970 = vrot.slane %v4968, 7
      %v4971 = vshll.u32 %v4755, 16
      %v4973 = vor.u32 %v4970, %v4971
      %v4974 = vrot.slane %v4970, 4
      %v4976 = vshrl.u32 %v4756, 16
      %v4978 = vrot.slane %v4976, 7
      %v4979 = vshll.u32 %v4756, 16
      %v4981 = vor.u32 %v4978, %v4979
      %v4982 = vsel %vm543, %v4974, %v4981
      %v4983 = vrot.slane %v4978, 4
      %v4985 = vshrl.u32 %v4757, 16
      %v4987 = vrot.slane %v4985, 7
      %v4988 = vshll.u32 %v4757, 16
      %v4990 = vor.u32 %v4987, %v4988
      %v4991 = vrot.slane %v4987, 4
      %v4993 = vshrl.u32 %v4758, 16
      %v4995 = vrot.slane %v4993, 7
      %v4996 = vshll.u32 %v4758, 16
      %v4998 = vor.u32 %v4995, %v4996
      %v4999 = vsel %vm543, %v4991, %v4998
      %v5000 = vrot.slane %v4995, 4
      %v5002 = vshrl.u32 %v4759, 16
      %v5004 = vrot.slane %v5002, 7
      %v5005 = vshll.u32 %v4759, 16
      %v5007 = vor.u32 %v5004, %v5005
      %v5008 = vrot.slane %v5004, 4
      %v5010 = vshrl.u32 %v4760, 16
      %v5012 = vrot.slane %v5010, 7
      %v5013 = vshll.u32 %v4760, 16
      %v5015 = vor.u32 %v5012, %v5013
      %v5016 = vsel %vm543, %v5008, %v5015
      %v5017 = vrot.slane %v5012, 4
      %v5019 = vshrl.u32 %v4761, 16
      %v5021 = vrot.slane %v5019, 7
      %v5022 = vshll.u32 %v4761, 16
      %v5024 = vor.u32 %v5021, %v5022
      %v5025 = vrot.slane %v5021, 4
      %v5027 = vshrl.u32 %v4762, 16
      %v5029 = vrot.slane %v5027, 7
      %v5030 = vshll.u32 %v4762, 16
      %v5032 = vor.u32 %v5029, %v5030
      %v5033 = vsel %vm543, %v5025, %v5032
      %v5034 = vrot.slane %v5029, 4
      %s5083 = scalar_lea.vmem [#allocation3], 12
      %vm5084 = vcmask 60416
      %vm5085 = vmand %vm5084, %vm339
      %v5086 = vld [vmem:[%s5083] sm:$0xf]
      %v5087 = vsel %vm5085, %v4769, %v5086
      %5088 = vst [vmem:[%s5083] sm:$0xf] %v5087
      %5089 = vst.msk [vmem:[%s5083 + $0x4] sm:$0xf] %vm273, %v4778
      %v5090 = vld [vmem:[%s5083 + $0x8] sm:$0x1]
      %v5091 = vsel %vm284, %v4779, %v5090
      %5092 = vst [vmem:[%s5083 + $0x8] sm:$0x1] %v5091
      %v5093 = vld [vmem:[%s5083 + $0xc] sm:$0xf]
      %v5094 = vsel %vm5085, %v4786, %v5093
      %5095 = vst [vmem:[%s5083 + $0xc] sm:$0xf] %v5094
      %5096 = vst.msk [vmem:[%s5083 + $0x10] sm:$0xf] %vm273, %v4795
      %v5097 = vld [vmem:[%s5083 + $0x14] sm:$0x1]
      %v5098 = vsel %vm284, %v4796, %v5097
      %5099 = vst [vmem:[%s5083 + $0x14] sm:$0x1] %v5098
      %v5100 = vld [vmem:[%s5083 + $0x18] sm:$0xf]
      %v5101 = vsel %vm5085, %v4803, %v5100
      %5102 = vst [vmem:[%s5083 + $0x18] sm:$0xf] %v5101
      %5103 = vst.msk [vmem:[%s5083 + $0x1c] sm:$0xf] %vm273, %v4812
      %v5104 = vld [vmem:[%s5083 + $0x20] sm:$0x1]
      %v5105 = vsel %vm284, %v4813, %v5104
      %5106 = vst [vmem:[%s5083 + $0x20] sm:$0x1] %v5105
      %v5107 = vld [vmem:[%s5083 + $0x24] sm:$0xf]
      %v5108 = vsel %vm5085, %v4820, %v5107
      %5109 = vst [vmem:[%s5083 + $0x24] sm:$0xf] %v5108
      %5110 = vst.msk [vmem:[%s5083 + $0x28] sm:$0xf] %vm273, %v4829
      %v5111 = vld [vmem:[%s5083 + $0x2c] sm:$0x1]
      %v5112 = vsel %vm284, %v4830, %v5111
      %5113 = vst [vmem:[%s5083 + $0x2c] sm:$0x1] %v5112
      %v5114 = vld [vmem:[%s5083 + $0x30] sm:$0xf]
      %v5115 = vsel %vm5085, %v4837, %v5114
      %5116 = vst [vmem:[%s5083 + $0x30] sm:$0xf] %v5115
      %5117 = vst.msk [vmem:[%s5083 + $0x34] sm:$0xf] %vm273, %v4846
      %v5118 = vld [vmem:[%s5083 + $0x38] sm:$0x1]
      %v5119 = vsel %vm284, %v4847, %v5118
      %5120 = vst [vmem:[%s5083 + $0x38] sm:$0x1] %v5119
      %v5121 = vld [vmem:[%s5083 + $0x3c] sm:$0xf]
      %v5122 = vsel %vm5085, %v4854, %v5121
      %5123 = vst [vmem:[%s5083 + $0x3c] sm:$0xf] %v5122
      %5124 = vst.msk [vmem:[%s5083 + $0x40] sm:$0xf] %vm273, %v4863
      %v5125 = vld [vmem:[%s5083 + $0x44] sm:$0x1]
      %v5126 = vsel %vm284, %v4864, %v5125
      %5127 = vst [vmem:[%s5083 + $0x44] sm:$0x1] %v5126
      %v5128 = vld [vmem:[%s5083 + $0x48] sm:$0xf]
      %v5129 = vsel %vm5085, %v4871, %v5128
      %5130 = vst [vmem:[%s5083 + $0x48] sm:$0xf] %v5129
      %5131 = vst.msk [vmem:[%s5083 + $0x4c] sm:$0xf] %vm273, %v4880
      %v5132 = vld [vmem:[%s5083 + $0x50] sm:$0x1]
      %v5133 = vsel %vm284, %v4881, %v5132
      %5134 = vst [vmem:[%s5083 + $0x50] sm:$0x1] %v5133
      %v5135 = vld [vmem:[%s5083 + $0x54] sm:$0xf]
      %v5136 = vsel %vm5085, %v4888, %v5135
      %5137 = vst [vmem:[%s5083 + $0x54] sm:$0xf] %v5136
      %5138 = vst.msk [vmem:[%s5083 + $0x58] sm:$0xf] %vm273, %v4897
      %v5139 = vld [vmem:[%s5083 + $0x5c] sm:$0x1]
      %v5140 = vsel %vm284, %v4898, %v5139
      %5141 = vst [vmem:[%s5083 + $0x5c] sm:$0x1] %v5140
      %v5142 = vld [vmem:[%s5083 + $0x60] sm:$0xf]
      %v5143 = vsel %vm5085, %v4905, %v5142
      %5144 = vst [vmem:[%s5083 + $0x60] sm:$0xf] %v5143
      %5145 = vst.msk [vmem:[%s5083 + $0x64] sm:$0xf] %vm273, %v4914
      %v5146 = vld [vmem:[%s5083 + $0x68] sm:$0x1]
      %v5147 = vsel %vm284, %v4915, %v5146
      %5148 = vst [vmem:[%s5083 + $0x68] sm:$0x1] %v5147
      %v5149 = vld [vmem:[%s5083 + $0x6c] sm:$0xf]
      %v5150 = vsel %vm5085, %v4922, %v5149
      %5151 = vst [vmem:[%s5083 + $0x6c] sm:$0xf] %v5150
      %5152 = vst.msk [vmem:[%s5083 + $0x70] sm:$0xf] %vm273, %v4931
      %v5153 = vld [vmem:[%s5083 + $0x74] sm:$0x1]
      %v5154 = vsel %vm284, %v4932, %v5153
      %5155 = vst [vmem:[%s5083 + $0x74] sm:$0x1] %v5154
      %v5156 = vld [vmem:[%s5083 + $0x78] sm:$0xf]
      %v5157 = vsel %vm5085, %v4939, %v5156
      %5158 = vst [vmem:[%s5083 + $0x78] sm:$0xf] %v5157
      %5159 = vst.msk [vmem:[%s5083 + $0x7c] sm:$0xf] %vm273, %v4948
      %v5160 = vld [vmem:[%s5083 + $0x80] sm:$0x1]
      %v5161 = vsel %vm284, %v4949, %v5160
      %5162 = vst [vmem:[%s5083 + $0x80] sm:$0x1] %v5161
      %v5163 = vld [vmem:[%s5083 + $0x84] sm:$0xf]
      %v5164 = vsel %vm5085, %v4956, %v5163
      %5165 = vst [vmem:[%s5083 + $0x84] sm:$0xf] %v5164
      %5166 = vst.msk [vmem:[%s5083 + $0x88] sm:$0xf] %vm273, %v4965
      %v5167 = vld [vmem:[%s5083 + $0x8c] sm:$0x1]
      %v5168 = vsel %vm284, %v4966, %v5167
      %5169 = vst [vmem:[%s5083 + $0x8c] sm:$0x1] %v5168
      %v5170 = vld [vmem:[%s5083 + $0x90] sm:$0xf]
      %v5171 = vsel %vm5085, %v4973, %v5170
      %5172 = vst [vmem:[%s5083 + $0x90] sm:$0xf] %v5171
      %5173 = vst.msk [vmem:[%s5083 + $0x94] sm:$0xf] %vm273, %v4982
      %v5174 = vld [vmem:[%s5083 + $0x98] sm:$0x1]
      %v5175 = vsel %vm284, %v4983, %v5174
      %5176 = vst [vmem:[%s5083 + $0x98] sm:$0x1] %v5175
      %v5177 = vld [vmem:[%s5083 + $0x9c] sm:$0xf]
      %v5178 = vsel %vm5085, %v4990, %v5177
      %5179 = vst [vmem:[%s5083 + $0x9c] sm:$0xf] %v5178
      %5180 = vst.msk [vmem:[%s5083 + $0xa0] sm:$0xf] %vm273, %v4999
      %v5181 = vld [vmem:[%s5083 + $0xa4] sm:$0x1]
      %v5182 = vsel %vm284, %v5000, %v5181
      %5183 = vst [vmem:[%s5083 + $0xa4] sm:$0x1] %v5182
      %v5184 = vld [vmem:[%s5083 + $0xa8] sm:$0xf]
      %v5185 = vsel %vm5085, %v5007, %v5184
      %5186 = vst [vmem:[%s5083 + $0xa8] sm:$0xf] %v5185
      %5187 = vst.msk [vmem:[%s5083 + $0xac] sm:$0xf] %vm273, %v5016
      %v5188 = vld [vmem:[%s5083 + $0xb0] sm:$0x1]
      %v5189 = vsel %vm284, %v5017, %v5188
      %5190 = vst [vmem:[%s5083 + $0xb0] sm:$0x1] %v5189
      %v5191 = vld [vmem:[%s5083 + $0xb4] sm:$0xf]
      %v5192 = vsel %vm5085, %v5024, %v5191
      %5193 = vst [vmem:[%s5083 + $0xb4] sm:$0xf] %v5192
      %5194 = vst.msk [vmem:[%s5083 + $0xb8] sm:$0xf] %vm273, %v5033
      %v5195 = vld [vmem:[%s5083 + $0xbc] sm:$0x1]
      %v5196 = vsel %vm284, %v5034, %v5195
      %5197 = vst [vmem:[%s5083 + $0xbc] sm:$0x1] %v5196
      %v5198 = vld [vmem:[#allocation3] sm:$0xf]
      %v5199 = vld [vmem:[#allocation3 + $0x4] sm:$0xf]
      %v5200 = vld [vmem:[#allocation3 + $0xc] sm:$0xf]
      %v5201 = vld [vmem:[#allocation3 + $0x10] sm:$0xf]
      %v5202 = vld [vmem:[#allocation3 + $0x18] sm:$0xf]
      %v5203 = vld [vmem:[#allocation3 + $0x1c] sm:$0xf]
      %v5204 = vld [vmem:[#allocation3 + $0x24] sm:$0xf]
      %v5205 = vld [vmem:[#allocation3 + $0x28] sm:$0xf]
      %v5206 = vld [vmem:[#allocation3 + $0x30] sm:$0xf]
      %v5207 = vld [vmem:[#allocation3 + $0x34] sm:$0xf]
      %v5208 = vld [vmem:[#allocation3 + $0x3c] sm:$0xf]
      %v5209 = vld [vmem:[#allocation3 + $0x40] sm:$0xf]
      %v5210 = vld [vmem:[#allocation3 + $0x48] sm:$0xf]
      %v5211 = vld [vmem:[#allocation3 + $0x4c] sm:$0xf]
      %v5212 = vld [vmem:[#allocation3 + $0x54] sm:$0xf]
      %v5213 = vld [vmem:[#allocation3 + $0x58] sm:$0xf]
      %v5214 = vld [vmem:[#allocation3 + $0x60] sm:$0xf]
      %v5215 = vld [vmem:[#allocation3 + $0x64] sm:$0xf]
      %v5216 = vld [vmem:[#allocation3 + $0x6c] sm:$0xf]
      %v5217 = vld [vmem:[#allocation3 + $0x70] sm:$0xf]
      %v5218 = vld [vmem:[#allocation3 + $0x78] sm:$0xf]
      %v5219 = vld [vmem:[#allocation3 + $0x7c] sm:$0xf]
      %v5220 = vld [vmem:[#allocation3 + $0x84] sm:$0xf]
      %v5221 = vld [vmem:[#allocation3 + $0x88] sm:$0xf]
      %v5222 = vld [vmem:[#allocation3 + $0x90] sm:$0xf]
      %v5223 = vld [vmem:[#allocation3 + $0x94] sm:$0xf]
      %v5224 = vld [vmem:[#allocation3 + $0x9c] sm:$0xf]
      %v5225 = vld [vmem:[#allocation3 + $0xa0] sm:$0xf]
      %v5226 = vld [vmem:[#allocation3 + $0xa8] sm:$0xf]
      %v5227 = vld [vmem:[#allocation3 + $0xac] sm:$0xf]
      %v5228 = vld [vmem:[#allocation3 + $0xb4] sm:$0xf]
      %v5229 = vld [vmem:[#allocation3 + $0xb8] sm:$0xf]
      %v5230 = vld [vmem:[#allocation3 + $0x8] sm:$0x1]
      %v5231 = vld [vmem:[#allocation3 + $0x14] sm:$0x1]
      %v5232 = vld [vmem:[#allocation3 + $0x20] sm:$0x1]
      %v5233 = vld [vmem:[#allocation3 + $0x2c] sm:$0x1]
      %v5234 = vld [vmem:[#allocation3 + $0x38] sm:$0x1]
      %v5235 = vld [vmem:[#allocation3 + $0x44] sm:$0x1]
      %v5236 = vld [vmem:[#allocation3 + $0x50] sm:$0x1]
      %v5237 = vld [vmem:[#allocation3 + $0x5c] sm:$0x1]
      %v5238 = vld [vmem:[#allocation3 + $0x68] sm:$0x1]
      %v5239 = vld [vmem:[#allocation3 + $0x74] sm:$0x1]
      %v5240 = vld [vmem:[#allocation3 + $0x80] sm:$0x1]
      %v5241 = vld [vmem:[#allocation3 + $0x8c] sm:$0x1]
      %v5242 = vld [vmem:[#allocation3 + $0x98] sm:$0x1]
      %v5243 = vld [vmem:[#allocation3 + $0xa4] sm:$0x1]
      %v5244 = vld [vmem:[#allocation3 + $0xb0] sm:$0x1]
      %v5245 = vld [vmem:[#allocation3 + $0xbc] sm:$0x1]
      %v5247 = vshrl.u32 %v5198, 16
      %v5249 = vrot.slane %v5247, 4
      %v5250 = vshll.u32 %v5198, 16
      %v5252 = vrot.slane %v5250, 5
      %v5253 = vor.u32 %v5249, %v5252
      %v5254 = vrot.slane %v5253, 4
      %v5256 = vshll.u32 %v5199, 16
      %v5258 = vrot.slane %v5256, 5
      %v5259 = vsel %vm1597, %v5254, %v5258
      %v5260 = vshrl.u32 %v5199, 16
      %v5262 = vrot.slane %v5260, 4
      %v5263 = vor.u32 %v5262, %v5258
      %v5264 = vrot.slane %v5263, 4
      %v5266 = vshll.u32 %v5230, 16
      %v5268 = vrot.slane %v5266, 5
      %v5269 = vsel %vm1597, %v5264, %v5268
      %v5271 = vshrl.u32 %v5200, 16
      %v5273 = vrot.slane %v5271, 4
      %v5274 = vshll.u32 %v5200, 16
      %v5276 = vrot.slane %v5274, 5
      %v5277 = vor.u32 %v5273, %v5276
      %v5278 = vrot.slane %v5277, 4
      %v5280 = vshll.u32 %v5201, 16
      %v5282 = vrot.slane %v5280, 5
      %v5283 = vsel %vm1597, %v5278, %v5282
      %v5284 = vshrl.u32 %v5201, 16
      %v5286 = vrot.slane %v5284, 4
      %v5287 = vor.u32 %v5286, %v5282
      %v5288 = vrot.slane %v5287, 4
      %v5290 = vshll.u32 %v5231, 16
      %v5292 = vrot.slane %v5290, 5
      %v5293 = vsel %vm1597, %v5288, %v5292
      %v5295 = vshrl.u32 %v5202, 16
      %v5297 = vrot.slane %v5295, 4
      %v5298 = vshll.u32 %v5202, 16
      %v5300 = vrot.slane %v5298, 5
      %v5301 = vor.u32 %v5297, %v5300
      %v5302 = vrot.slane %v5301, 4
      %v5304 = vshll.u32 %v5203, 16
      %v5306 = vrot.slane %v5304, 5
      %v5307 = vsel %vm1597, %v5302, %v5306
      %v5308 = vshrl.u32 %v5203, 16
      %v5310 = vrot.slane %v5308, 4
      %v5311 = vor.u32 %v5310, %v5306
      %v5312 = vrot.slane %v5311, 4
      %v5314 = vshll.u32 %v5232, 16
      %v5316 = vrot.slane %v5314, 5
      %v5317 = vsel %vm1597, %v5312, %v5316
      %v5319 = vshrl.u32 %v5204, 16
      %v5321 = vrot.slane %v5319, 4
      %v5322 = vshll.u32 %v5204, 16
      %v5324 = vrot.slane %v5322, 5
      %v5325 = vor.u32 %v5321, %v5324
      %v5326 = vrot.slane %v5325, 4
      %v5328 = vshll.u32 %v5205, 16
      %v5330 = vrot.slane %v5328, 5
      %v5331 = vsel %vm1597, %v5326, %v5330
      %v5332 = vshrl.u32 %v5205, 16
      %v5334 = vrot.slane %v5332, 4
      %v5335 = vor.u32 %v5334, %v5330
      %v5336 = vrot.slane %v5335, 4
      %v5338 = vshll.u32 %v5233, 16
      %v5340 = vrot.slane %v5338, 5
      %v5341 = vsel %vm1597, %v5336, %v5340
      %v5343 = vshrl.u32 %v5206, 16
      %v5345 = vrot.slane %v5343, 4
      %v5346 = vshll.u32 %v5206, 16
      %v5348 = vrot.slane %v5346, 5
      %v5349 = vor.u32 %v5345, %v5348
      %v5350 = vrot.slane %v5349, 4
      %v5352 = vshll.u32 %v5207, 16
      %v5354 = vrot.slane %v5352, 5
      %v5355 = vsel %vm1597, %v5350, %v5354
      %v5356 = vshrl.u32 %v5207, 16
      %v5358 = vrot.slane %v5356, 4
      %v5359 = vor.u32 %v5358, %v5354
      %v5360 = vrot.slane %v5359, 4
      %v5362 = vshll.u32 %v5234, 16
      %v5364 = vrot.slane %v5362, 5
      %v5365 = vsel %vm1597, %v5360, %v5364
      %v5367 = vshrl.u32 %v5208, 16
      %v5369 = vrot.slane %v5367, 4
      %v5370 = vshll.u32 %v5208, 16
      %v5372 = vrot.slane %v5370, 5
      %v5373 = vor.u32 %v5369, %v5372
      %v5374 = vrot.slane %v5373, 4
      %v5376 = vshll.u32 %v5209, 16
      %v5378 = vrot.slane %v5376, 5
      %v5379 = vsel %vm1597, %v5374, %v5378
      %v5380 = vshrl.u32 %v5209, 16
      %v5382 = vrot.slane %v5380, 4
      %v5383 = vor.u32 %v5382, %v5378
      %v5384 = vrot.slane %v5383, 4
      %v5386 = vshll.u32 %v5235, 16
      %v5388 = vrot.slane %v5386, 5
      %v5389 = vsel %vm1597, %v5384, %v5388
      %v5391 = vshrl.u32 %v5210, 16
      %v5393 = vrot.slane %v5391, 4
      %v5394 = vshll.u32 %v5210, 16
      %v5396 = vrot.slane %v5394, 5
      %v5397 = vor.u32 %v5393, %v5396
      %v5398 = vrot.slane %v5397, 4
      %v5400 = vshll.u32 %v5211, 16
      %v5402 = vrot.slane %v5400, 5
      %v5403 = vsel %vm1597, %v5398, %v5402
      %v5404 = vshrl.u32 %v5211, 16
      %v5406 = vrot.slane %v5404, 4
      %v5407 = vor.u32 %v5406, %v5402
      %v5408 = vrot.slane %v5407, 4
      %v5410 = vshll.u32 %v5236, 16
      %v5412 = vrot.slane %v5410, 5
      %v5413 = vsel %vm1597, %v5408, %v5412
      %v5415 = vshrl.u32 %v5212, 16
      %v5417 = vrot.slane %v5415, 4
      %v5418 = vshll.u32 %v5212, 16
      %v5420 = vrot.slane %v5418, 5
      %v5421 = vor.u32 %v5417, %v5420
      %v5422 = vrot.slane %v5421, 4
      %v5424 = vshll.u32 %v5213, 16
      %v5426 = vrot.slane %v5424, 5
      %v5427 = vsel %vm1597, %v5422, %v5426
      %v5428 = vshrl.u32 %v5213, 16
      %v5430 = vrot.slane %v5428, 4
      %v5431 = vor.u32 %v5430, %v5426
      %v5432 = vrot.slane %v5431, 4
      %v5434 = vshll.u32 %v5237, 16
      %v5436 = vrot.slane %v5434, 5
      %v5437 = vsel %vm1597, %v5432, %v5436
      %v5439 = vshrl.u32 %v5214, 16
      %v5441 = vrot.slane %v5439, 4
      %v5442 = vshll.u32 %v5214, 16
      %v5444 = vrot.slane %v5442, 5
      %v5445 = vor.u32 %v5441, %v5444
      %v5446 = vrot.slane %v5445, 4
      %v5448 = vshll.u32 %v5215, 16
      %v5450 = vrot.slane %v5448, 5
      %v5451 = vsel %vm1597, %v5446, %v5450
      %v5452 = vshrl.u32 %v5215, 16
      %v5454 = vrot.slane %v5452, 4
      %v5455 = vor.u32 %v5454, %v5450
      %v5456 = vrot.slane %v5455, 4
      %v5458 = vshll.u32 %v5238, 16
      %v5460 = vrot.slane %v5458, 5
      %v5461 = vsel %vm1597, %v5456, %v5460
      %v5463 = vshrl.u32 %v5216, 16
      %v5465 = vrot.slane %v5463, 4
      %v5466 = vshll.u32 %v5216, 16
      %v5468 = vrot.slane %v5466, 5
      %v5469 = vor.u32 %v5465, %v5468
      %v5470 = vrot.slane %v5469, 4
      %v5472 = vshll.u32 %v5217, 16
      %v5474 = vrot.slane %v5472, 5
      %v5475 = vsel %vm1597, %v5470, %v5474
      %v5476 = vshrl.u32 %v5217, 16
      %v5478 = vrot.slane %v5476, 4
      %v5479 = vor.u32 %v5478, %v5474
      %v5480 = vrot.slane %v5479, 4
      %v5482 = vshll.u32 %v5239, 16
      %v5484 = vrot.slane %v5482, 5
      %v5485 = vsel %vm1597, %v5480, %v5484
      %v5487 = vshrl.u32 %v5218, 16
      %v5489 = vrot.slane %v5487, 4
      %v5490 = vshll.u32 %v5218, 16
      %v5492 = vrot.slane %v5490, 5
      %v5493 = vor.u32 %v5489, %v5492
      %v5494 = vrot.slane %v5493, 4
      %v5496 = vshll.u32 %v5219, 16
      %v5498 = vrot.slane %v5496, 5
      %v5499 = vsel %vm1597, %v5494, %v5498
      %v5500 = vshrl.u32 %v5219, 16
      %v5502 = vrot.slane %v5500, 4
      %v5503 = vor.u32 %v5502, %v5498
      %v5504 = vrot.slane %v5503, 4
      %v5506 = vshll.u32 %v5240, 16
      %v5508 = vrot.slane %v5506, 5
      %v5509 = vsel %vm1597, %v5504, %v5508
      %v5511 = vshrl.u32 %v5220, 16
      %v5513 = vrot.slane %v5511, 4
      %v5514 = vshll.u32 %v5220, 16
      %v5516 = vrot.slane %v5514, 5
      %v5517 = vor.u32 %v5513, %v5516
      %v5518 = vrot.slane %v5517, 4
      %v5520 = vshll.u32 %v5221, 16
      %v5522 = vrot.slane %v5520, 5
      %v5523 = vsel %vm1597, %v5518, %v5522
      %v5524 = vshrl.u32 %v5221, 16
      %v5526 = vrot.slane %v5524, 4
      %v5527 = vor.u32 %v5526, %v5522
      %v5528 = vrot.slane %v5527, 4
      %v5530 = vshll.u32 %v5241, 16
      %v5532 = vrot.slane %v5530, 5
      %v5533 = vsel %vm1597, %v5528, %v5532
      %v5535 = vshrl.u32 %v5222, 16
      %v5537 = vrot.slane %v5535, 4
      %v5538 = vshll.u32 %v5222, 16
      %v5540 = vrot.slane %v5538, 5
      %v5541 = vor.u32 %v5537, %v5540
      %v5542 = vrot.slane %v5541, 4
      %v5544 = vshll.u32 %v5223, 16
      %v5546 = vrot.slane %v5544, 5
      %v5547 = vsel %vm1597, %v5542, %v5546
      %v5548 = vshrl.u32 %v5223, 16
      %v5550 = vrot.slane %v5548, 4
      %v5551 = vor.u32 %v5550, %v5546
      %v5552 = vrot.slane %v5551, 4
      %v5554 = vshll.u32 %v5242, 16
      %v5556 = vrot.slane %v5554, 5
      %v5557 = vsel %vm1597, %v5552, %v5556
      %v5559 = vshrl.u32 %v5224, 16
      %v5561 = vrot.slane %v5559, 4
      %v5562 = vshll.u32 %v5224, 16
      %v5564 = vrot.slane %v5562, 5
      %v5565 = vor.u32 %v5561, %v5564
      %v5566 = vrot.slane %v5565, 4
      %v5568 = vshll.u32 %v5225, 16
      %v5570 = vrot.slane %v5568, 5
      %v5571 = vsel %vm1597, %v5566, %v5570
      %v5572 = vshrl.u32 %v5225, 16
      %v5574 = vrot.slane %v5572, 4
      %v5575 = vor.u32 %v5574, %v5570
      %v5576 = vrot.slane %v5575, 4
      %v5578 = vshll.u32 %v5243, 16
      %v5580 = vrot.slane %v5578, 5
      %v5581 = vsel %vm1597, %v5576, %v5580
      %v5583 = vshrl.u32 %v5226, 16
      %v5585 = vrot.slane %v5583, 4
      %v5586 = vshll.u32 %v5226, 16
      %v5588 = vrot.slane %v5586, 5
      %v5589 = vor.u32 %v5585, %v5588
      %v5590 = vrot.slane %v5589, 4
      %v5592 = vshll.u32 %v5227, 16
      %v5594 = vrot.slane %v5592, 5
      %v5595 = vsel %vm1597, %v5590, %v5594
      %v5596 = vshrl.u32 %v5227, 16
      %v5598 = vrot.slane %v5596, 4
      %v5599 = vor.u32 %v5598, %v5594
      %v5600 = vrot.slane %v5599, 4
      %v5602 = vshll.u32 %v5244, 16
      %v5604 = vrot.slane %v5602, 5
      %v5605 = vsel %vm1597, %v5600, %v5604
      %v5607 = vshrl.u32 %v5228, 16
      %v5609 = vrot.slane %v5607, 4
      %v5610 = vshll.u32 %v5228, 16
      %v5612 = vrot.slane %v5610, 5
      %v5613 = vor.u32 %v5609, %v5612
      %v5614 = vrot.slane %v5613, 4
      %v5616 = vshll.u32 %v5229, 16
      %v5618 = vrot.slane %v5616, 5
      %v5619 = vsel %vm1597, %v5614, %v5618
      %v5620 = vshrl.u32 %v5229, 16
      %v5622 = vrot.slane %v5620, 4
      %v5623 = vor.u32 %v5622, %v5618
      %v5624 = vrot.slane %v5623, 4
      %v5626 = vshll.u32 %v5245, 16
      %v5628 = vrot.slane %v5626, 5
      %v5629 = vsel %vm1597, %v5624, %v5628
      %v5630 = vld [vmem:[#allocation3] sm:$0xe]
      %v5631 = vld [vmem:[#allocation3 + $0xc] sm:$0xe]
      %v5632 = vld [vmem:[#allocation3 + $0x18] sm:$0xe]
      %v5633 = vld [vmem:[#allocation3 + $0x24] sm:$0xe]
      %v5634 = vld [vmem:[#allocation3 + $0x30] sm:$0xe]
      %v5635 = vld [vmem:[#allocation3 + $0x3c] sm:$0xe]
      %v5636 = vld [vmem:[#allocation3 + $0x48] sm:$0xe]
      %v5637 = vld [vmem:[#allocation3 + $0x54] sm:$0xe]
      %v5638 = vld [vmem:[#allocation3 + $0x60] sm:$0xe]
      %v5639 = vld [vmem:[#allocation3 + $0x6c] sm:$0xe]
      %v5640 = vld [vmem:[#allocation3 + $0x78] sm:$0xe]
      %v5641 = vld [vmem:[#allocation3 + $0x84] sm:$0xe]
      %v5642 = vld [vmem:[#allocation3 + $0x90] sm:$0xe]
      %v5643 = vld [vmem:[#allocation3 + $0x9c] sm:$0xe]
      %v5644 = vld [vmem:[#allocation3 + $0xa8] sm:$0xe]
      %v5645 = vld [vmem:[#allocation3 + $0xb4] sm:$0xe]
      %v5694 = vrot.slane %v5630, 5
      %v5695 = vrot.slane %v5694, 4
      %v5696 = vrot.slane %v5199, 5
      %v5697 = vsel %vm2048, %v5695, %v5696
      %v5698 = vrot.slane %v5696, 4
      %v5699 = vrot.slane %v5230, 5
      %v5700 = vsel %vm2048, %v5698, %v5699
      %v5701 = vrot.slane %v5631, 5
      %v5702 = vrot.slane %v5701, 4
      %v5703 = vrot.slane %v5201, 5
      %v5704 = vsel %vm2048, %v5702, %v5703
      %v5705 = vrot.slane %v5703, 4
      %v5706 = vrot.slane %v5231, 5
      %v5707 = vsel %vm2048, %v5705, %v5706
      %v5708 = vrot.slane %v5632, 5
      %v5709 = vrot.slane %v5708, 4
      %v5710 = vrot.slane %v5203, 5
      %v5711 = vsel %vm2048, %v5709, %v5710
      %v5712 = vrot.slane %v5710, 4
      %v5713 = vrot.slane %v5232, 5
      %v5714 = vsel %vm2048, %v5712, %v5713
      %v5715 = vrot.slane %v5633, 5
      %v5716 = vrot.slane %v5715, 4
      %v5717 = vrot.slane %v5205, 5
      %v5718 = vsel %vm2048, %v5716, %v5717
      %v5719 = vrot.slane %v5717, 4
      %v5720 = vrot.slane %v5233, 5
      %v5721 = vsel %vm2048, %v5719, %v5720
      %v5722 = vrot.slane %v5634, 5
      %v5723 = vrot.slane %v5722, 4
      %v5724 = vrot.slane %v5207, 5
      %v5725 = vsel %vm2048, %v5723, %v5724
      %v5726 = vrot.slane %v5724, 4
      %v5727 = vrot.slane %v5234, 5
      %v5728 = vsel %vm2048, %v5726, %v5727
      %v5729 = vrot.slane %v5635, 5
      %v5730 = vrot.slane %v5729, 4
      %v5731 = vrot.slane %v5209, 5
      %v5732 = vsel %vm2048, %v5730, %v5731
      %v5733 = vrot.slane %v5731, 4
      %v5734 = vrot.slane %v5235, 5
      %v5735 = vsel %vm2048, %v5733, %v5734
      %v5736 = vrot.slane %v5636, 5
      %v5737 = vrot.slane %v5736, 4
      %v5738 = vrot.slane %v5211, 5
      %v5739 = vsel %vm2048, %v5737, %v5738
      %v5740 = vrot.slane %v5738, 4
      %v5741 = vrot.slane %v5236, 5
      %v5742 = vsel %vm2048, %v5740, %v5741
      %v5743 = vrot.slane %v5637, 5
      %v5744 = vrot.slane %v5743, 4
      %v5745 = vrot.slane %v5213, 5
      %v5746 = vsel %vm2048, %v5744, %v5745
      %v5747 = vrot.slane %v5745, 4
      %v5748 = vrot.slane %v5237, 5
      %v5749 = vsel %vm2048, %v5747, %v5748
      %v5750 = vrot.slane %v5638, 5
      %v5751 = vrot.slane %v5750, 4
      %v5752 = vrot.slane %v5215, 5
      %v5753 = vsel %vm2048, %v5751, %v5752
      %v5754 = vrot.slane %v5752, 4
      %v5755 = vrot.slane %v5238, 5
      %v5756 = vsel %vm2048, %v5754, %v5755
      %v5757 = vrot.slane %v5639, 5
      %v5758 = vrot.slane %v5757, 4
      %v5759 = vrot.slane %v5217, 5
      %v5760 = vsel %vm2048, %v5758, %v5759
      %v5761 = vrot.slane %v5759, 4
      %v5762 = vrot.slane %v5239, 5
      %v5763 = vsel %vm2048, %v5761, %v5762
      %v5764 = vrot.slane %v5640, 5
      %v5765 = vrot.slane %v5764, 4
      %v5766 = vrot.slane %v5219, 5
      %v5767 = vsel %vm2048, %v5765, %v5766
      %v5768 = vrot.slane %v5766, 4
      %v5769 = vrot.slane %v5240, 5
      %v5770 = vsel %vm2048, %v5768, %v5769
      %v5771 = vrot.slane %v5641, 5
      %v5772 = vrot.slane %v5771, 4
      %v5773 = vrot.slane %v5221, 5
      %v5774 = vsel %vm2048, %v5772, %v5773
      %v5775 = vrot.slane %v5773, 4
      %v5776 = vrot.slane %v5241, 5
      %v5777 = vsel %vm2048, %v5775, %v5776
      %v5778 = vrot.slane %v5642, 5
      %v5779 = vrot.slane %v5778, 4
      %v5780 = vrot.slane %v5223, 5
      %v5781 = vsel %vm2048, %v5779, %v5780
      %v5782 = vrot.slane %v5780, 4
      %v5783 = vrot.slane %v5242, 5
      %v5784 = vsel %vm2048, %v5782, %v5783
      %v5785 = vrot.slane %v5643, 5
      %v5786 = vrot.slane %v5785, 4
      %v5787 = vrot.slane %v5225, 5
      %v5788 = vsel %vm2048, %v5786, %v5787
      %v5789 = vrot.slane %v5787, 4
      %v5790 = vrot.slane %v5243, 5
      %v5791 = vsel %vm2048, %v5789, %v5790
      %v5792 = vrot.slane %v5644, 5
      %v5793 = vrot.slane %v5792, 4
      %v5794 = vrot.slane %v5227, 5
      %v5795 = vsel %vm2048, %v5793, %v5794
      %v5796 = vrot.slane %v5794, 4
      %v5797 = vrot.slane %v5244, 5
      %v5798 = vsel %vm2048, %v5796, %v5797
      %v5799 = vrot.slane %v5645, 5
      %v5800 = vrot.slane %v5799, 4
      %v5801 = vrot.slane %v5229, 5
      %v5802 = vsel %vm2048, %v5800, %v5801
      %v5803 = vrot.slane %v5801, 4
      %v5804 = vrot.slane %v5245, 5
      %v5805 = vsel %vm2048, %v5803, %v5804
      %v5806 = vld [vmem:[%s5083] sm:$0xf]
      %v5807 = vld [vmem:[%s5083 + $0x4] sm:$0xf]
      %v5808 = vld [vmem:[%s5083 + $0xc] sm:$0xf]
      %v5809 = vld [vmem:[%s5083 + $0x10] sm:$0xf]
      %v5810 = vld [vmem:[%s5083 + $0x18] sm:$0xf]
      %v5811 = vld [vmem:[%s5083 + $0x1c] sm:$0xf]
      %v5812 = vld [vmem:[%s5083 + $0x24] sm:$0xf]
      %v5813 = vld [vmem:[%s5083 + $0x28] sm:$0xf]
      %v5814 = vld [vmem:[%s5083 + $0x30] sm:$0xf]
      %v5815 = vld [vmem:[%s5083 + $0x34] sm:$0xf]
      %v5816 = vld [vmem:[%s5083 + $0x3c] sm:$0xf]
      %v5817 = vld [vmem:[%s5083 + $0x40] sm:$0xf]
      %v5818 = vld [vmem:[%s5083 + $0x48] sm:$0xf]
      %v5819 = vld [vmem:[%s5083 + $0x4c] sm:$0xf]
      %v5820 = vld [vmem:[%s5083 + $0x54] sm:$0xf]
      %v5821 = vld [vmem:[%s5083 + $0x58] sm:$0xf]
      %v5822 = vld [vmem:[%s5083 + $0x60] sm:$0xf]
      %v5823 = vld [vmem:[%s5083 + $0x64] sm:$0xf]
      %v5824 = vld [vmem:[%s5083 + $0x6c] sm:$0xf]
      %v5825 = vld [vmem:[%s5083 + $0x70] sm:$0xf]
      %v5826 = vld [vmem:[%s5083 + $0x78] sm:$0xf]
      %v5827 = vld [vmem:[%s5083 + $0x7c] sm:$0xf]
      %v5828 = vld [vmem:[%s5083 + $0x84] sm:$0xf]
      %v5829 = vld [vmem:[%s5083 + $0x88] sm:$0xf]
      %v5830 = vld [vmem:[%s5083 + $0x90] sm:$0xf]
      %v5831 = vld [vmem:[%s5083 + $0x94] sm:$0xf]
      %v5832 = vld [vmem:[%s5083 + $0x9c] sm:$0xf]
      %v5833 = vld [vmem:[%s5083 + $0xa0] sm:$0xf]
      %v5834 = vld [vmem:[%s5083 + $0xa8] sm:$0xf]
      %v5835 = vld [vmem:[%s5083 + $0xac] sm:$0xf]
      %v5836 = vld [vmem:[%s5083 + $0xb4] sm:$0xf]
      %v5837 = vld [vmem:[%s5083 + $0xb8] sm:$0xf]
      %v5838 = vld [vmem:[%s5083 + $0x8] sm:$0x1]
      %v5839 = vld [vmem:[%s5083 + $0x14] sm:$0x1]
      %v5840 = vld [vmem:[%s5083 + $0x20] sm:$0x1]
      %v5841 = vld [vmem:[%s5083 + $0x2c] sm:$0x1]
      %v5842 = vld [vmem:[%s5083 + $0x38] sm:$0x1]
      %v5843 = vld [vmem:[%s5083 + $0x44] sm:$0x1]
      %v5844 = vld [vmem:[%s5083 + $0x50] sm:$0x1]
      %v5845 = vld [vmem:[%s5083 + $0x5c] sm:$0x1]
      %v5846 = vld [vmem:[%s5083 + $0x68] sm:$0x1]
      %v5847 = vld [vmem:[%s5083 + $0x74] sm:$0x1]
      %v5848 = vld [vmem:[%s5083 + $0x80] sm:$0x1]
      %v5849 = vld [vmem:[%s5083 + $0x8c] sm:$0x1]
      %v5850 = vld [vmem:[%s5083 + $0x98] sm:$0x1]
      %v5851 = vld [vmem:[%s5083 + $0xa4] sm:$0x1]
      %v5852 = vld [vmem:[%s5083 + $0xb0] sm:$0x1]
      %v5853 = vld [vmem:[%s5083 + $0xbc] sm:$0x1]
      %v5855 = vshrl.u32 %v5806, 16
      %v5857 = vrot.slane %v5855, 4
      %v5858 = vshll.u32 %v5806, 16
      %v5860 = vrot.slane %v5858, 5
      %v5861 = vor.u32 %v5857, %v5860
      %v5862 = vrot.slane %v5861, 4
      %v5864 = vshll.u32 %v5807, 16
      %v5866 = vrot.slane %v5864, 5
      %v5867 = vsel %vm1597, %v5862, %v5866
      %v5868 = vshrl.u32 %v5807, 16
      %v5870 = vrot.slane %v5868, 4
      %v5871 = vor.u32 %v5870, %v5866
      %v5872 = vrot.slane %v5871, 4
      %v5874 = vshll.u32 %v5838, 16
      %v5876 = vrot.slane %v5874, 5
      %v5877 = vsel %vm1597, %v5872, %v5876
      %v5879 = vshrl.u32 %v5808, 16
      %v5881 = vrot.slane %v5879, 4
      %v5882 = vshll.u32 %v5808, 16
      %v5884 = vrot.slane %v5882, 5
      %v5885 = vor.u32 %v5881, %v5884
      %v5886 = vrot.slane %v5885, 4
      %v5888 = vshll.u32 %v5809, 16
      %v5890 = vrot.slane %v5888, 5
      %v5891 = vsel %vm1597, %v5886, %v5890
      %v5892 = vshrl.u32 %v5809, 16
      %v5894 = vrot.slane %v5892, 4
      %v5895 = vor.u32 %v5894, %v5890
      %v5896 = vrot.slane %v5895, 4
      %v5898 = vshll.u32 %v5839, 16
      %v5900 = vrot.slane %v5898, 5
      %v5901 = vsel %vm1597, %v5896, %v5900
      %v5903 = vshrl.u32 %v5810, 16
      %v5905 = vrot.slane %v5903, 4
      %v5906 = vshll.u32 %v5810, 16
      %v5908 = vrot.slane %v5906, 5
      %v5909 = vor.u32 %v5905, %v5908
      %v5910 = vrot.slane %v5909, 4
      %v5912 = vshll.u32 %v5811, 16
      %v5914 = vrot.slane %v5912, 5
      %v5915 = vsel %vm1597, %v5910, %v5914
      %v5916 = vshrl.u32 %v5811, 16
      %v5918 = vrot.slane %v5916, 4
      %v5919 = vor.u32 %v5918, %v5914
      %v5920 = vrot.slane %v5919, 4
      %v5922 = vshll.u32 %v5840, 16
      %v5924 = vrot.slane %v5922, 5
      %v5925 = vsel %vm1597, %v5920, %v5924
      %v5927 = vshrl.u32 %v5812, 16
      %v5929 = vrot.slane %v5927, 4
      %v5930 = vshll.u32 %v5812, 16
      %v5932 = vrot.slane %v5930, 5
      %v5933 = vor.u32 %v5929, %v5932
      %v5934 = vrot.slane %v5933, 4
      %v5936 = vshll.u32 %v5813, 16
      %v5938 = vrot.slane %v5936, 5
      %v5939 = vsel %vm1597, %v5934, %v5938
      %v5940 = vshrl.u32 %v5813, 16
      %v5942 = vrot.slane %v5940, 4
      %v5943 = vor.u32 %v5942, %v5938
      %v5944 = vrot.slane %v5943, 4
      %v5946 = vshll.u32 %v5841, 16
      %v5948 = vrot.slane %v5946, 5
      %v5949 = vsel %vm1597, %v5944, %v5948
      %v5951 = vshrl.u32 %v5814, 16
      %v5953 = vrot.slane %v5951, 4
      %v5954 = vshll.u32 %v5814, 16
      %v5956 = vrot.slane %v5954, 5
      %v5957 = vor.u32 %v5953, %v5956
      %v5958 = vrot.slane %v5957, 4
      %v5960 = vshll.u32 %v5815, 16
      %v5962 = vrot.slane %v5960, 5
      %v5963 = vsel %vm1597, %v5958, %v5962
      %v5964 = vshrl.u32 %v5815, 16
      %v5966 = vrot.slane %v5964, 4
      %v5967 = vor.u32 %v5966, %v5962
      %v5968 = vrot.slane %v5967, 4
      %v5970 = vshll.u32 %v5842, 16
      %v5972 = vrot.slane %v5970, 5
      %v5973 = vsel %vm1597, %v5968, %v5972
      %v5975 = vshrl.u32 %v5816, 16
      %v5977 = vrot.slane %v5975, 4
      %v5978 = vshll.u32 %v5816, 16
      %v5980 = vrot.slane %v5978, 5
      %v5981 = vor.u32 %v5977, %v5980
      %v5982 = vrot.slane %v5981, 4
      %v5984 = vshll.u32 %v5817, 16
      %v5986 = vrot.slane %v5984, 5
      %v5987 = vsel %vm1597, %v5982, %v5986
      %v5988 = vshrl.u32 %v5817, 16
      %v5990 = vrot.slane %v5988, 4
      %v5991 = vor.u32 %v5990, %v5986
      %v5992 = vrot.slane %v5991, 4
      %v5994 = vshll.u32 %v5843, 16
      %v5996 = vrot.slane %v5994, 5
      %v5997 = vsel %vm1597, %v5992, %v5996
      %v5999 = vshrl.u32 %v5818, 16
      %v6001 = vrot.slane %v5999, 4
      %v6002 = vshll.u32 %v5818, 16
      %v6004 = vrot.slane %v6002, 5
      %v6005 = vor.u32 %v6001, %v6004
      %v6006 = vrot.slane %v6005, 4
      %v6008 = vshll.u32 %v5819, 16
      %v6010 = vrot.slane %v6008, 5
      %v6011 = vsel %vm1597, %v6006, %v6010
      %v6012 = vshrl.u32 %v5819, 16
      %v6014 = vrot.slane %v6012, 4
      %v6015 = vor.u32 %v6014, %v6010
      %v6016 = vrot.slane %v6015, 4
      %v6018 = vshll.u32 %v5844, 16
      %v6020 = vrot.slane %v6018, 5
      %v6021 = vsel %vm1597, %v6016, %v6020
      %v6023 = vshrl.u32 %v5820, 16
      %v6025 = vrot.slane %v6023, 4
      %v6026 = vshll.u32 %v5820, 16
      %v6028 = vrot.slane %v6026, 5
      %v6029 = vor.u32 %v6025, %v6028
      %v6030 = vrot.slane %v6029, 4
      %v6032 = vshll.u32 %v5821, 16
      %v6034 = vrot.slane %v6032, 5
      %v6035 = vsel %vm1597, %v6030, %v6034
      %v6036 = vshrl.u32 %v5821, 16
      %v6038 = vrot.slane %v6036, 4
      %v6039 = vor.u32 %v6038, %v6034
      %v6040 = vrot.slane %v6039, 4
      %v6042 = vshll.u32 %v5845, 16
      %v6044 = vrot.slane %v6042, 5
      %v6045 = vsel %vm1597, %v6040, %v6044
      %v6047 = vshrl.u32 %v5822, 16
      %v6049 = vrot.slane %v6047, 4
      %v6050 = vshll.u32 %v5822, 16
      %v6052 = vrot.slane %v6050, 5
      %v6053 = vor.u32 %v6049, %v6052
      %v6054 = vrot.slane %v6053, 4
      %v6056 = vshll.u32 %v5823, 16
      %v6058 = vrot.slane %v6056, 5
      %v6059 = vsel %vm1597, %v6054, %v6058
      %v6060 = vshrl.u32 %v5823, 16
      %v6062 = vrot.slane %v6060, 4
      %v6063 = vor.u32 %v6062, %v6058
      %v6064 = vrot.slane %v6063, 4
      %v6066 = vshll.u32 %v5846, 16
      %v6068 = vrot.slane %v6066, 5
      %v6069 = vsel %vm1597, %v6064, %v6068
      %v6071 = vshrl.u32 %v5824, 16
      %v6073 = vrot.slane %v6071, 4
      %v6074 = vshll.u32 %v5824, 16
      %v6076 = vrot.slane %v6074, 5
      %v6077 = vor.u32 %v6073, %v6076
      %v6078 = vrot.slane %v6077, 4
      %v6080 = vshll.u32 %v5825, 16
      %v6082 = vrot.slane %v6080, 5
      %v6083 = vsel %vm1597, %v6078, %v6082
      %v6084 = vshrl.u32 %v5825, 16
      %v6086 = vrot.slane %v6084, 4
      %v6087 = vor.u32 %v6086, %v6082
      %v6088 = vrot.slane %v6087, 4
      %v6090 = vshll.u32 %v5847, 16
      %v6092 = vrot.slane %v6090, 5
      %v6093 = vsel %vm1597, %v6088, %v6092
      %v6095 = vshrl.u32 %v5826, 16
      %v6097 = vrot.slane %v6095, 4
      %v6098 = vshll.u32 %v5826, 16
      %v6100 = vrot.slane %v6098, 5
      %v6101 = vor.u32 %v6097, %v6100
      %v6102 = vrot.slane %v6101, 4
      %v6104 = vshll.u32 %v5827, 16
      %v6106 = vrot.slane %v6104, 5
      %v6107 = vsel %vm1597, %v6102, %v6106
      %v6108 = vshrl.u32 %v5827, 16
      %v6110 = vrot.slane %v6108, 4
      %v6111 = vor.u32 %v6110, %v6106
      %v6112 = vrot.slane %v6111, 4
      %v6114 = vshll.u32 %v5848, 16
      %v6116 = vrot.slane %v6114, 5
      %v6117 = vsel %vm1597, %v6112, %v6116
      %v6119 = vshrl.u32 %v5828, 16
      %v6121 = vrot.slane %v6119, 4
      %v6122 = vshll.u32 %v5828, 16
      %v6124 = vrot.slane %v6122, 5
      %v6125 = vor.u32 %v6121, %v6124
      %v6126 = vrot.slane %v6125, 4
      %v6128 = vshll.u32 %v5829, 16
      %v6130 = vrot.slane %v6128, 5
      %v6131 = vsel %vm1597, %v6126, %v6130
      %v6132 = vshrl.u32 %v5829, 16
      %v6134 = vrot.slane %v6132, 4
      %v6135 = vor.u32 %v6134, %v6130
      %v6136 = vrot.slane %v6135, 4
      %v6138 = vshll.u32 %v5849, 16
      %v6140 = vrot.slane %v6138, 5
      %v6141 = vsel %vm1597, %v6136, %v6140
      %v6143 = vshrl.u32 %v5830, 16
      %v6145 = vrot.slane %v6143, 4
      %v6146 = vshll.u32 %v5830, 16
      %v6148 = vrot.slane %v6146, 5
      %v6149 = vor.u32 %v6145, %v6148
      %v6150 = vrot.slane %v6149, 4
      %v6152 = vshll.u32 %v5831, 16
      %v6154 = vrot.slane %v6152, 5
      %v6155 = vsel %vm1597, %v6150, %v6154
      %v6156 = vshrl.u32 %v5831, 16
      %v6158 = vrot.slane %v6156, 4
      %v6159 = vor.u32 %v6158, %v6154
      %v6160 = vrot.slane %v6159, 4
      %v6162 = vshll.u32 %v5850, 16
      %v6164 = vrot.slane %v6162, 5
      %v6165 = vsel %vm1597, %v6160, %v6164
      %v6167 = vshrl.u32 %v5832, 16
      %v6169 = vrot.slane %v6167, 4
      %v6170 = vshll.u32 %v5832, 16
      %v6172 = vrot.slane %v6170, 5
      %v6173 = vor.u32 %v6169, %v6172
      %v6174 = vrot.slane %v6173, 4
      %v6176 = vshll.u32 %v5833, 16
      %v6178 = vrot.slane %v6176, 5
      %v6179 = vsel %vm1597, %v6174, %v6178
      %v6180 = vshrl.u32 %v5833, 16
      %v6182 = vrot.slane %v6180, 4
      %v6183 = vor.u32 %v6182, %v6178
      %v6184 = vrot.slane %v6183, 4
      %v6186 = vshll.u32 %v5851, 16
      %v6188 = vrot.slane %v6186, 5
      %v6189 = vsel %vm1597, %v6184, %v6188
      %v6191 = vshrl.u32 %v5834, 16
      %v6193 = vrot.slane %v6191, 4
      %v6194 = vshll.u32 %v5834, 16
      %v6196 = vrot.slane %v6194, 5
      %v6197 = vor.u32 %v6193, %v6196
      %v6198 = vrot.slane %v6197, 4
      %v6200 = vshll.u32 %v5835, 16
      %v6202 = vrot.slane %v6200, 5
      %v6203 = vsel %vm1597, %v6198, %v6202
      %v6204 = vshrl.u32 %v5835, 16
      %v6206 = vrot.slane %v6204, 4
      %v6207 = vor.u32 %v6206, %v6202
      %v6208 = vrot.slane %v6207, 4
      %v6210 = vshll.u32 %v5852, 16
      %v6212 = vrot.slane %v6210, 5
      %v6213 = vsel %vm1597, %v6208, %v6212
      %v6215 = vshrl.u32 %v5836, 16
      %v6217 = vrot.slane %v6215, 4
      %v6218 = vshll.u32 %v5836, 16
      %v6220 = vrot.slane %v6218, 5
      %v6221 = vor.u32 %v6217, %v6220
      %v6222 = vrot.slane %v6221, 4
      %v6224 = vshll.u32 %v5837, 16
      %v6226 = vrot.slane %v6224, 5
      %v6227 = vsel %vm1597, %v6222, %v6226
      %v6228 = vshrl.u32 %v5837, 16
      %v6230 = vrot.slane %v6228, 4
      %v6231 = vor.u32 %v6230, %v6226
      %v6232 = vrot.slane %v6231, 4
      %v6234 = vshll.u32 %v5853, 16
      %v6236 = vrot.slane %v6234, 5
      %v6237 = vsel %vm1597, %v6232, %v6236
      %v6238 = vld [vmem:[%s5083] sm:$0xe]
      %v6239 = vld [vmem:[%s5083 + $0xc] sm:$0xe]
      %v6240 = vld [vmem:[%s5083 + $0x18] sm:$0xe]
      %v6241 = vld [vmem:[%s5083 + $0x24] sm:$0xe]
      %v6242 = vld [vmem:[%s5083 + $0x30] sm:$0xe]
      %v6243 = vld [vmem:[%s5083 + $0x3c] sm:$0xe]
      %v6244 = vld [vmem:[%s5083 + $0x48] sm:$0xe]
      %v6245 = vld [vmem:[%s5083 + $0x54] sm:$0xe]
      %v6246 = vld [vmem:[%s5083 + $0x60] sm:$0xe]
      %v6247 = vld [vmem:[%s5083 + $0x6c] sm:$0xe]
      %v6248 = vld [vmem:[%s5083 + $0x78] sm:$0xe]
      %v6249 = vld [vmem:[%s5083 + $0x84] sm:$0xe]
      %v6250 = vld [vmem:[%s5083 + $0x90] sm:$0xe]
      %v6251 = vld [vmem:[%s5083 + $0x9c] sm:$0xe]
      %v6252 = vld [vmem:[%s5083 + $0xa8] sm:$0xe]
      %v6253 = vld [vmem:[%s5083 + $0xb4] sm:$0xe]
      %v6302 = vrot.slane %v6238, 5
      %v6303 = vrot.slane %v6302, 4
      %v6304 = vrot.slane %v5807, 5
      %v6305 = vsel %vm2048, %v6303, %v6304
      %v6306 = vrot.slane %v6304, 4
      %v6307 = vrot.slane %v5838, 5
      %v6308 = vsel %vm2048, %v6306, %v6307
      %v6309 = vrot.slane %v6239, 5
      %v6310 = vrot.slane %v6309, 4
      %v6311 = vrot.slane %v5809, 5
      %v6312 = vsel %vm2048, %v6310, %v6311
      %v6313 = vrot.slane %v6311, 4
      %v6314 = vrot.slane %v5839, 5
      %v6315 = vsel %vm2048, %v6313, %v6314
      %v6316 = vrot.slane %v6240, 5
      %v6317 = vrot.slane %v6316, 4
      %v6318 = vrot.slane %v5811, 5
      %v6319 = vsel %vm2048, %v6317, %v6318
      %v6320 = vrot.slane %v6318, 4
      %v6321 = vrot.slane %v5840, 5
      %v6322 = vsel %vm2048, %v6320, %v6321
      %v6323 = vrot.slane %v6241, 5
      %v6324 = vrot.slane %v6323, 4
      %v6325 = vrot.slane %v5813, 5
      %v6326 = vsel %vm2048, %v6324, %v6325
      %v6327 = vrot.slane %v6325, 4
      %v6328 = vrot.slane %v5841, 5
      %v6329 = vsel %vm2048, %v6327, %v6328
      %v6330 = vrot.slane %v6242, 5
      %v6331 = vrot.slane %v6330, 4
      %v6332 = vrot.slane %v5815, 5
      %v6333 = vsel %vm2048, %v6331, %v6332
      %v6334 = vrot.slane %v6332, 4
      %v6335 = vrot.slane %v5842, 5
      %v6336 = vsel %vm2048, %v6334, %v6335
      %v6337 = vrot.slane %v6243, 5
      %v6338 = vrot.slane %v6337, 4
      %v6339 = vrot.slane %v5817, 5
      %v6340 = vsel %vm2048, %v6338, %v6339
      %v6341 = vrot.slane %v6339, 4
      %v6342 = vrot.slane %v5843, 5
      %v6343 = vsel %vm2048, %v6341, %v6342
      %v6344 = vrot.slane %v6244, 5
      %v6345 = vrot.slane %v6344, 4
      %v6346 = vrot.slane %v5819, 5
      %v6347 = vsel %vm2048, %v6345, %v6346
      %v6348 = vrot.slane %v6346, 4
      %v6349 = vrot.slane %v5844, 5
      %v6350 = vsel %vm2048, %v6348, %v6349
      %v6351 = vrot.slane %v6245, 5
      %v6352 = vrot.slane %v6351, 4
      %v6353 = vrot.slane %v5821, 5
      %v6354 = vsel %vm2048, %v6352, %v6353
      %v6355 = vrot.slane %v6353, 4
      %v6356 = vrot.slane %v5845, 5
      %v6357 = vsel %vm2048, %v6355, %v6356
      %v6358 = vrot.slane %v6246, 5
      %v6359 = vrot.slane %v6358, 4
      %v6360 = vrot.slane %v5823, 5
      %v6361 = vsel %vm2048, %v6359, %v6360
      %v6362 = vrot.slane %v6360, 4
      %v6363 = vrot.slane %v5846, 5
      %v6364 = vsel %vm2048, %v6362, %v6363
      %v6365 = vrot.slane %v6247, 5
      %v6366 = vrot.slane %v6365, 4
      %v6367 = vrot.slane %v5825, 5
      %v6368 = vsel %vm2048, %v6366, %v6367
      %v6369 = vrot.slane %v6367, 4
      %v6370 = vrot.slane %v5847, 5
      %v6371 = vsel %vm2048, %v6369, %v6370
      %v6372 = vrot.slane %v6248, 5
      %v6373 = vrot.slane %v6372, 4
      %v6374 = vrot.slane %v5827, 5
      %v6375 = vsel %vm2048, %v6373, %v6374
      %v6376 = vrot.slane %v6374, 4
      %v6377 = vrot.slane %v5848, 5
      %v6378 = vsel %vm2048, %v6376, %v6377
      %v6379 = vrot.slane %v6249, 5
      %v6380 = vrot.slane %v6379, 4
      %v6381 = vrot.slane %v5829, 5
      %v6382 = vsel %vm2048, %v6380, %v6381
      %v6383 = vrot.slane %v6381, 4
      %v6384 = vrot.slane %v5849, 5
      %v6385 = vsel %vm2048, %v6383, %v6384
      %v6386 = vrot.slane %v6250, 5
      %v6387 = vrot.slane %v6386, 4
      %v6388 = vrot.slane %v5831, 5
      %v6389 = vsel %vm2048, %v6387, %v6388
      %v6390 = vrot.slane %v6388, 4
      %v6391 = vrot.slane %v5850, 5
      %v6392 = vsel %vm2048, %v6390, %v6391
      %v6393 = vrot.slane %v6251, 5
      %v6394 = vrot.slane %v6393, 4
      %v6395 = vrot.slane %v5833, 5
      %v6396 = vsel %vm2048, %v6394, %v6395
      %v6397 = vrot.slane %v6395, 4
      %v6398 = vrot.slane %v5851, 5
      %v6399 = vsel %vm2048, %v6397, %v6398
      %v6400 = vrot.slane %v6252, 5
      %v6401 = vrot.slane %v6400, 4
      %v6402 = vrot.slane %v5835, 5
      %v6403 = vsel %vm2048, %v6401, %v6402
      %v6404 = vrot.slane %v6402, 4
      %v6405 = vrot.slane %v5852, 5
      %v6406 = vsel %vm2048, %v6404, %v6405
      %v6407 = vrot.slane %v6253, 5
      %v6408 = vrot.slane %v6407, 4
      %v6409 = vrot.slane %v5837, 5
      %v6410 = vsel %vm2048, %v6408, %v6409
      %v6411 = vrot.slane %v6409, 4
      %v6412 = vrot.slane %v5853, 5
      %v6413 = vsel %vm2048, %v6411, %v6412
      %s6414 = scalar_lea.vmem [#allocation3], 24
      %v6415 = vld [vmem:[%s6414] sm:$0xf]
      %v6416 = vld [vmem:[%s6414 + $0x4] sm:$0xf]
      %v6417 = vld [vmem:[%s6414 + $0xc] sm:$0xf]
      %v6418 = vld [vmem:[%s6414 + $0x10] sm:$0xf]
      %v6419 = vld [vmem:[%s6414 + $0x18] sm:$0xf]
      %v6420 = vld [vmem:[%s6414 + $0x1c] sm:$0xf]
      %v6421 = vld [vmem:[%s6414 + $0x24] sm:$0xf]
      %v6422 = vld [vmem:[%s6414 + $0x28] sm:$0xf]
      %v6423 = vld [vmem:[%s6414 + $0x30] sm:$0xf]
      %v6424 = vld [vmem:[%s6414 + $0x34] sm:$0xf]
      %v6425 = vld [vmem:[%s6414 + $0x3c] sm:$0xf]
      %v6426 = vld [vmem:[%s6414 + $0x40] sm:$0xf]
      %v6427 = vld [vmem:[%s6414 + $0x48] sm:$0xf]
      %v6428 = vld [vmem:[%s6414 + $0x4c] sm:$0xf]
      %v6429 = vld [vmem:[%s6414 + $0x54] sm:$0xf]
      %v6430 = vld [vmem:[%s6414 + $0x58] sm:$0xf]
      %v6431 = vld [vmem:[%s6414 + $0x60] sm:$0xf]
      %v6432 = vld [vmem:[%s6414 + $0x64] sm:$0xf]
      %v6433 = vld [vmem:[%s6414 + $0x6c] sm:$0xf]
      %v6434 = vld [vmem:[%s6414 + $0x70] sm:$0xf]
      %v6435 = vld [vmem:[%s6414 + $0x78] sm:$0xf]
      %v6436 = vld [vmem:[%s6414 + $0x7c] sm:$0xf]
      %v6437 = vld [vmem:[%s6414 + $0x84] sm:$0xf]
      %v6438 = vld [vmem:[%s6414 + $0x88] sm:$0xf]
      %v6439 = vld [vmem:[%s6414 + $0x90] sm:$0xf]
      %v6440 = vld [vmem:[%s6414 + $0x94] sm:$0xf]
      %v6441 = vld [vmem:[%s6414 + $0x9c] sm:$0xf]
      %v6442 = vld [vmem:[%s6414 + $0xa0] sm:$0xf]
      %v6443 = vld [vmem:[%s6414 + $0xa8] sm:$0xf]
      %v6444 = vld [vmem:[%s6414 + $0xac] sm:$0xf]
      %v6445 = vld [vmem:[%s6414 + $0xb4] sm:$0xf]
      %v6446 = vld [vmem:[%s6414 + $0xb8] sm:$0xf]
      %v6447 = vld [vmem:[%s6414 + $0x8] sm:$0x1]
      %v6448 = vld [vmem:[%s6414 + $0x14] sm:$0x1]
      %v6449 = vld [vmem:[%s6414 + $0x20] sm:$0x1]
      %v6450 = vld [vmem:[%s6414 + $0x2c] sm:$0x1]
      %v6451 = vld [vmem:[%s6414 + $0x38] sm:$0x1]
      %v6452 = vld [vmem:[%s6414 + $0x44] sm:$0x1]
      %v6453 = vld [vmem:[%s6414 + $0x50] sm:$0x1]
      %v6454 = vld [vmem:[%s6414 + $0x5c] sm:$0x1]
      %v6455 = vld [vmem:[%s6414 + $0x68] sm:$0x1]
      %v6456 = vld [vmem:[%s6414 + $0x74] sm:$0x1]
      %v6457 = vld [vmem:[%s6414 + $0x80] sm:$0x1]
      %v6458 = vld [vmem:[%s6414 + $0x8c] sm:$0x1]
      %v6459 = vld [vmem:[%s6414 + $0x98] sm:$0x1]
      %v6460 = vld [vmem:[%s6414 + $0xa4] sm:$0x1]
      %v6461 = vld [vmem:[%s6414 + $0xb0] sm:$0x1]
      %v6462 = vld [vmem:[%s6414 + $0xbc] sm:$0x1]
      %v6464 = vshrl.u32 %v6415, 16
      %v6466 = vrot.slane %v6464, 4
      %v6467 = vshll.u32 %v6415, 16
      %v6469 = vrot.slane %v6467, 5
      %v6470 = vor.u32 %v6466, %v6469
      %v6471 = vrot.slane %v6470, 4
      %v6473 = vshll.u32 %v6416, 16
      %v6475 = vrot.slane %v6473, 5
      %v6476 = vsel %vm1597, %v6471, %v6475
      %v6477 = vshrl.u32 %v6416, 16
      %v6479 = vrot.slane %v6477, 4
      %v6480 = vor.u32 %v6479, %v6475
      %v6481 = vrot.slane %v6480, 4
      %v6483 = vshll.u32 %v6447, 16
      %v6485 = vrot.slane %v6483, 5
      %v6486 = vsel %vm1597, %v6481, %v6485
      %v6488 = vshrl.u32 %v6417, 16
      %v6490 = vrot.slane %v6488, 4
      %v6491 = vshll.u32 %v6417, 16
      %v6493 = vrot.slane %v6491, 5
      %v6494 = vor.u32 %v6490, %v6493
      %v6495 = vrot.slane %v6494, 4
      %v6497 = vshll.u32 %v6418, 16
      %v6499 = vrot.slane %v6497, 5
      %v6500 = vsel %vm1597, %v6495, %v6499
      %v6501 = vshrl.u32 %v6418, 16
      %v6503 = vrot.slane %v6501, 4
      %v6504 = vor.u32 %v6503, %v6499
      %v6505 = vrot.slane %v6504, 4
      %v6507 = vshll.u32 %v6448, 16
      %v6509 = vrot.slane %v6507, 5
      %v6510 = vsel %vm1597, %v6505, %v6509
      %v6512 = vshrl.u32 %v6419, 16
      %v6514 = vrot.slane %v6512, 4
      %v6515 = vshll.u32 %v6419, 16
      %v6517 = vrot.slane %v6515, 5
      %v6518 = vor.u32 %v6514, %v6517
      %v6519 = vrot.slane %v6518, 4
      %v6521 = vshll.u32 %v6420, 16
      %v6523 = vrot.slane %v6521, 5
      %v6524 = vsel %vm1597, %v6519, %v6523
      %v6525 = vshrl.u32 %v6420, 16
      %v6527 = vrot.slane %v6525, 4
      %v6528 = vor.u32 %v6527, %v6523
      %v6529 = vrot.slane %v6528, 4
      %v6531 = vshll.u32 %v6449, 16
      %v6533 = vrot.slane %v6531, 5
      %v6534 = vsel %vm1597, %v6529, %v6533
      %v6536 = vshrl.u32 %v6421, 16
      %v6538 = vrot.slane %v6536, 4
      %v6539 = vshll.u32 %v6421, 16
      %v6541 = vrot.slane %v6539, 5
      %v6542 = vor.u32 %v6538, %v6541
      %v6543 = vrot.slane %v6542, 4
      %v6545 = vshll.u32 %v6422, 16
      %v6547 = vrot.slane %v6545, 5
      %v6548 = vsel %vm1597, %v6543, %v6547
      %v6549 = vshrl.u32 %v6422, 16
      %v6551 = vrot.slane %v6549, 4
      %v6552 = vor.u32 %v6551, %v6547
      %v6553 = vrot.slane %v6552, 4
      %v6555 = vshll.u32 %v6450, 16
      %v6557 = vrot.slane %v6555, 5
      %v6558 = vsel %vm1597, %v6553, %v6557
      %v6560 = vshrl.u32 %v6423, 16
      %v6562 = vrot.slane %v6560, 4
      %v6563 = vshll.u32 %v6423, 16
      %v6565 = vrot.slane %v6563, 5
      %v6566 = vor.u32 %v6562, %v6565
      %v6567 = vrot.slane %v6566, 4
      %v6569 = vshll.u32 %v6424, 16
      %v6571 = vrot.slane %v6569, 5
      %v6572 = vsel %vm1597, %v6567, %v6571
      %v6573 = vshrl.u32 %v6424, 16
      %v6575 = vrot.slane %v6573, 4
      %v6576 = vor.u32 %v6575, %v6571
      %v6577 = vrot.slane %v6576, 4
      %v6579 = vshll.u32 %v6451, 16
      %v6581 = vrot.slane %v6579, 5
      %v6582 = vsel %vm1597, %v6577, %v6581
      %v6584 = vshrl.u32 %v6425, 16
      %v6586 = vrot.slane %v6584, 4
      %v6587 = vshll.u32 %v6425, 16
      %v6589 = vrot.slane %v6587, 5
      %v6590 = vor.u32 %v6586, %v6589
      %v6591 = vrot.slane %v6590, 4
      %v6593 = vshll.u32 %v6426, 16
      %v6595 = vrot.slane %v6593, 5
      %v6596 = vsel %vm1597, %v6591, %v6595
      %v6597 = vshrl.u32 %v6426, 16
      %v6599 = vrot.slane %v6597, 4
      %v6600 = vor.u32 %v6599, %v6595
      %v6601 = vrot.slane %v6600, 4
      %v6603 = vshll.u32 %v6452, 16
      %v6605 = vrot.slane %v6603, 5
      %v6606 = vsel %vm1597, %v6601, %v6605
      %v6608 = vshrl.u32 %v6427, 16
      %v6610 = vrot.slane %v6608, 4
      %v6611 = vshll.u32 %v6427, 16
      %v6613 = vrot.slane %v6611, 5
      %v6614 = vor.u32 %v6610, %v6613
      %v6615 = vrot.slane %v6614, 4
      %v6617 = vshll.u32 %v6428, 16
      %v6619 = vrot.slane %v6617, 5
      %v6620 = vsel %vm1597, %v6615, %v6619
      %v6621 = vshrl.u32 %v6428, 16
      %v6623 = vrot.slane %v6621, 4
      %v6624 = vor.u32 %v6623, %v6619
      %v6625 = vrot.slane %v6624, 4
      %v6627 = vshll.u32 %v6453, 16
      %v6629 = vrot.slane %v6627, 5
      %v6630 = vsel %vm1597, %v6625, %v6629
      %v6632 = vshrl.u32 %v6429, 16
      %v6634 = vrot.slane %v6632, 4
      %v6635 = vshll.u32 %v6429, 16
      %v6637 = vrot.slane %v6635, 5
      %v6638 = vor.u32 %v6634, %v6637
      %v6639 = vrot.slane %v6638, 4
      %v6641 = vshll.u32 %v6430, 16
      %v6643 = vrot.slane %v6641, 5
      %v6644 = vsel %vm1597, %v6639, %v6643
      %v6645 = vshrl.u32 %v6430, 16
      %v6647 = vrot.slane %v6645, 4
      %v6648 = vor.u32 %v6647, %v6643
      %v6649 = vrot.slane %v6648, 4
      %v6651 = vshll.u32 %v6454, 16
      %v6653 = vrot.slane %v6651, 5
      %v6654 = vsel %vm1597, %v6649, %v6653
      %v6656 = vshrl.u32 %v6431, 16
      %v6658 = vrot.slane %v6656, 4
      %v6659 = vshll.u32 %v6431, 16
      %v6661 = vrot.slane %v6659, 5
      %v6662 = vor.u32 %v6658, %v6661
      %v6663 = vrot.slane %v6662, 4
      %v6665 = vshll.u32 %v6432, 16
      %v6667 = vrot.slane %v6665, 5
      %v6668 = vsel %vm1597, %v6663, %v6667
      %v6669 = vshrl.u32 %v6432, 16
      %v6671 = vrot.slane %v6669, 4
      %v6672 = vor.u32 %v6671, %v6667
      %v6673 = vrot.slane %v6672, 4
      %v6675 = vshll.u32 %v6455, 16
      %v6677 = vrot.slane %v6675, 5
      %v6678 = vsel %vm1597, %v6673, %v6677
      %v6680 = vshrl.u32 %v6433, 16
      %v6682 = vrot.slane %v6680, 4
      %v6683 = vshll.u32 %v6433, 16
      %v6685 = vrot.slane %v6683, 5
      %v6686 = vor.u32 %v6682, %v6685
      %v6687 = vrot.slane %v6686, 4
      %v6689 = vshll.u32 %v6434, 16
      %v6691 = vrot.slane %v6689, 5
      %v6692 = vsel %vm1597, %v6687, %v6691
      %v6693 = vshrl.u32 %v6434, 16
      %v6695 = vrot.slane %v6693, 4
      %v6696 = vor.u32 %v6695, %v6691
      %v6697 = vrot.slane %v6696, 4
      %v6699 = vshll.u32 %v6456, 16
      %v6701 = vrot.slane %v6699, 5
      %v6702 = vsel %vm1597, %v6697, %v6701
      %v6704 = vshrl.u32 %v6435, 16
      %v6706 = vrot.slane %v6704, 4
      %v6707 = vshll.u32 %v6435, 16
      %v6709 = vrot.slane %v6707, 5
      %v6710 = vor.u32 %v6706, %v6709
      %v6711 = vrot.slane %v6710, 4
      %v6713 = vshll.u32 %v6436, 16
      %v6715 = vrot.slane %v6713, 5
      %v6716 = vsel %vm1597, %v6711, %v6715
      %v6717 = vshrl.u32 %v6436, 16
      %v6719 = vrot.slane %v6717, 4
      %v6720 = vor.u32 %v6719, %v6715
      %v6721 = vrot.slane %v6720, 4
      %v6723 = vshll.u32 %v6457, 16
      %v6725 = vrot.slane %v6723, 5
      %v6726 = vsel %vm1597, %v6721, %v6725
      %v6728 = vshrl.u32 %v6437, 16
      %v6730 = vrot.slane %v6728, 4
      %v6731 = vshll.u32 %v6437, 16
      %v6733 = vrot.slane %v6731, 5
      %v6734 = vor.u32 %v6730, %v6733
      %v6735 = vrot.slane %v6734, 4
      %v6737 = vshll.u32 %v6438, 16
      %v6739 = vrot.slane %v6737, 5
      %v6740 = vsel %vm1597, %v6735, %v6739
      %v6741 = vshrl.u32 %v6438, 16
      %v6743 = vrot.slane %v6741, 4
      %v6744 = vor.u32 %v6743, %v6739
      %v6745 = vrot.slane %v6744, 4
      %v6747 = vshll.u32 %v6458, 16
      %v6749 = vrot.slane %v6747, 5
      %v6750 = vsel %vm1597, %v6745, %v6749
      %v6752 = vshrl.u32 %v6439, 16
      %v6754 = vrot.slane %v6752, 4
      %v6755 = vshll.u32 %v6439, 16
      %v6757 = vrot.slane %v6755, 5
      %v6758 = vor.u32 %v6754, %v6757
      %v6759 = vrot.slane %v6758, 4
      %v6761 = vshll.u32 %v6440, 16
      %v6763 = vrot.slane %v6761, 5
      %v6764 = vsel %vm1597, %v6759, %v6763
      %v6765 = vshrl.u32 %v6440, 16
      %v6767 = vrot.slane %v6765, 4
      %v6768 = vor.u32 %v6767, %v6763
      %v6769 = vrot.slane %v6768, 4
      %v6771 = vshll.u32 %v6459, 16
      %v6773 = vrot.slane %v6771, 5
      %v6774 = vsel %vm1597, %v6769, %v6773
      %v6776 = vshrl.u32 %v6441, 16
      %v6778 = vrot.slane %v6776, 4
      %v6779 = vshll.u32 %v6441, 16
      %v6781 = vrot.slane %v6779, 5
      %v6782 = vor.u32 %v6778, %v6781
      %v6783 = vrot.slane %v6782, 4
      %v6785 = vshll.u32 %v6442, 16
      %v6787 = vrot.slane %v6785, 5
      %v6788 = vsel %vm1597, %v6783, %v6787
      %v6789 = vshrl.u32 %v6442, 16
      %v6791 = vrot.slane %v6789, 4
      %v6792 = vor.u32 %v6791, %v6787
      %v6793 = vrot.slane %v6792, 4
      %v6795 = vshll.u32 %v6460, 16
      %v6797 = vrot.slane %v6795, 5
      %v6798 = vsel %vm1597, %v6793, %v6797
      %v6800 = vshrl.u32 %v6443, 16
      %v6802 = vrot.slane %v6800, 4
      %v6803 = vshll.u32 %v6443, 16
      %v6805 = vrot.slane %v6803, 5
      %v6806 = vor.u32 %v6802, %v6805
      %v6807 = vrot.slane %v6806, 4
      %v6809 = vshll.u32 %v6444, 16
      %v6811 = vrot.slane %v6809, 5
      %v6812 = vsel %vm1597, %v6807, %v6811
      %v6813 = vshrl.u32 %v6444, 16
      %v6815 = vrot.slane %v6813, 4
      %v6816 = vor.u32 %v6815, %v6811
      %v6817 = vrot.slane %v6816, 4
      %v6819 = vshll.u32 %v6461, 16
      %v6821 = vrot.slane %v6819, 5
      %v6822 = vsel %vm1597, %v6817, %v6821
      %v6824 = vshrl.u32 %v6445, 16
      %v6826 = vrot.slane %v6824, 4
      %v6827 = vshll.u32 %v6445, 16
      %v6829 = vrot.slane %v6827, 5
      %v6830 = vor.u32 %v6826, %v6829
      %v6831 = vrot.slane %v6830, 4
      %v6833 = vshll.u32 %v6446, 16
      %v6835 = vrot.slane %v6833, 5
      %v6836 = vsel %vm1597, %v6831, %v6835
      %v6837 = vshrl.u32 %v6446, 16
      %v6839 = vrot.slane %v6837, 4
      %v6840 = vor.u32 %v6839, %v6835
      %v6841 = vrot.slane %v6840, 4
      %v6843 = vshll.u32 %v6462, 16
      %v6845 = vrot.slane %v6843, 5
      %v6846 = vsel %vm1597, %v6841, %v6845
      %v6847 = vld [vmem:[%s6414] sm:$0xe]
      %v6848 = vld [vmem:[%s6414 + $0xc] sm:$0xe]
      %v6849 = vld [vmem:[%s6414 + $0x18] sm:$0xe]
      %v6850 = vld [vmem:[%s6414 + $0x24] sm:$0xe]
      %v6851 = vld [vmem:[%s6414 + $0x30] sm:$0xe]
      %v6852 = vld [vmem:[%s6414 + $0x3c] sm:$0xe]
      %v6853 = vld [vmem:[%s6414 + $0x48] sm:$0xe]
      %v6854 = vld [vmem:[%s6414 + $0x54] sm:$0xe]
      %v6855 = vld [vmem:[%s6414 + $0x60] sm:$0xe]
      %v6856 = vld [vmem:[%s6414 + $0x6c] sm:$0xe]
      %v6857 = vld [vmem:[%s6414 + $0x78] sm:$0xe]
      %v6858 = vld [vmem:[%s6414 + $0x84] sm:$0xe]
      %v6859 = vld [vmem:[%s6414 + $0x90] sm:$0xe]
      %v6860 = vld [vmem:[%s6414 + $0x9c] sm:$0xe]
      %v6861 = vld [vmem:[%s6414 + $0xa8] sm:$0xe]
      %v6862 = vld [vmem:[%s6414 + $0xb4] sm:$0xe]
      %v6911 = vrot.slane %v6847, 5
      %v6912 = vrot.slane %v6911, 4
      %v6913 = vrot.slane %v6416, 5
      %v6914 = vsel %vm2048, %v6912, %v6913
      %v6915 = vrot.slane %v6913, 4
      %v6916 = vrot.slane %v6447, 5
      %v6917 = vsel %vm2048, %v6915, %v6916
      %v6918 = vrot.slane %v6848, 5
      %v6919 = vrot.slane %v6918, 4
      %v6920 = vrot.slane %v6418, 5
      %v6921 = vsel %vm2048, %v6919, %v6920
      %v6922 = vrot.slane %v6920, 4
      %v6923 = vrot.slane %v6448, 5
      %v6924 = vsel %vm2048, %v6922, %v6923
      %v6925 = vrot.slane %v6849, 5
      %v6926 = vrot.slane %v6925, 4
      %v6927 = vrot.slane %v6420, 5
      %v6928 = vsel %vm2048, %v6926, %v6927
      %v6929 = vrot.slane %v6927, 4
      %v6930 = vrot.slane %v6449, 5
      %v6931 = vsel %vm2048, %v6929, %v6930
      %v6932 = vrot.slane %v6850, 5
      %v6933 = vrot.slane %v6932, 4
      %v6934 = vrot.slane %v6422, 5
      %v6935 = vsel %vm2048, %v6933, %v6934
      %v6936 = vrot.slane %v6934, 4
      %v6937 = vrot.slane %v6450, 5
      %v6938 = vsel %vm2048, %v6936, %v6937
      %v6939 = vrot.slane %v6851, 5
      %v6940 = vrot.slane %v6939, 4
      %v6941 = vrot.slane %v6424, 5
      %v6942 = vsel %vm2048, %v6940, %v6941
      %v6943 = vrot.slane %v6941, 4
      %v6944 = vrot.slane %v6451, 5
      %v6945 = vsel %vm2048, %v6943, %v6944
      %v6946 = vrot.slane %v6852, 5
      %v6947 = vrot.slane %v6946, 4
      %v6948 = vrot.slane %v6426, 5
      %v6949 = vsel %vm2048, %v6947, %v6948
      %v6950 = vrot.slane %v6948, 4
      %v6951 = vrot.slane %v6452, 5
      %v6952 = vsel %vm2048, %v6950, %v6951
      %v6953 = vrot.slane %v6853, 5
      %v6954 = vrot.slane %v6953, 4
      %v6955 = vrot.slane %v6428, 5
      %v6956 = vsel %vm2048, %v6954, %v6955
      %v6957 = vrot.slane %v6955, 4
      %v6958 = vrot.slane %v6453, 5
      %v6959 = vsel %vm2048, %v6957, %v6958
      %v6960 = vrot.slane %v6854, 5
      %v6961 = vrot.slane %v6960, 4
      %v6962 = vrot.slane %v6430, 5
      %v6963 = vsel %vm2048, %v6961, %v6962
      %v6964 = vrot.slane %v6962, 4
      %v6965 = vrot.slane %v6454, 5
      %v6966 = vsel %vm2048, %v6964, %v6965
      %v6967 = vrot.slane %v6855, 5
      %v6968 = vrot.slane %v6967, 4
      %v6969 = vrot.slane %v6432, 5
      %v6970 = vsel %vm2048, %v6968, %v6969
      %v6971 = vrot.slane %v6969, 4
      %v6972 = vrot.slane %v6455, 5
      %v6973 = vsel %vm2048, %v6971, %v6972
      %v6974 = vrot.slane %v6856, 5
      %v6975 = vrot.slane %v6974, 4
      %v6976 = vrot.slane %v6434, 5
      %v6977 = vsel %vm2048, %v6975, %v6976
      %v6978 = vrot.slane %v6976, 4
      %v6979 = vrot.slane %v6456, 5
      %v6980 = vsel %vm2048, %v6978, %v6979
      %v6981 = vrot.slane %v6857, 5
      %v6982 = vrot.slane %v6981, 4
      %v6983 = vrot.slane %v6436, 5
      %v6984 = vsel %vm2048, %v6982, %v6983
      %v6985 = vrot.slane %v6983, 4
      %v6986 = vrot.slane %v6457, 5
      %v6987 = vsel %vm2048, %v6985, %v6986
      %v6988 = vrot.slane %v6858, 5
      %v6989 = vrot.slane %v6988, 4
      %v6990 = vrot.slane %v6438, 5
      %v6991 = vsel %vm2048, %v6989, %v6990
      %v6992 = vrot.slane %v6990, 4
      %v6993 = vrot.slane %v6458, 5
      %v6994 = vsel %vm2048, %v6992, %v6993
      %v6995 = vrot.slane %v6859, 5
      %v6996 = vrot.slane %v6995, 4
      %v6997 = vrot.slane %v6440, 5
      %v6998 = vsel %vm2048, %v6996, %v6997
      %v6999 = vrot.slane %v6997, 4
      %v7000 = vrot.slane %v6459, 5
      %v7001 = vsel %vm2048, %v6999, %v7000
      %v7002 = vrot.slane %v6860, 5
      %v7003 = vrot.slane %v7002, 4
      %v7004 = vrot.slane %v6442, 5
      %v7005 = vsel %vm2048, %v7003, %v7004
      %v7006 = vrot.slane %v7004, 4
      %v7007 = vrot.slane %v6460, 5
      %v7008 = vsel %vm2048, %v7006, %v7007
      %v7009 = vrot.slane %v6861, 5
      %v7010 = vrot.slane %v7009, 4
      %v7011 = vrot.slane %v6444, 5
      %v7012 = vsel %vm2048, %v7010, %v7011
      %v7013 = vrot.slane %v7011, 4
      %v7014 = vrot.slane %v6461, 5
      %v7015 = vsel %vm2048, %v7013, %v7014
      %v7016 = vrot.slane %v6862, 5
      %v7017 = vrot.slane %v7016, 4
      %v7018 = vrot.slane %v6446, 5
      %v7019 = vsel %vm2048, %v7017, %v7018
      %v7020 = vrot.slane %v7018, 4
      %v7021 = vrot.slane %v6462, 5
      %v7022 = vsel %vm2048, %v7020, %v7021
      %v7039 = vunpack.c.l.b16 %v5198
      %v7040 = vunpack.c.l.b16 %v5199
      %v7041 = vunpack.c.l.b16 %v5200
      %v7042 = vunpack.c.l.b16 %v5201
      %v7043 = vunpack.c.l.b16 %v5202
      %v7044 = vunpack.c.l.b16 %v5203
      %v7045 = vunpack.c.l.b16 %v5204
      %v7046 = vunpack.c.l.b16 %v5205
      %v7047 = vunpack.c.l.b16 %v5206
      %v7048 = vunpack.c.l.b16 %v5207
      %v7049 = vunpack.c.l.b16 %v5208
      %v7050 = vunpack.c.l.b16 %v5209
      %v7051 = vunpack.c.l.b16 %v5210
      %v7052 = vunpack.c.l.b16 %v5211
      %v7053 = vunpack.c.l.b16 %v5212
      %v7054 = vunpack.c.l.b16 %v5213
      %v7055 = vunpack.c.l.b16 %v5214
      %v7056 = vunpack.c.l.b16 %v5215
      %v7057 = vunpack.c.l.b16 %v5216
      %v7058 = vunpack.c.l.b16 %v5217
      %v7059 = vunpack.c.l.b16 %v5218
      %v7060 = vunpack.c.l.b16 %v5219
      %v7061 = vunpack.c.l.b16 %v5220
      %v7062 = vunpack.c.l.b16 %v5221
      %v7063 = vunpack.c.l.b16 %v5222
      %v7064 = vunpack.c.l.b16 %v5223
      %v7065 = vunpack.c.l.b16 %v5224
      %v7066 = vunpack.c.l.b16 %v5225
      %v7067 = vunpack.c.l.b16 %v5226
      %v7068 = vunpack.c.l.b16 %v5227
      %v7069 = vunpack.c.l.b16 %v5228
      %v7070 = vunpack.c.l.b16 %v5229
      %v7071 = vpack.c.b16 %v7040, %v7039
      %v7072 = vpack.c.b16 %v7042, %v7041
      %v7073 = vpack.c.b16 %v7044, %v7043
      %v7074 = vpack.c.b16 %v7046, %v7045
      %v7075 = vpack.c.b16 %v7048, %v7047
      %v7076 = vpack.c.b16 %v7050, %v7049
      %v7077 = vpack.c.b16 %v7052, %v7051
      %v7078 = vpack.c.b16 %v7054, %v7053
      %v7079 = vpack.c.b16 %v7056, %v7055
      %v7080 = vpack.c.b16 %v7058, %v7057
      %v7081 = vpack.c.b16 %v7060, %v7059
      %v7082 = vpack.c.b16 %v7062, %v7061
      %v7083 = vpack.c.b16 %v7064, %v7063
      %v7084 = vpack.c.b16 %v7066, %v7065
      %v7085 = vpack.c.b16 %v7068, %v7067
      %v7086 = vpack.c.b16 %v7070, %v7069
      %v7087 = vunpack.c.l.b16 %v5259
      %v7088 = vunpack.c.l.b16 %v5269
      %v7089 = vunpack.c.l.b16 %v5283
      %v7090 = vunpack.c.l.b16 %v5293
      %v7091 = vunpack.c.l.b16 %v5307
      %v7092 = vunpack.c.l.b16 %v5317
      %v7093 = vunpack.c.l.b16 %v5331
      %v7094 = vunpack.c.l.b16 %v5341
      %v7095 = vunpack.c.l.b16 %v5355
      %v7096 = vunpack.c.l.b16 %v5365
      %v7097 = vunpack.c.l.b16 %v5379
      %v7098 = vunpack.c.l.b16 %v5389
      %v7099 = vunpack.c.l.b16 %v5403
      %v7100 = vunpack.c.l.b16 %v5413
      %v7101 = vunpack.c.l.b16 %v5427
      %v7102 = vunpack.c.l.b16 %v5437
      %v7103 = vunpack.c.l.b16 %v5451
      %v7104 = vunpack.c.l.b16 %v5461
      %v7105 = vunpack.c.l.b16 %v5475
      %v7106 = vunpack.c.l.b16 %v5485
      %v7107 = vunpack.c.l.b16 %v5499
      %v7108 = vunpack.c.l.b16 %v5509
      %v7109 = vunpack.c.l.b16 %v5523
      %v7110 = vunpack.c.l.b16 %v5533
      %v7111 = vunpack.c.l.b16 %v5547
      %v7112 = vunpack.c.l.b16 %v5557
      %v7113 = vunpack.c.l.b16 %v5571
      %v7114 = vunpack.c.l.b16 %v5581
      %v7115 = vunpack.c.l.b16 %v5595
      %v7116 = vunpack.c.l.b16 %v5605
      %v7117 = vunpack.c.l.b16 %v5619
      %v7118 = vunpack.c.l.b16 %v5629
      %v7119 = vpack.c.b16 %v7088, %v7087
      %v7120 = vpack.c.b16 %v7090, %v7089
      %v7121 = vpack.c.b16 %v7092, %v7091
      %v7122 = vpack.c.b16 %v7094, %v7093
      %v7123 = vpack.c.b16 %v7096, %v7095
      %v7124 = vpack.c.b16 %v7098, %v7097
      %v7125 = vpack.c.b16 %v7100, %v7099
      %v7126 = vpack.c.b16 %v7102, %v7101
      %v7127 = vpack.c.b16 %v7104, %v7103
      %v7128 = vpack.c.b16 %v7106, %v7105
      %v7129 = vpack.c.b16 %v7108, %v7107
      %v7130 = vpack.c.b16 %v7110, %v7109
      %v7131 = vpack.c.b16 %v7112, %v7111
      %v7132 = vpack.c.b16 %v7114, %v7113
      %v7133 = vpack.c.b16 %v7116, %v7115
      %v7134 = vpack.c.b16 %v7118, %v7117
      %7135 = vrot.lane.b32.xlu0 %v7119, 8
      %v7136 = vpop.permute.xlu0 %7135
      %7137 = vrot.lane.b32.xlu0 %v7120, 8
      %v7138 = vpop.permute.xlu0 %7137
      %7139 = vrot.lane.b32.xlu0 %v7121, 8
      %v7140 = vpop.permute.xlu0 %7139
      %7141 = vrot.lane.b32.xlu0 %v7122, 8
      %v7142 = vpop.permute.xlu0 %7141
      %7143 = vrot.lane.b32.xlu0 %v7123, 8
      %v7144 = vpop.permute.xlu0 %7143
      %7145 = vrot.lane.b32.xlu0 %v7124, 8
      %v7146 = vpop.permute.xlu0 %7145
      %7147 = vrot.lane.b32.xlu0 %v7125, 8
      %v7148 = vpop.permute.xlu0 %7147
      %7149 = vrot.lane.b32.xlu0 %v7126, 8
      %v7150 = vpop.permute.xlu0 %7149
      %7151 = vrot.lane.b32.xlu0 %v7127, 8
      %v7152 = vpop.permute.xlu0 %7151
      %7153 = vrot.lane.b32.xlu0 %v7128, 8
      %v7154 = vpop.permute.xlu0 %7153
      %7155 = vrot.lane.b32.xlu0 %v7129, 8
      %v7156 = vpop.permute.xlu0 %7155
      %7157 = vrot.lane.b32.xlu0 %v7130, 8
      %v7158 = vpop.permute.xlu0 %7157
      %7159 = vrot.lane.b32.xlu0 %v7131, 8
      %v7160 = vpop.permute.xlu0 %7159
      %7161 = vrot.lane.b32.xlu0 %v7132, 8
      %v7162 = vpop.permute.xlu0 %7161
      %7163 = vrot.lane.b32.xlu0 %v7133, 8
      %v7164 = vpop.permute.xlu0 %7163
      %7165 = vrot.lane.b32.xlu0 %v7134, 8
      %v7166 = vpop.permute.xlu0 %7165
      %v7167 = vunpack.c.l.b16 %v5697
      %v7168 = vunpack.c.l.b16 %v5700
      %v7169 = vunpack.c.l.b16 %v5704
      %v7170 = vunpack.c.l.b16 %v5707
      %v7171 = vunpack.c.l.b16 %v5711
      %v7172 = vunpack.c.l.b16 %v5714
      %v7173 = vunpack.c.l.b16 %v5718
      %v7174 = vunpack.c.l.b16 %v5721
      %v7175 = vunpack.c.l.b16 %v5725
      %v7176 = vunpack.c.l.b16 %v5728
      %v7177 = vunpack.c.l.b16 %v5732
      %v7178 = vunpack.c.l.b16 %v5735
      %v7179 = vunpack.c.l.b16 %v5739
      %v7180 = vunpack.c.l.b16 %v5742
      %v7181 = vunpack.c.l.b16 %v5746
      %v7182 = vunpack.c.l.b16 %v5749
      %v7183 = vunpack.c.l.b16 %v5753
      %v7184 = vunpack.c.l.b16 %v5756
      %v7185 = vunpack.c.l.b16 %v5760
      %v7186 = vunpack.c.l.b16 %v5763
      %v7187 = vunpack.c.l.b16 %v5767
      %v7188 = vunpack.c.l.b16 %v5770
      %v7189 = vunpack.c.l.b16 %v5774
      %v7190 = vunpack.c.l.b16 %v5777
      %v7191 = vunpack.c.l.b16 %v5781
      %v7192 = vunpack.c.l.b16 %v5784
      %v7193 = vunpack.c.l.b16 %v5788
      %v7194 = vunpack.c.l.b16 %v5791
      %v7195 = vunpack.c.l.b16 %v5795
      %v7196 = vunpack.c.l.b16 %v5798
      %v7197 = vunpack.c.l.b16 %v5802
      %v7198 = vunpack.c.l.b16 %v5805
      %v7199 = vpack.c.b16 %v7168, %v7167
      %v7200 = vpack.c.b16 %v7170, %v7169
      %v7201 = vpack.c.b16 %v7172, %v7171
      %v7202 = vpack.c.b16 %v7174, %v7173
      %v7203 = vpack.c.b16 %v7176, %v7175
      %v7204 = vpack.c.b16 %v7178, %v7177
      %v7205 = vpack.c.b16 %v7180, %v7179
      %v7206 = vpack.c.b16 %v7182, %v7181
      %v7207 = vpack.c.b16 %v7184, %v7183
      %v7208 = vpack.c.b16 %v7186, %v7185
      %v7209 = vpack.c.b16 %v7188, %v7187
      %v7210 = vpack.c.b16 %v7190, %v7189
      %v7211 = vpack.c.b16 %v7192, %v7191
      %v7212 = vpack.c.b16 %v7194, %v7193
      %v7213 = vpack.c.b16 %v7196, %v7195
      %v7214 = vpack.c.b16 %v7198, %v7197
      %7215 = vrot.lane.b32.xlu0 %v7199, 16
      %v7216 = vpop.permute.xlu0 %7215
      %7217 = vrot.lane.b32.xlu0 %v7200, 16
      %v7218 = vpop.permute.xlu0 %7217
      %7219 = vrot.lane.b32.xlu0 %v7201, 16
      %v7220 = vpop.permute.xlu0 %7219
      %7221 = vrot.lane.b32.xlu0 %v7202, 16
      %v7222 = vpop.permute.xlu0 %7221
      %7223 = vrot.lane.b32.xlu0 %v7203, 16
      %v7224 = vpop.permute.xlu0 %7223
      %7225 = vrot.lane.b32.xlu0 %v7204, 16
      %v7226 = vpop.permute.xlu0 %7225
      %7227 = vrot.lane.b32.xlu0 %v7205, 16
      %v7228 = vpop.permute.xlu0 %7227
      %7229 = vrot.lane.b32.xlu0 %v7206, 16
      %v7230 = vpop.permute.xlu0 %7229
      %7231 = vrot.lane.b32.xlu0 %v7207, 16
      %v7232 = vpop.permute.xlu0 %7231
      %7233 = vrot.lane.b32.xlu0 %v7208, 16
      %v7234 = vpop.permute.xlu0 %7233
      %7235 = vrot.lane.b32.xlu0 %v7209, 16
      %v7236 = vpop.permute.xlu0 %7235
      %7237 = vrot.lane.b32.xlu0 %v7210, 16
      %v7238 = vpop.permute.xlu0 %7237
      %7239 = vrot.lane.b32.xlu0 %v7211, 16
      %v7240 = vpop.permute.xlu0 %7239
      %7241 = vrot.lane.b32.xlu0 %v7212, 16
      %v7242 = vpop.permute.xlu0 %7241
      %7243 = vrot.lane.b32.xlu0 %v7213, 16
      %v7244 = vpop.permute.xlu0 %7243
      %7245 = vrot.lane.b32.xlu0 %v7214, 16
      %v7246 = vpop.permute.xlu0 %7245
      %v7263 = vunpack.c.l.b16 %v5806
      %v7264 = vunpack.c.l.b16 %v5807
      %v7265 = vunpack.c.l.b16 %v5808
      %v7266 = vunpack.c.l.b16 %v5809
      %v7267 = vunpack.c.l.b16 %v5810
      %v7268 = vunpack.c.l.b16 %v5811
      %v7269 = vunpack.c.l.b16 %v5812
      %v7270 = vunpack.c.l.b16 %v5813
      %v7271 = vunpack.c.l.b16 %v5814
      %v7272 = vunpack.c.l.b16 %v5815
      %v7273 = vunpack.c.l.b16 %v5816
      %v7274 = vunpack.c.l.b16 %v5817
      %v7275 = vunpack.c.l.b16 %v5818
      %v7276 = vunpack.c.l.b16 %v5819
      %v7277 = vunpack.c.l.b16 %v5820
      %v7278 = vunpack.c.l.b16 %v5821
      %v7279 = vunpack.c.l.b16 %v5822
      %v7280 = vunpack.c.l.b16 %v5823
      %v7281 = vunpack.c.l.b16 %v5824
      %v7282 = vunpack.c.l.b16 %v5825
      %v7283 = vunpack.c.l.b16 %v5826
      %v7284 = vunpack.c.l.b16 %v5827
      %v7285 = vunpack.c.l.b16 %v5828
      %v7286 = vunpack.c.l.b16 %v5829
      %v7287 = vunpack.c.l.b16 %v5830
      %v7288 = vunpack.c.l.b16 %v5831
      %v7289 = vunpack.c.l.b16 %v5832
      %v7290 = vunpack.c.l.b16 %v5833
      %v7291 = vunpack.c.l.b16 %v5834
      %v7292 = vunpack.c.l.b16 %v5835
      %v7293 = vunpack.c.l.b16 %v5836
      %v7294 = vunpack.c.l.b16 %v5837
      %v7295 = vpack.c.b16 %v7264, %v7263
      %v7296 = vpack.c.b16 %v7266, %v7265
      %v7297 = vpack.c.b16 %v7268, %v7267
      %v7298 = vpack.c.b16 %v7270, %v7269
      %v7299 = vpack.c.b16 %v7272, %v7271
      %v7300 = vpack.c.b16 %v7274, %v7273
      %v7301 = vpack.c.b16 %v7276, %v7275
      %v7302 = vpack.c.b16 %v7278, %v7277
      %v7303 = vpack.c.b16 %v7280, %v7279
      %v7304 = vpack.c.b16 %v7282, %v7281
      %v7305 = vpack.c.b16 %v7284, %v7283
      %v7306 = vpack.c.b16 %v7286, %v7285
      %v7307 = vpack.c.b16 %v7288, %v7287
      %v7308 = vpack.c.b16 %v7290, %v7289
      %v7309 = vpack.c.b16 %v7292, %v7291
      %v7310 = vpack.c.b16 %v7294, %v7293
      %7311 = vrot.lane.b32.xlu0 %v7295, 24
      %v7312 = vpop.permute.xlu0 %7311
      %7313 = vrot.lane.b32.xlu0 %v7296, 24
      %v7314 = vpop.permute.xlu0 %7313
      %7315 = vrot.lane.b32.xlu0 %v7297, 24
      %v7316 = vpop.permute.xlu0 %7315
      %7317 = vrot.lane.b32.xlu0 %v7298, 24
      %v7318 = vpop.permute.xlu0 %7317
      %7319 = vrot.lane.b32.xlu0 %v7299, 24
      %v7320 = vpop.permute.xlu0 %7319
      %7321 = vrot.lane.b32.xlu0 %v7300, 24
      %v7322 = vpop.permute.xlu0 %7321
      %7323 = vrot.lane.b32.xlu0 %v7301, 24
      %v7324 = vpop.permute.xlu0 %7323
      %7325 = vrot.lane.b32.xlu0 %v7302, 24
      %v7326 = vpop.permute.xlu0 %7325
      %7327 = vrot.lane.b32.xlu0 %v7303, 24
      %v7328 = vpop.permute.xlu0 %7327
      %7329 = vrot.lane.b32.xlu0 %v7304, 24
      %v7330 = vpop.permute.xlu0 %7329
      %7331 = vrot.lane.b32.xlu0 %v7305, 24
      %v7332 = vpop.permute.xlu0 %7331
      %7333 = vrot.lane.b32.xlu0 %v7306, 24
      %v7334 = vpop.permute.xlu0 %7333
      %7335 = vrot.lane.b32.xlu0 %v7307, 24
      %v7336 = vpop.permute.xlu0 %7335
      %7337 = vrot.lane.b32.xlu0 %v7308, 24
      %v7338 = vpop.permute.xlu0 %7337
      %7339 = vrot.lane.b32.xlu0 %v7309, 24
      %v7340 = vpop.permute.xlu0 %7339
      %7341 = vrot.lane.b32.xlu0 %v7310, 24
      %v7342 = vpop.permute.xlu0 %7341
      %v7343 = vunpack.c.l.b16 %v5867
      %v7344 = vunpack.c.l.b16 %v5877
      %v7345 = vunpack.c.l.b16 %v5891
      %v7346 = vunpack.c.l.b16 %v5901
      %v7347 = vunpack.c.l.b16 %v5915
      %v7348 = vunpack.c.l.b16 %v5925
      %v7349 = vunpack.c.l.b16 %v5939
      %v7350 = vunpack.c.l.b16 %v5949
      %v7351 = vunpack.c.l.b16 %v5963
      %v7352 = vunpack.c.l.b16 %v5973
      %v7353 = vunpack.c.l.b16 %v5987
      %v7354 = vunpack.c.l.b16 %v5997
      %v7355 = vunpack.c.l.b16 %v6011
      %v7356 = vunpack.c.l.b16 %v6021
      %v7357 = vunpack.c.l.b16 %v6035
      %v7358 = vunpack.c.l.b16 %v6045
      %v7359 = vunpack.c.l.b16 %v6059
      %v7360 = vunpack.c.l.b16 %v6069
      %v7361 = vunpack.c.l.b16 %v6083
      %v7362 = vunpack.c.l.b16 %v6093
      %v7363 = vunpack.c.l.b16 %v6107
      %v7364 = vunpack.c.l.b16 %v6117
      %v7365 = vunpack.c.l.b16 %v6131
      %v7366 = vunpack.c.l.b16 %v6141
      %v7367 = vunpack.c.l.b16 %v6155
      %v7368 = vunpack.c.l.b16 %v6165
      %v7369 = vunpack.c.l.b16 %v6179
      %v7370 = vunpack.c.l.b16 %v6189
      %v7371 = vunpack.c.l.b16 %v6203
      %v7372 = vunpack.c.l.b16 %v6213
      %v7373 = vunpack.c.l.b16 %v6227
      %v7374 = vunpack.c.l.b16 %v6237
      %v7375 = vpack.c.b16 %v7344, %v7343
      %v7376 = vpack.c.b16 %v7346, %v7345
      %v7377 = vpack.c.b16 %v7348, %v7347
      %v7378 = vpack.c.b16 %v7350, %v7349
      %v7379 = vpack.c.b16 %v7352, %v7351
      %v7380 = vpack.c.b16 %v7354, %v7353
      %v7381 = vpack.c.b16 %v7356, %v7355
      %v7382 = vpack.c.b16 %v7358, %v7357
      %v7383 = vpack.c.b16 %v7360, %v7359
      %v7384 = vpack.c.b16 %v7362, %v7361
      %v7385 = vpack.c.b16 %v7364, %v7363
      %v7386 = vpack.c.b16 %v7366, %v7365
      %v7387 = vpack.c.b16 %v7368, %v7367
      %v7388 = vpack.c.b16 %v7370, %v7369
      %v7389 = vpack.c.b16 %v7372, %v7371
      %v7390 = vpack.c.b16 %v7374, %v7373
      %7391 = vrot.lane.b32.xlu0 %v7375, 32
      %v7392 = vpop.permute.xlu0 %7391
      %7393 = vrot.lane.b32.xlu0 %v7376, 32
      %v7394 = vpop.permute.xlu0 %7393
      %7395 = vrot.lane.b32.xlu0 %v7377, 32
      %v7396 = vpop.permute.xlu0 %7395
      %7397 = vrot.lane.b32.xlu0 %v7378, 32
      %v7398 = vpop.permute.xlu0 %7397
      %7399 = vrot.lane.b32.xlu0 %v7379, 32
      %v7400 = vpop.permute.xlu0 %7399
      %7401 = vrot.lane.b32.xlu0 %v7380, 32
      %v7402 = vpop.permute.xlu0 %7401
      %7403 = vrot.lane.b32.xlu0 %v7381, 32
      %v7404 = vpop.permute.xlu0 %7403
      %7405 = vrot.lane.b32.xlu0 %v7382, 32
      %v7406 = vpop.permute.xlu0 %7405
      %7407 = vrot.lane.b32.xlu0 %v7383, 32
      %v7408 = vpop.permute.xlu0 %7407
      %7409 = vrot.lane.b32.xlu0 %v7384, 32
      %v7410 = vpop.permute.xlu0 %7409
      %7411 = vrot.lane.b32.xlu0 %v7385, 32
      %v7412 = vpop.permute.xlu0 %7411
      %7413 = vrot.lane.b32.xlu0 %v7386, 32
      %v7414 = vpop.permute.xlu0 %7413
      %7415 = vrot.lane.b32.xlu0 %v7387, 32
      %v7416 = vpop.permute.xlu0 %7415
      %7417 = vrot.lane.b32.xlu0 %v7388, 32
      %v7418 = vpop.permute.xlu0 %7417
      %7419 = vrot.lane.b32.xlu0 %v7389, 32
      %v7420 = vpop.permute.xlu0 %7419
      %7421 = vrot.lane.b32.xlu0 %v7390, 32
      %v7422 = vpop.permute.xlu0 %7421
      %v7423 = vunpack.c.l.b16 %v6305
      %v7424 = vunpack.c.l.b16 %v6308
      %v7425 = vunpack.c.l.b16 %v6312
      %v7426 = vunpack.c.l.b16 %v6315
      %v7427 = vunpack.c.l.b16 %v6319
      %v7428 = vunpack.c.l.b16 %v6322
      %v7429 = vunpack.c.l.b16 %v6326
      %v7430 = vunpack.c.l.b16 %v6329
      %v7431 = vunpack.c.l.b16 %v6333
      %v7432 = vunpack.c.l.b16 %v6336
      %v7433 = vunpack.c.l.b16 %v6340
      %v7434 = vunpack.c.l.b16 %v6343
      %v7435 = vunpack.c.l.b16 %v6347
      %v7436 = vunpack.c.l.b16 %v6350
      %v7437 = vunpack.c.l.b16 %v6354
      %v7438 = vunpack.c.l.b16 %v6357
      %v7439 = vunpack.c.l.b16 %v6361
      %v7440 = vunpack.c.l.b16 %v6364
      %v7441 = vunpack.c.l.b16 %v6368
      %v7442 = vunpack.c.l.b16 %v6371
      %v7443 = vunpack.c.l.b16 %v6375
      %v7444 = vunpack.c.l.b16 %v6378
      %v7445 = vunpack.c.l.b16 %v6382
      %v7446 = vunpack.c.l.b16 %v6385
      %v7447 = vunpack.c.l.b16 %v6389
      %v7448 = vunpack.c.l.b16 %v6392
      %v7449 = vunpack.c.l.b16 %v6396
      %v7450 = vunpack.c.l.b16 %v6399
      %v7451 = vunpack.c.l.b16 %v6403
      %v7452 = vunpack.c.l.b16 %v6406
      %v7453 = vunpack.c.l.b16 %v6410
      %v7454 = vunpack.c.l.b16 %v6413
      %v7455 = vpack.c.b16 %v7424, %v7423
      %v7456 = vpack.c.b16 %v7426, %v7425
      %v7457 = vpack.c.b16 %v7428, %v7427
      %v7458 = vpack.c.b16 %v7430, %v7429
      %v7459 = vpack.c.b16 %v7432, %v7431
      %v7460 = vpack.c.b16 %v7434, %v7433
      %v7461 = vpack.c.b16 %v7436, %v7435
      %v7462 = vpack.c.b16 %v7438, %v7437
      %v7463 = vpack.c.b16 %v7440, %v7439
      %v7464 = vpack.c.b16 %v7442, %v7441
      %v7465 = vpack.c.b16 %v7444, %v7443
      %v7466 = vpack.c.b16 %v7446, %v7445
      %v7467 = vpack.c.b16 %v7448, %v7447
      %v7468 = vpack.c.b16 %v7450, %v7449
      %v7469 = vpack.c.b16 %v7452, %v7451
      %v7470 = vpack.c.b16 %v7454, %v7453
      %7471 = vrot.lane.b32.xlu0 %v7455, 40
      %v7472 = vpop.permute.xlu0 %7471
      %7473 = vrot.lane.b32.xlu0 %v7456, 40
      %v7474 = vpop.permute.xlu0 %7473
      %7475 = vrot.lane.b32.xlu0 %v7457, 40
      %v7476 = vpop.permute.xlu0 %7475
      %7477 = vrot.lane.b32.xlu0 %v7458, 40
      %v7478 = vpop.permute.xlu0 %7477
      %7479 = vrot.lane.b32.xlu0 %v7459, 40
      %v7480 = vpop.permute.xlu0 %7479
      %7481 = vrot.lane.b32.xlu0 %v7460, 40
      %v7482 = vpop.permute.xlu0 %7481
      %7483 = vrot.lane.b32.xlu0 %v7461, 40
      %v7484 = vpop.permute.xlu0 %7483
      %7485 = vrot.lane.b32.xlu0 %v7462, 40
      %v7486 = vpop.permute.xlu0 %7485
      %7487 = vrot.lane.b32.xlu0 %v7463, 40
      %v7488 = vpop.permute.xlu0 %7487
      %7489 = vrot.lane.b32.xlu0 %v7464, 40
      %v7490 = vpop.permute.xlu0 %7489
      %7491 = vrot.lane.b32.xlu0 %v7465, 40
      %v7492 = vpop.permute.xlu0 %7491
      %7493 = vrot.lane.b32.xlu0 %v7466, 40
      %v7494 = vpop.permute.xlu0 %7493
      %7495 = vrot.lane.b32.xlu0 %v7467, 40
      %v7496 = vpop.permute.xlu0 %7495
      %7497 = vrot.lane.b32.xlu0 %v7468, 40
      %v7498 = vpop.permute.xlu0 %7497
      %7499 = vrot.lane.b32.xlu0 %v7469, 40
      %v7500 = vpop.permute.xlu0 %7499
      %7501 = vrot.lane.b32.xlu0 %v7470, 40
      %v7502 = vpop.permute.xlu0 %7501
      %v7519 = vunpack.c.l.b16 %v6415
      %v7520 = vunpack.c.l.b16 %v6416
      %v7521 = vunpack.c.l.b16 %v6417
      %v7522 = vunpack.c.l.b16 %v6418
      %v7523 = vunpack.c.l.b16 %v6419
      %v7524 = vunpack.c.l.b16 %v6420
      %v7525 = vunpack.c.l.b16 %v6421
      %v7526 = vunpack.c.l.b16 %v6422
      %v7527 = vunpack.c.l.b16 %v6423
      %v7528 = vunpack.c.l.b16 %v6424
      %v7529 = vunpack.c.l.b16 %v6425
      %v7530 = vunpack.c.l.b16 %v6426
      %v7531 = vunpack.c.l.b16 %v6427
      %v7532 = vunpack.c.l.b16 %v6428
      %v7533 = vunpack.c.l.b16 %v6429
      %v7534 = vunpack.c.l.b16 %v6430
      %v7535 = vunpack.c.l.b16 %v6431
      %v7536 = vunpack.c.l.b16 %v6432
      %v7537 = vunpack.c.l.b16 %v6433
      %v7538 = vunpack.c.l.b16 %v6434
      %v7539 = vunpack.c.l.b16 %v6435
      %v7540 = vunpack.c.l.b16 %v6436
      %v7541 = vunpack.c.l.b16 %v6437
      %v7542 = vunpack.c.l.b16 %v6438
      %v7543 = vunpack.c.l.b16 %v6439
      %v7544 = vunpack.c.l.b16 %v6440
      %v7545 = vunpack.c.l.b16 %v6441
      %v7546 = vunpack.c.l.b16 %v6442
      %v7547 = vunpack.c.l.b16 %v6443
      %v7548 = vunpack.c.l.b16 %v6444
      %v7549 = vunpack.c.l.b16 %v6445
      %v7550 = vunpack.c.l.b16 %v6446
      %v7551 = vpack.c.b16 %v7520, %v7519
      %v7552 = vpack.c.b16 %v7522, %v7521
      %v7553 = vpack.c.b16 %v7524, %v7523
      %v7554 = vpack.c.b16 %v7526, %v7525
      %v7555 = vpack.c.b16 %v7528, %v7527
      %v7556 = vpack.c.b16 %v7530, %v7529
      %v7557 = vpack.c.b16 %v7532, %v7531
      %v7558 = vpack.c.b16 %v7534, %v7533
      %v7559 = vpack.c.b16 %v7536, %v7535
      %v7560 = vpack.c.b16 %v7538, %v7537
      %v7561 = vpack.c.b16 %v7540, %v7539
      %v7562 = vpack.c.b16 %v7542, %v7541
      %v7563 = vpack.c.b16 %v7544, %v7543
      %v7564 = vpack.c.b16 %v7546, %v7545
      %v7565 = vpack.c.b16 %v7548, %v7547
      %v7566 = vpack.c.b16 %v7550, %v7549
      %7567 = vrot.lane.b32.xlu0 %v7551, 48
      %v7568 = vpop.permute.xlu0 %7567
      %7569 = vrot.lane.b32.xlu0 %v7552, 48
      %v7570 = vpop.permute.xlu0 %7569
      %7571 = vrot.lane.b32.xlu0 %v7553, 48
      %v7572 = vpop.permute.xlu0 %7571
      %7573 = vrot.lane.b32.xlu0 %v7554, 48
      %v7574 = vpop.permute.xlu0 %7573
      %7575 = vrot.lane.b32.xlu0 %v7555, 48
      %v7576 = vpop.permute.xlu0 %7575
      %7577 = vrot.lane.b32.xlu0 %v7556, 48
      %v7578 = vpop.permute.xlu0 %7577
      %7579 = vrot.lane.b32.xlu0 %v7557, 48
      %v7580 = vpop.permute.xlu0 %7579
      %7581 = vrot.lane.b32.xlu0 %v7558, 48
      %v7582 = vpop.permute.xlu0 %7581
      %7583 = vrot.lane.b32.xlu0 %v7559, 48
      %v7584 = vpop.permute.xlu0 %7583
      %7585 = vrot.lane.b32.xlu0 %v7560, 48
      %v7586 = vpop.permute.xlu0 %7585
      %7587 = vrot.lane.b32.xlu0 %v7561, 48
      %v7588 = vpop.permute.xlu0 %7587
      %7589 = vrot.lane.b32.xlu0 %v7562, 48
      %v7590 = vpop.permute.xlu0 %7589
      %7591 = vrot.lane.b32.xlu0 %v7563, 48
      %v7592 = vpop.permute.xlu0 %7591
      %7593 = vrot.lane.b32.xlu0 %v7564, 48
      %v7594 = vpop.permute.xlu0 %7593
      %7595 = vrot.lane.b32.xlu0 %v7565, 48
      %v7596 = vpop.permute.xlu0 %7595
      %7597 = vrot.lane.b32.xlu0 %v7566, 48
      %v7598 = vpop.permute.xlu0 %7597
      %v7599 = vunpack.c.l.b16 %v6476
      %v7600 = vunpack.c.l.b16 %v6486
      %v7601 = vunpack.c.l.b16 %v6500
      %v7602 = vunpack.c.l.b16 %v6510
      %v7603 = vunpack.c.l.b16 %v6524
      %v7604 = vunpack.c.l.b16 %v6534
      %v7605 = vunpack.c.l.b16 %v6548
      %v7606 = vunpack.c.l.b16 %v6558
      %v7607 = vunpack.c.l.b16 %v6572
      %v7608 = vunpack.c.l.b16 %v6582
      %v7609 = vunpack.c.l.b16 %v6596
      %v7610 = vunpack.c.l.b16 %v6606
      %v7611 = vunpack.c.l.b16 %v6620
      %v7612 = vunpack.c.l.b16 %v6630
      %v7613 = vunpack.c.l.b16 %v6644
      %v7614 = vunpack.c.l.b16 %v6654
      %v7615 = vunpack.c.l.b16 %v6668
      %v7616 = vunpack.c.l.b16 %v6678
      %v7617 = vunpack.c.l.b16 %v6692
      %v7618 = vunpack.c.l.b16 %v6702
      %v7619 = vunpack.c.l.b16 %v6716
      %v7620 = vunpack.c.l.b16 %v6726
      %v7621 = vunpack.c.l.b16 %v6740
      %v7622 = vunpack.c.l.b16 %v6750
      %v7623 = vunpack.c.l.b16 %v6764
      %v7624 = vunpack.c.l.b16 %v6774
      %v7625 = vunpack.c.l.b16 %v6788
      %v7626 = vunpack.c.l.b16 %v6798
      %v7627 = vunpack.c.l.b16 %v6812
      %v7628 = vunpack.c.l.b16 %v6822
      %v7629 = vunpack.c.l.b16 %v6836
      %v7630 = vunpack.c.l.b16 %v6846
      %v7631 = vpack.c.b16 %v7600, %v7599
      %v7632 = vpack.c.b16 %v7602, %v7601
      %v7633 = vpack.c.b16 %v7604, %v7603
      %v7634 = vpack.c.b16 %v7606, %v7605
      %v7635 = vpack.c.b16 %v7608, %v7607
      %v7636 = vpack.c.b16 %v7610, %v7609
      %v7637 = vpack.c.b16 %v7612, %v7611
      %v7638 = vpack.c.b16 %v7614, %v7613
      %v7639 = vpack.c.b16 %v7616, %v7615
      %v7640 = vpack.c.b16 %v7618, %v7617
      %v7641 = vpack.c.b16 %v7620, %v7619
      %v7642 = vpack.c.b16 %v7622, %v7621
      %v7643 = vpack.c.b16 %v7624, %v7623
      %v7644 = vpack.c.b16 %v7626, %v7625
      %v7645 = vpack.c.b16 %v7628, %v7627
      %v7646 = vpack.c.b16 %v7630, %v7629
      %7647 = vrot.lane.b32.xlu0 %v7631, 56
      %v7648 = vpop.permute.xlu0 %7647
      %7649 = vrot.lane.b32.xlu0 %v7632, 56
      %v7650 = vpop.permute.xlu0 %7649
      %7651 = vrot.lane.b32.xlu0 %v7633, 56
      %v7652 = vpop.permute.xlu0 %7651
      %7653 = vrot.lane.b32.xlu0 %v7634, 56
      %v7654 = vpop.permute.xlu0 %7653
      %7655 = vrot.lane.b32.xlu0 %v7635, 56
      %v7656 = vpop.permute.xlu0 %7655
      %7657 = vrot.lane.b32.xlu0 %v7636, 56
      %v7658 = vpop.permute.xlu0 %7657
      %7659 = vrot.lane.b32.xlu0 %v7637, 56
      %v7660 = vpop.permute.xlu0 %7659
      %7661 = vrot.lane.b32.xlu0 %v7638, 56
      %v7662 = vpop.permute.xlu0 %7661
      %7663 = vrot.lane.b32.xlu0 %v7639, 56
      %v7664 = vpop.permute.xlu0 %7663
      %7665 = vrot.lane.b32.xlu0 %v7640, 56
      %v7666 = vpop.permute.xlu0 %7665
      %7667 = vrot.lane.b32.xlu0 %v7641, 56
      %v7668 = vpop.permute.xlu0 %7667
      %7669 = vrot.lane.b32.xlu0 %v7642, 56
      %v7670 = vpop.permute.xlu0 %7669
      %7671 = vrot.lane.b32.xlu0 %v7643, 56
      %v7672 = vpop.permute.xlu0 %7671
      %7673 = vrot.lane.b32.xlu0 %v7644, 56
      %v7674 = vpop.permute.xlu0 %7673
      %7675 = vrot.lane.b32.xlu0 %v7645, 56
      %v7676 = vpop.permute.xlu0 %7675
      %7677 = vrot.lane.b32.xlu0 %v7646, 56
      %v7678 = vpop.permute.xlu0 %7677
      %v7679 = vunpack.c.l.b16 %v6914
      %v7680 = vunpack.c.l.b16 %v6917
      %v7681 = vunpack.c.l.b16 %v6921
      %v7682 = vunpack.c.l.b16 %v6924
      %v7683 = vunpack.c.l.b16 %v6928
      %v7684 = vunpack.c.l.b16 %v6931
      %v7685 = vunpack.c.l.b16 %v6935
      %v7686 = vunpack.c.l.b16 %v6938
      %v7687 = vunpack.c.l.b16 %v6942
      %v7688 = vunpack.c.l.b16 %v6945
      %v7689 = vunpack.c.l.b16 %v6949
      %v7690 = vunpack.c.l.b16 %v6952
      %v7691 = vunpack.c.l.b16 %v6956
      %v7692 = vunpack.c.l.b16 %v6959
      %v7693 = vunpack.c.l.b16 %v6963
      %v7694 = vunpack.c.l.b16 %v6966
      %v7695 = vunpack.c.l.b16 %v6970
      %v7696 = vunpack.c.l.b16 %v6973
      %v7697 = vunpack.c.l.b16 %v6977
      %v7698 = vunpack.c.l.b16 %v6980
      %v7699 = vunpack.c.l.b16 %v6984
      %v7700 = vunpack.c.l.b16 %v6987
      %v7701 = vunpack.c.l.b16 %v6991
      %v7702 = vunpack.c.l.b16 %v6994
      %v7703 = vunpack.c.l.b16 %v6998
      %v7704 = vunpack.c.l.b16 %v7001
      %v7705 = vunpack.c.l.b16 %v7005
      %v7706 = vunpack.c.l.b16 %v7008
      %v7707 = vunpack.c.l.b16 %v7012
      %v7708 = vunpack.c.l.b16 %v7015
      %v7709 = vunpack.c.l.b16 %v7019
      %v7710 = vunpack.c.l.b16 %v7022
      %v7711 = vpack.c.b16 %v7680, %v7679
      %v7712 = vpack.c.b16 %v7682, %v7681
      %v7713 = vpack.c.b16 %v7684, %v7683
      %v7714 = vpack.c.b16 %v7686, %v7685
      %v7715 = vpack.c.b16 %v7688, %v7687
      %v7716 = vpack.c.b16 %v7690, %v7689
      %v7717 = vpack.c.b16 %v7692, %v7691
      %v7718 = vpack.c.b16 %v7694, %v7693
      %v7719 = vpack.c.b16 %v7696, %v7695
      %v7720 = vpack.c.b16 %v7698, %v7697
      %v7721 = vpack.c.b16 %v7700, %v7699
      %v7722 = vpack.c.b16 %v7702, %v7701
      %v7723 = vpack.c.b16 %v7704, %v7703
      %v7724 = vpack.c.b16 %v7706, %v7705
      %v7725 = vpack.c.b16 %v7708, %v7707
      %v7726 = vpack.c.b16 %v7710, %v7709
      %7727 = vrot.lane.b32.xlu0 %v7711, 64
      %v7728 = vpop.permute.xlu0 %7727
      %7729 = vrot.lane.b32.xlu0 %v7712, 64
      %v7730 = vpop.permute.xlu0 %7729
      %7731 = vrot.lane.b32.xlu0 %v7713, 64
      %v7732 = vpop.permute.xlu0 %7731
      %7733 = vrot.lane.b32.xlu0 %v7714, 64
      %v7734 = vpop.permute.xlu0 %7733
      %7735 = vrot.lane.b32.xlu0 %v7715, 64
      %v7736 = vpop.permute.xlu0 %7735
      %7737 = vrot.lane.b32.xlu0 %v7716, 64
      %v7738 = vpop.permute.xlu0 %7737
      %7739 = vrot.lane.b32.xlu0 %v7717, 64
      %v7740 = vpop.permute.xlu0 %7739
      %7741 = vrot.lane.b32.xlu0 %v7718, 64
      %v7742 = vpop.permute.xlu0 %7741
      %7743 = vrot.lane.b32.xlu0 %v7719, 64
      %v7744 = vpop.permute.xlu0 %7743
      %7745 = vrot.lane.b32.xlu0 %v7720, 64
      %v7746 = vpop.permute.xlu0 %7745
      %7747 = vrot.lane.b32.xlu0 %v7721, 64
      %v7748 = vpop.permute.xlu0 %7747
      %7749 = vrot.lane.b32.xlu0 %v7722, 64
      %v7750 = vpop.permute.xlu0 %7749
      %7751 = vrot.lane.b32.xlu0 %v7723, 64
      %v7752 = vpop.permute.xlu0 %7751
      %7753 = vrot.lane.b32.xlu0 %v7724, 64
      %v7754 = vpop.permute.xlu0 %7753
      %7755 = vrot.lane.b32.xlu0 %v7725, 64
      %v7756 = vpop.permute.xlu0 %7755
      %7757 = vrot.lane.b32.xlu0 %v7726, 64
      %v7758 = vpop.permute.xlu0 %7757
      %v7761 = vsel %vm4114, %v7071, %v7136
      %v7764 = vsel %vm4114, %v7072, %v7138
      %v7767 = vsel %vm4114, %v7073, %v7140
      %v7770 = vsel %vm4114, %v7074, %v7142
      %v7773 = vsel %vm4114, %v7075, %v7144
      %v7776 = vsel %vm4114, %v7076, %v7146
      %v7779 = vsel %vm4114, %v7077, %v7148
      %v7782 = vsel %vm4114, %v7078, %v7150
      %v7785 = vsel %vm4114, %v7079, %v7152
      %v7788 = vsel %vm4114, %v7080, %v7154
      %v7791 = vsel %vm4114, %v7081, %v7156
      %v7794 = vsel %vm4114, %v7082, %v7158
      %v7797 = vsel %vm4114, %v7083, %v7160
      %v7800 = vsel %vm4114, %v7084, %v7162
      %v7803 = vsel %vm4114, %v7085, %v7164
      %v7806 = vsel %vm4114, %v7086, %v7166
      %v7808 = vsel %vm4163, %v7761, %v7216
      %v7810 = vsel %vm4163, %v7764, %v7218
      %v7812 = vsel %vm4163, %v7767, %v7220
      %v7814 = vsel %vm4163, %v7770, %v7222
      %v7816 = vsel %vm4163, %v7773, %v7224
      %v7818 = vsel %vm4163, %v7776, %v7226
      %v7820 = vsel %vm4163, %v7779, %v7228
      %v7822 = vsel %vm4163, %v7782, %v7230
      %v7824 = vsel %vm4163, %v7785, %v7232
      %v7826 = vsel %vm4163, %v7788, %v7234
      %v7828 = vsel %vm4163, %v7791, %v7236
      %v7830 = vsel %vm4163, %v7794, %v7238
      %v7832 = vsel %vm4163, %v7797, %v7240
      %v7834 = vsel %vm4163, %v7800, %v7242
      %v7836 = vsel %vm4163, %v7803, %v7244
      %v7838 = vsel %vm4163, %v7806, %v7246
      %v7840 = vsel %vm4196, %v7808, %v7312
      %v7842 = vsel %vm4196, %v7810, %v7314
      %v7844 = vsel %vm4196, %v7812, %v7316
      %v7846 = vsel %vm4196, %v7814, %v7318
      %v7848 = vsel %vm4196, %v7816, %v7320
      %v7850 = vsel %vm4196, %v7818, %v7322
      %v7852 = vsel %vm4196, %v7820, %v7324
      %v7854 = vsel %vm4196, %v7822, %v7326
      %v7856 = vsel %vm4196, %v7824, %v7328
      %v7858 = vsel %vm4196, %v7826, %v7330
      %v7860 = vsel %vm4196, %v7828, %v7332
      %v7862 = vsel %vm4196, %v7830, %v7334
      %v7864 = vsel %vm4196, %v7832, %v7336
      %v7866 = vsel %vm4196, %v7834, %v7338
      %v7868 = vsel %vm4196, %v7836, %v7340
      %v7870 = vsel %vm4196, %v7838, %v7342
      %v7872 = vsel %vm4229, %v7840, %v7392
      %v7874 = vsel %vm4229, %v7842, %v7394
      %v7876 = vsel %vm4229, %v7844, %v7396
      %v7878 = vsel %vm4229, %v7846, %v7398
      %v7880 = vsel %vm4229, %v7848, %v7400
      %v7882 = vsel %vm4229, %v7850, %v7402
      %v7884 = vsel %vm4229, %v7852, %v7404
      %v7886 = vsel %vm4229, %v7854, %v7406
      %v7888 = vsel %vm4229, %v7856, %v7408
      %v7890 = vsel %vm4229, %v7858, %v7410
      %v7892 = vsel %vm4229, %v7860, %v7412
      %v7894 = vsel %vm4229, %v7862, %v7414
      %v7896 = vsel %vm4229, %v7864, %v7416
      %v7898 = vsel %vm4229, %v7866, %v7418
      %v7900 = vsel %vm4229, %v7868, %v7420
      %v7902 = vsel %vm4229, %v7870, %v7422
      %v7904 = vsel %vm4262, %v7872, %v7472
      %v7906 = vsel %vm4262, %v7874, %v7474
      %v7908 = vsel %vm4262, %v7876, %v7476
      %v7910 = vsel %vm4262, %v7878, %v7478
      %v7912 = vsel %vm4262, %v7880, %v7480
      %v7914 = vsel %vm4262, %v7882, %v7482
      %v7916 = vsel %vm4262, %v7884, %v7484
      %v7918 = vsel %vm4262, %v7886, %v7486
      %v7920 = vsel %vm4262, %v7888, %v7488
      %v7922 = vsel %vm4262, %v7890, %v7490
      %v7924 = vsel %vm4262, %v7892, %v7492
      %v7926 = vsel %vm4262, %v7894, %v7494
      %v7928 = vsel %vm4262, %v7896, %v7496
      %v7930 = vsel %vm4262, %v7898, %v7498
      %v7932 = vsel %vm4262, %v7900, %v7500
      %v7934 = vsel %vm4262, %v7902, %v7502
      %v7936 = vsel %vm4295, %v7904, %v7568
      %v7938 = vsel %vm4295, %v7906, %v7570
      %v7940 = vsel %vm4295, %v7908, %v7572
      %v7942 = vsel %vm4295, %v7910, %v7574
      %v7944 = vsel %vm4295, %v7912, %v7576
      %v7946 = vsel %vm4295, %v7914, %v7578
      %v7948 = vsel %vm4295, %v7916, %v7580
      %v7950 = vsel %vm4295, %v7918, %v7582
      %v7952 = vsel %vm4295, %v7920, %v7584
      %v7954 = vsel %vm4295, %v7922, %v7586
      %v7956 = vsel %vm4295, %v7924, %v7588
      %v7958 = vsel %vm4295, %v7926, %v7590
      %v7960 = vsel %vm4295, %v7928, %v7592
      %v7962 = vsel %vm4295, %v7930, %v7594
      %v7964 = vsel %vm4295, %v7932, %v7596
      %v7966 = vsel %vm4295, %v7934, %v7598
      %v7968 = vsel %vm4328, %v7936, %v7648
      %v7970 = vsel %vm4328, %v7938, %v7650
      %v7972 = vsel %vm4328, %v7940, %v7652
      %v7974 = vsel %vm4328, %v7942, %v7654
      %v7976 = vsel %vm4328, %v7944, %v7656
      %v7978 = vsel %vm4328, %v7946, %v7658
      %v7980 = vsel %vm4328, %v7948, %v7660
      %v7982 = vsel %vm4328, %v7950, %v7662
      %v7984 = vsel %vm4328, %v7952, %v7664
      %v7986 = vsel %vm4328, %v7954, %v7666
      %v7988 = vsel %vm4328, %v7956, %v7668
      %v7990 = vsel %vm4328, %v7958, %v7670
      %v7992 = vsel %vm4328, %v7960, %v7672
      %v7994 = vsel %vm4328, %v7962, %v7674
      %v7996 = vsel %vm4328, %v7964, %v7676
      %v7998 = vsel %vm4328, %v7966, %v7678
      %v8000 = vsel %vm4361, %v7968, %v7728
      %v8002 = vsel %vm4361, %v7970, %v7730
      %v8004 = vsel %vm4361, %v7972, %v7732
      %v8006 = vsel %vm4361, %v7974, %v7734
      %v8008 = vsel %vm4361, %v7976, %v7736
      %v8010 = vsel %vm4361, %v7978, %v7738
      %v8012 = vsel %vm4361, %v7980, %v7740
      %v8014 = vsel %vm4361, %v7982, %v7742
      %v8016 = vsel %vm4361, %v7984, %v7744
      %v8018 = vsel %vm4361, %v7986, %v7746
      %v8020 = vsel %vm4361, %v7988, %v7748
      %v8022 = vsel %vm4361, %v7990, %v7750
      %v8024 = vsel %vm4361, %v7992, %v7752
      %v8026 = vsel %vm4361, %v7994, %v7754
      %v8028 = vsel %vm4361, %v7996, %v7756
      %v8030 = vsel %vm4361, %v7998, %v7758
      %v8031 = vld [vmem:[%s4] sm:$0xf]
      %v8032 = vld [vmem:[%s4 + $0x4] sm:$0xf]
      %v8033 = vld [vmem:[%s4 + $0x8] sm:$0xf]
      %v8034 = vld [vmem:[%s4 + $0xc] sm:$0xf]
      %v8035 = vld [vmem:[%s4 + $0x10] sm:$0xf]
      %v8036 = vld [vmem:[%s4 + $0x14] sm:$0xf]
      %v8037 = vld [vmem:[%s4 + $0x18] sm:$0xf]
      %v8038 = vld [vmem:[%s4 + $0x1c] sm:$0xf]
      %v8039 = vld [vmem:[%s4 + $0x20] sm:$0xf]
      %v8040 = vld [vmem:[%s5] sm:$0x1]
      %v8042 = vlaneseq
      %v8043 = vshrl.u32 %v8042, 7
      %v8044 = vsub.s32 0, %v8043
      %v8045 = vrot.slane %v8040, %v8044
      %v8056 = vunpack.c.l.b16 %v8031
      %v8057 = vunpack.c.l.b16 %v8032
      %v8058 = vunpack.c.l.b16 %v8033
      %v8059 = vunpack.c.l.b16 %v8034
      %v8060 = vunpack.c.l.b16 %v8035
      %v8061 = vunpack.c.l.b16 %v8036
      %v8062 = vunpack.c.l.b16 %v8037
      %v8063 = vunpack.c.l.b16 %v8038
      %v8064 = vunpack.c.l.b16 %v8039
      %v8065 = vpack.c.b16 %v8057, %v8056
      %v8066 = vpack.c.b16 %v8059, %v8058
      %v8067 = vpack.c.b16 %v8061, %v8060
      %v8068 = vpack.c.b16 %v8063, %v8062
      %v8069 = vpack.c.b16 %v8064, %v8064
      %v8074 = vsel %vm4437, %v8000, 0
      %v8076 = vsel %vm4437, %v8002, 0
      %v8078 = vsel %vm4437, %v8004, 0
      %v8080 = vsel %vm4437, %v8006, 0
      %v8082 = vsel %vm4437, %v8008, 0
      %v8084 = vsel %vm4437, %v8010, 0
      %v8086 = vsel %vm4437, %v8012, 0
      %v8088 = vsel %vm4437, %v8014, 0
      %v8090 = vsel %vm4437, %v8016, 0
      %v8092 = vsel %vm4437, %v8018, 0
      %v8094 = vsel %vm4437, %v8020, 0
      %v8096 = vsel %vm4437, %v8022, 0
      %v8098 = vsel %vm4437, %v8024, 0
      %v8100 = vsel %vm4437, %v8026, 0
      %v8102 = vsel %vm4437, %v8028, 0
      %v8104 = vsel %vm4437, %v8030, 0
      %v8107 = vsel %vm4470, %v8069, 0
      %8109 = vmatprep.subr.bf16.mxu0 0
      %8110 = vmatpush1.bf16.msra.mxu0 0
      %8111 = vmatprep.subr.bf16.mxu0 0
      %8112 = vmatpush1.bf16.msra.mxu0 0
      %8113 = vmatprep.subr.bf16.mxu0 0
      %8114 = vmatpush1.bf16.msra.mxu0 0
      %8115 = vmatprep.subr.bf16.mxu0 0
      %8116 = vmatpush1.bf16.msra.mxu0 %v8107
      %8117 = vmatprep.subr.bf16.mxu0 0
      %8118 = vmatpush1.bf16.msra.mxu0 %v8068
      %8119 = vmatprep.subr.bf16.mxu0 0
      %8120 = vmatpush1.bf16.msra.mxu0 %v8067
      %8121 = vmatprep.subr.bf16.mxu0 0
      %8122 = vmatpush1.bf16.msra.mxu0 %v8066
      %8123 = vmatprep.subr.bf16.mxu0 0
      %8124 = vmatpush1.bf16.msra.mxu0 %v8065
      %8125 = vmatprep.subr.bf16.mxu0 0
      %8126 = vmatpush2.bf16.msra.mxu0 0
      %8127 = vmatprep.subr.bf16.mxu0 0
      %8128 = vmatpush2.bf16.msra.mxu0 0
      %8129 = vmatprep.subr.bf16.mxu0 0
      %8130 = vmatpush2.bf16.msra.mxu0 0
      %8131 = vmatprep.subr.bf16.mxu0 0
      %8132 = vmatpush2.bf16.msra.mxu0 0
      %8133 = vmatprep.subr.bf16.mxu0 0
      %8134 = vmatpush2.bf16.msra.mxu0 0
      %8135 = vmatprep.subr.bf16.mxu0 0
      %8136 = vmatpush2.bf16.msra.mxu0 0
      %8137 = vmatprep.subr.bf16.mxu0 0
      %8138 = vmatpush2.bf16.msra.mxu0 0
      %8139 = vmatprep.subr.bf16.mxu0 0
      %8140 = vmatpush2.bf16.msra.mxu0 0
      %8141 = vmatprep.mubr.bf16.mxu0 0
      %8142 = vmatmul.mubr.bf16.gmra.mxu0 %v8074
      %v8143 = vpop.f32.mrf.mxu0
      %v8144 = vadd.f32 %v8045, %v8143
      %v8145 = vpop.f32.mrf.mxu0
      %v8146 = vpop.f32.mrf.mxu0
      %v8147 = vadd.f32 %v8045, %v8146
      %v8148 = vpop.f32.mrf.mxu0
      %8149 = vmatprep.mubr.bf16.mxu0 0
      %8150 = vmatmul.mubr.bf16.gmra.mxu0 %v8076
      %v8151 = vpop.f32.mrf.mxu0
      %v8152 = vadd.f32 %v8045, %v8151
      %v8153 = vpop.f32.mrf.mxu0
      %v8154 = vpop.f32.mrf.mxu0
      %v8155 = vadd.f32 %v8045, %v8154
      %v8156 = vpop.f32.mrf.mxu0
      %8157 = vmatprep.mubr.bf16.mxu0 0
      %8158 = vmatmul.mubr.bf16.gmra.mxu0 %v8078
      %v8159 = vpop.f32.mrf.mxu0
      %v8160 = vadd.f32 %v8045, %v8159
      %v8161 = vpop.f32.mrf.mxu0
      %v8162 = vpop.f32.mrf.mxu0
      %v8163 = vadd.f32 %v8045, %v8162
      %v8164 = vpop.f32.mrf.mxu0
      %8165 = vmatprep.mubr.bf16.mxu0 0
      %8166 = vmatmul.mubr.bf16.gmra.mxu0 %v8080
      %v8167 = vpop.f32.mrf.mxu0
      %v8168 = vadd.f32 %v8045, %v8167
      %v8169 = vpop.f32.mrf.mxu0
      %v8170 = vpop.f32.mrf.mxu0
      %v8171 = vadd.f32 %v8045, %v8170
      %v8172 = vpop.f32.mrf.mxu0
      %8173 = vmatprep.mubr.bf16.mxu0 0
      %8174 = vmatmul.mubr.bf16.gmra.mxu0 %v8082
      %v8175 = vpop.f32.mrf.mxu0
      %v8176 = vadd.f32 %v8045, %v8175
      %v8177 = vpop.f32.mrf.mxu0
      %v8178 = vpop.f32.mrf.mxu0
      %v8179 = vadd.f32 %v8045, %v8178
      %v8180 = vpop.f32.mrf.mxu0
      %8181 = vmatprep.mubr.bf16.mxu0 0
      %8182 = vmatmul.mubr.bf16.gmra.mxu0 %v8084
      %v8183 = vpop.f32.mrf.mxu0
      %v8184 = vadd.f32 %v8045, %v8183
      %v8185 = vpop.f32.mrf.mxu0
      %v8186 = vpop.f32.mrf.mxu0
      %v8187 = vadd.f32 %v8045, %v8186
      %v8188 = vpop.f32.mrf.mxu0
      %8189 = vmatprep.mubr.bf16.mxu0 0
      %8190 = vmatmul.mubr.bf16.gmra.mxu0 %v8086
      %v8191 = vpop.f32.mrf.mxu0
      %v8192 = vadd.f32 %v8045, %v8191
      %v8193 = vpop.f32.mrf.mxu0
      %v8194 = vpop.f32.mrf.mxu0
      %v8195 = vadd.f32 %v8045, %v8194
      %v8196 = vpop.f32.mrf.mxu0
      %8197 = vmatprep.mubr.bf16.mxu0 0
      %8198 = vmatmul.mubr.bf16.gmra.mxu0 %v8088
      %v8199 = vpop.f32.mrf.mxu0
      %v8200 = vadd.f32 %v8045, %v8199
      %v8201 = vpop.f32.mrf.mxu0
      %v8202 = vpop.f32.mrf.mxu0
      %v8203 = vadd.f32 %v8045, %v8202
      %v8204 = vpop.f32.mrf.mxu0
      %8205 = vmatprep.mubr.bf16.mxu0 0
      %8206 = vmatmul.mubr.bf16.gmra.mxu0 %v8090
      %v8207 = vpop.f32.mrf.mxu0
      %v8208 = vadd.f32 %v8045, %v8207
      %v8209 = vpop.f32.mrf.mxu0
      %v8210 = vpop.f32.mrf.mxu0
      %v8211 = vadd.f32 %v8045, %v8210
      %v8212 = vpop.f32.mrf.mxu0
      %8213 = vmatprep.mubr.bf16.mxu0 0
      %8214 = vmatmul.mubr.bf16.gmra.mxu0 %v8092
      %v8215 = vpop.f32.mrf.mxu0
      %v8216 = vadd.f32 %v8045, %v8215
      %v8217 = vpop.f32.mrf.mxu0
      %v8218 = vpop.f32.mrf.mxu0
      %v8219 = vadd.f32 %v8045, %v8218
      %v8220 = vpop.f32.mrf.mxu0
      %8221 = vmatprep.mubr.bf16.mxu0 0
      %8222 = vmatmul.mubr.bf16.gmra.mxu0 %v8094
      %v8223 = vpop.f32.mrf.mxu0
      %v8224 = vadd.f32 %v8045, %v8223
      %v8225 = vpop.f32.mrf.mxu0
      %v8226 = vpop.f32.mrf.mxu0
      %v8227 = vadd.f32 %v8045, %v8226
      %v8228 = vpop.f32.mrf.mxu0
      %8229 = vmatprep.mubr.bf16.mxu0 0
      %8230 = vmatmul.mubr.bf16.gmra.mxu0 %v8096
      %v8231 = vpop.f32.mrf.mxu0
      %v8232 = vadd.f32 %v8045, %v8231
      %v8233 = vpop.f32.mrf.mxu0
      %v8234 = vpop.f32.mrf.mxu0
      %v8235 = vadd.f32 %v8045, %v8234
      %v8236 = vpop.f32.mrf.mxu0
      %8237 = vmatprep.mubr.bf16.mxu0 0
      %8238 = vmatmul.mubr.bf16.gmra.mxu0 %v8098
      %v8239 = vpop.f32.mrf.mxu0
      %v8240 = vadd.f32 %v8045, %v8239
      %v8241 = vpop.f32.mrf.mxu0
      %v8242 = vpop.f32.mrf.mxu0
      %v8243 = vadd.f32 %v8045, %v8242
      %v8244 = vpop.f32.mrf.mxu0
      %8245 = vmatprep.mubr.bf16.mxu0 0
      %8246 = vmatmul.mubr.bf16.gmra.mxu0 %v8100
      %v8247 = vpop.f32.mrf.mxu0
      %v8248 = vadd.f32 %v8045, %v8247
      %v8249 = vpop.f32.mrf.mxu0
      %v8250 = vpop.f32.mrf.mxu0
      %v8251 = vadd.f32 %v8045, %v8250
      %v8252 = vpop.f32.mrf.mxu0
      %8253 = vmatprep.mubr.bf16.mxu0 0
      %8254 = vmatmul.mubr.bf16.gmra.mxu0 %v8102
      %v8255 = vpop.f32.mrf.mxu0
      %v8256 = vadd.f32 %v8045, %v8255
      %v8257 = vpop.f32.mrf.mxu0
      %v8258 = vpop.f32.mrf.mxu0
      %v8259 = vadd.f32 %v8045, %v8258
      %v8260 = vpop.f32.mrf.mxu0
      %8261 = vmatprep.mubr.bf16.mxu0 0
      %8262 = vmatmul.mubr.bf16.gmra.mxu0 %v8104
      %v8263 = vpop.f32.mrf.mxu0
      %v8264 = vadd.f32 %v8045, %v8263
      %v8265 = vpop.f32.mrf.mxu0
      %v8266 = vpop.f32.mrf.mxu0
      %v8267 = vadd.f32 %v8045, %v8266
      %v8268 = vpop.f32.mrf.mxu0
      %8269 = vdwg.mxu0
      %v8270 = vmax.f32 %v8144, 0.0
      %v8271 = vmax.f32 %v8147, 0.0
      %v8272 = vmax.f32 %v8152, 0.0
      %v8273 = vmax.f32 %v8155, 0.0
      %v8274 = vmax.f32 %v8160, 0.0
      %v8275 = vmax.f32 %v8163, 0.0
      %v8276 = vmax.f32 %v8168, 0.0
      %v8277 = vmax.f32 %v8171, 0.0
      %v8278 = vmax.f32 %v8176, 0.0
      %v8279 = vmax.f32 %v8179, 0.0
      %v8280 = vmax.f32 %v8184, 0.0
      %v8281 = vmax.f32 %v8187, 0.0
      %v8282 = vmax.f32 %v8192, 0.0
      %v8283 = vmax.f32 %v8195, 0.0
      %v8284 = vmax.f32 %v8200, 0.0
      %v8285 = vmax.f32 %v8203, 0.0
      %v8286 = vmax.f32 %v8208, 0.0
      %v8287 = vmax.f32 %v8211, 0.0
      %v8288 = vmax.f32 %v8216, 0.0
      %v8289 = vmax.f32 %v8219, 0.0
      %v8290 = vmax.f32 %v8224, 0.0
      %v8291 = vmax.f32 %v8227, 0.0
      %v8292 = vmax.f32 %v8232, 0.0
      %v8293 = vmax.f32 %v8235, 0.0
      %v8294 = vmax.f32 %v8240, 0.0
      %v8295 = vmax.f32 %v8243, 0.0
      %v8296 = vmax.f32 %v8248, 0.0
      %v8297 = vmax.f32 %v8251, 0.0
      %v8298 = vmax.f32 %v8256, 0.0
      %v8299 = vmax.f32 %v8259, 0.0
      %v8300 = vmax.f32 %v8264, 0.0
      %v8301 = vmax.f32 %v8267, 0.0
      %vm8302 = vcmask 31744
      %8303 = vst.msk [vmem:[%s271] sm:$0xff] %vm8302, %v8270
      %8304 = vst.msk [vmem:[%s271 + $0x8] sm:$0xff] %vm8302, %v8271
      %8305 = vst.msk [vmem:[%s271 + $0x10] sm:$0xff] %vm8302, %v8272
      %8306 = vst.msk [vmem:[%s271 + $0x18] sm:$0xff] %vm8302, %v8273
      %8307 = vst.msk [vmem:[%s271 + $0x20] sm:$0xff] %vm8302, %v8274
      %8308 = vst.msk [vmem:[%s271 + $0x28] sm:$0xff] %vm8302, %v8275
      %8309 = vst.msk [vmem:[%s271 + $0x30] sm:$0xff] %vm8302, %v8276
      %8310 = vst.msk [vmem:[%s271 + $0x38] sm:$0xff] %vm8302, %v8277
      %8311 = vst.msk [vmem:[%s271 + $0x40] sm:$0xff] %vm8302, %v8278
      %8312 = vst.msk [vmem:[%s271 + $0x48] sm:$0xff] %vm8302, %v8279
      %8313 = vst.msk [vmem:[%s271 + $0x50] sm:$0xff] %vm8302, %v8280
      %8314 = vst.msk [vmem:[%s271 + $0x58] sm:$0xff] %vm8302, %v8281
      %8315 = vst.msk [vmem:[%s271 + $0x60] sm:$0xff] %vm8302, %v8282
      %8316 = vst.msk [vmem:[%s271 + $0x68] sm:$0xff] %vm8302, %v8283
      %8317 = vst.msk [vmem:[%s271 + $0x70] sm:$0xff] %vm8302, %v8284
      %8318 = vst.msk [vmem:[%s271 + $0x78] sm:$0xff] %vm8302, %v8285
      %8319 = vst.msk [vmem:[%s271 + $0x80] sm:$0xff] %vm8302, %v8286
      %8320 = vst.msk [vmem:[%s271 + $0x88] sm:$0xff] %vm8302, %v8287
      %8321 = vst.msk [vmem:[%s271 + $0x90] sm:$0xff] %vm8302, %v8288
      %8322 = vst.msk [vmem:[%s271 + $0x98] sm:$0xff] %vm8302, %v8289
      %8323 = vst.msk [vmem:[%s271 + $0xa0] sm:$0xff] %vm8302, %v8290
      %8324 = vst.msk [vmem:[%s271 + $0xa8] sm:$0xff] %vm8302, %v8291
      %8325 = vst.msk [vmem:[%s271 + $0xb0] sm:$0xff] %vm8302, %v8292
      %8326 = vst.msk [vmem:[%s271 + $0xb8] sm:$0xff] %vm8302, %v8293
      %8327 = vst.msk [vmem:[%s271 + $0xc0] sm:$0xff] %vm8302, %v8294
      %8328 = vst.msk [vmem:[%s271 + $0xc8] sm:$0xff] %vm8302, %v8295
      %8329 = vst.msk [vmem:[%s271 + $0xd0] sm:$0xff] %vm8302, %v8296
      %8330 = vst.msk [vmem:[%s271 + $0xd8] sm:$0xff] %vm8302, %v8297
      %8331 = vst.msk [vmem:[%s271 + $0xe0] sm:$0xff] %vm8302, %v8298
      %8332 = vst.msk [vmem:[%s271 + $0xe8] sm:$0xff] %vm8302, %v8299
      %8333 = vst.msk [vmem:[%s271 + $0xf0] sm:$0xff] %vm8302, %v8300
      %8334 = vst.msk [vmem:[%s271 + $0xf8] sm:$0xff] %vm8302, %v8301
      %p8335 = scmp.lt.s32.totalorder %s17, 1
      %s8336 = scalar_select %p8335, %s17, 1
      %s8337 = smul.addr %s8336, 32
      %s8338 = smul.addr %s8337, 8
      %s8339 = scalar_lea.vmem %s6, %s8338
      // Predicated region
      $region45: #{decoder_forward.3} parent=43 // pred_check
        %p8340 = pneg %p171
      $region46: #{decoder_forward.3} parent=43 // pred_check_branch
        %8342 = sbr.rel (%p8340) target = $region48
      $region47: #{decoder_forward.3} parent=43 // pred_region
        _
      $region48: #{decoder_forward.3} parent=43 // pred_fallthru
        _
    $region44: #{decoder_forward.3} parent=5 // pred_fallthru
      _
    %p8343 = scmp.le.s32.totalorder 2, %s12
    // Predicated region
    $region49: #{decoder_forward.3} parent=5 // pred_check
      %p8344 = pneg %p8343
    $region50: #{decoder_forward.3} parent=5 // pred_check_branch
      %8346 = sbr.rel (%p8344) target = $region52
    $region51: #{decoder_forward.3} parent=5 // pred_region
      %s8347 = ssub.s32 %s12, 2
      // Predicated region
      $region53: #{decoder_forward.3} parent=51 // pred_check
        %p8348 = pneg %p177
      $region54: #{decoder_forward.3} parent=51 // pred_check_branch
        %8350 = sbr.rel (%p8348) target = $region56
      $region55: #{decoder_forward.3} parent=51 // pred_region
        %p8351 = scmp.lt.s32.totalorder %s18, 1
        %s8352 = scalar_select %p8351, %s18, 1
        %s8353 = smul.addr %s8352, 32
        %s8354 = smul.addr %s8353, 8
        %s8355 = scalar_lea.vmem %s6, %s8354
      $region56: #{decoder_forward.3} parent=51 // pred_fallthru
        _
    $region52: #{decoder_forward.3} parent=5 // pred_fallthru
      _
  $region6: #{decoder_forward.3} parent=0 // loop_footer
    %s16 = sadd.s32 1, %s12
  $region7: #{decoder_forward.3} parent=0 // loop_footer_branch
    %11 = sbr.rel target = $region3
  $region8: #{decoder_forward.3} parent=0 // loop_exit
    _

</llo_original>
